<compile_context>
chip_gen: v7x
topology: tpu7x:2x2x1
jax: 0.10.0
libtpu: 0.0.40
codegen_flags: <defaults>
</compile_context>

<pallas_src>
import jax
import jax.numpy as jnp
from jax.experimental import pallas as pl
from jax.experimental.pallas import tpu as pltpu

EPS = 1e-5  # nn.BatchNorm default eps


def _full_spec(shape):
    nd = len(shape)
    return pl.BlockSpec(shape, lambda i, nd=nd: (0,) * nd)


def simple_cnn_forward(x_nchw, params):
    B = x_nchw.shape[0]
    H1 = x_nchw.shape[2]                       # 24 -> 3x3 after three 2x2 pools
    C1 = params["w1"].shape[-1]                # cha_input
    C2 = params["w2"].shape[-1]                # cha_hidden
    F = params["wf1"].shape[-1]                # fc_hidden
    NCLS = params["wf2"].shape[-1]             # 10

    H2, H3, H4 = H1 // 2, H1 // 4, H1 // 8     # 12, 6, 3
    Hp1, Hp2, Hp3 = H1 + 2, H2 + 2, H3 + 2     # padded grids
    G1, G2, G3 = Hp1 * Hp1, Hp2 * Hp2, Hp3 * Hp3
    N1, N2, N3 = B * G1, B * G2, B * G3        # flattened padded positions
    LP1, LP2, LP3 = Hp1 + 2, Hp2 + 2, Hp3 + 2  # lane pad >= max tap shift (Wp+1)
    K = H4 * H4                                # 9 spatial positions per channel

    f32 = jnp.float32

    # ---- operand preparation (tiny, shape-only layout plumbing) ------------
    x = x_nchw[:, 0].astype(f32)                               # Cin = 1
    xp = jnp.pad(x, ((0, 0), (1, 1), (1, 1)))                  # [B, Hp1, Hp1]
    xflat = jnp.pad(xp.reshape(1, N1), ((0, 0), (LP1, LP1)))   # [1, LP1+N1+LP1]

    def valid_mask(h):
        m = jnp.pad(jnp.ones((B, h, h), f32), ((0, 0), (1, 1), (1, 1)))
        return m.reshape(1, B * (h + 2) * (h + 2))

    def pool_matrix(h_in, col_of, width):
        """Dense [B*Hp_in^2, width] matrix: fused 2x2 avg-pool + scatter into
        the (zero-padded, lane-padded) destination layout as one matmul."""
        hp = h_in + 2
        n_in = B * hp * hp
        idx = jnp.arange(n_in)
        b = idx // (hp * hp)
        rc = idx % (hp * hp)
        r, c = rc // hp, rc % hp
        valid = (r >= 1) & (r <= h_in) & (c >= 1) & (c <= h_in)
        oi, oj = (r - 1) // 2, (c - 1) // 2
        col = col_of(b, oi, oj)
        onehot = (col[:, None] == jnp.arange(width)[None, :]) & valid[:, None]
        return jnp.where(onehot, 0.25, 0.0).astype(f32)

    def conv_w(w):       # [3,3,Cin,Cout] -> [9, Cout, Cin] (tap-major)
        cin, cout = w.shape[2], w.shape[3]
        return jnp.transpose(w, (0, 1, 3, 2)).reshape(9, cout, cin)

    m1, m2, m3 = valid_mask(H1), valid_mask(H2), valid_mask(H3)
    # Pool matrices: stage-1/2 write straight into the next padded input buffer
    # (padding & lane-pad columns are all-zero); stage-3 writes NCHW-flatten.
    p1 = pool_matrix(H1, lambda b, oi, oj: LP2 + b * G2 + (1 + oi) * Hp2 + (1 + oj),
                     LP2 + N2 + LP2)
    p2 = pool_matrix(H2, lambda b, oi, oj: LP3 + b * G3 + (1 + oi) * Hp3 + (1 + oj),
                     LP3 + N3 + LP3)
    p3m = pool_matrix(H3, lambda b, oi, oj: b * K + oi * H4 + oj, B * K)

    w1, w2, w3 = conv_w(params["w1"]), conv_w(params["w2"]), conv_w(params["w3"])
    g1, be1 = params["g1"].reshape(C1, 1), params["be1"].reshape(C1, 1)
    g2, be2 = params["g2"].reshape(C2, 1), params["be2"].reshape(C2, 1)
    g3, be3 = params["g3"].reshape(C2, 1), params["be3"].reshape(C2, 1)
    g4, be4 = params["g4"].reshape(1, F), params["be4"].reshape(1, F)
    wf1r = params["wf1"].reshape(C2, K, F)     # rows already in NCHW-flatten order
    wf2 = params["wf2"]                        # [F, 10]
    bf2 = params["bf2"].reshape(1, NCLS)
    # NOTE: conv/fc1 biases (b1,b2,b3,bf1) are intentionally not passed -- a
    # per-channel constant added before BatchNorm is cancelled by the mean.

    def kernel(x_ref,
               w1_ref, g1_ref, be1_ref, m1_ref, p1_ref,
               w2_ref, g2_ref, be2_ref, m2_ref, p2_ref,
               w3_ref, g3_ref, be3_ref, m3_ref, p3_ref,
               wf1_ref, g4_ref, be4_ref, wf2_ref, bf2_ref,
               o_ref,
               y1_ref, in2_ref, y2_ref, in3_ref, y3_ref, x3_ref, h_ref):

        def conv_bn_relu(src, w_ref, g_ref, beta_ref, m_ref, y_ref,
                         lp, wp, n, count):
            cin = w_ref.shape[2]
            acc = None
            for u in range(3):
                for v in range(3):
                    off = (u - 1) * wp + (v - 1)
                    a = src[:, lp + off: lp + off + n]       # [Cin, n]
                    wk = w_ref[u * 3 + v]                    # [Cout, Cin]
                    if cin == 1:
                        d = wk * a                           # outer product on VPU
                    else:
                        d = jnp.dot(wk, a, preferred_element_type=jnp.float32)
                    acc = d if acc is None else acc + d
            # masked one-pass BN stats (junk border columns excluded)
            mask = m_ref[...]                                # [1, n]
            inv = 1.0 / count
            ym = acc * mask
            mu = jnp.sum(ym, axis=1, keepdims=True) * inv
            var = jnp.maximum(
                jnp.sum(ym * acc, axis=1, keepdims=True) * inv - mu * mu, 0.0)
            scale = g_ref[...] * jax.lax.rsqrt(var + EPS)
            y_ref[...] = jnp.maximum((acc - mu) * scale + beta_ref[...], 0.0)

        # ---- block 1: conv(1->C1)+BN+ReLU; pool writes conv2's padded input
        #      buffer (including its zero padding) with one matmul ------------
        conv_bn_relu(x_ref, w1_ref, g1_ref, be1_ref, m1_ref, y1_ref,
                     LP1, Hp1, N1, B * H1 * H1)
        in2_ref[...] = jnp.dot(y1_ref[...], p1_ref[...],
                               preferred_element_type=jnp.float32)

        # ---- block 2 ---------------------------------------------------------
        conv_bn_relu(in2_ref, w2_ref, g2_ref, be2_ref, m2_ref, y2_ref,
                     LP2, Hp2, N2, B * H2 * H2)
        in3_ref[...] = jnp.dot(y2_ref[...], p2_ref[...],
                               preferred_element_type=jnp.float32)

        # ---- block 3: pooled 3x3 map lands in x3[C2, B*9], NCHW-flatten order
        conv_bn_relu(in3_ref, w3_ref, g3_ref, be3_ref, m3_ref, y3_ref,
                     LP3, Hp3, N3, B * H3 * H3)
        x3_ref[...] = jnp.dot(y3_ref[...], p3_ref[...],
                              preferred_element_type=jnp.float32)

        # ---- fc1 + bn4 + ReLU + fc2 (tiny, f32) ------------------------------
        for b in range(B):
            row = None
            for c in range(C2):
                xc = x3_ref[c:c + 1, b * K: (b + 1) * K]     # [1, 9]
                d = jnp.dot(xc, wf1_ref[c], preferred_element_type=jnp.float32)
                row = d if row is None else row + d
            h_ref[b:b + 1, :] = row
        h = h_ref[...]                                       # [B, F]
        mu = jnp.mean(h, axis=0, keepdims=True)
        var = jnp.maximum(jnp.mean(h * h, axis=0, keepdims=True) - mu * mu, 0.0)
        hb = jnp.maximum(
            (h - mu) * (g4_ref[...] * jax.lax.rsqrt(var + EPS)) + be4_ref[...],
            0.0)
        o_ref[...] = jnp.dot(hb, wf2_ref[...],
                             preferred_element_type=jnp.float32) + bf2_ref[...]

    inputs = [xflat,
              w1, g1, be1, m1, p1,
              w2, g2, be2, m2, p2,
              w3, g3, be3, m3, p3m,
              wf1r, g4, be4, wf2, bf2]

    return pl.pallas_call(
        kernel,
        out_shape=jax.ShapeDtypeStruct((B, NCLS), f32),
        grid=(1,),
        in_specs=[_full_spec(a.shape) for a in inputs],
        out_specs=_full_spec((B, NCLS)),
        scratch_shapes=[
            pltpu.VMEM((C1, N1), f32),                # y1: conv1 post-BN/ReLU
            pltpu.VMEM((C1, LP2 + N2 + LP2), f32),    # in2: padded conv2 input
            pltpu.VMEM((C2, N2), f32),                # y2
            pltpu.VMEM((C2, LP3 + N3 + LP3), f32),    # in3
            pltpu.VMEM((C2, N3), f32),                # y3
            pltpu.VMEM((C2, B * K), f32),             # x3: pooled 3x3 map
            pltpu.VMEM((B, F), f32),                  # h: fc1 pre-activation
        ],
        compiler_params=pltpu.CompilerParams(
            dimension_semantics=("arbitrary",)),
    )(*inputs)


def init_params(key, cha_input, cha_hidden, fc_hidden):
    ks = jax.random.split(key, 10)

    def w(k, shape, scale=0.1):
        return scale * jax.random.normal(k, shape, jnp.float32)

    # Conv weights are stored HWIO ([kh, kw, Cin, Cout]); fc weights as
    # [in, out].  Biases b1/b2/b3/bf1 are kept for parity with the torch module
    # but do not influence the forward output (they sit before a BatchNorm).
    return {
        "w1": w(ks[0], (3, 3, 1, cha_input)),
        "b1": w(ks[1], (cha_input,)),
        "g1": jnp.ones((cha_input,), jnp.float32),
        "be1": jnp.zeros((cha_input,), jnp.float32),
        "w2": w(ks[2], (3, 3, cha_input, cha_hidden)),
        "b2": w(ks[3], (cha_hidden,)),
        "g2": jnp.ones((cha_hidden,), jnp.float32),
        "be2": jnp.zeros((cha_hidden,), jnp.float32),
        "w3": w(ks[4], (3, 3, cha_hidden, cha_hidden)),
        "b3": w(ks[5], (cha_hidden,)),
        "g3": jnp.ones((cha_hidden,), jnp.float32),
        "be3": jnp.zeros((cha_hidden,), jnp.float32),
        "wf1": w(ks[6], (cha_hidden * 3 * 3, fc_hidden)),   # rows: c*9 + h*3 + w
        "bf1": w(ks[7], (fc_hidden,)),
        "g4": jnp.ones((fc_hidden,), jnp.float32),
        "be4": jnp.zeros((fc_hidden,), jnp.float32),
        "wf2": w(ks[8], (fc_hidden, 10)),
        "bf2": w(ks[9], (10,)),
    }


if __name__ == "__main__":
    cha_input, cha_hidden, fc_hidden = 4, 8, 32
    B = 2
    key = jax.random.PRNGKey(0)
    kx, kp = jax.random.split(key)

    x = jax.random.normal(kx, (B, 1, 24, 24), jnp.float32)   # NCHW like PyTorch
    params = init_params(kp, cha_input, cha_hidden, fc_hidden)

    fwd = jax.jit(simple_cnn_forward)
    out = jax.block_until_ready(fwd(x, params))
    assert out.shape == (B, 10), out.shape
    assert bool(jnp.all(jnp.isfinite(out)))
    print("KERNEL_OK")
</pallas_src>

<mosaic_0001>
module attributes {stable_mosaic.version = 11 : i64} {
  func.func @kernel(%arg0: i32, %arg1: memref<1x1408xf32, #tpu.memory_space<vmem>>, %arg2: memref<9x4x1xf32, #tpu.memory_space<vmem>>, %arg3: memref<4x1xf32, #tpu.memory_space<vmem>>, %arg4: memref<4x1xf32, #tpu.memory_space<vmem>>, %arg5: memref<1x1352xf32, #tpu.memory_space<vmem>>, %arg6: memref<1352x424xf32, #tpu.memory_space<vmem>>, %arg7: memref<9x8x4xf32, #tpu.memory_space<vmem>>, %arg8: memref<8x1xf32, #tpu.memory_space<vmem>>, %arg9: memref<8x1xf32, #tpu.memory_space<vmem>>, %arg10: memref<1x392xf32, #tpu.memory_space<vmem>>, %arg11: memref<392x148xf32, #tpu.memory_space<vmem>>, %arg12: memref<9x8x8xf32, #tpu.memory_space<vmem>>, %arg13: memref<8x1xf32, #tpu.memory_space<vmem>>, %arg14: memref<8x1xf32, #tpu.memory_space<vmem>>, %arg15: memref<1x128xf32, #tpu.memory_space<vmem>>, %arg16: memref<128x18xf32, #tpu.memory_space<vmem>>, %arg17: memref<8x9x32xf32, #tpu.memory_space<vmem>>, %arg18: memref<1x32xf32, #tpu.memory_space<vmem>>, %arg19: memref<1x32xf32, #tpu.memory_space<vmem>>, %arg20: memref<32x10xf32, #tpu.memory_space<vmem>>, %arg21: memref<1x10xf32, #tpu.memory_space<vmem>>, %arg22: memref<2x10xf32, #tpu.memory_space<vmem>>, %arg23: memref<4x1352xf32, #tpu.memory_space<vmem>>, %arg24: memref<4x424xf32, #tpu.memory_space<vmem>>, %arg25: memref<8x392xf32, #tpu.memory_space<vmem>>, %arg26: memref<8x148xf32, #tpu.memory_space<vmem>>, %arg27: memref<8x128xf32, #tpu.memory_space<vmem>>, %arg28: memref<8x18xf32, #tpu.memory_space<vmem>>, %arg29: memref<2x32xf32, #tpu.memory_space<vmem>>) attributes {dimension_semantics = [#tpu.dimension_semantics<arbitrary>], iteration_bounds = array<i64: 1>, scalar_prefetch = 0 : i64, scratch_operands = 7 : i64, tpu.core_type = #tpu.core_type<tc>, window_params = [{pipeline_mode = #tpu.pipeline_mode<synchronous>, transform_indices = @transform_0, window_bounds = array<i64: 1, 1408>}, {pipeline_mode = #tpu.pipeline_mode<synchronous>, transform_indices = @transform_1, window_bounds = array<i64: 9, 4, 1>}, {pipeline_mode = #tpu.pipeline_mode<synchronous>, transform_indices = @transform_2, window_bounds = array<i64: 4, 1>}, {pipeline_mode = #tpu.pipeline_mode<synchronous>, transform_indices = @transform_3, window_bounds = array<i64: 4, 1>}, {pipeline_mode = #tpu.pipeline_mode<synchronous>, transform_indices = @transform_4, window_bounds = array<i64: 1, 1352>}, {pipeline_mode = #tpu.pipeline_mode<synchronous>, transform_indices = @transform_5, window_bounds = array<i64: 1352, 424>}, {pipeline_mode = #tpu.pipeline_mode<synchronous>, transform_indices = @transform_6, window_bounds = array<i64: 9, 8, 4>}, {pipeline_mode = #tpu.pipeline_mode<synchronous>, transform_indices = @transform_7, window_bounds = array<i64: 8, 1>}, {pipeline_mode = #tpu.pipeline_mode<synchronous>, transform_indices = @transform_8, window_bounds = array<i64: 8, 1>}, {pipeline_mode = #tpu.pipeline_mode<synchronous>, transform_indices = @transform_9, window_bounds = array<i64: 1, 392>}, {pipeline_mode = #tpu.pipeline_mode<synchronous>, transform_indices = @transform_10, window_bounds = array<i64: 392, 148>}, {pipeline_mode = #tpu.pipeline_mode<synchronous>, transform_indices = @transform_11, window_bounds = array<i64: 9, 8, 8>}, {pipeline_mode = #tpu.pipeline_mode<synchronous>, transform_indices = @transform_12, window_bounds = array<i64: 8, 1>}, {pipeline_mode = #tpu.pipeline_mode<synchronous>, transform_indices = @transform_13, window_bounds = array<i64: 8, 1>}, {pipeline_mode = #tpu.pipeline_mode<synchronous>, transform_indices = @transform_14, window_bounds = array<i64: 1, 128>}, {pipeline_mode = #tpu.pipeline_mode<synchronous>, transform_indices = @transform_15, window_bounds = array<i64: 128, 18>}, {pipeline_mode = #tpu.pipeline_mode<synchronous>, transform_indices = @transform_16, window_bounds = array<i64: 8, 9, 32>}, {pipeline_mode = #tpu.pipeline_mode<synchronous>, transform_indices = @transform_17, window_bounds = array<i64: 1, 32>}, {pipeline_mode = #tpu.pipeline_mode<synchronous>, transform_indices = @transform_18, window_bounds = array<i64: 1, 32>}, {pipeline_mode = #tpu.pipeline_mode<synchronous>, transform_indices = @transform_19, window_bounds = array<i64: 32, 10>}, {pipeline_mode = #tpu.pipeline_mode<synchronous>, transform_indices = @transform_20, window_bounds = array<i64: 1, 10>}, {pipeline_mode = #tpu.pipeline_mode<synchronous>, transform_indices = @transform_21, window_bounds = array<i64: 2, 10>}]} {
    %c0 = arith.constant 0 : index
    %c1 = arith.constant 1 : index
    %0 = vector.load %arg1[%c0, %c1] : memref<1x1408xf32, #tpu.memory_space<vmem>>, vector<1x1352xf32>
    %c0_0 = arith.constant 0 : index
    %c0_1 = arith.constant 0 : index
    %c0_2 = arith.constant 0 : index
    %1 = vector.load %arg2[%c0_0, %c0_1, %c0_2] : memref<9x4x1xf32, #tpu.memory_space<vmem>>, vector<1x4x1xf32>
    %2 = vector.shape_cast %1 : vector<1x4x1xf32> to vector<4x1xf32>
    %3 = vector.broadcast %2 : vector<4x1xf32> to vector<4x1352xf32>
    %4 = vector.broadcast %0 : vector<1x1352xf32> to vector<4x1352xf32>
    %5 = arith.mulf %3, %4 : vector<4x1352xf32>
    %c0_3 = arith.constant 0 : index
    %c2 = arith.constant 2 : index
    %6 = vector.load %arg1[%c0_3, %c2] : memref<1x1408xf32, #tpu.memory_space<vmem>>, vector<1x1352xf32>
    %c1_4 = arith.constant 1 : index
    %c0_5 = arith.constant 0 : index
    %c0_6 = arith.constant 0 : index
    %7 = vector.load %arg2[%c1_4, %c0_5, %c0_6] : memref<9x4x1xf32, #tpu.memory_space<vmem>>, vector<1x4x1xf32>
    %8 = vector.shape_cast %7 : vector<1x4x1xf32> to vector<4x1xf32>
    %9 = vector.broadcast %8 : vector<4x1xf32> to vector<4x1352xf32>
    %10 = vector.broadcast %6 : vector<1x1352xf32> to vector<4x1352xf32>
    %11 = arith.mulf %9, %10 : vector<4x1352xf32>
    %12 = arith.addf %5, %11 : vector<4x1352xf32>
    %c0_7 = arith.constant 0 : index
    %c3 = arith.constant 3 : index
    %13 = vector.load %arg1[%c0_7, %c3] : memref<1x1408xf32, #tpu.memory_space<vmem>>, vector<1x1352xf32>
    %c2_8 = arith.constant 2 : index
    %c0_9 = arith.constant 0 : index
    %c0_10 = arith.constant 0 : index
    %14 = vector.load %arg2[%c2_8, %c0_9, %c0_10] : memref<9x4x1xf32, #tpu.memory_space<vmem>>, vector<1x4x1xf32>
    %15 = vector.shape_cast %14 : vector<1x4x1xf32> to vector<4x1xf32>
    %16 = vector.broadcast %15 : vector<4x1xf32> to vector<4x1352xf32>
    %17 = vector.broadcast %13 : vector<1x1352xf32> to vector<4x1352xf32>
    %18 = arith.mulf %16, %17 : vector<4x1352xf32>
    %19 = arith.addf %12, %18 : vector<4x1352xf32>
    %c0_11 = arith.constant 0 : index
    %c27 = arith.constant 27 : index
    %20 = vector.load %arg1[%c0_11, %c27] : memref<1x1408xf32, #tpu.memory_space<vmem>>, vector<1x1352xf32>
    %c3_12 = arith.constant 3 : index
    %c0_13 = arith.constant 0 : index
    %c0_14 = arith.constant 0 : index
    %21 = vector.load %arg2[%c3_12, %c0_13, %c0_14] : memref<9x4x1xf32, #tpu.memory_space<vmem>>, vector<1x4x1xf32>
    %22 = vector.shape_cast %21 : vector<1x4x1xf32> to vector<4x1xf32>
    %23 = vector.broadcast %22 : vector<4x1xf32> to vector<4x1352xf32>
    %24 = vector.broadcast %20 : vector<1x1352xf32> to vector<4x1352xf32>
    %25 = arith.mulf %23, %24 : vector<4x1352xf32>
    %26 = arith.addf %19, %25 : vector<4x1352xf32>
    %c0_15 = arith.constant 0 : index
    %c28 = arith.constant 28 : index
    %27 = vector.load %arg1[%c0_15, %c28] : memref<1x1408xf32, #tpu.memory_space<vmem>>, vector<1x1352xf32>
    %c4 = arith.constant 4 : index
    %c0_16 = arith.constant 0 : index
    %c0_17 = arith.constant 0 : index
    %28 = vector.load %arg2[%c4, %c0_16, %c0_17] : memref<9x4x1xf32, #tpu.memory_space<vmem>>, vector<1x4x1xf32>
    %29 = vector.shape_cast %28 : vector<1x4x1xf32> to vector<4x1xf32>
    %30 = vector.broadcast %29 : vector<4x1xf32> to vector<4x1352xf32>
    %31 = vector.broadcast %27 : vector<1x1352xf32> to vector<4x1352xf32>
    %32 = arith.mulf %30, %31 : vector<4x1352xf32>
    %33 = arith.addf %26, %32 : vector<4x1352xf32>
    %c0_18 = arith.constant 0 : index
    %c29 = arith.constant 29 : index
    %34 = vector.load %arg1[%c0_18, %c29] : memref<1x1408xf32, #tpu.memory_space<vmem>>, vector<1x1352xf32>
    %c5 = arith.constant 5 : index
    %c0_19 = arith.constant 0 : index
    %c0_20 = arith.constant 0 : index
    %35 = vector.load %arg2[%c5, %c0_19, %c0_20] : memref<9x4x1xf32, #tpu.memory_space<vmem>>, vector<1x4x1xf32>
    %36 = vector.shape_cast %35 : vector<1x4x1xf32> to vector<4x1xf32>
    %37 = vector.broadcast %36 : vector<4x1xf32> to vector<4x1352xf32>
    %38 = vector.broadcast %34 : vector<1x1352xf32> to vector<4x1352xf32>
    %39 = arith.mulf %37, %38 : vector<4x1352xf32>
    %40 = arith.addf %33, %39 : vector<4x1352xf32>
    %c0_21 = arith.constant 0 : index
    %c53 = arith.constant 53 : index
    %41 = vector.load %arg1[%c0_21, %c53] : memref<1x1408xf32, #tpu.memory_space<vmem>>, vector<1x1352xf32>
    %c6 = arith.constant 6 : index
    %c0_22 = arith.constant 0 : index
    %c0_23 = arith.constant 0 : index
    %42 = vector.load %arg2[%c6, %c0_22, %c0_23] : memref<9x4x1xf32, #tpu.memory_space<vmem>>, vector<1x4x1xf32>
    %43 = vector.shape_cast %42 : vector<1x4x1xf32> to vector<4x1xf32>
    %44 = vector.broadcast %43 : vector<4x1xf32> to vector<4x1352xf32>
    %45 = vector.broadcast %41 : vector<1x1352xf32> to vector<4x1352xf32>
    %46 = arith.mulf %44, %45 : vector<4x1352xf32>
    %47 = arith.addf %40, %46 : vector<4x1352xf32>
    %c0_24 = arith.constant 0 : index
    %c54 = arith.constant 54 : index
    %48 = vector.load %arg1[%c0_24, %c54] : memref<1x1408xf32, #tpu.memory_space<vmem>>, vector<1x1352xf32>
    %c7 = arith.constant 7 : index
    %c0_25 = arith.constant 0 : index
    %c0_26 = arith.constant 0 : index
    %49 = vector.load %arg2[%c7, %c0_25, %c0_26] : memref<9x4x1xf32, #tpu.memory_space<vmem>>, vector<1x4x1xf32>
    %50 = vector.shape_cast %49 : vector<1x4x1xf32> to vector<4x1xf32>
    %51 = vector.broadcast %50 : vector<4x1xf32> to vector<4x1352xf32>
    %52 = vector.broadcast %48 : vector<1x1352xf32> to vector<4x1352xf32>
    %53 = arith.mulf %51, %52 : vector<4x1352xf32>
    %54 = arith.addf %47, %53 : vector<4x1352xf32>
    %c0_27 = arith.constant 0 : index
    %c55 = arith.constant 55 : index
    %55 = vector.load %arg1[%c0_27, %c55] : memref<1x1408xf32, #tpu.memory_space<vmem>>, vector<1x1352xf32>
    %c8 = arith.constant 8 : index
    %c0_28 = arith.constant 0 : index
    %c0_29 = arith.constant 0 : index
    %56 = vector.load %arg2[%c8, %c0_28, %c0_29] : memref<9x4x1xf32, #tpu.memory_space<vmem>>, vector<1x4x1xf32>
    %57 = vector.shape_cast %56 : vector<1x4x1xf32> to vector<4x1xf32>
    %58 = vector.broadcast %57 : vector<4x1xf32> to vector<4x1352xf32>
    %59 = vector.broadcast %55 : vector<1x1352xf32> to vector<4x1352xf32>
    %60 = arith.mulf %58, %59 : vector<4x1352xf32>
    %61 = arith.addf %54, %60 : vector<4x1352xf32>
    %c0_30 = arith.constant 0 : index
    %c0_31 = arith.constant 0 : index
    %62 = vector.load %arg5[%c0_30, %c0_31] : memref<1x1352xf32, #tpu.memory_space<vmem>>, vector<1x1352xf32>
    %63 = vector.broadcast %62 : vector<1x1352xf32> to vector<4x1352xf32>
    %64 = arith.mulf %61, %63 : vector<4x1352xf32>
    %cst = arith.constant dense<0.000000e+00> : vector<4xf32>
    %65 = vector.multi_reduction <add>, %64, %cst [1] : vector<4x1352xf32> to vector<4xf32>
    %66 = vector.shape_cast %65 : vector<4xf32> to vector<4x1xf32>
    %cst_32 = arith.constant 8.68055562E-4 : f32
    %67 = vector.broadcast %cst_32 : f32 to vector<4x1xf32>
    %68 = arith.mulf %66, %67 : vector<4x1xf32>
    %69 = arith.mulf %64, %61 : vector<4x1352xf32>
    %cst_33 = arith.constant dense<0.000000e+00> : vector<4xf32>
    %70 = vector.multi_reduction <add>, %69, %cst_33 [1] : vector<4x1352xf32> to vector<4xf32>
    %71 = vector.shape_cast %70 : vector<4xf32> to vector<4x1xf32>
    %cst_34 = arith.constant 8.68055562E-4 : f32
    %72 = vector.broadcast %cst_34 : f32 to vector<4x1xf32>
    %73 = arith.mulf %71, %72 : vector<4x1xf32>
    %74 = arith.mulf %68, %68 : vector<4x1xf32>
    %75 = arith.subf %73, %74 : vector<4x1xf32>
    %cst_35 = arith.constant 0.000000e+00 : f32
    %76 = vector.broadcast %cst_35 : f32 to vector<4x1xf32>
    %77 = arith.maximumf %75, %76 : vector<4x1xf32>
    %c0_36 = arith.constant 0 : index
    %c0_37 = arith.constant 0 : index
    %78 = vector.load %arg3[%c0_36, %c0_37] : memref<4x1xf32, #tpu.memory_space<vmem>>, vector<4x1xf32>
    %cst_38 = arith.constant 9.99999974E-6 : f32
    %79 = vector.broadcast %cst_38 : f32 to vector<4x1xf32>
    %80 = arith.addf %77, %79 : vector<4x1xf32>
    %81 = math.rsqrt %80 : vector<4x1xf32>
    %82 = arith.mulf %78, %81 : vector<4x1xf32>
    %83 = vector.broadcast %68 : vector<4x1xf32> to vector<4x1352xf32>
    %84 = arith.subf %61, %83 : vector<4x1352xf32>
    %85 = vector.broadcast %82 : vector<4x1xf32> to vector<4x1352xf32>
    %86 = arith.mulf %84, %85 : vector<4x1352xf32>
    %c0_39 = arith.constant 0 : index
    %c0_40 = arith.constant 0 : index
    %87 = vector.load %arg4[%c0_39, %c0_40] : memref<4x1xf32, #tpu.memory_space<vmem>>, vector<4x1xf32>
    %88 = vector.broadcast %87 : vector<4x1xf32> to vector<4x1352xf32>
    %89 = arith.addf %86, %88 : vector<4x1352xf32>
    %cst_41 = arith.constant 0.000000e+00 : f32
    %90 = vector.broadcast %cst_41 : f32 to vector<4x1352xf32>
    %91 = arith.maximumf %89, %90 : vector<4x1352xf32>
    %c0_42 = arith.constant 0 : index
    %c0_43 = arith.constant 0 : index
    %92 = vector.load %arg23[%c0_42, %c0_43] : memref<4x1352xf32, #tpu.memory_space<vmem>>, vector<4x1352xf32>
    tpu.vector_store %arg23[%c0_42, %c0_43], %91 {strides = array<i32>} : memref<4x1352xf32, #tpu.memory_space<vmem>>, vector<4x1352xf32>,
    %c0_44 = arith.constant 0 : index
    %c0_45 = arith.constant 0 : index
    %93 = vector.load %arg23[%c0_44, %c0_45] : memref<4x1352xf32, #tpu.memory_space<vmem>>, vector<4x1352xf32>
    %c0_46 = arith.constant 0 : index
    %c0_47 = arith.constant 0 : index
    %94 = vector.load %arg6[%c0_46, %c0_47] : memref<1352x424xf32, #tpu.memory_space<vmem>>, vector<1352x424xf32>
    %cst_48 = arith.constant dense<0.000000e+00> : vector<4x424xf32>
    %95 = tpu.matmul %93, %94, %cst_48 {dimension_numbers = #tpu.dot_dimension_numbers<[1], [0], [0], [1], [0, 0, 1, 1], [], []>} : vector<4x1352xf32>, vector<1352x424xf32>, vector<4x424xf32> -> vector<4x424xf32>
    %c0_49 = arith.constant 0 : index
    %c0_50 = arith.constant 0 : index
    %96 = vector.load %arg24[%c0_49, %c0_50] : memref<4x424xf32, #tpu.memory_space<vmem>>, vector<4x424xf32>
    tpu.vector_store %arg24[%c0_49, %c0_50], %95 {strides = array<i32>} : memref<4x424xf32, #tpu.memory_space<vmem>>, vector<4x424xf32>,
    %c0_51 = arith.constant 0 : index
    %c1_52 = arith.constant 1 : index
    %97 = vector.load %arg24[%c0_51, %c1_52] : memref<4x424xf32, #tpu.memory_space<vmem>>, vector<4x392xf32>
    %c0_53 = arith.constant 0 : index
    %c0_54 = arith.constant 0 : index
    %c0_55 = arith.constant 0 : index
    %98 = vector.load %arg7[%c0_53, %c0_54, %c0_55] : memref<9x8x4xf32, #tpu.memory_space<vmem>>, vector<1x8x4xf32>
    %99 = vector.shape_cast %98 : vector<1x8x4xf32> to vector<8x4xf32>
    %cst_56 = arith.constant dense<0.000000e+00> : vector<8x392xf32>
    %100 = tpu.matmul %99, %97, %cst_56 {dimension_numbers = #tpu.dot_dimension_numbers<[1], [0], [0], [1], [0, 0, 1, 1], [], []>} : vector<8x4xf32>, vector<4x392xf32>, vector<8x392xf32> -> vector<8x392xf32>
    %c0_57 = arith.constant 0 : index
    %c2_58 = arith.constant 2 : index
    %101 = vector.load %arg24[%c0_57, %c2_58] : memref<4x424xf32, #tpu.memory_space<vmem>>, vector<4x392xf32>
    %c1_59 = arith.constant 1 : index
    %c0_60 = arith.constant 0 : index
    %c0_61 = arith.constant 0 : index
    %102 = vector.load %arg7[%c1_59, %c0_60, %c0_61] : memref<9x8x4xf32, #tpu.memory_space<vmem>>, vector<1x8x4xf32>
    %103 = vector.shape_cast %102 : vector<1x8x4xf32> to vector<8x4xf32>
    %cst_62 = arith.constant dense<0.000000e+00> : vector<8x392xf32>
    %104 = tpu.matmul %103, %101, %cst_62 {dimension_numbers = #tpu.dot_dimension_numbers<[1], [0], [0], [1], [0, 0, 1, 1], [], []>} : vector<8x4xf32>, vector<4x392xf32>, vector<8x392xf32> -> vector<8x392xf32>
    %105 = arith.addf %100, %104 : vector<8x392xf32>
    %c0_63 = arith.constant 0 : index
    %c3_64 = arith.constant 3 : index
    %106 = vector.load %arg24[%c0_63, %c3_64] : memref<4x424xf32, #tpu.memory_space<vmem>>, vector<4x392xf32>
    %c2_65 = arith.constant 2 : index
    %c0_66 = arith.constant 0 : index
    %c0_67 = arith.constant 0 : index
    %107 = vector.load %arg7[%c2_65, %c0_66, %c0_67] : memref<9x8x4xf32, #tpu.memory_space<vmem>>, vector<1x8x4xf32>
    %108 = vector.shape_cast %107 : vector<1x8x4xf32> to vector<8x4xf32>
    %cst_68 = arith.constant dense<0.000000e+00> : vector<8x392xf32>
    %109 = tpu.matmul %108, %106, %cst_68 {dimension_numbers = #tpu.dot_dimension_numbers<[1], [0], [0], [1], [0, 0, 1, 1], [], []>} : vector<8x4xf32>, vector<4x392xf32>, vector<8x392xf32> -> vector<8x392xf32>
    %110 = arith.addf %105, %109 : vector<8x392xf32>
    %c0_69 = arith.constant 0 : index
    %c15 = arith.constant 15 : index
    %111 = vector.load %arg24[%c0_69, %c15] : memref<4x424xf32, #tpu.memory_space<vmem>>, vector<4x392xf32>
    %c3_70 = arith.constant 3 : index
    %c0_71 = arith.constant 0 : index
    %c0_72 = arith.constant 0 : index
    %112 = vector.load %arg7[%c3_70, %c0_71, %c0_72] : memref<9x8x4xf32, #tpu.memory_space<vmem>>, vector<1x8x4xf32>
    %113 = vector.shape_cast %112 : vector<1x8x4xf32> to vector<8x4xf32>
    %cst_73 = arith.constant dense<0.000000e+00> : vector<8x392xf32>
    %114 = tpu.matmul %113, %111, %cst_73 {dimension_numbers = #tpu.dot_dimension_numbers<[1], [0], [0], [1], [0, 0, 1, 1], [], []>} : vector<8x4xf32>, vector<4x392xf32>, vector<8x392xf32> -> vector<8x392xf32>
    %115 = arith.addf %110, %114 : vector<8x392xf32>
    %c0_74 = arith.constant 0 : index
    %c16 = arith.constant 16 : index
    %116 = vector.load %arg24[%c0_74, %c16] : memref<4x424xf32, #tpu.memory_space<vmem>>, vector<4x392xf32>
    %c4_75 = arith.constant 4 : index
    %c0_76 = arith.constant 0 : index
    %c0_77 = arith.constant 0 : index
    %117 = vector.load %arg7[%c4_75, %c0_76, %c0_77] : memref<9x8x4xf32, #tpu.memory_space<vmem>>, vector<1x8x4xf32>
    %118 = vector.shape_cast %117 : vector<1x8x4xf32> to vector<8x4xf32>
    %cst_78 = arith.constant dense<0.000000e+00> : vector<8x392xf32>
    %119 = tpu.matmul %118, %116, %cst_78 {dimension_numbers = #tpu.dot_dimension_numbers<[1], [0], [0], [1], [0, 0, 1, 1], [], []>} : vector<8x4xf32>, vector<4x392xf32>, vector<8x392xf32> -> vector<8x392xf32>
    %120 = arith.addf %115, %119 : vector<8x392xf32>
    %c0_79 = arith.constant 0 : index
    %c17 = arith.constant 17 : index
    %121 = vector.load %arg24[%c0_79, %c17] : memref<4x424xf32, #tpu.memory_space<vmem>>, vector<4x392xf32>
    %c5_80 = arith.constant 5 : index
    %c0_81 = arith.constant 0 : index
    %c0_82 = arith.constant 0 : index
    %122 = vector.load %arg7[%c5_80, %c0_81, %c0_82] : memref<9x8x4xf32, #tpu.memory_space<vmem>>, vector<1x8x4xf32>
    %123 = vector.shape_cast %122 : vector<1x8x4xf32> to vector<8x4xf32>
    %cst_83 = arith.constant dense<0.000000e+00> : vector<8x392xf32>
    %124 = tpu.matmul %123, %121, %cst_83 {dimension_numbers = #tpu.dot_dimension_numbers<[1], [0], [0], [1], [0, 0, 1, 1], [], []>} : vector<8x4xf32>, vector<4x392xf32>, vector<8x392xf32> -> vector<8x392xf32>
    %125 = arith.addf %120, %124 : vector<8x392xf32>
    %c0_84 = arith.constant 0 : index
    %c29_85 = arith.constant 29 : index
    %126 = vector.load %arg24[%c0_84, %c29_85] : memref<4x424xf32, #tpu.memory_space<vmem>>, vector<4x392xf32>
    %c6_86 = arith.constant 6 : index
    %c0_87 = arith.constant 0 : index
    %c0_88 = arith.constant 0 : index
    %127 = vector.load %arg7[%c6_86, %c0_87, %c0_88] : memref<9x8x4xf32, #tpu.memory_space<vmem>>, vector<1x8x4xf32>
    %128 = vector.shape_cast %127 : vector<1x8x4xf32> to vector<8x4xf32>
    %cst_89 = arith.constant dense<0.000000e+00> : vector<8x392xf32>
    %129 = tpu.matmul %128, %126, %cst_89 {dimension_numbers = #tpu.dot_dimension_numbers<[1], [0], [0], [1], [0, 0, 1, 1], [], []>} : vector<8x4xf32>, vector<4x392xf32>, vector<8x392xf32> -> vector<8x392xf32>
    %130 = arith.addf %125, %129 : vector<8x392xf32>
    %c0_90 = arith.constant 0 : index
    %c30 = arith.constant 30 : index
    %131 = vector.load %arg24[%c0_90, %c30] : memref<4x424xf32, #tpu.memory_space<vmem>>, vector<4x392xf32>
    %c7_91 = arith.constant 7 : index
    %c0_92 = arith.constant 0 : index
    %c0_93 = arith.constant 0 : index
    %132 = vector.load %arg7[%c7_91, %c0_92, %c0_93] : memref<9x8x4xf32, #tpu.memory_space<vmem>>, vector<1x8x4xf32>
    %133 = vector.shape_cast %132 : vector<1x8x4xf32> to vector<8x4xf32>
    %cst_94 = arith.constant dense<0.000000e+00> : vector<8x392xf32>
    %134 = tpu.matmul %133, %131, %cst_94 {dimension_numbers = #tpu.dot_dimension_numbers<[1], [0], [0], [1], [0, 0, 1, 1], [], []>} : vector<8x4xf32>, vector<4x392xf32>, vector<8x392xf32> -> vector<8x392xf32>
    %135 = arith.addf %130, %134 : vector<8x392xf32>
    %c0_95 = arith.constant 0 : index
    %c31 = arith.constant 31 : index
    %136 = vector.load %arg24[%c0_95, %c31] : memref<4x424xf32, #tpu.memory_space<vmem>>, vector<4x392xf32>
    %c8_96 = arith.constant 8 : index
    %c0_97 = arith.constant 0 : index
    %c0_98 = arith.constant 0 : index
    %137 = vector.load %arg7[%c8_96, %c0_97, %c0_98] : memref<9x8x4xf32, #tpu.memory_space<vmem>>, vector<1x8x4xf32>
    %138 = vector.shape_cast %137 : vector<1x8x4xf32> to vector<8x4xf32>
    %cst_99 = arith.constant dense<0.000000e+00> : vector<8x392xf32>
    %139 = tpu.matmul %138, %136, %cst_99 {dimension_numbers = #tpu.dot_dimension_numbers<[1], [0], [0], [1], [0, 0, 1, 1], [], []>} : vector<8x4xf32>, vector<4x392xf32>, vector<8x392xf32> -> vector<8x392xf32>
    %140 = arith.addf %135, %139 : vector<8x392xf32>
    %c0_100 = arith.constant 0 : index
    %c0_101 = arith.constant 0 : index
    %141 = vector.load %arg10[%c0_100, %c0_101] : memref<1x392xf32, #tpu.memory_space<vmem>>, vector<1x392xf32>
    %142 = vector.broadcast %141 : vector<1x392xf32> to vector<8x392xf32>
    %143 = arith.mulf %140, %142 : vector<8x392xf32>
    %cst_102 = arith.constant dense<0.000000e+00> : vector<8xf32>
    %144 = vector.multi_reduction <add>, %143, %cst_102 [1] : vector<8x392xf32> to vector<8xf32>
    %145 = vector.shape_cast %144 : vector<8xf32> to vector<8x1xf32>
    %cst_103 = arith.constant 0.00347222225 : f32
    %146 = vector.broadcast %cst_103 : f32 to vector<8x1xf32>
    %147 = arith.mulf %145, %146 : vector<8x1xf32>
    %148 = arith.mulf %143, %140 : vector<8x392xf32>
    %cst_104 = arith.constant dense<0.000000e+00> : vector<8xf32>
    %149 = vector.multi_reduction <add>, %148, %cst_104 [1] : vector<8x392xf32> to vector<8xf32>
    %150 = vector.shape_cast %149 : vector<8xf32> to vector<8x1xf32>
    %cst_105 = arith.constant 0.00347222225 : f32
    %151 = vector.broadcast %cst_105 : f32 to vector<8x1xf32>
    %152 = arith.mulf %150, %151 : vector<8x1xf32>
    %153 = arith.mulf %147, %147 : vector<8x1xf32>
    %154 = arith.subf %152, %153 : vector<8x1xf32>
    %cst_106 = arith.constant 0.000000e+00 : f32
    %155 = vector.broadcast %cst_106 : f32 to vector<8x1xf32>
    %156 = arith.maximumf %154, %155 : vector<8x1xf32>
    %c0_107 = arith.constant 0 : index
    %c0_108 = arith.constant 0 : index
    %157 = vector.load %arg8[%c0_107, %c0_108] : memref<8x1xf32, #tpu.memory_space<vmem>>, vector<8x1xf32>
    %cst_109 = arith.constant 9.99999974E-6 : f32
    %158 = vector.broadcast %cst_109 : f32 to vector<8x1xf32>
    %159 = arith.addf %156, %158 : vector<8x1xf32>
    %160 = math.rsqrt %159 : vector<8x1xf32>
    %161 = arith.mulf %157, %160 : vector<8x1xf32>
    %162 = vector.broadcast %147 : vector<8x1xf32> to vector<8x392xf32>
    %163 = arith.subf %140, %162 : vector<8x392xf32>
    %164 = vector.broadcast %161 : vector<8x1xf32> to vector<8x392xf32>
    %165 = arith.mulf %163, %164 : vector<8x392xf32>
    %c0_110 = arith.constant 0 : index
    %c0_111 = arith.constant 0 : index
    %166 = vector.load %arg9[%c0_110, %c0_111] : memref<8x1xf32, #tpu.memory_space<vmem>>, vector<8x1xf32>
    %167 = vector.broadcast %166 : vector<8x1xf32> to vector<8x392xf32>
    %168 = arith.addf %165, %167 : vector<8x392xf32>
    %cst_112 = arith.constant 0.000000e+00 : f32
    %169 = vector.broadcast %cst_112 : f32 to vector<8x392xf32>
    %170 = arith.maximumf %168, %169 : vector<8x392xf32>
    %c0_113 = arith.constant 0 : index
    %c0_114 = arith.constant 0 : index
    %171 = vector.load %arg25[%c0_113, %c0_114] : memref<8x392xf32, #tpu.memory_space<vmem>>, vector<8x392xf32>
    tpu.vector_store %arg25[%c0_113, %c0_114], %170 {strides = array<i32>} : memref<8x392xf32, #tpu.memory_space<vmem>>, vector<8x392xf32>,
    %c0_115 = arith.constant 0 : index
    %c0_116 = arith.constant 0 : index
    %172 = vector.load %arg25[%c0_115, %c0_116] : memref<8x392xf32, #tpu.memory_space<vmem>>, vector<8x392xf32>
    %c0_117 = arith.constant 0 : index
    %c0_118 = arith.constant 0 : index
    %173 = vector.load %arg11[%c0_117, %c0_118] : memref<392x148xf32, #tpu.memory_space<vmem>>, vector<392x148xf32>
    %cst_119 = arith.constant dense<0.000000e+00> : vector<8x148xf32>
    %174 = tpu.matmul %172, %173, %cst_119 {dimension_numbers = #tpu.dot_dimension_numbers<[1], [0], [0], [1], [0, 0, 1, 1], [], []>} : vector<8x392xf32>, vector<392x148xf32>, vector<8x148xf32> -> vector<8x148xf32>
    %c0_120 = arith.constant 0 : index
    %c0_121 = arith.constant 0 : index
    %175 = vector.load %arg26[%c0_120, %c0_121] : memref<8x148xf32, #tpu.memory_space<vmem>>, vector<8x148xf32>
    tpu.vector_store %arg26[%c0_120, %c0_121], %174 {strides = array<i32>} : memref<8x148xf32, #tpu.memory_space<vmem>>, vector<8x148xf32>,
    %c0_122 = arith.constant 0 : index
    %c1_123 = arith.constant 1 : index
    %176 = vector.load %arg26[%c0_122, %c1_123] : memref<8x148xf32, #tpu.memory_space<vmem>>, vector<8x128xf32>
    %c0_124 = arith.constant 0 : index
    %c0_125 = arith.constant 0 : index
    %c0_126 = arith.constant 0 : index
    %177 = vector.load %arg12[%c0_124, %c0_125, %c0_126] : memref<9x8x8xf32, #tpu.memory_space<vmem>>, vector<1x8x8xf32>
    %178 = vector.shape_cast %177 : vector<1x8x8xf32> to vector<8x8xf32>
    %cst_127 = arith.constant dense<0.000000e+00> : vector<8x128xf32>
    %179 = tpu.matmul %178, %176, %cst_127 {dimension_numbers = #tpu.dot_dimension_numbers<[1], [0], [0], [1], [0, 0, 1, 1], [], []>} : vector<8x8xf32>, vector<8x128xf32>, vector<8x128xf32> -> vector<8x128xf32>
    %c0_128 = arith.constant 0 : index
    %c2_129 = arith.constant 2 : index
    %180 = vector.load %arg26[%c0_128, %c2_129] : memref<8x148xf32, #tpu.memory_space<vmem>>, vector<8x128xf32>
    %c1_130 = arith.constant 1 : index
    %c0_131 = arith.constant 0 : index
    %c0_132 = arith.constant 0 : index
    %181 = vector.load %arg12[%c1_130, %c0_131, %c0_132] : memref<9x8x8xf32, #tpu.memory_space<vmem>>, vector<1x8x8xf32>
    %182 = vector.shape_cast %181 : vector<1x8x8xf32> to vector<8x8xf32>
    %cst_133 = arith.constant dense<0.000000e+00> : vector<8x128xf32>
    %183 = tpu.matmul %182, %180, %cst_133 {dimension_numbers = #tpu.dot_dimension_numbers<[1], [0], [0], [1], [0, 0, 1, 1], [], []>} : vector<8x8xf32>, vector<8x128xf32>, vector<8x128xf32> -> vector<8x128xf32>
    %184 = arith.addf %179, %183 : vector<8x128xf32>
    %c0_134 = arith.constant 0 : index
    %c3_135 = arith.constant 3 : index
    %185 = vector.load %arg26[%c0_134, %c3_135] : memref<8x148xf32, #tpu.memory_space<vmem>>, vector<8x128xf32>
    %c2_136 = arith.constant 2 : index
    %c0_137 = arith.constant 0 : index
    %c0_138 = arith.constant 0 : index
    %186 = vector.load %arg12[%c2_136, %c0_137, %c0_138] : memref<9x8x8xf32, #tpu.memory_space<vmem>>, vector<1x8x8xf32>
    %187 = vector.shape_cast %186 : vector<1x8x8xf32> to vector<8x8xf32>
    %cst_139 = arith.constant dense<0.000000e+00> : vector<8x128xf32>
    %188 = tpu.matmul %187, %185, %cst_139 {dimension_numbers = #tpu.dot_dimension_numbers<[1], [0], [0], [1], [0, 0, 1, 1], [], []>} : vector<8x8xf32>, vector<8x128xf32>, vector<8x128xf32> -> vector<8x128xf32>
    %189 = arith.addf %184, %188 : vector<8x128xf32>
    %c0_140 = arith.constant 0 : index
    %c9 = arith.constant 9 : index
    %190 = vector.load %arg26[%c0_140, %c9] : memref<8x148xf32, #tpu.memory_space<vmem>>, vector<8x128xf32>
    %c3_141 = arith.constant 3 : index
    %c0_142 = arith.constant 0 : index
    %c0_143 = arith.constant 0 : index
    %191 = vector.load %arg12[%c3_141, %c0_142, %c0_143] : memref<9x8x8xf32, #tpu.memory_space<vmem>>, vector<1x8x8xf32>
    %192 = vector.shape_cast %191 : vector<1x8x8xf32> to vector<8x8xf32>
    %cst_144 = arith.constant dense<0.000000e+00> : vector<8x128xf32>
    %193 = tpu.matmul %192, %190, %cst_144 {dimension_numbers = #tpu.dot_dimension_numbers<[1], [0], [0], [1], [0, 0, 1, 1], [], []>} : vector<8x8xf32>, vector<8x128xf32>, vector<8x128xf32> -> vector<8x128xf32>
    %194 = arith.addf %189, %193 : vector<8x128xf32>
    %c0_145 = arith.constant 0 : index
    %c10 = arith.constant 10 : index
    %195 = vector.load %arg26[%c0_145, %c10] : memref<8x148xf32, #tpu.memory_space<vmem>>, vector<8x128xf32>
    %c4_146 = arith.constant 4 : index
    %c0_147 = arith.constant 0 : index
    %c0_148 = arith.constant 0 : index
    %196 = vector.load %arg12[%c4_146, %c0_147, %c0_148] : memref<9x8x8xf32, #tpu.memory_space<vmem>>, vector<1x8x8xf32>
    %197 = vector.shape_cast %196 : vector<1x8x8xf32> to vector<8x8xf32>
    %cst_149 = arith.constant dense<0.000000e+00> : vector<8x128xf32>
    %198 = tpu.matmul %197, %195, %cst_149 {dimension_numbers = #tpu.dot_dimension_numbers<[1], [0], [0], [1], [0, 0, 1, 1], [], []>} : vector<8x8xf32>, vector<8x128xf32>, vector<8x128xf32> -> vector<8x128xf32>
    %199 = arith.addf %194, %198 : vector<8x128xf32>
    %c0_150 = arith.constant 0 : index
    %c11 = arith.constant 11 : index
    %200 = vector.load %arg26[%c0_150, %c11] : memref<8x148xf32, #tpu.memory_space<vmem>>, vector<8x128xf32>
    %c5_151 = arith.constant 5 : index
    %c0_152 = arith.constant 0 : index
    %c0_153 = arith.constant 0 : index
    %201 = vector.load %arg12[%c5_151, %c0_152, %c0_153] : memref<9x8x8xf32, #tpu.memory_space<vmem>>, vector<1x8x8xf32>
    %202 = vector.shape_cast %201 : vector<1x8x8xf32> to vector<8x8xf32>
    %cst_154 = arith.constant dense<0.000000e+00> : vector<8x128xf32>
    %203 = tpu.matmul %202, %200, %cst_154 {dimension_numbers = #tpu.dot_dimension_numbers<[1], [0], [0], [1], [0, 0, 1, 1], [], []>} : vector<8x8xf32>, vector<8x128xf32>, vector<8x128xf32> -> vector<8x128xf32>
    %204 = arith.addf %199, %203 : vector<8x128xf32>
    %c0_155 = arith.constant 0 : index
    %c17_156 = arith.constant 17 : index
    %205 = vector.load %arg26[%c0_155, %c17_156] : memref<8x148xf32, #tpu.memory_space<vmem>>, vector<8x128xf32>
    %c6_157 = arith.constant 6 : index
    %c0_158 = arith.constant 0 : index
    %c0_159 = arith.constant 0 : index
    %206 = vector.load %arg12[%c6_157, %c0_158, %c0_159] : memref<9x8x8xf32, #tpu.memory_space<vmem>>, vector<1x8x8xf32>
    %207 = vector.shape_cast %206 : vector<1x8x8xf32> to vector<8x8xf32>
    %cst_160 = arith.constant dense<0.000000e+00> : vector<8x128xf32>
    %208 = tpu.matmul %207, %205, %cst_160 {dimension_numbers = #tpu.dot_dimension_numbers<[1], [0], [0], [1], [0, 0, 1, 1], [], []>} : vector<8x8xf32>, vector<8x128xf32>, vector<8x128xf32> -> vector<8x128xf32>
    %209 = arith.addf %204, %208 : vector<8x128xf32>
    %c0_161 = arith.constant 0 : index
    %c18 = arith.constant 18 : index
    %210 = vector.load %arg26[%c0_161, %c18] : memref<8x148xf32, #tpu.memory_space<vmem>>, vector<8x128xf32>
    %c7_162 = arith.constant 7 : index
    %c0_163 = arith.constant 0 : index
    %c0_164 = arith.constant 0 : index
    %211 = vector.load %arg12[%c7_162, %c0_163, %c0_164] : memref<9x8x8xf32, #tpu.memory_space<vmem>>, vector<1x8x8xf32>
    %212 = vector.shape_cast %211 : vector<1x8x8xf32> to vector<8x8xf32>
    %cst_165 = arith.constant dense<0.000000e+00> : vector<8x128xf32>
    %213 = tpu.matmul %212, %210, %cst_165 {dimension_numbers = #tpu.dot_dimension_numbers<[1], [0], [0], [1], [0, 0, 1, 1], [], []>} : vector<8x8xf32>, vector<8x128xf32>, vector<8x128xf32> -> vector<8x128xf32>
    %214 = arith.addf %209, %213 : vector<8x128xf32>
    %c0_166 = arith.constant 0 : index
    %c19 = arith.constant 19 : index
    %215 = vector.load %arg26[%c0_166, %c19] : memref<8x148xf32, #tpu.memory_space<vmem>>, vector<8x128xf32>
    %c8_167 = arith.constant 8 : index
    %c0_168 = arith.constant 0 : index
    %c0_169 = arith.constant 0 : index
    %216 = vector.load %arg12[%c8_167, %c0_168, %c0_169] : memref<9x8x8xf32, #tpu.memory_space<vmem>>, vector<1x8x8xf32>
    %217 = vector.shape_cast %216 : vector<1x8x8xf32> to vector<8x8xf32>
    %cst_170 = arith.constant dense<0.000000e+00> : vector<8x128xf32>
    %218 = tpu.matmul %217, %215, %cst_170 {dimension_numbers = #tpu.dot_dimension_numbers<[1], [0], [0], [1], [0, 0, 1, 1], [], []>} : vector<8x8xf32>, vector<8x128xf32>, vector<8x128xf32> -> vector<8x128xf32>
    %219 = arith.addf %214, %218 : vector<8x128xf32>
    %c0_171 = arith.constant 0 : index
    %c0_172 = arith.constant 0 : index
    %220 = vector.load %arg15[%c0_171, %c0_172] : memref<1x128xf32, #tpu.memory_space<vmem>>, vector<1x128xf32>
    %221 = vector.broadcast %220 : vector<1x128xf32> to vector<8x128xf32>
    %222 = arith.mulf %219, %221 : vector<8x128xf32>
    %cst_173 = arith.constant dense<0.000000e+00> : vector<8xf32>
    %223 = vector.multi_reduction <add>, %222, %cst_173 [1] : vector<8x128xf32> to vector<8xf32>
    %224 = vector.shape_cast %223 : vector<8xf32> to vector<8x1xf32>
    %cst_174 = arith.constant 0.013888889 : f32
    %225 = vector.broadcast %cst_174 : f32 to vector<8x1xf32>
    %226 = arith.mulf %224, %225 : vector<8x1xf32>
    %227 = arith.mulf %222, %219 : vector<8x128xf32>
    %cst_175 = arith.constant dense<0.000000e+00> : vector<8xf32>
    %228 = vector.multi_reduction <add>, %227, %cst_175 [1] : vector<8x128xf32> to vector<8xf32>
    %229 = vector.shape_cast %228 : vector<8xf32> to vector<8x1xf32>
    %cst_176 = arith.constant 0.013888889 : f32
    %230 = vector.broadcast %cst_176 : f32 to vector<8x1xf32>
    %231 = arith.mulf %229, %230 : vector<8x1xf32>
    %232 = arith.mulf %226, %226 : vector<8x1xf32>
    %233 = arith.subf %231, %232 : vector<8x1xf32>
    %cst_177 = arith.constant 0.000000e+00 : f32
    %234 = vector.broadcast %cst_177 : f32 to vector<8x1xf32>
    %235 = arith.maximumf %233, %234 : vector<8x1xf32>
    %c0_178 = arith.constant 0 : index
    %c0_179 = arith.constant 0 : index
    %236 = vector.load %arg13[%c0_178, %c0_179] : memref<8x1xf32, #tpu.memory_space<vmem>>, vector<8x1xf32>
    %cst_180 = arith.constant 9.99999974E-6 : f32
    %237 = vector.broadcast %cst_180 : f32 to vector<8x1xf32>
    %238 = arith.addf %235, %237 : vector<8x1xf32>
    %239 = math.rsqrt %238 : vector<8x1xf32>
    %240 = arith.mulf %236, %239 : vector<8x1xf32>
    %241 = vector.broadcast %226 : vector<8x1xf32> to vector<8x128xf32>
    %242 = arith.subf %219, %241 : vector<8x128xf32>
    %243 = vector.broadcast %240 : vector<8x1xf32> to vector<8x128xf32>
    %244 = arith.mulf %242, %243 : vector<8x128xf32>
    %c0_181 = arith.constant 0 : index
    %c0_182 = arith.constant 0 : index
    %245 = vector.load %arg14[%c0_181, %c0_182] : memref<8x1xf32, #tpu.memory_space<vmem>>, vector<8x1xf32>
    %246 = vector.broadcast %245 : vector<8x1xf32> to vector<8x128xf32>
    %247 = arith.addf %244, %246 : vector<8x128xf32>
    %cst_183 = arith.constant 0.000000e+00 : f32
    %248 = vector.broadcast %cst_183 : f32 to vector<8x128xf32>
    %249 = arith.maximumf %247, %248 : vector<8x128xf32>
    %c0_184 = arith.constant 0 : index
    %c0_185 = arith.constant 0 : index
    %250 = vector.load %arg27[%c0_184, %c0_185] : memref<8x128xf32, #tpu.memory_space<vmem>>, vector<8x128xf32>
    tpu.vector_store %arg27[%c0_184, %c0_185], %249 {strides = array<i32>} : memref<8x128xf32, #tpu.memory_space<vmem>>, vector<8x128xf32>,
    %c0_186 = arith.constant 0 : index
    %c0_187 = arith.constant 0 : index
    %251 = vector.load %arg27[%c0_186, %c0_187] : memref<8x128xf32, #tpu.memory_space<vmem>>, vector<8x128xf32>
    %c0_188 = arith.constant 0 : index
    %c0_189 = arith.constant 0 : index
    %252 = vector.load %arg16[%c0_188, %c0_189] : memref<128x18xf32, #tpu.memory_space<vmem>>, vector<128x18xf32>
    %cst_190 = arith.constant dense<0.000000e+00> : vector<8x18xf32>
    %253 = tpu.matmul %251, %252, %cst_190 {dimension_numbers = #tpu.dot_dimension_numbers<[1], [0], [0], [1], [0, 0, 1, 1], [], []>} : vector<8x128xf32>, vector<128x18xf32>, vector<8x18xf32> -> vector<8x18xf32>
    %c0_191 = arith.constant 0 : index
    %c0_192 = arith.constant 0 : index
    %254 = vector.load %arg28[%c0_191, %c0_192] : memref<8x18xf32, #tpu.memory_space<vmem>>, vector<8x18xf32>
    tpu.vector_store %arg28[%c0_191, %c0_192], %253 {strides = array<i32>} : memref<8x18xf32, #tpu.memory_space<vmem>>, vector<8x18xf32>,
    %c0_193 = arith.constant 0 : index
    %c0_194 = arith.constant 0 : index
    %255 = vector.load %arg28[%c0_193, %c0_194] : memref<8x18xf32, #tpu.memory_space<vmem>>, vector<1x9xf32>
    %c0_195 = arith.constant 0 : index
    %c0_196 = arith.constant 0 : index
    %c0_197 = arith.constant 0 : index
    %256 = vector.load %arg17[%c0_195, %c0_196, %c0_197] : memref<8x9x32xf32, #tpu.memory_space<vmem>>, vector<1x9x32xf32>
    %257 = vector.shape_cast %256 : vector<1x9x32xf32> to vector<9x32xf32>
    %cst_198 = arith.constant dense<0.000000e+00> : vector<1x32xf32>
    %258 = tpu.matmul %255, %257, %cst_198 {dimension_numbers = #tpu.dot_dimension_numbers<[1], [0], [0], [1], [0, 0, 1, 1], [], []>} : vector<1x9xf32>, vector<9x32xf32>, vector<1x32xf32> -> vector<1x32xf32>
    %c1_199 = arith.constant 1 : index
    %c0_200 = arith.constant 0 : index
    %259 = vector.load %arg28[%c1_199, %c0_200] : memref<8x18xf32, #tpu.memory_space<vmem>>, vector<1x9xf32>
    %c1_201 = arith.constant 1 : index
    %c0_202 = arith.constant 0 : index
    %c0_203 = arith.constant 0 : index
    %260 = vector.load %arg17[%c1_201, %c0_202, %c0_203] : memref<8x9x32xf32, #tpu.memory_space<vmem>>, vector<1x9x32xf32>
    %261 = vector.shape_cast %260 : vector<1x9x32xf32> to vector<9x32xf32>
    %cst_204 = arith.constant dense<0.000000e+00> : vector<1x32xf32>
    %262 = tpu.matmul %259, %261, %cst_204 {dimension_numbers = #tpu.dot_dimension_numbers<[1], [0], [0], [1], [0, 0, 1, 1], [], []>} : vector<1x9xf32>, vector<9x32xf32>, vector<1x32xf32> -> vector<1x32xf32>
    %263 = arith.addf %258, %262 : vector<1x32xf32>
    %c2_205 = arith.constant 2 : index
    %c0_206 = arith.constant 0 : index
    %264 = vector.load %arg28[%c2_205, %c0_206] : memref<8x18xf32, #tpu.memory_space<vmem>>, vector<1x9xf32>
    %c2_207 = arith.constant 2 : index
    %c0_208 = arith.constant 0 : index
    %c0_209 = arith.constant 0 : index
    %265 = vector.load %arg17[%c2_207, %c0_208, %c0_209] : memref<8x9x32xf32, #tpu.memory_space<vmem>>, vector<1x9x32xf32>
    %266 = vector.shape_cast %265 : vector<1x9x32xf32> to vector<9x32xf32>
    %cst_210 = arith.constant dense<0.000000e+00> : vector<1x32xf32>
    %267 = tpu.matmul %264, %266, %cst_210 {dimension_numbers = #tpu.dot_dimension_numbers<[1], [0], [0], [1], [0, 0, 1, 1], [], []>} : vector<1x9xf32>, vector<9x32xf32>, vector<1x32xf32> -> vector<1x32xf32>
    %268 = arith.addf %263, %267 : vector<1x32xf32>
    %c3_211 = arith.constant 3 : index
    %c0_212 = arith.constant 0 : index
    %269 = vector.load %arg28[%c3_211, %c0_212] : memref<8x18xf32, #tpu.memory_space<vmem>>, vector<1x9xf32>
    %c3_213 = arith.constant 3 : index
    %c0_214 = arith.constant 0 : index
    %c0_215 = arith.constant 0 : index
    %270 = vector.load %arg17[%c3_213, %c0_214, %c0_215] : memref<8x9x32xf32, #tpu.memory_space<vmem>>, vector<1x9x32xf32>
    %271 = vector.shape_cast %270 : vector<1x9x32xf32> to vector<9x32xf32>
    %cst_216 = arith.constant dense<0.000000e+00> : vector<1x32xf32>
    %272 = tpu.matmul %269, %271, %cst_216 {dimension_numbers = #tpu.dot_dimension_numbers<[1], [0], [0], [1], [0, 0, 1, 1], [], []>} : vector<1x9xf32>, vector<9x32xf32>, vector<1x32xf32> -> vector<1x32xf32>
    %273 = arith.addf %268, %272 : vector<1x32xf32>
    %c4_217 = arith.constant 4 : index
    %c0_218 = arith.constant 0 : index
    %274 = vector.load %arg28[%c4_217, %c0_218] : memref<8x18xf32, #tpu.memory_space<vmem>>, vector<1x9xf32>
    %c4_219 = arith.constant 4 : index
    %c0_220 = arith.constant 0 : index
    %c0_221 = arith.constant 0 : index
    %275 = vector.load %arg17[%c4_219, %c0_220, %c0_221] : memref<8x9x32xf32, #tpu.memory_space<vmem>>, vector<1x9x32xf32>
    %276 = vector.shape_cast %275 : vector<1x9x32xf32> to vector<9x32xf32>
    %cst_222 = arith.constant dense<0.000000e+00> : vector<1x32xf32>
    %277 = tpu.matmul %274, %276, %cst_222 {dimension_numbers = #tpu.dot_dimension_numbers<[1], [0], [0], [1], [0, 0, 1, 1], [], []>} : vector<1x9xf32>, vector<9x32xf32>, vector<1x32xf32> -> vector<1x32xf32>
    %278 = arith.addf %273, %277 : vector<1x32xf32>
    %c5_223 = arith.constant 5 : index
    %c0_224 = arith.constant 0 : index
    %279 = vector.load %arg28[%c5_223, %c0_224] : memref<8x18xf32, #tpu.memory_space<vmem>>, vector<1x9xf32>
    %c5_225 = arith.constant 5 : index
    %c0_226 = arith.constant 0 : index
    %c0_227 = arith.constant 0 : index
    %280 = vector.load %arg17[%c5_225, %c0_226, %c0_227] : memref<8x9x32xf32, #tpu.memory_space<vmem>>, vector<1x9x32xf32>
    %281 = vector.shape_cast %280 : vector<1x9x32xf32> to vector<9x32xf32>
    %cst_228 = arith.constant dense<0.000000e+00> : vector<1x32xf32>
    %282 = tpu.matmul %279, %281, %cst_228 {dimension_numbers = #tpu.dot_dimension_numbers<[1], [0], [0], [1], [0, 0, 1, 1], [], []>} : vector<1x9xf32>, vector<9x32xf32>, vector<1x32xf32> -> vector<1x32xf32>
    %283 = arith.addf %278, %282 : vector<1x32xf32>
    %c6_229 = arith.constant 6 : index
    %c0_230 = arith.constant 0 : index
    %284 = vector.load %arg28[%c6_229, %c0_230] : memref<8x18xf32, #tpu.memory_space<vmem>>, vector<1x9xf32>
    %c6_231 = arith.constant 6 : index
    %c0_232 = arith.constant 0 : index
    %c0_233 = arith.constant 0 : index
    %285 = vector.load %arg17[%c6_231, %c0_232, %c0_233] : memref<8x9x32xf32, #tpu.memory_space<vmem>>, vector<1x9x32xf32>
    %286 = vector.shape_cast %285 : vector<1x9x32xf32> to vector<9x32xf32>
    %cst_234 = arith.constant dense<0.000000e+00> : vector<1x32xf32>
    %287 = tpu.matmul %284, %286, %cst_234 {dimension_numbers = #tpu.dot_dimension_numbers<[1], [0], [0], [1], [0, 0, 1, 1], [], []>} : vector<1x9xf32>, vector<9x32xf32>, vector<1x32xf32> -> vector<1x32xf32>
    %288 = arith.addf %283, %287 : vector<1x32xf32>
    %c7_235 = arith.constant 7 : index
    %c0_236 = arith.constant 0 : index
    %289 = vector.load %arg28[%c7_235, %c0_236] : memref<8x18xf32, #tpu.memory_space<vmem>>, vector<1x9xf32>
    %c7_237 = arith.constant 7 : index
    %c0_238 = arith.constant 0 : index
    %c0_239 = arith.constant 0 : index
    %290 = vector.load %arg17[%c7_237, %c0_238, %c0_239] : memref<8x9x32xf32, #tpu.memory_space<vmem>>, vector<1x9x32xf32>
    %291 = vector.shape_cast %290 : vector<1x9x32xf32> to vector<9x32xf32>
    %cst_240 = arith.constant dense<0.000000e+00> : vector<1x32xf32>
    %292 = tpu.matmul %289, %291, %cst_240 {dimension_numbers = #tpu.dot_dimension_numbers<[1], [0], [0], [1], [0, 0, 1, 1], [], []>} : vector<1x9xf32>, vector<9x32xf32>, vector<1x32xf32> -> vector<1x32xf32>
    %293 = arith.addf %288, %292 : vector<1x32xf32>
    %c0_241 = arith.constant 0 : index
    %c0_242 = arith.constant 0 : index
    %294 = vector.load %arg29[%c0_241, %c0_242] : memref<2x32xf32, #tpu.memory_space<vmem>>, vector<1x32xf32>
    tpu.vector_store %arg29[%c0_241, %c0_242], %293 {strides = array<i32>} : memref<2x32xf32, #tpu.memory_space<vmem>>, vector<1x32xf32>,
    %c0_243 = arith.constant 0 : index
    %c9_244 = arith.constant 9 : index
    %295 = vector.load %arg28[%c0_243, %c9_244] : memref<8x18xf32, #tpu.memory_space<vmem>>, vector<1x9xf32>
    %c0_245 = arith.constant 0 : index
    %c0_246 = arith.constant 0 : index
    %c0_247 = arith.constant 0 : index
    %296 = vector.load %arg17[%c0_245, %c0_246, %c0_247] : memref<8x9x32xf32, #tpu.memory_space<vmem>>, vector<1x9x32xf32>
    %297 = vector.shape_cast %296 : vector<1x9x32xf32> to vector<9x32xf32>
    %cst_248 = arith.constant dense<0.000000e+00> : vector<1x32xf32>
    %298 = tpu.matmul %295, %297, %cst_248 {dimension_numbers = #tpu.dot_dimension_numbers<[1], [0], [0], [1], [0, 0, 1, 1], [], []>} : vector<1x9xf32>, vector<9x32xf32>, vector<1x32xf32> -> vector<1x32xf32>
    %c1_249 = arith.constant 1 : index
    %c9_250 = arith.constant 9 : index
    %299 = vector.load %arg28[%c1_249, %c9_250] : memref<8x18xf32, #tpu.memory_space<vmem>>, vector<1x9xf32>
    %c1_251 = arith.constant 1 : index
    %c0_252 = arith.constant 0 : index
    %c0_253 = arith.constant 0 : index
    %300 = vector.load %arg17[%c1_251, %c0_252, %c0_253] : memref<8x9x32xf32, #tpu.memory_space<vmem>>, vector<1x9x32xf32>
    %301 = vector.shape_cast %300 : vector<1x9x32xf32> to vector<9x32xf32>
    %cst_254 = arith.constant dense<0.000000e+00> : vector<1x32xf32>
    %302 = tpu.matmul %299, %301, %cst_254 {dimension_numbers = #tpu.dot_dimension_numbers<[1], [0], [0], [1], [0, 0, 1, 1], [], []>} : vector<1x9xf32>, vector<9x32xf32>, vector<1x32xf32> -> vector<1x32xf32>
    %303 = arith.addf %298, %302 : vector<1x32xf32>
    %c2_255 = arith.constant 2 : index
    %c9_256 = arith.constant 9 : index
    %304 = vector.load %arg28[%c2_255, %c9_256] : memref<8x18xf32, #tpu.memory_space<vmem>>, vector<1x9xf32>
    %c2_257 = arith.constant 2 : index
    %c0_258 = arith.constant 0 : index
    %c0_259 = arith.constant 0 : index
    %305 = vector.load %arg17[%c2_257, %c0_258, %c0_259] : memref<8x9x32xf32, #tpu.memory_space<vmem>>, vector<1x9x32xf32>
    %306 = vector.shape_cast %305 : vector<1x9x32xf32> to vector<9x32xf32>
    %cst_260 = arith.constant dense<0.000000e+00> : vector<1x32xf32>
    %307 = tpu.matmul %304, %306, %cst_260 {dimension_numbers = #tpu.dot_dimension_numbers<[1], [0], [0], [1], [0, 0, 1, 1], [], []>} : vector<1x9xf32>, vector<9x32xf32>, vector<1x32xf32> -> vector<1x32xf32>
    %308 = arith.addf %303, %307 : vector<1x32xf32>
    %c3_261 = arith.constant 3 : index
    %c9_262 = arith.constant 9 : index
    %309 = vector.load %arg28[%c3_261, %c9_262] : memref<8x18xf32, #tpu.memory_space<vmem>>, vector<1x9xf32>
    %c3_263 = arith.constant 3 : index
    %c0_264 = arith.constant 0 : index
    %c0_265 = arith.constant 0 : index
    %310 = vector.load %arg17[%c3_263, %c0_264, %c0_265] : memref<8x9x32xf32, #tpu.memory_space<vmem>>, vector<1x9x32xf32>
    %311 = vector.shape_cast %310 : vector<1x9x32xf32> to vector<9x32xf32>
    %cst_266 = arith.constant dense<0.000000e+00> : vector<1x32xf32>
    %312 = tpu.matmul %309, %311, %cst_266 {dimension_numbers = #tpu.dot_dimension_numbers<[1], [0], [0], [1], [0, 0, 1, 1], [], []>} : vector<1x9xf32>, vector<9x32xf32>, vector<1x32xf32> -> vector<1x32xf32>
    %313 = arith.addf %308, %312 : vector<1x32xf32>
    %c4_267 = arith.constant 4 : index
    %c9_268 = arith.constant 9 : index
    %314 = vector.load %arg28[%c4_267, %c9_268] : memref<8x18xf32, #tpu.memory_space<vmem>>, vector<1x9xf32>
    %c4_269 = arith.constant 4 : index
    %c0_270 = arith.constant 0 : index
    %c0_271 = arith.constant 0 : index
    %315 = vector.load %arg17[%c4_269, %c0_270, %c0_271] : memref<8x9x32xf32, #tpu.memory_space<vmem>>, vector<1x9x32xf32>
    %316 = vector.shape_cast %315 : vector<1x9x32xf32> to vector<9x32xf32>
    %cst_272 = arith.constant dense<0.000000e+00> : vector<1x32xf32>
    %317 = tpu.matmul %314, %316, %cst_272 {dimension_numbers = #tpu.dot_dimension_numbers<[1], [0], [0], [1], [0, 0, 1, 1], [], []>} : vector<1x9xf32>, vector<9x32xf32>, vector<1x32xf32> -> vector<1x32xf32>
    %318 = arith.addf %313, %317 : vector<1x32xf32>
    %c5_273 = arith.constant 5 : index
    %c9_274 = arith.constant 9 : index
    %319 = vector.load %arg28[%c5_273, %c9_274] : memref<8x18xf32, #tpu.memory_space<vmem>>, vector<1x9xf32>
    %c5_275 = arith.constant 5 : index
    %c0_276 = arith.constant 0 : index
    %c0_277 = arith.constant 0 : index
    %320 = vector.load %arg17[%c5_275, %c0_276, %c0_277] : memref<8x9x32xf32, #tpu.memory_space<vmem>>, vector<1x9x32xf32>
    %321 = vector.shape_cast %320 : vector<1x9x32xf32> to vector<9x32xf32>
    %cst_278 = arith.constant dense<0.000000e+00> : vector<1x32xf32>
    %322 = tpu.matmul %319, %321, %cst_278 {dimension_numbers = #tpu.dot_dimension_numbers<[1], [0], [0], [1], [0, 0, 1, 1], [], []>} : vector<1x9xf32>, vector<9x32xf32>, vector<1x32xf32> -> vector<1x32xf32>
    %323 = arith.addf %318, %322 : vector<1x32xf32>
    %c6_279 = arith.constant 6 : index
    %c9_280 = arith.constant 9 : index
    %324 = vector.load %arg28[%c6_279, %c9_280] : memref<8x18xf32, #tpu.memory_space<vmem>>, vector<1x9xf32>
    %c6_281 = arith.constant 6 : index
    %c0_282 = arith.constant 0 : index
    %c0_283 = arith.constant 0 : index
    %325 = vector.load %arg17[%c6_281, %c0_282, %c0_283] : memref<8x9x32xf32, #tpu.memory_space<vmem>>, vector<1x9x32xf32>
    %326 = vector.shape_cast %325 : vector<1x9x32xf32> to vector<9x32xf32>
    %cst_284 = arith.constant dense<0.000000e+00> : vector<1x32xf32>
    %327 = tpu.matmul %324, %326, %cst_284 {dimension_numbers = #tpu.dot_dimension_numbers<[1], [0], [0], [1], [0, 0, 1, 1], [], []>} : vector<1x9xf32>, vector<9x32xf32>, vector<1x32xf32> -> vector<1x32xf32>
    %328 = arith.addf %323, %327 : vector<1x32xf32>
    %c7_285 = arith.constant 7 : index
    %c9_286 = arith.constant 9 : index
    %329 = vector.load %arg28[%c7_285, %c9_286] : memref<8x18xf32, #tpu.memory_space<vmem>>, vector<1x9xf32>
    %c7_287 = arith.constant 7 : index
    %c0_288 = arith.constant 0 : index
    %c0_289 = arith.constant 0 : index
    %330 = vector.load %arg17[%c7_287, %c0_288, %c0_289] : memref<8x9x32xf32, #tpu.memory_space<vmem>>, vector<1x9x32xf32>
    %331 = vector.shape_cast %330 : vector<1x9x32xf32> to vector<9x32xf32>
    %cst_290 = arith.constant dense<0.000000e+00> : vector<1x32xf32>
    %332 = tpu.matmul %329, %331, %cst_290 {dimension_numbers = #tpu.dot_dimension_numbers<[1], [0], [0], [1], [0, 0, 1, 1], [], []>} : vector<1x9xf32>, vector<9x32xf32>, vector<1x32xf32> -> vector<1x32xf32>
    %333 = arith.addf %328, %332 : vector<1x32xf32>
    %c1_291 = arith.constant 1 : index
    %c0_292 = arith.constant 0 : index
    %334 = vector.load %arg29[%c1_291, %c0_292] : memref<2x32xf32, #tpu.memory_space<vmem>>, vector<1x32xf32>
    tpu.vector_store %arg29[%c1_291, %c0_292], %333 {strides = array<i32>} : memref<2x32xf32, #tpu.memory_space<vmem>>, vector<1x32xf32>,
    %c0_293 = arith.constant 0 : index
    %c0_294 = arith.constant 0 : index
    %335 = vector.load %arg29[%c0_293, %c0_294] : memref<2x32xf32, #tpu.memory_space<vmem>>, vector<2x32xf32>
    %cst_295 = arith.constant dense<0.000000e+00> : vector<32xf32>
    %336 = vector.multi_reduction <add>, %335, %cst_295 [0] : vector<2x32xf32> to vector<32xf32>
    %337 = vector.shape_cast %336 : vector<32xf32> to vector<1x32xf32>
    %cst_296 = arith.constant 2.000000e+00 : f32
    %338 = vector.broadcast %cst_296 : f32 to vector<1x32xf32>
    %339 = arith.divf %337, %338 : vector<1x32xf32>
    %340 = arith.mulf %335, %335 : vector<2x32xf32>
    %cst_297 = arith.constant dense<0.000000e+00> : vector<32xf32>
    %341 = vector.multi_reduction <add>, %340, %cst_297 [0] : vector<2x32xf32> to vector<32xf32>
    %342 = vector.shape_cast %341 : vector<32xf32> to vector<1x32xf32>
    %cst_298 = arith.constant 2.000000e+00 : f32
    %343 = vector.broadcast %cst_298 : f32 to vector<1x32xf32>
    %344 = arith.divf %342, %343 : vector<1x32xf32>
    %345 = arith.mulf %339, %339 : vector<1x32xf32>
    %346 = arith.subf %344, %345 : vector<1x32xf32>
    %cst_299 = arith.constant 0.000000e+00 : f32
    %347 = vector.broadcast %cst_299 : f32 to vector<1x32xf32>
    %348 = arith.maximumf %346, %347 : vector<1x32xf32>
    %349 = vector.broadcast %339 : vector<1x32xf32> to vector<2x32xf32>
    %350 = arith.subf %335, %349 : vector<2x32xf32>
    %c0_300 = arith.constant 0 : index
    %c0_301 = arith.constant 0 : index
    %351 = vector.load %arg18[%c0_300, %c0_301] : memref<1x32xf32, #tpu.memory_space<vmem>>, vector<1x32xf32>
    %cst_302 = arith.constant 9.99999974E-6 : f32
    %352 = vector.broadcast %cst_302 : f32 to vector<1x32xf32>
    %353 = arith.addf %348, %352 : vector<1x32xf32>
    %354 = math.rsqrt %353 : vector<1x32xf32>
    %355 = arith.mulf %351, %354 : vector<1x32xf32>
    %356 = vector.broadcast %355 : vector<1x32xf32> to vector<2x32xf32>
    %357 = arith.mulf %350, %356 : vector<2x32xf32>
    %c0_303 = arith.constant 0 : index
    %c0_304 = arith.constant 0 : index
    %358 = vector.load %arg19[%c0_303, %c0_304] : memref<1x32xf32, #tpu.memory_space<vmem>>, vector<1x32xf32>
    %359 = vector.broadcast %358 : vector<1x32xf32> to vector<2x32xf32>
    %360 = arith.addf %357, %359 : vector<2x32xf32>
    %cst_305 = arith.constant 0.000000e+00 : f32
    %361 = vector.broadcast %cst_305 : f32 to vector<2x32xf32>
    %362 = arith.maximumf %360, %361 : vector<2x32xf32>
    %c0_306 = arith.constant 0 : index
    %c0_307 = arith.constant 0 : index
    %363 = vector.load %arg20[%c0_306, %c0_307] : memref<32x10xf32, #tpu.memory_space<vmem>>, vector<32x10xf32>
    %cst_308 = arith.constant dense<0.000000e+00> : vector<2x10xf32>
    %364 = tpu.matmul %362, %363, %cst_308 {dimension_numbers = #tpu.dot_dimension_numbers<[1], [0], [0], [1], [0, 0, 1, 1], [], []>} : vector<2x32xf32>, vector<32x10xf32>, vector<2x10xf32> -> vector<2x10xf32>
    %c0_309 = arith.constant 0 : index
    %c0_310 = arith.constant 0 : index
    %365 = vector.load %arg21[%c0_309, %c0_310] : memref<1x10xf32, #tpu.memory_space<vmem>>, vector<1x10xf32>
    %366 = vector.broadcast %365 : vector<1x10xf32> to vector<2x10xf32>
    %367 = arith.addf %364, %366 : vector<2x10xf32>
    %c0_311 = arith.constant 0 : index
    %c0_312 = arith.constant 0 : index
    %368 = vector.load %arg22[%c0_311, %c0_312] : memref<2x10xf32, #tpu.memory_space<vmem>>, vector<2x10xf32>
    tpu.vector_store %arg22[%c0_311, %c0_312], %367 {strides = array<i32>} : memref<2x10xf32, #tpu.memory_space<vmem>>, vector<2x10xf32>,
    return
  }
  func.func @transform_0(%arg0: i32) -> (i32, i32) {
    %c0_i32 = arith.constant 0 : i32
    %c0_i32_0 = arith.constant 0 : i32
    %c0_i32_1 = arith.constant 0 : i32
    return %c0_i32, %c0_i32_0 : i32, i32
  }
  func.func @transform_1(%arg0: i32) -> (i32, i32, i32) {
    %c0_i32 = arith.constant 0 : i32
    %c0_i32_0 = arith.constant 0 : i32
    %c0_i32_1 = arith.constant 0 : i32
    %c0_i32_2 = arith.constant 0 : i32
    return %c0_i32, %c0_i32_0, %c0_i32_1 : i32, i32, i32
  }
  func.func @transform_2(%arg0: i32) -> (i32, i32) {
    %c0_i32 = arith.constant 0 : i32
    %c0_i32_0 = arith.constant 0 : i32
    %c0_i32_1 = arith.constant 0 : i32
    return %c0_i32, %c0_i32_0 : i32, i32
  }
  func.func @transform_3(%arg0: i32) -> (i32, i32) {
    %c0_i32 = arith.constant 0 : i32
    %c0_i32_0 = arith.constant 0 : i32
    %c0_i32_1 = arith.constant 0 : i32
    return %c0_i32, %c0_i32_0 : i32, i32
  }
  func.func @transform_4(%arg0: i32) -> (i32, i32) {
    %c0_i32 = arith.constant 0 : i32
    %c0_i32_0 = arith.constant 0 : i32
    %c0_i32_1 = arith.constant 0 : i32
    return %c0_i32, %c0_i32_0 : i32, i32
  }
  func.func @transform_5(%arg0: i32) -> (i32, i32) {
    %c0_i32 = arith.constant 0 : i32
    %c0_i32_0 = arith.constant 0 : i32
    %c0_i32_1 = arith.constant 0 : i32
    return %c0_i32, %c0_i32_0 : i32, i32
  }
  func.func @transform_6(%arg0: i32) -> (i32, i32, i32) {
    %c0_i32 = arith.constant 0 : i32
    %c0_i32_0 = arith.constant 0 : i32
    %c0_i32_1 = arith.constant 0 : i32
    %c0_i32_2 = arith.constant 0 : i32
    return %c0_i32, %c0_i32_0, %c0_i32_1 : i32, i32, i32
  }
  func.func @transform_7(%arg0: i32) -> (i32, i32) {
    %c0_i32 = arith.constant 0 : i32
    %c0_i32_0 = arith.constant 0 : i32
    %c0_i32_1 = arith.constant 0 : i32
    return %c0_i32, %c0_i32_0 : i32, i32
  }
  func.func @transform_8(%arg0: i32) -> (i32, i32) {
    %c0_i32 = arith.constant 0 : i32
    %c0_i32_0 = arith.constant 0 : i32
    %c0_i32_1 = arith.constant 0 : i32
    return %c0_i32, %c0_i32_0 : i32, i32
  }
  func.func @transform_9(%arg0: i32) -> (i32, i32) {
    %c0_i32 = arith.constant 0 : i32
    %c0_i32_0 = arith.constant 0 : i32
    %c0_i32_1 = arith.constant 0 : i32
    return %c0_i32, %c0_i32_0 : i32, i32
  }
  func.func @transform_10(%arg0: i32) -> (i32, i32) {
    %c0_i32 = arith.constant 0 : i32
    %c0_i32_0 = arith.constant 0 : i32
    %c0_i32_1 = arith.constant 0 : i32
    return %c0_i32, %c0_i32_0 : i32, i32
  }
  func.func @transform_11(%arg0: i32) -> (i32, i32, i32) {
    %c0_i32 = arith.constant 0 : i32
    %c0_i32_0 = arith.constant 0 : i32
    %c0_i32_1 = arith.constant 0 : i32
    %c0_i32_2 = arith.constant 0 : i32
    return %c0_i32, %c0_i32_0, %c0_i32_1 : i32, i32, i32
  }
  func.func @transform_12(%arg0: i32) -> (i32, i32) {
    %c0_i32 = arith.constant 0 : i32
    %c0_i32_0 = arith.constant 0 : i32
    %c0_i32_1 = arith.constant 0 : i32
    return %c0_i32, %c0_i32_0 : i32, i32
  }
  func.func @transform_13(%arg0: i32) -> (i32, i32) {
    %c0_i32 = arith.constant 0 : i32
    %c0_i32_0 = arith.constant 0 : i32
    %c0_i32_1 = arith.constant 0 : i32
    return %c0_i32, %c0_i32_0 : i32, i32
  }
  func.func @transform_14(%arg0: i32) -> (i32, i32) {
    %c0_i32 = arith.constant 0 : i32
    %c0_i32_0 = arith.constant 0 : i32
    %c0_i32_1 = arith.constant 0 : i32
    return %c0_i32, %c0_i32_0 : i32, i32
  }
  func.func @transform_15(%arg0: i32) -> (i32, i32) {
    %c0_i32 = arith.constant 0 : i32
    %c0_i32_0 = arith.constant 0 : i32
    %c0_i32_1 = arith.constant 0 : i32
    return %c0_i32, %c0_i32_0 : i32, i32
  }
  func.func @transform_16(%arg0: i32) -> (i32, i32, i32) {
    %c0_i32 = arith.constant 0 : i32
    %c0_i32_0 = arith.constant 0 : i32
    %c0_i32_1 = arith.constant 0 : i32
    %c0_i32_2 = arith.constant 0 : i32
    return %c0_i32, %c0_i32_0, %c0_i32_1 : i32, i32, i32
  }
  func.func @transform_17(%arg0: i32) -> (i32, i32) {
    %c0_i32 = arith.constant 0 : i32
    %c0_i32_0 = arith.constant 0 : i32
    %c0_i32_1 = arith.constant 0 : i32
    return %c0_i32, %c0_i32_0 : i32, i32
  }
  func.func @transform_18(%arg0: i32) -> (i32, i32) {
    %c0_i32 = arith.constant 0 : i32
    %c0_i32_0 = arith.constant 0 : i32
    %c0_i32_1 = arith.constant 0 : i32
    return %c0_i32, %c0_i32_0 : i32, i32
  }
  func.func @transform_19(%arg0: i32) -> (i32, i32) {
    %c0_i32 = arith.constant 0 : i32
    %c0_i32_0 = arith.constant 0 : i32
    %c0_i32_1 = arith.constant 0 : i32
    return %c0_i32, %c0_i32_0 : i32, i32
  }
  func.func @transform_20(%arg0: i32) -> (i32, i32) {
    %c0_i32 = arith.constant 0 : i32
    %c0_i32_0 = arith.constant 0 : i32
    %c0_i32_1 = arith.constant 0 : i32
    return %c0_i32, %c0_i32_0 : i32, i32
  }
  func.func @transform_21(%arg0: i32) -> (i32, i32) {
    %c0_i32 = arith.constant 0 : i32
    %c0_i32_0 = arith.constant 0 : i32
    %c0_i32_1 = arith.constant 0 : i32
    return %c0_i32, %c0_i32_0 : i32, i32
  }
}

</mosaic_0001>

<llo_original>
// kernel: simple_cnn_forward.1
$region0: #{simple_cnn_forward.1}
  #allocation0 [shape = 'u32[]', space=smem, size = 0x4, offset = 0x4, fixed_abs, tag = 'smem constant byte address 0x4 - core index']
  #allocation1 [shape = 'u32[144,128]{1,0:T(1,128)}', space=vmem, size = 0x12000, scoped, tag = 'internal scratch']
  #allocation2 [shape = 'f32[4,1352]{1,0:T(4,128)}', space=vmem, size = 0x5800, scoped, tag = 'scratch operand']
  #allocation3 [shape = 'f32[4,424]{1,0:T(4,128)}', space=vmem, size = 0x2000, scoped, tag = 'scratch operand']
  #allocation4 [shape = 'f32[8,392]{1,0:T(8,128)}', space=vmem, size = 0x4000, scoped, tag = 'scratch operand']
  #allocation5 [shape = 'f32[8,148]{1,0:T(8,128)}', space=vmem, size = 0x2000, scoped, tag = 'scratch operand']
  #allocation6 [shape = 'f32[8,128]{1,0:T(8,128)}', space=vmem, size = 0x1000, scoped, tag = 'scratch operand']
  #allocation7 [shape = 'f32[8,18]{1,0:T(8,128)}', space=vmem, size = 0x1000, scoped, tag = 'scratch operand']
  #allocation8 [shape = 'f32[2,32]{1,0:T(2,128)}', space=vmem, size = 0x400, scoped, tag = 'scratch operand']
  %s0 = inlined_call_operand.vmem [shape: f32[1,1408], index: 0, kind: input, shape index: {}]
  %s1 = inlined_call_operand.vmem [shape: f32[9,4,1], index: 1, kind: input, shape index: {}]
  %s2 = inlined_call_operand.vmem [shape: f32[4,1], index: 2, kind: input, shape index: {}]
  %s3 = inlined_call_operand.vmem [shape: f32[4,1], index: 3, kind: input, shape index: {}]
  %s4 = inlined_call_operand.vmem [shape: f32[1,1352], index: 4, kind: input, shape index: {}]
  %s5 = inlined_call_operand.vmem [shape: f32[1352,424], index: 5, kind: input, shape index: {}]
  %s6 = inlined_call_operand.vmem [shape: f32[9,8,4], index: 6, kind: input, shape index: {}]
  %s7 = inlined_call_operand.vmem [shape: f32[8,1], index: 7, kind: input, shape index: {}]
  %s8 = inlined_call_operand.vmem [shape: f32[8,1], index: 8, kind: input, shape index: {}]
  %s9 = inlined_call_operand.vmem [shape: f32[1,392], index: 9, kind: input, shape index: {}]
  %s10 = inlined_call_operand.vmem [shape: f32[392,148], index: 10, kind: input, shape index: {}]
  %s11 = inlined_call_operand.vmem [shape: f32[9,8,8], index: 11, kind: input, shape index: {}]
  %s12 = inlined_call_operand.vmem [shape: f32[8,1], index: 12, kind: input, shape index: {}]
  %s13 = inlined_call_operand.vmem [shape: f32[8,1], index: 13, kind: input, shape index: {}]
  %s14 = inlined_call_operand.vmem [shape: f32[1,128], index: 14, kind: input, shape index: {}]
  %s15 = inlined_call_operand.vmem [shape: f32[128,18], index: 15, kind: input, shape index: {}]
  %s16 = inlined_call_operand.vmem [shape: f32[8,9,32], index: 16, kind: input, shape index: {}]
  %s17 = inlined_call_operand.vmem [shape: f32[1,32], index: 17, kind: input, shape index: {}]
  %s18 = inlined_call_operand.vmem [shape: f32[1,32], index: 18, kind: input, shape index: {}]
  %s19 = inlined_call_operand.vmem [shape: f32[32,10], index: 19, kind: input, shape index: {}]
  %s20 = inlined_call_operand.vmem [shape: f32[1,10], index: 20, kind: input, shape index: {}]
  %s21 = inlined_call_operand.hbm [shape: f32[2,10], index: 21, kind: output, shape index: {}]
  %s22 = sld [smem:[#allocation0]]
  $region94: #{simple_cnn_forward.1} parent=0
    _
  %s24 = ssub.s32 1, %s22
  %s25 = scalar_select 0, %s24, %s22
  $region1: #{simple_cnn_forward.1} parent=0
    #allocation9 [shape = 'u8[1024]{0}', space=vmem, size = 0x400, scoped, tag = 'output window, operand 0, single buffered']
    #allocation10 [shape = 's32[1]{0}', space=sflag, size = 0x4, scoped, tag = 'scoped memory for simple_cnn_forward.1']
    %26 = vsyncpa [#allocation10], 0
    // Predicated region
    $region2: #{simple_cnn_forward.1} parent=1 // pred_check
      _
    $region3: #{simple_cnn_forward.1} parent=1 // pred_check_branch
      %28 = sbr.rel (0) target = $region5
    $region4: #{simple_cnn_forward.1} parent=1 // pred_region
      _
    $region5: #{simple_cnn_forward.1} parent=1 // pred_fallthru
      _
    // Predicated region
    $region6: #{simple_cnn_forward.1} parent=1 // pred_check
      _
    $region7: #{simple_cnn_forward.1} parent=1 // pred_check_branch
      %30 = sbr.rel (0) target = $region9
    $region8: #{simple_cnn_forward.1} parent=1 // pred_region
      _
    $region9: #{simple_cnn_forward.1} parent=1 // pred_fallthru
      _
    // Predicated region
    $region10: #{simple_cnn_forward.1} parent=1 // pred_check
      _
    $region11: #{simple_cnn_forward.1} parent=1 // pred_check_branch
      %32 = sbr.rel (0) target = $region13
    $region12: #{simple_cnn_forward.1} parent=1 // pred_region
      _
    $region13: #{simple_cnn_forward.1} parent=1 // pred_fallthru
      _
    // Predicated region
    $region14: #{simple_cnn_forward.1} parent=1 // pred_check
      _
    $region15: #{simple_cnn_forward.1} parent=1 // pred_check_branch
      %34 = sbr.rel (0) target = $region17
    $region16: #{simple_cnn_forward.1} parent=1 // pred_region
      _
    $region17: #{simple_cnn_forward.1} parent=1 // pred_fallthru
      _
    // Predicated region
    $region18: #{simple_cnn_forward.1} parent=1 // pred_check
      _
    $region19: #{simple_cnn_forward.1} parent=1 // pred_check_branch
      %36 = sbr.rel (0) target = $region21
    $region20: #{simple_cnn_forward.1} parent=1 // pred_region
      _
    $region21: #{simple_cnn_forward.1} parent=1 // pred_fallthru
      _
    // Predicated region
    $region22: #{simple_cnn_forward.1} parent=1 // pred_check
      _
    $region23: #{simple_cnn_forward.1} parent=1 // pred_check_branch
      %38 = sbr.rel (0) target = $region25
    $region24: #{simple_cnn_forward.1} parent=1 // pred_region
      _
    $region25: #{simple_cnn_forward.1} parent=1 // pred_fallthru
      _
    // Predicated region
    $region26: #{simple_cnn_forward.1} parent=1 // pred_check
      _
    $region27: #{simple_cnn_forward.1} parent=1 // pred_check_branch
      %40 = sbr.rel (0) target = $region29
    $region28: #{simple_cnn_forward.1} parent=1 // pred_region
      _
    $region29: #{simple_cnn_forward.1} parent=1 // pred_fallthru
      _
    // Predicated region
    $region30: #{simple_cnn_forward.1} parent=1 // pred_check
      _
    $region31: #{simple_cnn_forward.1} parent=1 // pred_check_branch
      %42 = sbr.rel (0) target = $region33
    $region32: #{simple_cnn_forward.1} parent=1 // pred_region
      _
    $region33: #{simple_cnn_forward.1} parent=1 // pred_fallthru
      _
    // Predicated region
    $region34: #{simple_cnn_forward.1} parent=1 // pred_check
      _
    $region35: #{simple_cnn_forward.1} parent=1 // pred_check_branch
      %44 = sbr.rel (0) target = $region37
    $region36: #{simple_cnn_forward.1} parent=1 // pred_region
      _
    $region37: #{simple_cnn_forward.1} parent=1 // pred_fallthru
      _
    // Predicated region
    $region38: #{simple_cnn_forward.1} parent=1 // pred_check
      _
    $region39: #{simple_cnn_forward.1} parent=1 // pred_check_branch
      %46 = sbr.rel (0) target = $region41
    $region40: #{simple_cnn_forward.1} parent=1 // pred_region
      _
    $region41: #{simple_cnn_forward.1} parent=1 // pred_fallthru
      _
    // Predicated region
    $region42: #{simple_cnn_forward.1} parent=1 // pred_check
      _
    $region43: #{simple_cnn_forward.1} parent=1 // pred_check_branch
      %48 = sbr.rel (0) target = $region45
    $region44: #{simple_cnn_forward.1} parent=1 // pred_region
      _
    $region45: #{simple_cnn_forward.1} parent=1 // pred_fallthru
      _
    // Predicated region
    $region46: #{simple_cnn_forward.1} parent=1 // pred_check
      _
    $region47: #{simple_cnn_forward.1} parent=1 // pred_check_branch
      %50 = sbr.rel (0) target = $region49
    $region48: #{simple_cnn_forward.1} parent=1 // pred_region
      _
    $region49: #{simple_cnn_forward.1} parent=1 // pred_fallthru
      _
    // Predicated region
    $region50: #{simple_cnn_forward.1} parent=1 // pred_check
      _
    $region51: #{simple_cnn_forward.1} parent=1 // pred_check_branch
      %52 = sbr.rel (0) target = $region53
    $region52: #{simple_cnn_forward.1} parent=1 // pred_region
      _
    $region53: #{simple_cnn_forward.1} parent=1 // pred_fallthru
      _
    // Predicated region
    $region54: #{simple_cnn_forward.1} parent=1 // pred_check
      _
    $region55: #{simple_cnn_forward.1} parent=1 // pred_check_branch
      %54 = sbr.rel (0) target = $region57
    $region56: #{simple_cnn_forward.1} parent=1 // pred_region
      _
    $region57: #{simple_cnn_forward.1} parent=1 // pred_fallthru
      _
    // Predicated region
    $region58: #{simple_cnn_forward.1} parent=1 // pred_check
      _
    $region59: #{simple_cnn_forward.1} parent=1 // pred_check_branch
      %56 = sbr.rel (0) target = $region61
    $region60: #{simple_cnn_forward.1} parent=1 // pred_region
      _
    $region61: #{simple_cnn_forward.1} parent=1 // pred_fallthru
      _
    // Predicated region
    $region62: #{simple_cnn_forward.1} parent=1 // pred_check
      _
    $region63: #{simple_cnn_forward.1} parent=1 // pred_check_branch
      %58 = sbr.rel (0) target = $region65
    $region64: #{simple_cnn_forward.1} parent=1 // pred_region
      _
    $region65: #{simple_cnn_forward.1} parent=1 // pred_fallthru
      _
    // Predicated region
    $region66: #{simple_cnn_forward.1} parent=1 // pred_check
      _
    $region67: #{simple_cnn_forward.1} parent=1 // pred_check_branch
      %60 = sbr.rel (0) target = $region69
    $region68: #{simple_cnn_forward.1} parent=1 // pred_region
      _
    $region69: #{simple_cnn_forward.1} parent=1 // pred_fallthru
      _
    // Predicated region
    $region70: #{simple_cnn_forward.1} parent=1 // pred_check
      _
    $region71: #{simple_cnn_forward.1} parent=1 // pred_check_branch
      %62 = sbr.rel (0) target = $region73
    $region72: #{simple_cnn_forward.1} parent=1 // pred_region
      _
    $region73: #{simple_cnn_forward.1} parent=1 // pred_fallthru
      _
    // Predicated region
    $region74: #{simple_cnn_forward.1} parent=1 // pred_check
      _
    $region75: #{simple_cnn_forward.1} parent=1 // pred_check_branch
      %64 = sbr.rel (0) target = $region77
    $region76: #{simple_cnn_forward.1} parent=1 // pred_region
      _
    $region77: #{simple_cnn_forward.1} parent=1 // pred_fallthru
      _
    // Predicated region
    $region78: #{simple_cnn_forward.1} parent=1 // pred_check
      _
    $region79: #{simple_cnn_forward.1} parent=1 // pred_check_branch
      %66 = sbr.rel (0) target = $region81
    $region80: #{simple_cnn_forward.1} parent=1 // pred_region
      _
    $region81: #{simple_cnn_forward.1} parent=1 // pred_fallthru
      _
    // Predicated region
    $region82: #{simple_cnn_forward.1} parent=1 // pred_check
      _
    $region83: #{simple_cnn_forward.1} parent=1 // pred_check_branch
      %68 = sbr.rel (0) target = $region85
    $region84: #{simple_cnn_forward.1} parent=1 // pred_region
      _
    $region85: #{simple_cnn_forward.1} parent=1 // pred_fallthru
      _
    %v69 = vld [vmem:[%s0] sm:$0xff]
    %v70 = vld [vmem:[%s0 + $0x8] sm:$0x7]
    %v71 = vld [vmem:[%s1] sm:$0xf]
    %73 = vset.pattern.permute.xlu0 0
    %74 = vperm.xlu0 %73, %v71
    %v75 = vpop.permute.xlu0 %74
    %v79 = vlaneseq
    %v80 = vshrl.u32 %v79, 7
    %v81 = vsub.s32 0, %v80
    %v82 = vrot.slane %v69, %v81
    %v83 = vlaneseq
    %v84 = vshrl.u32 %v83, 7
    %v85 = vsub.s32 1, %v84
    %v86 = vrot.slane %v69, %v85
    %v87 = vlaneseq
    %v88 = vshrl.u32 %v87, 7
    %v89 = vsub.s32 2, %v88
    %v90 = vrot.slane %v69, %v89
    %v91 = vlaneseq
    %v92 = vshrl.u32 %v91, 7
    %v93 = vsub.s32 3, %v92
    %v94 = vrot.slane %v69, %v93
    %v95 = vlaneseq
    %v96 = vshrl.u32 %v95, 7
    %v97 = vsub.s32 4, %v96
    %v98 = vrot.slane %v69, %v97
    %v99 = vlaneseq
    %v100 = vshrl.u32 %v99, 7
    %v101 = vsub.s32 5, %v100
    %v102 = vrot.slane %v69, %v101
    %v103 = vlaneseq
    %v104 = vshrl.u32 %v103, 7
    %v105 = vsub.s32 6, %v104
    %v106 = vrot.slane %v69, %v105
    %v107 = vlaneseq
    %v108 = vshrl.u32 %v107, 7
    %v109 = vsub.s32 7, %v108
    %v110 = vrot.slane %v69, %v109
    %v111 = vlaneseq
    %v112 = vshrl.u32 %v111, 7
    %v113 = vsub.s32 0, %v112
    %v114 = vrot.slane %v70, %v113
    %v115 = vlaneseq
    %v116 = vshrl.u32 %v115, 7
    %v117 = vsub.s32 1, %v116
    %v118 = vrot.slane %v70, %v117
    %v119 = vlaneseq
    %v120 = vshrl.u32 %v119, 7
    %v121 = vsub.s32 2, %v120
    %v122 = vrot.slane %v70, %v121
    %v134 = vmul.f32 %v75, %v82
    %v135 = vmul.f32 %v75, %v86
    %v136 = vmul.f32 %v75, %v90
    %v137 = vmul.f32 %v75, %v94
    %v138 = vmul.f32 %v75, %v98
    %v139 = vmul.f32 %v75, %v102
    %v140 = vmul.f32 %v75, %v106
    %v141 = vmul.f32 %v75, %v110
    %v142 = vmul.f32 %v75, %v114
    %v143 = vmul.f32 %v75, %v118
    %v144 = vmul.f32 %v75, %v122
    %s145 = scalar_lea.vmem %s1, 4
    %v146 = vld [vmem:[%s145] sm:$0xf]
    %148 = vset.pattern.permute.xlu0 0
    %149 = vperm.xlu0 %148, %v146
    %v150 = vpop.permute.xlu0 %149
    %v152 = vmul.f32 %v150, %v82
    %v153 = vmul.f32 %v150, %v86
    %v154 = vmul.f32 %v150, %v90
    %v155 = vmul.f32 %v150, %v94
    %v156 = vmul.f32 %v150, %v98
    %v157 = vmul.f32 %v150, %v102
    %v158 = vmul.f32 %v150, %v106
    %v159 = vmul.f32 %v150, %v110
    %v160 = vmul.f32 %v150, %v114
    %v161 = vmul.f32 %v150, %v118
    %v162 = vmul.f32 %v150, %v122
    %174 = vrot.lane.b32.xlu0 %v152, 127
    %v175 = vpop.permute.xlu0 %174
    %176 = vrot.lane.b32.xlu0 %v153, 127
    %v177 = vpop.permute.xlu0 %176
    %178 = vrot.lane.b32.xlu0 %v154, 127
    %v179 = vpop.permute.xlu0 %178
    %180 = vrot.lane.b32.xlu0 %v155, 127
    %v181 = vpop.permute.xlu0 %180
    %182 = vrot.lane.b32.xlu0 %v156, 127
    %v183 = vpop.permute.xlu0 %182
    %184 = vrot.lane.b32.xlu0 %v157, 127
    %v185 = vpop.permute.xlu0 %184
    %186 = vrot.lane.b32.xlu0 %v158, 127
    %v187 = vpop.permute.xlu0 %186
    %188 = vrot.lane.b32.xlu0 %v159, 127
    %v189 = vpop.permute.xlu0 %188
    %190 = vrot.lane.b32.xlu0 %v160, 127
    %v191 = vpop.permute.xlu0 %190
    %192 = vrot.lane.b32.xlu0 %v161, 127
    %v193 = vpop.permute.xlu0 %192
    %194 = vrot.lane.b32.xlu0 %v162, 127
    %v195 = vpop.permute.xlu0 %194
    %vm196 = vcmask 1039360
    %v197 = vsel %vm196, %v175, %v177
    %v198 = vsel %vm196, %v177, %v179
    %v199 = vsel %vm196, %v179, %v181
    %v200 = vsel %vm196, %v181, %v183
    %v201 = vsel %vm196, %v183, %v185
    %v202 = vsel %vm196, %v185, %v187
    %v203 = vsel %vm196, %v187, %v189
    %v204 = vsel %vm196, %v189, %v191
    %v205 = vsel %vm196, %v191, %v193
    %v206 = vsel %vm196, %v193, %v195
    %v218 = vadd.f32 %v134, %v197
    %v219 = vadd.f32 %v135, %v198
    %v220 = vadd.f32 %v136, %v199
    %v221 = vadd.f32 %v137, %v200
    %v222 = vadd.f32 %v138, %v201
    %v223 = vadd.f32 %v139, %v202
    %v224 = vadd.f32 %v140, %v203
    %v225 = vadd.f32 %v141, %v204
    %v226 = vadd.f32 %v142, %v205
    %v227 = vadd.f32 %v143, %v206
    %v228 = vadd.f32 %v144, %v195
    %s229 = scalar_lea.vmem %s1, 8
    %v230 = vld [vmem:[%s229] sm:$0xf]
    %232 = vset.pattern.permute.xlu0 0
    %233 = vperm.xlu0 %232, %v230
    %v234 = vpop.permute.xlu0 %233
    %v236 = vmul.f32 %v234, %v82
    %v237 = vmul.f32 %v234, %v86
    %v238 = vmul.f32 %v234, %v90
    %v239 = vmul.f32 %v234, %v94
    %v240 = vmul.f32 %v234, %v98
    %v241 = vmul.f32 %v234, %v102
    %v242 = vmul.f32 %v234, %v106
    %v243 = vmul.f32 %v234, %v110
    %v244 = vmul.f32 %v234, %v114
    %v245 = vmul.f32 %v234, %v118
    %v246 = vmul.f32 %v234, %v122
    %258 = vrot.lane.b32.xlu0 %v236, 126
    %v259 = vpop.permute.xlu0 %258
    %260 = vrot.lane.b32.xlu0 %v237, 126
    %v261 = vpop.permute.xlu0 %260
    %262 = vrot.lane.b32.xlu0 %v238, 126
    %v263 = vpop.permute.xlu0 %262
    %264 = vrot.lane.b32.xlu0 %v239, 126
    %v265 = vpop.permute.xlu0 %264
    %266 = vrot.lane.b32.xlu0 %v240, 126
    %v267 = vpop.permute.xlu0 %266
    %268 = vrot.lane.b32.xlu0 %v241, 126
    %v269 = vpop.permute.xlu0 %268
    %270 = vrot.lane.b32.xlu0 %v242, 126
    %v271 = vpop.permute.xlu0 %270
    %272 = vrot.lane.b32.xlu0 %v243, 126
    %v273 = vpop.permute.xlu0 %272
    %274 = vrot.lane.b32.xlu0 %v244, 126
    %v275 = vpop.permute.xlu0 %274
    %276 = vrot.lane.b32.xlu0 %v245, 126
    %v277 = vpop.permute.xlu0 %276
    %278 = vrot.lane.b32.xlu0 %v246, 126
    %v279 = vpop.permute.xlu0 %278
    %vm280 = vcmask 1031168
    %v281 = vsel %vm280, %v259, %v261
    %v282 = vsel %vm280, %v261, %v263
    %v283 = vsel %vm280, %v263, %v265
    %v284 = vsel %vm280, %v265, %v267
    %v285 = vsel %vm280, %v267, %v269
    %v286 = vsel %vm280, %v269, %v271
    %v287 = vsel %vm280, %v271, %v273
    %v288 = vsel %vm280, %v273, %v275
    %v289 = vsel %vm280, %v275, %v277
    %v290 = vsel %vm280, %v277, %v279
    %v302 = vadd.f32 %v218, %v281
    %v303 = vadd.f32 %v219, %v282
    %v304 = vadd.f32 %v220, %v283
    %v305 = vadd.f32 %v221, %v284
    %v306 = vadd.f32 %v222, %v285
    %v307 = vadd.f32 %v223, %v286
    %v308 = vadd.f32 %v224, %v287
    %v309 = vadd.f32 %v225, %v288
    %v310 = vadd.f32 %v226, %v289
    %v311 = vadd.f32 %v227, %v290
    %v312 = vadd.f32 %v228, %v279
    %s313 = scalar_lea.vmem %s1, 12
    %v314 = vld [vmem:[%s313] sm:$0xf]
    %316 = vset.pattern.permute.xlu0 0
    %317 = vperm.xlu0 %316, %v314
    %v318 = vpop.permute.xlu0 %317
    %v320 = vmul.f32 %v318, %v82
    %v321 = vmul.f32 %v318, %v86
    %v322 = vmul.f32 %v318, %v90
    %v323 = vmul.f32 %v318, %v94
    %v324 = vmul.f32 %v318, %v98
    %v325 = vmul.f32 %v318, %v102
    %v326 = vmul.f32 %v318, %v106
    %v327 = vmul.f32 %v318, %v110
    %v328 = vmul.f32 %v318, %v114
    %v329 = vmul.f32 %v318, %v118
    %v330 = vmul.f32 %v318, %v122
    %342 = vrot.lane.b32.xlu0 %v320, 102
    %v343 = vpop.permute.xlu0 %342
    %344 = vrot.lane.b32.xlu0 %v321, 102
    %v345 = vpop.permute.xlu0 %344
    %346 = vrot.lane.b32.xlu0 %v322, 102
    %v347 = vpop.permute.xlu0 %346
    %348 = vrot.lane.b32.xlu0 %v323, 102
    %v349 = vpop.permute.xlu0 %348
    %350 = vrot.lane.b32.xlu0 %v324, 102
    %v351 = vpop.permute.xlu0 %350
    %352 = vrot.lane.b32.xlu0 %v325, 102
    %v353 = vpop.permute.xlu0 %352
    %354 = vrot.lane.b32.xlu0 %v326, 102
    %v355 = vpop.permute.xlu0 %354
    %356 = vrot.lane.b32.xlu0 %v327, 102
    %v357 = vpop.permute.xlu0 %356
    %358 = vrot.lane.b32.xlu0 %v328, 102
    %v359 = vpop.permute.xlu0 %358
    %360 = vrot.lane.b32.xlu0 %v329, 102
    %v361 = vpop.permute.xlu0 %360
    %362 = vrot.lane.b32.xlu0 %v330, 102
    %v363 = vpop.permute.xlu0 %362
    %vm364 = vcmask 834560
    %v365 = vsel %vm364, %v343, %v345
    %v366 = vsel %vm364, %v345, %v347
    %v367 = vsel %vm364, %v347, %v349
    %v368 = vsel %vm364, %v349, %v351
    %v369 = vsel %vm364, %v351, %v353
    %v370 = vsel %vm364, %v353, %v355
    %v371 = vsel %vm364, %v355, %v357
    %v372 = vsel %vm364, %v357, %v359
    %v373 = vsel %vm364, %v359, %v361
    %v374 = vsel %vm364, %v361, %v363
    %v386 = vadd.f32 %v302, %v365
    %v387 = vadd.f32 %v303, %v366
    %v388 = vadd.f32 %v304, %v367
    %v389 = vadd.f32 %v305, %v368
    %v390 = vadd.f32 %v306, %v369
    %v391 = vadd.f32 %v307, %v370
    %v392 = vadd.f32 %v308, %v371
    %v393 = vadd.f32 %v309, %v372
    %v394 = vadd.f32 %v310, %v373
    %v395 = vadd.f32 %v311, %v374
    %v396 = vadd.f32 %v312, %v363
    %s397 = scalar_lea.vmem %s1, 16
    %v398 = vld [vmem:[%s397] sm:$0xf]
    %400 = vset.pattern.permute.xlu0 0
    %401 = vperm.xlu0 %400, %v398
    %v402 = vpop.permute.xlu0 %401
    %v404 = vmul.f32 %v402, %v82
    %v405 = vmul.f32 %v402, %v86
    %v406 = vmul.f32 %v402, %v90
    %v407 = vmul.f32 %v402, %v94
    %v408 = vmul.f32 %v402, %v98
    %v409 = vmul.f32 %v402, %v102
    %v410 = vmul.f32 %v402, %v106
    %v411 = vmul.f32 %v402, %v110
    %v412 = vmul.f32 %v402, %v114
    %v413 = vmul.f32 %v402, %v118
    %v414 = vmul.f32 %v402, %v122
    %426 = vrot.lane.b32.xlu0 %v404, 101
    %v427 = vpop.permute.xlu0 %426
    %428 = vrot.lane.b32.xlu0 %v405, 101
    %v429 = vpop.permute.xlu0 %428
    %430 = vrot.lane.b32.xlu0 %v406, 101
    %v431 = vpop.permute.xlu0 %430
    %432 = vrot.lane.b32.xlu0 %v407, 101
    %v433 = vpop.permute.xlu0 %432
    %434 = vrot.lane.b32.xlu0 %v408, 101
    %v435 = vpop.permute.xlu0 %434
    %436 = vrot.lane.b32.xlu0 %v409, 101
    %v437 = vpop.permute.xlu0 %436
    %438 = vrot.lane.b32.xlu0 %v410, 101
    %v439 = vpop.permute.xlu0 %438
    %440 = vrot.lane.b32.xlu0 %v411, 101
    %v441 = vpop.permute.xlu0 %440
    %442 = vrot.lane.b32.xlu0 %v412, 101
    %v443 = vpop.permute.xlu0 %442
    %444 = vrot.lane.b32.xlu0 %v413, 101
    %v445 = vpop.permute.xlu0 %444
    %446 = vrot.lane.b32.xlu0 %v414, 101
    %v447 = vpop.permute.xlu0 %446
    %vm448 = vcmask 826368
    %v449 = vsel %vm448, %v427, %v429
    %v450 = vsel %vm448, %v429, %v431
    %v451 = vsel %vm448, %v431, %v433
    %v452 = vsel %vm448, %v433, %v435
    %v453 = vsel %vm448, %v435, %v437
    %v454 = vsel %vm448, %v437, %v439
    %v455 = vsel %vm448, %v439, %v441
    %v456 = vsel %vm448, %v441, %v443
    %v457 = vsel %vm448, %v443, %v445
    %v458 = vsel %vm448, %v445, %v447
    %v470 = vadd.f32 %v386, %v449
    %v471 = vadd.f32 %v387, %v450
    %v472 = vadd.f32 %v388, %v451
    %v473 = vadd.f32 %v389, %v452
    %v474 = vadd.f32 %v390, %v453
    %v475 = vadd.f32 %v391, %v454
    %v476 = vadd.f32 %v392, %v455
    %v477 = vadd.f32 %v393, %v456
    %v478 = vadd.f32 %v394, %v457
    %v479 = vadd.f32 %v395, %v458
    %v480 = vadd.f32 %v396, %v447
    %s481 = scalar_lea.vmem %s1, 20
    %v482 = vld [vmem:[%s481] sm:$0xf]
    %484 = vset.pattern.permute.xlu0 0
    %485 = vperm.xlu0 %484, %v482
    %v486 = vpop.permute.xlu0 %485
    %v488 = vmul.f32 %v486, %v82
    %v489 = vmul.f32 %v486, %v86
    %v490 = vmul.f32 %v486, %v90
    %v491 = vmul.f32 %v486, %v94
    %v492 = vmul.f32 %v486, %v98
    %v493 = vmul.f32 %v486, %v102
    %v494 = vmul.f32 %v486, %v106
    %v495 = vmul.f32 %v486, %v110
    %v496 = vmul.f32 %v486, %v114
    %v497 = vmul.f32 %v486, %v118
    %v498 = vmul.f32 %v486, %v122
    %510 = vrot.lane.b32.xlu0 %v488, 100
    %v511 = vpop.permute.xlu0 %510
    %512 = vrot.lane.b32.xlu0 %v489, 100
    %v513 = vpop.permute.xlu0 %512
    %514 = vrot.lane.b32.xlu0 %v490, 100
    %v515 = vpop.permute.xlu0 %514
    %516 = vrot.lane.b32.xlu0 %v491, 100
    %v517 = vpop.permute.xlu0 %516
    %518 = vrot.lane.b32.xlu0 %v492, 100
    %v519 = vpop.permute.xlu0 %518
    %520 = vrot.lane.b32.xlu0 %v493, 100
    %v521 = vpop.permute.xlu0 %520
    %522 = vrot.lane.b32.xlu0 %v494, 100
    %v523 = vpop.permute.xlu0 %522
    %524 = vrot.lane.b32.xlu0 %v495, 100
    %v525 = vpop.permute.xlu0 %524
    %526 = vrot.lane.b32.xlu0 %v496, 100
    %v527 = vpop.permute.xlu0 %526
    %528 = vrot.lane.b32.xlu0 %v497, 100
    %v529 = vpop.permute.xlu0 %528
    %530 = vrot.lane.b32.xlu0 %v498, 100
    %v531 = vpop.permute.xlu0 %530
    %vm532 = vcmask 818176
    %v533 = vsel %vm532, %v511, %v513
    %v534 = vsel %vm532, %v513, %v515
    %v535 = vsel %vm532, %v515, %v517
    %v536 = vsel %vm532, %v517, %v519
    %v537 = vsel %vm532, %v519, %v521
    %v538 = vsel %vm532, %v521, %v523
    %v539 = vsel %vm532, %v523, %v525
    %v540 = vsel %vm532, %v525, %v527
    %v541 = vsel %vm532, %v527, %v529
    %v542 = vsel %vm532, %v529, %v531
    %v554 = vadd.f32 %v470, %v533
    %v555 = vadd.f32 %v471, %v534
    %v556 = vadd.f32 %v472, %v535
    %v557 = vadd.f32 %v473, %v536
    %v558 = vadd.f32 %v474, %v537
    %v559 = vadd.f32 %v475, %v538
    %v560 = vadd.f32 %v476, %v539
    %v561 = vadd.f32 %v477, %v540
    %v562 = vadd.f32 %v478, %v541
    %v563 = vadd.f32 %v479, %v542
    %v564 = vadd.f32 %v480, %v531
    %s565 = scalar_lea.vmem %s1, 24
    %v566 = vld [vmem:[%s565] sm:$0xf]
    %568 = vset.pattern.permute.xlu0 0
    %569 = vperm.xlu0 %568, %v566
    %v570 = vpop.permute.xlu0 %569
    %v572 = vmul.f32 %v570, %v82
    %v573 = vmul.f32 %v570, %v86
    %v574 = vmul.f32 %v570, %v90
    %v575 = vmul.f32 %v570, %v94
    %v576 = vmul.f32 %v570, %v98
    %v577 = vmul.f32 %v570, %v102
    %v578 = vmul.f32 %v570, %v106
    %v579 = vmul.f32 %v570, %v110
    %v580 = vmul.f32 %v570, %v114
    %v581 = vmul.f32 %v570, %v118
    %v582 = vmul.f32 %v570, %v122
    %594 = vrot.lane.b32.xlu0 %v572, 76
    %v595 = vpop.permute.xlu0 %594
    %596 = vrot.lane.b32.xlu0 %v573, 76
    %v597 = vpop.permute.xlu0 %596
    %598 = vrot.lane.b32.xlu0 %v574, 76
    %v599 = vpop.permute.xlu0 %598
    %600 = vrot.lane.b32.xlu0 %v575, 76
    %v601 = vpop.permute.xlu0 %600
    %602 = vrot.lane.b32.xlu0 %v576, 76
    %v603 = vpop.permute.xlu0 %602
    %604 = vrot.lane.b32.xlu0 %v577, 76
    %v605 = vpop.permute.xlu0 %604
    %606 = vrot.lane.b32.xlu0 %v578, 76
    %v607 = vpop.permute.xlu0 %606
    %608 = vrot.lane.b32.xlu0 %v579, 76
    %v609 = vpop.permute.xlu0 %608
    %610 = vrot.lane.b32.xlu0 %v580, 76
    %v611 = vpop.permute.xlu0 %610
    %612 = vrot.lane.b32.xlu0 %v581, 76
    %v613 = vpop.permute.xlu0 %612
    %614 = vrot.lane.b32.xlu0 %v582, 76
    %v615 = vpop.permute.xlu0 %614
    %vm616 = vcmask 621568
    %v617 = vsel %vm616, %v595, %v597
    %v618 = vsel %vm616, %v597, %v599
    %v619 = vsel %vm616, %v599, %v601
    %v620 = vsel %vm616, %v601, %v603
    %v621 = vsel %vm616, %v603, %v605
    %v622 = vsel %vm616, %v605, %v607
    %v623 = vsel %vm616, %v607, %v609
    %v624 = vsel %vm616, %v609, %v611
    %v625 = vsel %vm616, %v611, %v613
    %v626 = vsel %vm616, %v613, %v615
    %v638 = vadd.f32 %v554, %v617
    %v639 = vadd.f32 %v555, %v618
    %v640 = vadd.f32 %v556, %v619
    %v641 = vadd.f32 %v557, %v620
    %v642 = vadd.f32 %v558, %v621
    %v643 = vadd.f32 %v559, %v622
    %v644 = vadd.f32 %v560, %v623
    %v645 = vadd.f32 %v561, %v624
    %v646 = vadd.f32 %v562, %v625
    %v647 = vadd.f32 %v563, %v626
    %v648 = vadd.f32 %v564, %v615
    %s649 = scalar_lea.vmem %s1, 28
    %v650 = vld [vmem:[%s649] sm:$0xf]
    %652 = vset.pattern.permute.xlu0 0
    %653 = vperm.xlu0 %652, %v650
    %v654 = vpop.permute.xlu0 %653
    %v656 = vmul.f32 %v654, %v82
    %v657 = vmul.f32 %v654, %v86
    %v658 = vmul.f32 %v654, %v90
    %v659 = vmul.f32 %v654, %v94
    %v660 = vmul.f32 %v654, %v98
    %v661 = vmul.f32 %v654, %v102
    %v662 = vmul.f32 %v654, %v106
    %v663 = vmul.f32 %v654, %v110
    %v664 = vmul.f32 %v654, %v114
    %v665 = vmul.f32 %v654, %v118
    %v666 = vmul.f32 %v654, %v122
    %678 = vrot.lane.b32.xlu0 %v656, 75
    %v679 = vpop.permute.xlu0 %678
    %680 = vrot.lane.b32.xlu0 %v657, 75
    %v681 = vpop.permute.xlu0 %680
    %682 = vrot.lane.b32.xlu0 %v658, 75
    %v683 = vpop.permute.xlu0 %682
    %684 = vrot.lane.b32.xlu0 %v659, 75
    %v685 = vpop.permute.xlu0 %684
    %686 = vrot.lane.b32.xlu0 %v660, 75
    %v687 = vpop.permute.xlu0 %686
    %688 = vrot.lane.b32.xlu0 %v661, 75
    %v689 = vpop.permute.xlu0 %688
    %690 = vrot.lane.b32.xlu0 %v662, 75
    %v691 = vpop.permute.xlu0 %690
    %692 = vrot.lane.b32.xlu0 %v663, 75
    %v693 = vpop.permute.xlu0 %692
    %694 = vrot.lane.b32.xlu0 %v664, 75
    %v695 = vpop.permute.xlu0 %694
    %696 = vrot.lane.b32.xlu0 %v665, 75
    %v697 = vpop.permute.xlu0 %696
    %698 = vrot.lane.b32.xlu0 %v666, 75
    %v699 = vpop.permute.xlu0 %698
    %vm700 = vcmask 613376
    %v701 = vsel %vm700, %v679, %v681
    %v702 = vsel %vm700, %v681, %v683
    %v703 = vsel %vm700, %v683, %v685
    %v704 = vsel %vm700, %v685, %v687
    %v705 = vsel %vm700, %v687, %v689
    %v706 = vsel %vm700, %v689, %v691
    %v707 = vsel %vm700, %v691, %v693
    %v708 = vsel %vm700, %v693, %v695
    %v709 = vsel %vm700, %v695, %v697
    %v710 = vsel %vm700, %v697, %v699
    %v722 = vadd.f32 %v638, %v701
    %v723 = vadd.f32 %v639, %v702
    %v724 = vadd.f32 %v640, %v703
    %v725 = vadd.f32 %v641, %v704
    %v726 = vadd.f32 %v642, %v705
    %v727 = vadd.f32 %v643, %v706
    %v728 = vadd.f32 %v644, %v707
    %v729 = vadd.f32 %v645, %v708
    %v730 = vadd.f32 %v646, %v709
    %v731 = vadd.f32 %v647, %v710
    %v732 = vadd.f32 %v648, %v699
    %s733 = scalar_lea.vmem %s1, 32
    %v734 = vld [vmem:[%s733] sm:$0xf]
    %736 = vset.pattern.permute.xlu0 0
    %737 = vperm.xlu0 %736, %v734
    %v738 = vpop.permute.xlu0 %737
    %v740 = vmul.f32 %v738, %v82
    %v741 = vmul.f32 %v738, %v86
    %v742 = vmul.f32 %v738, %v90
    %v743 = vmul.f32 %v738, %v94
    %v744 = vmul.f32 %v738, %v98
    %v745 = vmul.f32 %v738, %v102
    %v746 = vmul.f32 %v738, %v106
    %v747 = vmul.f32 %v738, %v110
    %v748 = vmul.f32 %v738, %v114
    %v749 = vmul.f32 %v738, %v118
    %v750 = vmul.f32 %v738, %v122
    %762 = vrot.lane.b32.xlu0 %v740, 74
    %v763 = vpop.permute.xlu0 %762
    %764 = vrot.lane.b32.xlu0 %v741, 74
    %v765 = vpop.permute.xlu0 %764
    %766 = vrot.lane.b32.xlu0 %v742, 74
    %v767 = vpop.permute.xlu0 %766
    %768 = vrot.lane.b32.xlu0 %v743, 74
    %v769 = vpop.permute.xlu0 %768
    %770 = vrot.lane.b32.xlu0 %v744, 74
    %v771 = vpop.permute.xlu0 %770
    %772 = vrot.lane.b32.xlu0 %v745, 74
    %v773 = vpop.permute.xlu0 %772
    %774 = vrot.lane.b32.xlu0 %v746, 74
    %v775 = vpop.permute.xlu0 %774
    %776 = vrot.lane.b32.xlu0 %v747, 74
    %v777 = vpop.permute.xlu0 %776
    %778 = vrot.lane.b32.xlu0 %v748, 74
    %v779 = vpop.permute.xlu0 %778
    %780 = vrot.lane.b32.xlu0 %v749, 74
    %v781 = vpop.permute.xlu0 %780
    %782 = vrot.lane.b32.xlu0 %v750, 74
    %v783 = vpop.permute.xlu0 %782
    %vm784 = vcmask 605184
    %v785 = vsel %vm784, %v763, %v765
    %v786 = vsel %vm784, %v765, %v767
    %v787 = vsel %vm784, %v767, %v769
    %v788 = vsel %vm784, %v769, %v771
    %v789 = vsel %vm784, %v771, %v773
    %v790 = vsel %vm784, %v773, %v775
    %v791 = vsel %vm784, %v775, %v777
    %v792 = vsel %vm784, %v777, %v779
    %v793 = vsel %vm784, %v779, %v781
    %v794 = vsel %vm784, %v781, %v783
    %v806 = vadd.f32 %v722, %v785
    %v807 = vadd.f32 %v723, %v786
    %v808 = vadd.f32 %v724, %v787
    %v809 = vadd.f32 %v725, %v788
    %v810 = vadd.f32 %v726, %v789
    %v811 = vadd.f32 %v727, %v790
    %v812 = vadd.f32 %v728, %v791
    %v813 = vadd.f32 %v729, %v792
    %v814 = vadd.f32 %v730, %v793
    %v815 = vadd.f32 %v731, %v794
    %v816 = vadd.f32 %v732, %v783
    %v817 = vld [vmem:[%s4] sm:$0xff]
    %v818 = vld [vmem:[%s4 + $0x8] sm:$0x7]
    %v821 = vlaneseq
    %v822 = vshrl.u32 %v821, 7
    %v823 = vsub.s32 0, %v822
    %v824 = vrot.slane %v817, %v823
    %v825 = vlaneseq
    %v826 = vshrl.u32 %v825, 7
    %v827 = vsub.s32 1, %v826
    %v828 = vrot.slane %v817, %v827
    %v829 = vlaneseq
    %v830 = vshrl.u32 %v829, 7
    %v831 = vsub.s32 2, %v830
    %v832 = vrot.slane %v817, %v831
    %v833 = vlaneseq
    %v834 = vshrl.u32 %v833, 7
    %v835 = vsub.s32 3, %v834
    %v836 = vrot.slane %v817, %v835
    %v837 = vlaneseq
    %v838 = vshrl.u32 %v837, 7
    %v839 = vsub.s32 4, %v838
    %v840 = vrot.slane %v817, %v839
    %v841 = vlaneseq
    %v842 = vshrl.u32 %v841, 7
    %v843 = vsub.s32 5, %v842
    %v844 = vrot.slane %v817, %v843
    %v845 = vlaneseq
    %v846 = vshrl.u32 %v845, 7
    %v847 = vsub.s32 6, %v846
    %v848 = vrot.slane %v817, %v847
    %v849 = vlaneseq
    %v850 = vshrl.u32 %v849, 7
    %v851 = vsub.s32 7, %v850
    %v852 = vrot.slane %v817, %v851
    %v853 = vlaneseq
    %v854 = vshrl.u32 %v853, 7
    %v855 = vsub.s32 0, %v854
    %v856 = vrot.slane %v818, %v855
    %v857 = vlaneseq
    %v858 = vshrl.u32 %v857, 7
    %v859 = vsub.s32 1, %v858
    %v860 = vrot.slane %v818, %v859
    %v861 = vlaneseq
    %v862 = vshrl.u32 %v861, 7
    %v863 = vsub.s32 2, %v862
    %v864 = vrot.slane %v818, %v863
    %865 = vrot.lane.b32.xlu0 %v824, 1
    %v866 = vpop.permute.xlu0 %865
    %867 = vrot.lane.b32.xlu0 %v828, 1
    %v868 = vpop.permute.xlu0 %867
    %869 = vrot.lane.b32.xlu0 %v832, 1
    %v870 = vpop.permute.xlu0 %869
    %871 = vrot.lane.b32.xlu0 %v836, 1
    %v872 = vpop.permute.xlu0 %871
    %873 = vrot.lane.b32.xlu0 %v840, 1
    %v874 = vpop.permute.xlu0 %873
    %875 = vrot.lane.b32.xlu0 %v844, 1
    %v876 = vpop.permute.xlu0 %875
    %877 = vrot.lane.b32.xlu0 %v848, 1
    %v878 = vpop.permute.xlu0 %877
    %879 = vrot.lane.b32.xlu0 %v852, 1
    %v880 = vpop.permute.xlu0 %879
    %881 = vrot.lane.b32.xlu0 %v856, 1
    %v882 = vpop.permute.xlu0 %881
    %883 = vrot.lane.b32.xlu0 %v860, 1
    %v884 = vpop.permute.xlu0 %883
    %885 = vrot.lane.b32.xlu0 %v864, 1
    %v886 = vpop.permute.xlu0 %885
    %vm887 = vcmask 7168
    %v888 = vsel %vm887, %v866, %v868
    %v889 = vsel %vm887, %v868, %v870
    %v890 = vsel %vm887, %v870, %v872
    %v891 = vsel %vm887, %v872, %v874
    %v892 = vsel %vm887, %v874, %v876
    %v893 = vsel %vm887, %v876, %v878
    %v894 = vsel %vm887, %v878, %v880
    %v895 = vsel %vm887, %v880, %v882
    %v896 = vsel %vm887, %v882, %v884
    %v897 = vsel %vm887, %v884, %v886
    %v909 = vmul.f32 %v806, %v866
    %v910 = vmul.f32 %v807, %v888
    %v911 = vmul.f32 %v808, %v889
    %v912 = vmul.f32 %v809, %v890
    %v913 = vmul.f32 %v810, %v891
    %v914 = vmul.f32 %v811, %v892
    %v915 = vmul.f32 %v812, %v893
    %v916 = vmul.f32 %v813, %v894
    %v917 = vmul.f32 %v814, %v895
    %v918 = vmul.f32 %v815, %v896
    %v919 = vmul.f32 %v816, %v897
    %931 = vrot.lane.b32.xlu0 %v909, 127
    %v932 = vpop.permute.xlu0 %931
    %933 = vrot.lane.b32.xlu0 %v910, 127
    %v934 = vpop.permute.xlu0 %933
    %935 = vrot.lane.b32.xlu0 %v911, 127
    %v936 = vpop.permute.xlu0 %935
    %937 = vrot.lane.b32.xlu0 %v912, 127
    %v938 = vpop.permute.xlu0 %937
    %939 = vrot.lane.b32.xlu0 %v913, 127
    %v940 = vpop.permute.xlu0 %939
    %941 = vrot.lane.b32.xlu0 %v914, 127
    %v942 = vpop.permute.xlu0 %941
    %943 = vrot.lane.b32.xlu0 %v915, 127
    %v944 = vpop.permute.xlu0 %943
    %945 = vrot.lane.b32.xlu0 %v916, 127
    %v946 = vpop.permute.xlu0 %945
    %947 = vrot.lane.b32.xlu0 %v917, 127
    %v948 = vpop.permute.xlu0 %947
    %949 = vrot.lane.b32.xlu0 %v918, 127
    %v950 = vpop.permute.xlu0 %949
    %951 = vrot.lane.b32.xlu0 %v919, 127
    %v952 = vpop.permute.xlu0 %951
    %v953 = vsel %vm196, %v932, %v934
    %v954 = vsel %vm196, %v934, %v936
    %v955 = vsel %vm196, %v936, %v938
    %v956 = vsel %vm196, %v938, %v940
    %v957 = vsel %vm196, %v940, %v942
    %v958 = vsel %vm196, %v942, %v944
    %v959 = vsel %vm196, %v944, %v946
    %v960 = vsel %vm196, %v946, %v948
    %v961 = vsel %vm196, %v948, %v950
    %v962 = vsel %vm196, %v950, %v952
    %vm974 = vcmask 1043456
    %v975 = vsel %vm974, %v953, 0.0
    %v976 = vsel %vm974, %v954, 0.0
    %v977 = vadd.f32 %v975, %v976
    %v978 = vsel %vm974, %v955, 0.0
    %v979 = vadd.f32 %v977, %v978
    %v980 = vsel %vm974, %v956, 0.0
    %v981 = vadd.f32 %v979, %v980
    %v982 = vsel %vm974, %v957, 0.0
    %v983 = vadd.f32 %v981, %v982
    %v984 = vsel %vm974, %v958, 0.0
    %v985 = vadd.f32 %v983, %v984
    %v986 = vsel %vm974, %v959, 0.0
    %v987 = vadd.f32 %v985, %v986
    %v988 = vsel %vm974, %v960, 0.0
    %v989 = vadd.f32 %v987, %v988
    %v990 = vsel %vm974, %v961, 0.0
    %v991 = vadd.f32 %v989, %v990
    %v992 = vsel %vm974, %v962, 0.0
    %v993 = vadd.f32 %v991, %v992
    %vm994 = vcmask 584704
    %v995 = vsel %vm994, %v952, 0.0
    %v996 = vadd.f32 %v993, %v995
    %997 = vadd.xlane.f32.xlu0 %v996
    %v998 = vpop.xlane.xlu0 %997
    %v999 = vmul.f32 %v998, 0.00086805556
    %v1000 = vmul.f32 %v909, %v806
    %v1001 = vmul.f32 %v910, %v807
    %v1002 = vmul.f32 %v911, %v808
    %v1003 = vmul.f32 %v912, %v809
    %v1004 = vmul.f32 %v913, %v810
    %v1005 = vmul.f32 %v914, %v811
    %v1006 = vmul.f32 %v915, %v812
    %v1007 = vmul.f32 %v916, %v813
    %v1008 = vmul.f32 %v917, %v814
    %v1009 = vmul.f32 %v918, %v815
    %v1010 = vmul.f32 %v919, %v816
    %1022 = vrot.lane.b32.xlu0 %v1000, 127
    %v1023 = vpop.permute.xlu0 %1022
    %1024 = vrot.lane.b32.xlu0 %v1001, 127
    %v1025 = vpop.permute.xlu0 %1024
    %1026 = vrot.lane.b32.xlu0 %v1002, 127
    %v1027 = vpop.permute.xlu0 %1026
    %1028 = vrot.lane.b32.xlu0 %v1003, 127
    %v1029 = vpop.permute.xlu0 %1028
    %1030 = vrot.lane.b32.xlu0 %v1004, 127
    %v1031 = vpop.permute.xlu0 %1030
    %1032 = vrot.lane.b32.xlu0 %v1005, 127
    %v1033 = vpop.permute.xlu0 %1032
    %1034 = vrot.lane.b32.xlu0 %v1006, 127
    %v1035 = vpop.permute.xlu0 %1034
    %1036 = vrot.lane.b32.xlu0 %v1007, 127
    %v1037 = vpop.permute.xlu0 %1036
    %1038 = vrot.lane.b32.xlu0 %v1008, 127
    %v1039 = vpop.permute.xlu0 %1038
    %1040 = vrot.lane.b32.xlu0 %v1009, 127
    %v1041 = vpop.permute.xlu0 %1040
    %1042 = vrot.lane.b32.xlu0 %v1010, 127
    %v1043 = vpop.permute.xlu0 %1042
    %v1044 = vsel %vm196, %v1023, %v1025
    %v1045 = vsel %vm196, %v1025, %v1027
    %v1046 = vsel %vm196, %v1027, %v1029
    %v1047 = vsel %vm196, %v1029, %v1031
    %v1048 = vsel %vm196, %v1031, %v1033
    %v1049 = vsel %vm196, %v1033, %v1035
    %v1050 = vsel %vm196, %v1035, %v1037
    %v1051 = vsel %vm196, %v1037, %v1039
    %v1052 = vsel %vm196, %v1039, %v1041
    %v1053 = vsel %vm196, %v1041, %v1043
    %v1065 = vsel %vm974, %v1044, 0.0
    %v1066 = vsel %vm974, %v1045, 0.0
    %v1067 = vadd.f32 %v1065, %v1066
    %v1068 = vsel %vm974, %v1046, 0.0
    %v1069 = vadd.f32 %v1067, %v1068
    %v1070 = vsel %vm974, %v1047, 0.0
    %v1071 = vadd.f32 %v1069, %v1070
    %v1072 = vsel %vm974, %v1048, 0.0
    %v1073 = vadd.f32 %v1071, %v1072
    %v1074 = vsel %vm974, %v1049, 0.0
    %v1075 = vadd.f32 %v1073, %v1074
    %v1076 = vsel %vm974, %v1050, 0.0
    %v1077 = vadd.f32 %v1075, %v1076
    %v1078 = vsel %vm974, %v1051, 0.0
    %v1079 = vadd.f32 %v1077, %v1078
    %v1080 = vsel %vm974, %v1052, 0.0
    %v1081 = vadd.f32 %v1079, %v1080
    %v1082 = vsel %vm974, %v1053, 0.0
    %v1083 = vadd.f32 %v1081, %v1082
    %v1084 = vsel %vm994, %v1043, 0.0
    %v1085 = vadd.f32 %v1083, %v1084
    %1086 = vadd.xlane.f32.xlu0 %v1085
    %v1087 = vpop.xlane.xlu0 %1086
    %v1088 = vmul.f32 %v1087, 0.00086805556
    %v1089 = vmul.f32 %v999, %v999
    %v1090 = vsub.f32 %v1088, %v1089
    %v1091 = vmax.f32 %v1090, 0.0
    %v1092 = vld [vmem:[%s2] sm:$0xf]
    %v1093 = vadd.f32 %v1091, 1e-05
    %v1094 = vrsqrt.pop %v1093
    %v1095 = vmul.f32 %v1092, %v1094
    %v1096 = vsub.f32 %v806, %v999
    %v1097 = vsub.f32 %v807, %v999
    %v1098 = vsub.f32 %v808, %v999
    %v1099 = vsub.f32 %v809, %v999
    %v1100 = vsub.f32 %v810, %v999
    %v1101 = vsub.f32 %v811, %v999
    %v1102 = vsub.f32 %v812, %v999
    %v1103 = vsub.f32 %v813, %v999
    %v1104 = vsub.f32 %v814, %v999
    %v1105 = vsub.f32 %v815, %v999
    %v1106 = vsub.f32 %v816, %v999
    %1108 = vset.pattern.permute.xlu0 0
    %1109 = vperm.xlu0 %1108, %v1095
    %v1110 = vpop.permute.xlu0 %1109
    %v1112 = vmul.f32 %v1096, %v1110
    %v1113 = vmul.f32 %v1097, %v1110
    %v1114 = vmul.f32 %v1098, %v1110
    %v1115 = vmul.f32 %v1099, %v1110
    %v1116 = vmul.f32 %v1100, %v1110
    %v1117 = vmul.f32 %v1101, %v1110
    %v1118 = vmul.f32 %v1102, %v1110
    %v1119 = vmul.f32 %v1103, %v1110
    %v1120 = vmul.f32 %v1104, %v1110
    %v1121 = vmul.f32 %v1105, %v1110
    %v1122 = vmul.f32 %v1106, %v1110
    %v1123 = vld [vmem:[%s3] sm:$0xf]
    %1125 = vset.pattern.permute.xlu0 0
    %1126 = vperm.xlu0 %1125, %v1123
    %v1127 = vpop.permute.xlu0 %1126
    %v1129 = vadd.f32 %v1112, %v1127
    %v1130 = vadd.f32 %v1113, %v1127
    %v1131 = vadd.f32 %v1114, %v1127
    %v1132 = vadd.f32 %v1115, %v1127
    %v1133 = vadd.f32 %v1116, %v1127
    %v1134 = vadd.f32 %v1117, %v1127
    %v1135 = vadd.f32 %v1118, %v1127
    %v1136 = vadd.f32 %v1119, %v1127
    %v1137 = vadd.f32 %v1120, %v1127
    %v1138 = vadd.f32 %v1121, %v1127
    %v1139 = vadd.f32 %v1122, %v1127
    %v1140 = vmax.f32 %v1129, 0.0
    %v1141 = vmax.f32 %v1130, 0.0
    %v1142 = vmax.f32 %v1131, 0.0
    %v1143 = vmax.f32 %v1132, 0.0
    %v1144 = vmax.f32 %v1133, 0.0
    %v1145 = vmax.f32 %v1134, 0.0
    %v1146 = vmax.f32 %v1135, 0.0
    %v1147 = vmax.f32 %v1136, 0.0
    %v1148 = vmax.f32 %v1137, 0.0
    %v1149 = vmax.f32 %v1138, 0.0
    %v1150 = vmax.f32 %v1139, 0.0
    %v1162 = vcombine.low %v1140, %v1141
    %v1163 = vcombine.low %v1142, %v1143
    %v1164 = vcombine.low %v1144, %v1145
    %v1165 = vcombine.low %v1146, %v1147
    %v1166 = vcombine.low %v1148, %v1149
    %1167 = vrot.lane.b32.xlu0 %v1162, 127
    %v1168 = vpop.permute.xlu0 %1167
    %1169 = vrot.lane.b32.xlu0 %v1163, 127
    %v1170 = vpop.permute.xlu0 %1169
    %1171 = vrot.lane.b32.xlu0 %v1164, 127
    %v1172 = vpop.permute.xlu0 %1171
    %1173 = vrot.lane.b32.xlu0 %v1165, 127
    %v1174 = vpop.permute.xlu0 %1173
    %1175 = vrot.lane.b32.xlu0 %v1166, 127
    %v1176 = vpop.permute.xlu0 %1175
    %1177 = vrot.lane.b32.xlu0 %v1150, 127
    %v1178 = vpop.permute.xlu0 %1177
    %v1179 = vrot.slane %v1168, 4
    %v1180 = vrot.slane %v1170, 4
    %v1181 = vrot.slane %v1172, 4
    %v1182 = vrot.slane %v1174, 4
    %v1183 = vrot.slane %v1176, 4
    %v1184 = vrot.slane %v1178, 4
    %v1185 = vsel %vm974, %v1179, %v1180
    %v1186 = vsel %vm196, %v1168, %v1185
    %v1187 = vsel %vm974, %v1180, %v1181
    %v1188 = vsel %vm196, %v1170, %v1187
    %v1189 = vsel %vm974, %v1181, %v1182
    %v1190 = vsel %vm196, %v1172, %v1189
    %v1191 = vsel %vm974, %v1182, %v1183
    %v1192 = vsel %vm196, %v1174, %v1191
    %v1193 = vsel %vm974, %v1183, %v1184
    %v1194 = vsel %vm196, %v1176, %v1193
    %1201 = vst [vmem:[#allocation2] sm:$0xff] %v1186
    %1202 = vst [vmem:[#allocation2 + $0x8] sm:$0xff] %v1188
    %1203 = vst [vmem:[#allocation2 + $0x10] sm:$0xff] %v1190
    %1204 = vst [vmem:[#allocation2 + $0x18] sm:$0xff] %v1192
    %1205 = vst [vmem:[#allocation2 + $0x20] sm:$0xff] %v1194
    %1206 = vst.msk [vmem:[#allocation2 + $0x28] sm:$0xf] %vm994, %v1178
    %v1207 = vld [vmem:[#allocation2] sm:$0xff]
    %v1208 = vld [vmem:[#allocation2 + $0x8] sm:$0xff]
    %v1209 = vld [vmem:[#allocation2 + $0x10] sm:$0xff]
    %v1210 = vld [vmem:[#allocation2 + $0x18] sm:$0xff]
    %v1211 = vld [vmem:[#allocation2 + $0x20] sm:$0xff]
    %v1212 = vld [vmem:[#allocation2 + $0x28] sm:$0xf]
    %v1213 = vld [vmem:[%s5] sm:$0xff]
    %v1214 = vld [vmem:[%s5 + $0x8] sm:$0xff]
    %v1215 = vld [vmem:[%s5 + $0x10] sm:$0xff]
    %v1216 = vld [vmem:[%s5 + $0x18] sm:$0xff]
    %v1217 = vld [vmem:[%s5 + $0x20] sm:$0xff]
    %v1218 = vld [vmem:[%s5 + $0x28] sm:$0xff]
    %v1219 = vld [vmem:[%s5 + $0x30] sm:$0xff]
    %v1220 = vld [vmem:[%s5 + $0x38] sm:$0xff]
    %v1221 = vld [vmem:[%s5 + $0x40] sm:$0xff]
    %v1222 = vld [vmem:[%s5 + $0x48] sm:$0xff]
    %v1223 = vld [vmem:[%s5 + $0x50] sm:$0xff]
    %v1224 = vld [vmem:[%s5 + $0x58] sm:$0xff]
    %v1225 = vld [vmem:[%s5 + $0x60] sm:$0xff]
    %v1226 = vld [vmem:[%s5 + $0x68] sm:$0xff]
    %v1227 = vld [vmem:[%s5 + $0x70] sm:$0xff]
    %v1228 = vld [vmem:[%s5 + $0x78] sm:$0xff]
    %v1229 = vld [vmem:[%s5 + $0x80] sm:$0xff]
    %v1230 = vld [vmem:[%s5 + $0x88] sm:$0xff]
    %v1231 = vld [vmem:[%s5 + $0x90] sm:$0xff]
    %v1232 = vld [vmem:[%s5 + $0x98] sm:$0xff]
    %v1233 = vld [vmem:[%s5 + $0xa0] sm:$0xff]
    %v1234 = vld [vmem:[%s5 + $0xa8] sm:$0xff]
    %v1235 = vld [vmem:[%s5 + $0xb0] sm:$0xff]
    %v1236 = vld [vmem:[%s5 + $0xb8] sm:$0xff]
    %v1237 = vld [vmem:[%s5 + $0xc0] sm:$0xff]
    %v1238 = vld [vmem:[%s5 + $0xc8] sm:$0xff]
    %v1239 = vld [vmem:[%s5 + $0xd0] sm:$0xff]
    %v1240 = vld [vmem:[%s5 + $0xd8] sm:$0xff]
    %v1241 = vld [vmem:[%s5 + $0xe0] sm:$0xff]
    %v1242 = vld [vmem:[%s5 + $0xe8] sm:$0xff]
    %v1243 = vld [vmem:[%s5 + $0xf0] sm:$0xff]
    %v1244 = vld [vmem:[%s5 + $0xf8] sm:$0xff]
    %v1245 = vld [vmem:[%s5 + $0x100] sm:$0xff]
    %v1246 = vld [vmem:[%s5 + $0x108] sm:$0xff]
    %v1247 = vld [vmem:[%s5 + $0x110] sm:$0xff]
    %v1248 = vld [vmem:[%s5 + $0x118] sm:$0xff]
    %v1249 = vld [vmem:[%s5 + $0x120] sm:$0xff]
    %v1250 = vld [vmem:[%s5 + $0x128] sm:$0xff]
    %v1251 = vld [vmem:[%s5 + $0x130] sm:$0xff]
    %v1252 = vld [vmem:[%s5 + $0x138] sm:$0xff]
    %v1253 = vld [vmem:[%s5 + $0x140] sm:$0xff]
    %v1254 = vld [vmem:[%s5 + $0x148] sm:$0xff]
    %v1255 = vld [vmem:[%s5 + $0x150] sm:$0xff]
    %v1256 = vld [vmem:[%s5 + $0x158] sm:$0xff]
    %v1257 = vld [vmem:[%s5 + $0x160] sm:$0xff]
    %v1258 = vld [vmem:[%s5 + $0x168] sm:$0xff]
    %v1259 = vld [vmem:[%s5 + $0x170] sm:$0xff]
    %v1260 = vld [vmem:[%s5 + $0x178] sm:$0xff]
    %v1261 = vld [vmem:[%s5 + $0x180] sm:$0xff]
    %v1262 = vld [vmem:[%s5 + $0x188] sm:$0xff]
    %v1263 = vld [vmem:[%s5 + $0x190] sm:$0xff]
    %v1264 = vld [vmem:[%s5 + $0x198] sm:$0xff]
    %v1265 = vld [vmem:[%s5 + $0x1a0] sm:$0xff]
    %v1266 = vld [vmem:[%s5 + $0x1a8] sm:$0xff]
    %v1267 = vld [vmem:[%s5 + $0x1b0] sm:$0xff]
    %v1268 = vld [vmem:[%s5 + $0x1b8] sm:$0xff]
    %v1269 = vld [vmem:[%s5 + $0x1c0] sm:$0xff]
    %v1270 = vld [vmem:[%s5 + $0x1c8] sm:$0xff]
    %v1271 = vld [vmem:[%s5 + $0x1d0] sm:$0xff]
    %v1272 = vld [vmem:[%s5 + $0x1d8] sm:$0xff]
    %v1273 = vld [vmem:[%s5 + $0x1e0] sm:$0xff]
    %v1274 = vld [vmem:[%s5 + $0x1e8] sm:$0xff]
    %v1275 = vld [vmem:[%s5 + $0x1f0] sm:$0xff]
    %v1276 = vld [vmem:[%s5 + $0x1f8] sm:$0xff]
    %v1277 = vld [vmem:[%s5 + $0x200] sm:$0xff]
    %v1278 = vld [vmem:[%s5 + $0x208] sm:$0xff]
    %v1279 = vld [vmem:[%s5 + $0x210] sm:$0xff]
    %v1280 = vld [vmem:[%s5 + $0x218] sm:$0xff]
    %v1281 = vld [vmem:[%s5 + $0x220] sm:$0xff]
    %v1282 = vld [vmem:[%s5 + $0x228] sm:$0xff]
    %v1283 = vld [vmem:[%s5 + $0x230] sm:$0xff]
    %v1284 = vld [vmem:[%s5 + $0x238] sm:$0xff]
    %v1285 = vld [vmem:[%s5 + $0x240] sm:$0xff]
    %v1286 = vld [vmem:[%s5 + $0x248] sm:$0xff]
    %v1287 = vld [vmem:[%s5 + $0x250] sm:$0xff]
    %v1288 = vld [vmem:[%s5 + $0x258] sm:$0xff]
    %v1289 = vld [vmem:[%s5 + $0x260] sm:$0xff]
    %v1290 = vld [vmem:[%s5 + $0x268] sm:$0xff]
    %v1291 = vld [vmem:[%s5 + $0x270] sm:$0xff]
    %v1292 = vld [vmem:[%s5 + $0x278] sm:$0xff]
    %v1293 = vld [vmem:[%s5 + $0x280] sm:$0xff]
    %v1294 = vld [vmem:[%s5 + $0x288] sm:$0xff]
    %v1295 = vld [vmem:[%s5 + $0x290] sm:$0xff]
    %v1296 = vld [vmem:[%s5 + $0x298] sm:$0xff]
    %v1297 = vld [vmem:[%s5 + $0x2a0] sm:$0xff]
    %v1298 = vld [vmem:[%s5 + $0x2a8] sm:$0xff]
    %v1299 = vld [vmem:[%s5 + $0x2b0] sm:$0xff]
    %v1300 = vld [vmem:[%s5 + $0x2b8] sm:$0xff]
    %v1301 = vld [vmem:[%s5 + $0x2c0] sm:$0xff]
    %v1302 = vld [vmem:[%s5 + $0x2c8] sm:$0xff]
    %v1303 = vld [vmem:[%s5 + $0x2d0] sm:$0xff]
    %v1304 = vld [vmem:[%s5 + $0x2d8] sm:$0xff]
    %v1305 = vld [vmem:[%s5 + $0x2e0] sm:$0xff]
    %v1306 = vld [vmem:[%s5 + $0x2e8] sm:$0xff]
    %v1307 = vld [vmem:[%s5 + $0x2f0] sm:$0xff]
    %v1308 = vld [vmem:[%s5 + $0x2f8] sm:$0xff]
    %v1309 = vld [vmem:[%s5 + $0x300] sm:$0xff]
    %v1310 = vld [vmem:[%s5 + $0x308] sm:$0xff]
    %v1311 = vld [vmem:[%s5 + $0x310] sm:$0xff]
    %v1312 = vld [vmem:[%s5 + $0x318] sm:$0xff]
    %v1313 = vld [vmem:[%s5 + $0x320] sm:$0xff]
    %v1314 = vld [vmem:[%s5 + $0x328] sm:$0xff]
    %v1315 = vld [vmem:[%s5 + $0x330] sm:$0xff]
    %v1316 = vld [vmem:[%s5 + $0x338] sm:$0xff]
    %v1317 = vld [vmem:[%s5 + $0x340] sm:$0xff]
    %v1318 = vld [vmem:[%s5 + $0x348] sm:$0xff]
    %v1319 = vld [vmem:[%s5 + $0x350] sm:$0xff]
    %v1320 = vld [vmem:[%s5 + $0x358] sm:$0xff]
    %v1321 = vld [vmem:[%s5 + $0x360] sm:$0xff]
    %v1322 = vld [vmem:[%s5 + $0x368] sm:$0xff]
    %v1323 = vld [vmem:[%s5 + $0x370] sm:$0xff]
    %v1324 = vld [vmem:[%s5 + $0x378] sm:$0xff]
    %v1325 = vld [vmem:[%s5 + $0x380] sm:$0xff]
    %v1326 = vld [vmem:[%s5 + $0x388] sm:$0xff]
    %v1327 = vld [vmem:[%s5 + $0x390] sm:$0xff]
    %v1328 = vld [vmem:[%s5 + $0x398] sm:$0xff]
    %v1329 = vld [vmem:[%s5 + $0x3a0] sm:$0xff]
    %v1330 = vld [vmem:[%s5 + $0x3a8] sm:$0xff]
    %v1331 = vld [vmem:[%s5 + $0x3b0] sm:$0xff]
    %v1332 = vld [vmem:[%s5 + $0x3b8] sm:$0xff]
    %v1333 = vld [vmem:[%s5 + $0x3c0] sm:$0xff]
    %v1334 = vld [vmem:[%s5 + $0x3c8] sm:$0xff]
    %v1335 = vld [vmem:[%s5 + $0x3d0] sm:$0xff]
    %v1336 = vld [vmem:[%s5 + $0x3d8] sm:$0xff]
    %v1337 = vld [vmem:[%s5 + $0x3e0] sm:$0xff]
    %v1338 = vld [vmem:[%s5 + $0x3e8] sm:$0xff]
    %v1339 = vld [vmem:[%s5 + $0x3f0] sm:$0xff]
    %v1340 = vld [vmem:[%s5 + $0x3f8] sm:$0xff]
    %v1341 = vld [vmem:[%s5 + $0x400] sm:$0xff]
    %v1342 = vld [vmem:[%s5 + $0x408] sm:$0xff]
    %v1343 = vld [vmem:[%s5 + $0x410] sm:$0xff]
    %v1344 = vld [vmem:[%s5 + $0x418] sm:$0xff]
    %v1345 = vld [vmem:[%s5 + $0x420] sm:$0xff]
    %v1346 = vld [vmem:[%s5 + $0x428] sm:$0xff]
    %v1347 = vld [vmem:[%s5 + $0x430] sm:$0xff]
    %v1348 = vld [vmem:[%s5 + $0x438] sm:$0xff]
    %v1349 = vld [vmem:[%s5 + $0x440] sm:$0xff]
    %v1350 = vld [vmem:[%s5 + $0x448] sm:$0xff]
    %v1351 = vld [vmem:[%s5 + $0x450] sm:$0xff]
    %v1352 = vld [vmem:[%s5 + $0x458] sm:$0xff]
    %v1353 = vld [vmem:[%s5 + $0x460] sm:$0xff]
    %v1354 = vld [vmem:[%s5 + $0x468] sm:$0xff]
    %v1355 = vld [vmem:[%s5 + $0x470] sm:$0xff]
    %v1356 = vld [vmem:[%s5 + $0x478] sm:$0xff]
    %v1357 = vld [vmem:[%s5 + $0x480] sm:$0xff]
    %v1358 = vld [vmem:[%s5 + $0x488] sm:$0xff]
    %v1359 = vld [vmem:[%s5 + $0x490] sm:$0xff]
    %v1360 = vld [vmem:[%s5 + $0x498] sm:$0xff]
    %v1361 = vld [vmem:[%s5 + $0x4a0] sm:$0xff]
    %v1362 = vld [vmem:[%s5 + $0x4a8] sm:$0xff]
    %v1363 = vld [vmem:[%s5 + $0x4b0] sm:$0xff]
    %v1364 = vld [vmem:[%s5 + $0x4b8] sm:$0xff]
    %v1365 = vld [vmem:[%s5 + $0x4c0] sm:$0xff]
    %v1366 = vld [vmem:[%s5 + $0x4c8] sm:$0xff]
    %v1367 = vld [vmem:[%s5 + $0x4d0] sm:$0xff]
    %v1368 = vld [vmem:[%s5 + $0x4d8] sm:$0xff]
    %v1369 = vld [vmem:[%s5 + $0x4e0] sm:$0xff]
    %v1370 = vld [vmem:[%s5 + $0x4e8] sm:$0xff]
    %v1371 = vld [vmem:[%s5 + $0x4f0] sm:$0xff]
    %v1372 = vld [vmem:[%s5 + $0x4f8] sm:$0xff]
    %v1373 = vld [vmem:[%s5 + $0x500] sm:$0xff]
    %v1374 = vld [vmem:[%s5 + $0x508] sm:$0xff]
    %v1375 = vld [vmem:[%s5 + $0x510] sm:$0xff]
    %v1376 = vld [vmem:[%s5 + $0x518] sm:$0xff]
    %v1377 = vld [vmem:[%s5 + $0x520] sm:$0xff]
    %v1378 = vld [vmem:[%s5 + $0x528] sm:$0xff]
    %v1379 = vld [vmem:[%s5 + $0x530] sm:$0xff]
    %v1380 = vld [vmem:[%s5 + $0x538] sm:$0xff]
    %v1381 = vld [vmem:[%s5 + $0x540] sm:$0xff]
    %v1382 = vld [vmem:[%s5 + $0x548] sm:$0xff]
    %v1383 = vld [vmem:[%s5 + $0x550] sm:$0xff]
    %v1384 = vld [vmem:[%s5 + $0x558] sm:$0xff]
    %v1385 = vld [vmem:[%s5 + $0x560] sm:$0xff]
    %v1386 = vld [vmem:[%s5 + $0x568] sm:$0xff]
    %v1387 = vld [vmem:[%s5 + $0x570] sm:$0xff]
    %v1388 = vld [vmem:[%s5 + $0x578] sm:$0xff]
    %v1389 = vld [vmem:[%s5 + $0x580] sm:$0xff]
    %v1390 = vld [vmem:[%s5 + $0x588] sm:$0xff]
    %v1391 = vld [vmem:[%s5 + $0x590] sm:$0xff]
    %v1392 = vld [vmem:[%s5 + $0x598] sm:$0xff]
    %v1393 = vld [vmem:[%s5 + $0x5a0] sm:$0xff]
    %v1394 = vld [vmem:[%s5 + $0x5a8] sm:$0xff]
    %v1395 = vld [vmem:[%s5 + $0x5b0] sm:$0xff]
    %v1396 = vld [vmem:[%s5 + $0x5b8] sm:$0xff]
    %v1397 = vld [vmem:[%s5 + $0x5c0] sm:$0xff]
    %v1398 = vld [vmem:[%s5 + $0x5c8] sm:$0xff]
    %v1399 = vld [vmem:[%s5 + $0x5d0] sm:$0xff]
    %v1400 = vld [vmem:[%s5 + $0x5d8] sm:$0xff]
    %v1401 = vld [vmem:[%s5 + $0x5e0] sm:$0xff]
    %v1402 = vld [vmem:[%s5 + $0x5e8] sm:$0xff]
    %v1403 = vld [vmem:[%s5 + $0x5f0] sm:$0xff]
    %v1404 = vld [vmem:[%s5 + $0x5f8] sm:$0xff]
    %v1405 = vld [vmem:[%s5 + $0x600] sm:$0xff]
    %v1406 = vld [vmem:[%s5 + $0x608] sm:$0xff]
    %v1407 = vld [vmem:[%s5 + $0x610] sm:$0xff]
    %v1408 = vld [vmem:[%s5 + $0x618] sm:$0xff]
    %v1409 = vld [vmem:[%s5 + $0x620] sm:$0xff]
    %v1410 = vld [vmem:[%s5 + $0x628] sm:$0xff]
    %v1411 = vld [vmem:[%s5 + $0x630] sm:$0xff]
    %v1412 = vld [vmem:[%s5 + $0x638] sm:$0xff]
    %v1413 = vld [vmem:[%s5 + $0x640] sm:$0xff]
    %v1414 = vld [vmem:[%s5 + $0x648] sm:$0xff]
    %v1415 = vld [vmem:[%s5 + $0x650] sm:$0xff]
    %v1416 = vld [vmem:[%s5 + $0x658] sm:$0xff]
    %v1417 = vld [vmem:[%s5 + $0x660] sm:$0xff]
    %v1418 = vld [vmem:[%s5 + $0x668] sm:$0xff]
    %v1419 = vld [vmem:[%s5 + $0x670] sm:$0xff]
    %v1420 = vld [vmem:[%s5 + $0x678] sm:$0xff]
    %v1421 = vld [vmem:[%s5 + $0x680] sm:$0xff]
    %v1422 = vld [vmem:[%s5 + $0x688] sm:$0xff]
    %v1423 = vld [vmem:[%s5 + $0x690] sm:$0xff]
    %v1424 = vld [vmem:[%s5 + $0x698] sm:$0xff]
    %v1425 = vld [vmem:[%s5 + $0x6a0] sm:$0xff]
    %v1426 = vld [vmem:[%s5 + $0x6a8] sm:$0xff]
    %v1427 = vld [vmem:[%s5 + $0x6b0] sm:$0xff]
    %v1428 = vld [vmem:[%s5 + $0x6b8] sm:$0xff]
    %v1429 = vld [vmem:[%s5 + $0x6c0] sm:$0xff]
    %v1430 = vld [vmem:[%s5 + $0x6c8] sm:$0xff]
    %v1431 = vld [vmem:[%s5 + $0x6d0] sm:$0xff]
    %v1432 = vld [vmem:[%s5 + $0x6d8] sm:$0xff]
    %v1433 = vld [vmem:[%s5 + $0x6e0] sm:$0xff]
    %v1434 = vld [vmem:[%s5 + $0x6e8] sm:$0xff]
    %v1435 = vld [vmem:[%s5 + $0x6f0] sm:$0xff]
    %v1436 = vld [vmem:[%s5 + $0x6f8] sm:$0xff]
    %v1437 = vld [vmem:[%s5 + $0x700] sm:$0xff]
    %v1438 = vld [vmem:[%s5 + $0x708] sm:$0xff]
    %v1439 = vld [vmem:[%s5 + $0x710] sm:$0xff]
    %v1440 = vld [vmem:[%s5 + $0x718] sm:$0xff]
    %v1441 = vld [vmem:[%s5 + $0x720] sm:$0xff]
    %v1442 = vld [vmem:[%s5 + $0x728] sm:$0xff]
    %v1443 = vld [vmem:[%s5 + $0x730] sm:$0xff]
    %v1444 = vld [vmem:[%s5 + $0x738] sm:$0xff]
    %v1445 = vld [vmem:[%s5 + $0x740] sm:$0xff]
    %v1446 = vld [vmem:[%s5 + $0x748] sm:$0xff]
    %v1447 = vld [vmem:[%s5 + $0x750] sm:$0xff]
    %v1448 = vld [vmem:[%s5 + $0x758] sm:$0xff]
    %v1449 = vld [vmem:[%s5 + $0x760] sm:$0xff]
    %v1450 = vld [vmem:[%s5 + $0x768] sm:$0xff]
    %v1451 = vld [vmem:[%s5 + $0x770] sm:$0xff]
    %v1452 = vld [vmem:[%s5 + $0x778] sm:$0xff]
    %v1453 = vld [vmem:[%s5 + $0x780] sm:$0xff]
    %v1454 = vld [vmem:[%s5 + $0x788] sm:$0xff]
    %v1455 = vld [vmem:[%s5 + $0x790] sm:$0xff]
    %v1456 = vld [vmem:[%s5 + $0x798] sm:$0xff]
    %v1457 = vld [vmem:[%s5 + $0x7a0] sm:$0xff]
    %v1458 = vld [vmem:[%s5 + $0x7a8] sm:$0xff]
    %v1459 = vld [vmem:[%s5 + $0x7b0] sm:$0xff]
    %v1460 = vld [vmem:[%s5 + $0x7b8] sm:$0xff]
    %v1461 = vld [vmem:[%s5 + $0x7c0] sm:$0xff]
    %v1462 = vld [vmem:[%s5 + $0x7c8] sm:$0xff]
    %v1463 = vld [vmem:[%s5 + $0x7d0] sm:$0xff]
    %v1464 = vld [vmem:[%s5 + $0x7d8] sm:$0xff]
    %v1465 = vld [vmem:[%s5 + $0x7e0] sm:$0xff]
    %v1466 = vld [vmem:[%s5 + $0x7e8] sm:$0xff]
    %v1467 = vld [vmem:[%s5 + $0x7f0] sm:$0xff]
    %v1468 = vld [vmem:[%s5 + $0x7f8] sm:$0xff]
    %v1469 = vld [vmem:[%s5 + $0x800] sm:$0xff]
    %v1470 = vld [vmem:[%s5 + $0x808] sm:$0xff]
    %v1471 = vld [vmem:[%s5 + $0x810] sm:$0xff]
    %v1472 = vld [vmem:[%s5 + $0x818] sm:$0xff]
    %v1473 = vld [vmem:[%s5 + $0x820] sm:$0xff]
    %v1474 = vld [vmem:[%s5 + $0x828] sm:$0xff]
    %v1475 = vld [vmem:[%s5 + $0x830] sm:$0xff]
    %v1476 = vld [vmem:[%s5 + $0x838] sm:$0xff]
    %v1477 = vld [vmem:[%s5 + $0x840] sm:$0xff]
    %v1478 = vld [vmem:[%s5 + $0x848] sm:$0xff]
    %v1479 = vld [vmem:[%s5 + $0x850] sm:$0xff]
    %v1480 = vld [vmem:[%s5 + $0x858] sm:$0xff]
    %v1481 = vld [vmem:[%s5 + $0x860] sm:$0xff]
    %v1482 = vld [vmem:[%s5 + $0x868] sm:$0xff]
    %v1483 = vld [vmem:[%s5 + $0x870] sm:$0xff]
    %v1484 = vld [vmem:[%s5 + $0x878] sm:$0xff]
    %v1485 = vld [vmem:[%s5 + $0x880] sm:$0xff]
    %v1486 = vld [vmem:[%s5 + $0x888] sm:$0xff]
    %v1487 = vld [vmem:[%s5 + $0x890] sm:$0xff]
    %v1488 = vld [vmem:[%s5 + $0x898] sm:$0xff]
    %v1489 = vld [vmem:[%s5 + $0x8a0] sm:$0xff]
    %v1490 = vld [vmem:[%s5 + $0x8a8] sm:$0xff]
    %v1491 = vld [vmem:[%s5 + $0x8b0] sm:$0xff]
    %v1492 = vld [vmem:[%s5 + $0x8b8] sm:$0xff]
    %v1493 = vld [vmem:[%s5 + $0x8c0] sm:$0xff]
    %v1494 = vld [vmem:[%s5 + $0x8c8] sm:$0xff]
    %v1495 = vld [vmem:[%s5 + $0x8d0] sm:$0xff]
    %v1496 = vld [vmem:[%s5 + $0x8d8] sm:$0xff]
    %v1497 = vld [vmem:[%s5 + $0x8e0] sm:$0xff]
    %v1498 = vld [vmem:[%s5 + $0x8e8] sm:$0xff]
    %v1499 = vld [vmem:[%s5 + $0x8f0] sm:$0xff]
    %v1500 = vld [vmem:[%s5 + $0x8f8] sm:$0xff]
    %v1501 = vld [vmem:[%s5 + $0x900] sm:$0xff]
    %v1502 = vld [vmem:[%s5 + $0x908] sm:$0xff]
    %v1503 = vld [vmem:[%s5 + $0x910] sm:$0xff]
    %v1504 = vld [vmem:[%s5 + $0x918] sm:$0xff]
    %v1505 = vld [vmem:[%s5 + $0x920] sm:$0xff]
    %v1506 = vld [vmem:[%s5 + $0x928] sm:$0xff]
    %v1507 = vld [vmem:[%s5 + $0x930] sm:$0xff]
    %v1508 = vld [vmem:[%s5 + $0x938] sm:$0xff]
    %v1509 = vld [vmem:[%s5 + $0x940] sm:$0xff]
    %v1510 = vld [vmem:[%s5 + $0x948] sm:$0xff]
    %v1511 = vld [vmem:[%s5 + $0x950] sm:$0xff]
    %v1512 = vld [vmem:[%s5 + $0x958] sm:$0xff]
    %v1513 = vld [vmem:[%s5 + $0x960] sm:$0xff]
    %v1514 = vld [vmem:[%s5 + $0x968] sm:$0xff]
    %v1515 = vld [vmem:[%s5 + $0x970] sm:$0xff]
    %v1516 = vld [vmem:[%s5 + $0x978] sm:$0xff]
    %v1517 = vld [vmem:[%s5 + $0x980] sm:$0xff]
    %v1518 = vld [vmem:[%s5 + $0x988] sm:$0xff]
    %v1519 = vld [vmem:[%s5 + $0x990] sm:$0xff]
    %v1520 = vld [vmem:[%s5 + $0x998] sm:$0xff]
    %v1521 = vld [vmem:[%s5 + $0x9a0] sm:$0xff]
    %v1522 = vld [vmem:[%s5 + $0x9a8] sm:$0xff]
    %v1523 = vld [vmem:[%s5 + $0x9b0] sm:$0xff]
    %v1524 = vld [vmem:[%s5 + $0x9b8] sm:$0xff]
    %v1525 = vld [vmem:[%s5 + $0x9c0] sm:$0xff]
    %v1526 = vld [vmem:[%s5 + $0x9c8] sm:$0xff]
    %v1527 = vld [vmem:[%s5 + $0x9d0] sm:$0xff]
    %v1528 = vld [vmem:[%s5 + $0x9d8] sm:$0xff]
    %v1529 = vld [vmem:[%s5 + $0x9e0] sm:$0xff]
    %v1530 = vld [vmem:[%s5 + $0x9e8] sm:$0xff]
    %v1531 = vld [vmem:[%s5 + $0x9f0] sm:$0xff]
    %v1532 = vld [vmem:[%s5 + $0x9f8] sm:$0xff]
    %v1533 = vld [vmem:[%s5 + $0xa00] sm:$0xff]
    %v1534 = vld [vmem:[%s5 + $0xa08] sm:$0xff]
    %v1535 = vld [vmem:[%s5 + $0xa10] sm:$0xff]
    %v1536 = vld [vmem:[%s5 + $0xa18] sm:$0xff]
    %v1537 = vld [vmem:[%s5 + $0xa20] sm:$0xff]
    %v1538 = vld [vmem:[%s5 + $0xa28] sm:$0xff]
    %v1539 = vld [vmem:[%s5 + $0xa30] sm:$0xff]
    %v1540 = vld [vmem:[%s5 + $0xa38] sm:$0xff]
    %v1541 = vld [vmem:[%s5 + $0xa40] sm:$0xff]
    %v1542 = vld [vmem:[%s5 + $0xa48] sm:$0xff]
    %v1543 = vld [vmem:[%s5 + $0xa50] sm:$0xff]
    %v1544 = vld [vmem:[%s5 + $0xa58] sm:$0xff]
    %v1545 = vld [vmem:[%s5 + $0xa60] sm:$0xff]
    %v1546 = vld [vmem:[%s5 + $0xa68] sm:$0xff]
    %v1547 = vld [vmem:[%s5 + $0xa70] sm:$0xff]
    %v1548 = vld [vmem:[%s5 + $0xa78] sm:$0xff]
    %v1549 = vld [vmem:[%s5 + $0xa80] sm:$0xff]
    %v1550 = vld [vmem:[%s5 + $0xa88] sm:$0xff]
    %v1551 = vld [vmem:[%s5 + $0xa90] sm:$0xff]
    %v1552 = vld [vmem:[%s5 + $0xa98] sm:$0xff]
    %v1553 = vld [vmem:[%s5 + $0xaa0] sm:$0xff]
    %v1554 = vld [vmem:[%s5 + $0xaa8] sm:$0xff]
    %v1555 = vld [vmem:[%s5 + $0xab0] sm:$0xff]
    %v1556 = vld [vmem:[%s5 + $0xab8] sm:$0xff]
    %v1557 = vld [vmem:[%s5 + $0xac0] sm:$0xff]
    %v1558 = vld [vmem:[%s5 + $0xac8] sm:$0xff]
    %v1559 = vld [vmem:[%s5 + $0xad0] sm:$0xff]
    %v1560 = vld [vmem:[%s5 + $0xad8] sm:$0xff]
    %v1561 = vld [vmem:[%s5 + $0xae0] sm:$0xff]
    %v1562 = vld [vmem:[%s5 + $0xae8] sm:$0xff]
    %v1563 = vld [vmem:[%s5 + $0xaf0] sm:$0xff]
    %v1564 = vld [vmem:[%s5 + $0xaf8] sm:$0xff]
    %v1565 = vld [vmem:[%s5 + $0xb00] sm:$0xff]
    %v1566 = vld [vmem:[%s5 + $0xb08] sm:$0xff]
    %v1567 = vld [vmem:[%s5 + $0xb10] sm:$0xff]
    %v1568 = vld [vmem:[%s5 + $0xb18] sm:$0xff]
    %v1569 = vld [vmem:[%s5 + $0xb20] sm:$0xff]
    %v1570 = vld [vmem:[%s5 + $0xb28] sm:$0xff]
    %v1571 = vld [vmem:[%s5 + $0xb30] sm:$0xff]
    %v1572 = vld [vmem:[%s5 + $0xb38] sm:$0xff]
    %v1573 = vld [vmem:[%s5 + $0xb40] sm:$0xff]
    %v1574 = vld [vmem:[%s5 + $0xb48] sm:$0xff]
    %v1575 = vld [vmem:[%s5 + $0xb50] sm:$0xff]
    %v1576 = vld [vmem:[%s5 + $0xb58] sm:$0xff]
    %v1577 = vld [vmem:[%s5 + $0xb60] sm:$0xff]
    %v1578 = vld [vmem:[%s5 + $0xb68] sm:$0xff]
    %v1579 = vld [vmem:[%s5 + $0xb70] sm:$0xff]
    %v1580 = vld [vmem:[%s5 + $0xb78] sm:$0xff]
    %v1581 = vld [vmem:[%s5 + $0xb80] sm:$0xff]
    %v1582 = vld [vmem:[%s5 + $0xb88] sm:$0xff]
    %v1583 = vld [vmem:[%s5 + $0xb90] sm:$0xff]
    %v1584 = vld [vmem:[%s5 + $0xb98] sm:$0xff]
    %v1585 = vld [vmem:[%s5 + $0xba0] sm:$0xff]
    %v1586 = vld [vmem:[%s5 + $0xba8] sm:$0xff]
    %v1587 = vld [vmem:[%s5 + $0xbb0] sm:$0xff]
    %v1588 = vld [vmem:[%s5 + $0xbb8] sm:$0xff]
    %v1589 = vld [vmem:[%s5 + $0xbc0] sm:$0xff]
    %v1590 = vld [vmem:[%s5 + $0xbc8] sm:$0xff]
    %v1591 = vld [vmem:[%s5 + $0xbd0] sm:$0xff]
    %v1592 = vld [vmem:[%s5 + $0xbd8] sm:$0xff]
    %v1593 = vld [vmem:[%s5 + $0xbe0] sm:$0xff]
    %v1594 = vld [vmem:[%s5 + $0xbe8] sm:$0xff]
    %v1595 = vld [vmem:[%s5 + $0xbf0] sm:$0xff]
    %v1596 = vld [vmem:[%s5 + $0xbf8] sm:$0xff]
    %v1597 = vld [vmem:[%s5 + $0xc00] sm:$0xff]
    %v1598 = vld [vmem:[%s5 + $0xc08] sm:$0xff]
    %v1599 = vld [vmem:[%s5 + $0xc10] sm:$0xff]
    %v1600 = vld [vmem:[%s5 + $0xc18] sm:$0xff]
    %v1601 = vld [vmem:[%s5 + $0xc20] sm:$0xff]
    %v1602 = vld [vmem:[%s5 + $0xc28] sm:$0xff]
    %v1603 = vld [vmem:[%s5 + $0xc30] sm:$0xff]
    %v1604 = vld [vmem:[%s5 + $0xc38] sm:$0xff]
    %v1605 = vld [vmem:[%s5 + $0xc40] sm:$0xff]
    %v1606 = vld [vmem:[%s5 + $0xc48] sm:$0xff]
    %v1607 = vld [vmem:[%s5 + $0xc50] sm:$0xff]
    %v1608 = vld [vmem:[%s5 + $0xc58] sm:$0xff]
    %v1609 = vld [vmem:[%s5 + $0xc60] sm:$0xff]
    %v1610 = vld [vmem:[%s5 + $0xc68] sm:$0xff]
    %v1611 = vld [vmem:[%s5 + $0xc70] sm:$0xff]
    %v1612 = vld [vmem:[%s5 + $0xc78] sm:$0xff]
    %v1613 = vld [vmem:[%s5 + $0xc80] sm:$0xff]
    %v1614 = vld [vmem:[%s5 + $0xc88] sm:$0xff]
    %v1615 = vld [vmem:[%s5 + $0xc90] sm:$0xff]
    %v1616 = vld [vmem:[%s5 + $0xc98] sm:$0xff]
    %v1617 = vld [vmem:[%s5 + $0xca0] sm:$0xff]
    %v1618 = vld [vmem:[%s5 + $0xca8] sm:$0xff]
    %v1619 = vld [vmem:[%s5 + $0xcb0] sm:$0xff]
    %v1620 = vld [vmem:[%s5 + $0xcb8] sm:$0xff]
    %v1621 = vld [vmem:[%s5 + $0xcc0] sm:$0xff]
    %v1622 = vld [vmem:[%s5 + $0xcc8] sm:$0xff]
    %v1623 = vld [vmem:[%s5 + $0xcd0] sm:$0xff]
    %v1624 = vld [vmem:[%s5 + $0xcd8] sm:$0xff]
    %v1625 = vld [vmem:[%s5 + $0xce0] sm:$0xff]
    %v1626 = vld [vmem:[%s5 + $0xce8] sm:$0xff]
    %v1627 = vld [vmem:[%s5 + $0xcf0] sm:$0xff]
    %v1628 = vld [vmem:[%s5 + $0xcf8] sm:$0xff]
    %v1629 = vld [vmem:[%s5 + $0xd00] sm:$0xff]
    %v1630 = vld [vmem:[%s5 + $0xd08] sm:$0xff]
    %v1631 = vld [vmem:[%s5 + $0xd10] sm:$0xff]
    %v1632 = vld [vmem:[%s5 + $0xd18] sm:$0xff]
    %v1633 = vld [vmem:[%s5 + $0xd20] sm:$0xff]
    %v1634 = vld [vmem:[%s5 + $0xd28] sm:$0xff]
    %v1635 = vld [vmem:[%s5 + $0xd30] sm:$0xff]
    %v1636 = vld [vmem:[%s5 + $0xd38] sm:$0xff]
    %v1637 = vld [vmem:[%s5 + $0xd40] sm:$0xff]
    %v1638 = vld [vmem:[%s5 + $0xd48] sm:$0xff]
    %v1639 = vld [vmem:[%s5 + $0xd50] sm:$0xff]
    %v1640 = vld [vmem:[%s5 + $0xd58] sm:$0xff]
    %v1641 = vld [vmem:[%s5 + $0xd60] sm:$0xff]
    %v1642 = vld [vmem:[%s5 + $0xd68] sm:$0xff]
    %v1643 = vld [vmem:[%s5 + $0xd70] sm:$0xff]
    %v1644 = vld [vmem:[%s5 + $0xd78] sm:$0xff]
    %v1645 = vld [vmem:[%s5 + $0xd80] sm:$0xff]
    %v1646 = vld [vmem:[%s5 + $0xd88] sm:$0xff]
    %v1647 = vld [vmem:[%s5 + $0xd90] sm:$0xff]
    %v1648 = vld [vmem:[%s5 + $0xd98] sm:$0xff]
    %v1649 = vld [vmem:[%s5 + $0xda0] sm:$0xff]
    %v1650 = vld [vmem:[%s5 + $0xda8] sm:$0xff]
    %v1651 = vld [vmem:[%s5 + $0xdb0] sm:$0xff]
    %v1652 = vld [vmem:[%s5 + $0xdb8] sm:$0xff]
    %v1653 = vld [vmem:[%s5 + $0xdc0] sm:$0xff]
    %v1654 = vld [vmem:[%s5 + $0xdc8] sm:$0xff]
    %v1655 = vld [vmem:[%s5 + $0xdd0] sm:$0xff]
    %v1656 = vld [vmem:[%s5 + $0xdd8] sm:$0xff]
    %v1657 = vld [vmem:[%s5 + $0xde0] sm:$0xff]
    %v1658 = vld [vmem:[%s5 + $0xde8] sm:$0xff]
    %v1659 = vld [vmem:[%s5 + $0xdf0] sm:$0xff]
    %v1660 = vld [vmem:[%s5 + $0xdf8] sm:$0xff]
    %v1661 = vld [vmem:[%s5 + $0xe00] sm:$0xff]
    %v1662 = vld [vmem:[%s5 + $0xe08] sm:$0xff]
    %v1663 = vld [vmem:[%s5 + $0xe10] sm:$0xff]
    %v1664 = vld [vmem:[%s5 + $0xe18] sm:$0xff]
    %v1665 = vld [vmem:[%s5 + $0xe20] sm:$0xff]
    %v1666 = vld [vmem:[%s5 + $0xe28] sm:$0xff]
    %v1667 = vld [vmem:[%s5 + $0xe30] sm:$0xff]
    %v1668 = vld [vmem:[%s5 + $0xe38] sm:$0xff]
    %v1669 = vld [vmem:[%s5 + $0xe40] sm:$0xff]
    %v1670 = vld [vmem:[%s5 + $0xe48] sm:$0xff]
    %v1671 = vld [vmem:[%s5 + $0xe50] sm:$0xff]
    %v1672 = vld [vmem:[%s5 + $0xe58] sm:$0xff]
    %v1673 = vld [vmem:[%s5 + $0xe60] sm:$0xff]
    %v1674 = vld [vmem:[%s5 + $0xe68] sm:$0xff]
    %v1675 = vld [vmem:[%s5 + $0xe70] sm:$0xff]
    %v1676 = vld [vmem:[%s5 + $0xe78] sm:$0xff]
    %v1677 = vld [vmem:[%s5 + $0xe80] sm:$0xff]
    %v1678 = vld [vmem:[%s5 + $0xe88] sm:$0xff]
    %v1679 = vld [vmem:[%s5 + $0xe90] sm:$0xff]
    %v1680 = vld [vmem:[%s5 + $0xe98] sm:$0xff]
    %v1681 = vld [vmem:[%s5 + $0xea0] sm:$0xff]
    %v1682 = vld [vmem:[%s5 + $0xea8] sm:$0xff]
    %v1683 = vld [vmem:[%s5 + $0xeb0] sm:$0xff]
    %v1684 = vld [vmem:[%s5 + $0xeb8] sm:$0xff]
    %v1685 = vld [vmem:[%s5 + $0xec0] sm:$0xff]
    %v1686 = vld [vmem:[%s5 + $0xec8] sm:$0xff]
    %v1687 = vld [vmem:[%s5 + $0xed0] sm:$0xff]
    %v1688 = vld [vmem:[%s5 + $0xed8] sm:$0xff]
    %v1689 = vld [vmem:[%s5 + $0xee0] sm:$0xff]
    %v1690 = vld [vmem:[%s5 + $0xee8] sm:$0xff]
    %v1691 = vld [vmem:[%s5 + $0xef0] sm:$0xff]
    %v1692 = vld [vmem:[%s5 + $0xef8] sm:$0xff]
    %v1693 = vld [vmem:[%s5 + $0xf00] sm:$0xff]
    %v1694 = vld [vmem:[%s5 + $0xf08] sm:$0xff]
    %v1695 = vld [vmem:[%s5 + $0xf10] sm:$0xff]
    %v1696 = vld [vmem:[%s5 + $0xf18] sm:$0xff]
    %v1697 = vld [vmem:[%s5 + $0xf20] sm:$0xff]
    %v1698 = vld [vmem:[%s5 + $0xf28] sm:$0xff]
    %v1699 = vld [vmem:[%s5 + $0xf30] sm:$0xff]
    %v1700 = vld [vmem:[%s5 + $0xf38] sm:$0xff]
    %v1701 = vld [vmem:[%s5 + $0xf40] sm:$0xff]
    %v1702 = vld [vmem:[%s5 + $0xf48] sm:$0xff]
    %v1703 = vld [vmem:[%s5 + $0xf50] sm:$0xff]
    %v1704 = vld [vmem:[%s5 + $0xf58] sm:$0xff]
    %v1705 = vld [vmem:[%s5 + $0xf60] sm:$0xff]
    %v1706 = vld [vmem:[%s5 + $0xf68] sm:$0xff]
    %v1707 = vld [vmem:[%s5 + $0xf70] sm:$0xff]
    %v1708 = vld [vmem:[%s5 + $0xf78] sm:$0xff]
    %v1709 = vld [vmem:[%s5 + $0xf80] sm:$0xff]
    %v1710 = vld [vmem:[%s5 + $0xf88] sm:$0xff]
    %v1711 = vld [vmem:[%s5 + $0xf90] sm:$0xff]
    %v1712 = vld [vmem:[%s5 + $0xf98] sm:$0xff]
    %v1713 = vld [vmem:[%s5 + $0xfa0] sm:$0xff]
    %v1714 = vld [vmem:[%s5 + $0xfa8] sm:$0xff]
    %v1715 = vld [vmem:[%s5 + $0xfb0] sm:$0xff]
    %v1716 = vld [vmem:[%s5 + $0xfb8] sm:$0xff]
    %v1717 = vld [vmem:[%s5 + $0xfc0] sm:$0xff]
    %v1718 = vld [vmem:[%s5 + $0xfc8] sm:$0xff]
    %v1719 = vld [vmem:[%s5 + $0xfd0] sm:$0xff]
    %v1720 = vld [vmem:[%s5 + $0xfd8] sm:$0xff]
    %v1721 = vld [vmem:[%s5 + $0xfe0] sm:$0xff]
    %v1722 = vld [vmem:[%s5 + $0xfe8] sm:$0xff]
    %v1723 = vld [vmem:[%s5 + $0xff0] sm:$0xff]
    %v1724 = vld [vmem:[%s5 + $0xff8] sm:$0xff]
    %v1725 = vld [vmem:[%s5 + $0x1000] sm:$0xff]
    %v1726 = vld [vmem:[%s5 + $0x1008] sm:$0xff]
    %v1727 = vld [vmem:[%s5 + $0x1010] sm:$0xff]
    %v1728 = vld [vmem:[%s5 + $0x1018] sm:$0xff]
    %v1729 = vld [vmem:[%s5 + $0x1020] sm:$0xff]
    %v1730 = vld [vmem:[%s5 + $0x1028] sm:$0xff]
    %v1731 = vld [vmem:[%s5 + $0x1030] sm:$0xff]
    %v1732 = vld [vmem:[%s5 + $0x1038] sm:$0xff]
    %v1733 = vld [vmem:[%s5 + $0x1040] sm:$0xff]
    %v1734 = vld [vmem:[%s5 + $0x1048] sm:$0xff]
    %v1735 = vld [vmem:[%s5 + $0x1050] sm:$0xff]
    %v1736 = vld [vmem:[%s5 + $0x1058] sm:$0xff]
    %v1737 = vld [vmem:[%s5 + $0x1060] sm:$0xff]
    %v1738 = vld [vmem:[%s5 + $0x1068] sm:$0xff]
    %v1739 = vld [vmem:[%s5 + $0x1070] sm:$0xff]
    %v1740 = vld [vmem:[%s5 + $0x1078] sm:$0xff]
    %v1741 = vld [vmem:[%s5 + $0x1080] sm:$0xff]
    %v1742 = vld [vmem:[%s5 + $0x1088] sm:$0xff]
    %v1743 = vld [vmem:[%s5 + $0x1090] sm:$0xff]
    %v1744 = vld [vmem:[%s5 + $0x1098] sm:$0xff]
    %v1745 = vld [vmem:[%s5 + $0x10a0] sm:$0xff]
    %v1746 = vld [vmem:[%s5 + $0x10a8] sm:$0xff]
    %v1747 = vld [vmem:[%s5 + $0x10b0] sm:$0xff]
    %v1748 = vld [vmem:[%s5 + $0x10b8] sm:$0xff]
    %v1749 = vld [vmem:[%s5 + $0x10c0] sm:$0xff]
    %v1750 = vld [vmem:[%s5 + $0x10c8] sm:$0xff]
    %v1751 = vld [vmem:[%s5 + $0x10d0] sm:$0xff]
    %v1752 = vld [vmem:[%s5 + $0x10d8] sm:$0xff]
    %v1753 = vld [vmem:[%s5 + $0x10e0] sm:$0xff]
    %v1754 = vld [vmem:[%s5 + $0x10e8] sm:$0xff]
    %v1755 = vld [vmem:[%s5 + $0x10f0] sm:$0xff]
    %v1756 = vld [vmem:[%s5 + $0x10f8] sm:$0xff]
    %v1757 = vld [vmem:[%s5 + $0x1100] sm:$0xff]
    %v1758 = vld [vmem:[%s5 + $0x1108] sm:$0xff]
    %v1759 = vld [vmem:[%s5 + $0x1110] sm:$0xff]
    %v1760 = vld [vmem:[%s5 + $0x1118] sm:$0xff]
    %v1761 = vld [vmem:[%s5 + $0x1120] sm:$0xff]
    %v1762 = vld [vmem:[%s5 + $0x1128] sm:$0xff]
    %v1763 = vld [vmem:[%s5 + $0x1130] sm:$0xff]
    %v1764 = vld [vmem:[%s5 + $0x1138] sm:$0xff]
    %v1765 = vld [vmem:[%s5 + $0x1140] sm:$0xff]
    %v1766 = vld [vmem:[%s5 + $0x1148] sm:$0xff]
    %v1767 = vld [vmem:[%s5 + $0x1150] sm:$0xff]
    %v1768 = vld [vmem:[%s5 + $0x1158] sm:$0xff]
    %v1769 = vld [vmem:[%s5 + $0x1160] sm:$0xff]
    %v1770 = vld [vmem:[%s5 + $0x1168] sm:$0xff]
    %v1771 = vld [vmem:[%s5 + $0x1170] sm:$0xff]
    %v1772 = vld [vmem:[%s5 + $0x1178] sm:$0xff]
    %v1773 = vld [vmem:[%s5 + $0x1180] sm:$0xff]
    %v1774 = vld [vmem:[%s5 + $0x1188] sm:$0xff]
    %v1775 = vld [vmem:[%s5 + $0x1190] sm:$0xff]
    %v1776 = vld [vmem:[%s5 + $0x1198] sm:$0xff]
    %v1777 = vld [vmem:[%s5 + $0x11a0] sm:$0xff]
    %v1778 = vld [vmem:[%s5 + $0x11a8] sm:$0xff]
    %v1779 = vld [vmem:[%s5 + $0x11b0] sm:$0xff]
    %v1780 = vld [vmem:[%s5 + $0x11b8] sm:$0xff]
    %v1781 = vld [vmem:[%s5 + $0x11c0] sm:$0xff]
    %v1782 = vld [vmem:[%s5 + $0x11c8] sm:$0xff]
    %v1783 = vld [vmem:[%s5 + $0x11d0] sm:$0xff]
    %v1784 = vld [vmem:[%s5 + $0x11d8] sm:$0xff]
    %v1785 = vld [vmem:[%s5 + $0x11e0] sm:$0xff]
    %v1786 = vld [vmem:[%s5 + $0x11e8] sm:$0xff]
    %v1787 = vld [vmem:[%s5 + $0x11f0] sm:$0xff]
    %v1788 = vld [vmem:[%s5 + $0x11f8] sm:$0xff]
    %v1789 = vld [vmem:[%s5 + $0x1200] sm:$0xff]
    %v1790 = vld [vmem:[%s5 + $0x1208] sm:$0xff]
    %v1791 = vld [vmem:[%s5 + $0x1210] sm:$0xff]
    %v1792 = vld [vmem:[%s5 + $0x1218] sm:$0xff]
    %v1793 = vld [vmem:[%s5 + $0x1220] sm:$0xff]
    %v1794 = vld [vmem:[%s5 + $0x1228] sm:$0xff]
    %v1795 = vld [vmem:[%s5 + $0x1230] sm:$0xff]
    %v1796 = vld [vmem:[%s5 + $0x1238] sm:$0xff]
    %v1797 = vld [vmem:[%s5 + $0x1240] sm:$0xff]
    %v1798 = vld [vmem:[%s5 + $0x1248] sm:$0xff]
    %v1799 = vld [vmem:[%s5 + $0x1250] sm:$0xff]
    %v1800 = vld [vmem:[%s5 + $0x1258] sm:$0xff]
    %v1801 = vld [vmem:[%s5 + $0x1260] sm:$0xff]
    %v1802 = vld [vmem:[%s5 + $0x1268] sm:$0xff]
    %v1803 = vld [vmem:[%s5 + $0x1270] sm:$0xff]
    %v1804 = vld [vmem:[%s5 + $0x1278] sm:$0xff]
    %v1805 = vld [vmem:[%s5 + $0x1280] sm:$0xff]
    %v1806 = vld [vmem:[%s5 + $0x1288] sm:$0xff]
    %v1807 = vld [vmem:[%s5 + $0x1290] sm:$0xff]
    %v1808 = vld [vmem:[%s5 + $0x1298] sm:$0xff]
    %v1809 = vld [vmem:[%s5 + $0x12a0] sm:$0xff]
    %v1810 = vld [vmem:[%s5 + $0x12a8] sm:$0xff]
    %v1811 = vld [vmem:[%s5 + $0x12b0] sm:$0xff]
    %v1812 = vld [vmem:[%s5 + $0x12b8] sm:$0xff]
    %v1813 = vld [vmem:[%s5 + $0x12c0] sm:$0xff]
    %v1814 = vld [vmem:[%s5 + $0x12c8] sm:$0xff]
    %v1815 = vld [vmem:[%s5 + $0x12d0] sm:$0xff]
    %v1816 = vld [vmem:[%s5 + $0x12d8] sm:$0xff]
    %v1817 = vld [vmem:[%s5 + $0x12e0] sm:$0xff]
    %v1818 = vld [vmem:[%s5 + $0x12e8] sm:$0xff]
    %v1819 = vld [vmem:[%s5 + $0x12f0] sm:$0xff]
    %v1820 = vld [vmem:[%s5 + $0x12f8] sm:$0xff]
    %v1821 = vld [vmem:[%s5 + $0x1300] sm:$0xff]
    %v1822 = vld [vmem:[%s5 + $0x1308] sm:$0xff]
    %v1823 = vld [vmem:[%s5 + $0x1310] sm:$0xff]
    %v1824 = vld [vmem:[%s5 + $0x1318] sm:$0xff]
    %v1825 = vld [vmem:[%s5 + $0x1320] sm:$0xff]
    %v1826 = vld [vmem:[%s5 + $0x1328] sm:$0xff]
    %v1827 = vld [vmem:[%s5 + $0x1330] sm:$0xff]
    %v1828 = vld [vmem:[%s5 + $0x1338] sm:$0xff]
    %v1829 = vld [vmem:[%s5 + $0x1340] sm:$0xff]
    %v1830 = vld [vmem:[%s5 + $0x1348] sm:$0xff]
    %v1831 = vld [vmem:[%s5 + $0x1350] sm:$0xff]
    %v1832 = vld [vmem:[%s5 + $0x1358] sm:$0xff]
    %v1833 = vld [vmem:[%s5 + $0x1360] sm:$0xff]
    %v1834 = vld [vmem:[%s5 + $0x1368] sm:$0xff]
    %v1835 = vld [vmem:[%s5 + $0x1370] sm:$0xff]
    %v1836 = vld [vmem:[%s5 + $0x1378] sm:$0xff]
    %v1837 = vld [vmem:[%s5 + $0x1380] sm:$0xff]
    %v1838 = vld [vmem:[%s5 + $0x1388] sm:$0xff]
    %v1839 = vld [vmem:[%s5 + $0x1390] sm:$0xff]
    %v1840 = vld [vmem:[%s5 + $0x1398] sm:$0xff]
    %v1841 = vld [vmem:[%s5 + $0x13a0] sm:$0xff]
    %v1842 = vld [vmem:[%s5 + $0x13a8] sm:$0xff]
    %v1843 = vld [vmem:[%s5 + $0x13b0] sm:$0xff]
    %v1844 = vld [vmem:[%s5 + $0x13b8] sm:$0xff]
    %v1845 = vld [vmem:[%s5 + $0x13c0] sm:$0xff]
    %v1846 = vld [vmem:[%s5 + $0x13c8] sm:$0xff]
    %v1847 = vld [vmem:[%s5 + $0x13d0] sm:$0xff]
    %v1848 = vld [vmem:[%s5 + $0x13d8] sm:$0xff]
    %v1849 = vld [vmem:[%s5 + $0x13e0] sm:$0xff]
    %v1850 = vld [vmem:[%s5 + $0x13e8] sm:$0xff]
    %v1851 = vld [vmem:[%s5 + $0x13f0] sm:$0xff]
    %v1852 = vld [vmem:[%s5 + $0x13f8] sm:$0xff]
    %v1853 = vld [vmem:[%s5 + $0x1400] sm:$0xff]
    %v1854 = vld [vmem:[%s5 + $0x1408] sm:$0xff]
    %v1855 = vld [vmem:[%s5 + $0x1410] sm:$0xff]
    %v1856 = vld [vmem:[%s5 + $0x1418] sm:$0xff]
    %v1857 = vld [vmem:[%s5 + $0x1420] sm:$0xff]
    %v1858 = vld [vmem:[%s5 + $0x1428] sm:$0xff]
    %v1859 = vld [vmem:[%s5 + $0x1430] sm:$0xff]
    %v1860 = vld [vmem:[%s5 + $0x1438] sm:$0xff]
    %v1861 = vld [vmem:[%s5 + $0x1440] sm:$0xff]
    %v1862 = vld [vmem:[%s5 + $0x1448] sm:$0xff]
    %v1863 = vld [vmem:[%s5 + $0x1450] sm:$0xff]
    %v1864 = vld [vmem:[%s5 + $0x1458] sm:$0xff]
    %v1865 = vld [vmem:[%s5 + $0x1460] sm:$0xff]
    %v1866 = vld [vmem:[%s5 + $0x1468] sm:$0xff]
    %v1867 = vld [vmem:[%s5 + $0x1470] sm:$0xff]
    %v1868 = vld [vmem:[%s5 + $0x1478] sm:$0xff]
    %v1869 = vld [vmem:[%s5 + $0x1480] sm:$0xff]
    %v1870 = vld [vmem:[%s5 + $0x1488] sm:$0xff]
    %v1871 = vld [vmem:[%s5 + $0x1490] sm:$0xff]
    %v1872 = vld [vmem:[%s5 + $0x1498] sm:$0xff]
    %v1873 = vld [vmem:[%s5 + $0x14a0] sm:$0xff]
    %v1874 = vld [vmem:[%s5 + $0x14a8] sm:$0xff]
    %v1875 = vld [vmem:[%s5 + $0x14b0] sm:$0xff]
    %v1876 = vld [vmem:[%s5 + $0x14b8] sm:$0xff]
    %v1877 = vld [vmem:[%s5 + $0x14c0] sm:$0xff]
    %v1878 = vld [vmem:[%s5 + $0x14c8] sm:$0xff]
    %v1879 = vld [vmem:[%s5 + $0x14d0] sm:$0xff]
    %v1880 = vld [vmem:[%s5 + $0x14d8] sm:$0xff]
    %v1881 = vld [vmem:[%s5 + $0x14e0] sm:$0xff]
    %v1882 = vld [vmem:[%s5 + $0x14e8] sm:$0xff]
    %v1883 = vld [vmem:[%s5 + $0x14f0] sm:$0xff]
    %v1884 = vld [vmem:[%s5 + $0x14f8] sm:$0xff]
    %v1885 = vld [vmem:[%s5 + $0x1500] sm:$0xff]
    %v1886 = vld [vmem:[%s5 + $0x1508] sm:$0xff]
    %v1887 = vld [vmem:[%s5 + $0x1510] sm:$0xff]
    %v1888 = vld [vmem:[%s5 + $0x1518] sm:$0xff]
    %v1895 = vcombine.high %v1207, %v1207
    %v1896 = vcombine.high %v1208, %v1208
    %v1897 = vcombine.high %v1209, %v1209
    %v1898 = vcombine.high %v1210, %v1210
    %v1899 = vcombine.high %v1211, %v1211
    %vm1905 = vcmask 588800
    %v1906 = vsel %vm1905, %v1212, 0
    %1908 = vmatprep.subr.mxu0 %v1214
    %1909 = vmatpush1.msra.mxu0 %v1213
    %1910 = vmatprep.subr.mxu0 %v1218
    %1911 = vmatpush1.msra.mxu0 %v1217
    %1912 = vmatprep.subr.mxu0 %v1222
    %1913 = vmatpush1.msra.mxu0 %v1221
    %1914 = vmatprep.subr.mxu0 %v1226
    %1915 = vmatpush1.msra.mxu0 %v1225
    %1916 = vmatprep.subr.mxu0 %v1230
    %1917 = vmatpush1.msra.mxu0 %v1229
    %1918 = vmatprep.subr.mxu0 %v1234
    %1919 = vmatpush1.msra.mxu0 %v1233
    %1920 = vmatprep.subr.mxu0 %v1238
    %1921 = vmatpush1.msra.mxu0 %v1237
    %1922 = vmatprep.subr.mxu0 %v1242
    %1923 = vmatpush1.msra.mxu0 %v1241
    %1924 = vmatprep.subr.mxu0 %v1246
    %1925 = vmatpush1.msra.mxu0 %v1245
    %1926 = vmatprep.subr.mxu0 %v1250
    %1927 = vmatpush1.msra.mxu0 %v1249
    %1928 = vmatprep.subr.mxu0 %v1254
    %1929 = vmatpush1.msra.mxu0 %v1253
    %1930 = vmatprep.subr.mxu0 %v1258
    %1931 = vmatpush1.msra.mxu0 %v1257
    %1932 = vmatprep.subr.mxu0 %v1262
    %1933 = vmatpush1.msra.mxu0 %v1261
    %1934 = vmatprep.subr.mxu0 %v1266
    %1935 = vmatpush1.msra.mxu0 %v1265
    %1936 = vmatprep.subr.mxu0 %v1270
    %1937 = vmatpush1.msra.mxu0 %v1269
    %1938 = vmatprep.subr.mxu0 %v1274
    %1939 = vmatpush1.msra.mxu0 %v1273
    %1940 = vmatprep.subr.mxu0 %v1278
    %1941 = vmatpush1.msra.mxu0 %v1277
    %1942 = vmatprep.subr.mxu0 %v1282
    %1943 = vmatpush1.msra.mxu0 %v1281
    %1944 = vmatprep.subr.mxu0 %v1286
    %1945 = vmatpush1.msra.mxu0 %v1285
    %1946 = vmatprep.subr.mxu0 %v1290
    %1947 = vmatpush1.msra.mxu0 %v1289
    %1948 = vmatprep.subr.mxu0 %v1294
    %1949 = vmatpush1.msra.mxu0 %v1293
    %1950 = vmatprep.subr.mxu0 %v1298
    %1951 = vmatpush1.msra.mxu0 %v1297
    %1952 = vmatprep.subr.mxu0 %v1302
    %1953 = vmatpush1.msra.mxu0 %v1301
    %1954 = vmatprep.subr.mxu0 %v1306
    %1955 = vmatpush1.msra.mxu0 %v1305
    %1956 = vmatprep.subr.mxu0 %v1310
    %1957 = vmatpush1.msra.mxu0 %v1309
    %1958 = vmatprep.subr.mxu0 %v1314
    %1959 = vmatpush1.msra.mxu0 %v1313
    %1960 = vmatprep.subr.mxu0 %v1318
    %1961 = vmatpush1.msra.mxu0 %v1317
    %1962 = vmatprep.subr.mxu0 %v1322
    %1963 = vmatpush1.msra.mxu0 %v1321
    %1964 = vmatprep.subr.mxu0 %v1326
    %1965 = vmatpush1.msra.mxu0 %v1325
    %1966 = vmatprep.subr.mxu0 %v1330
    %1967 = vmatpush1.msra.mxu0 %v1329
    %1968 = vmatprep.subr.mxu0 %v1334
    %1969 = vmatpush1.msra.mxu0 %v1333
    %1970 = vmatprep.subr.mxu0 %v1338
    %1971 = vmatpush1.msra.mxu0 %v1337
    %1972 = vmatprep.mubr.f32.mxu0 %v1895
    %1973 = vmatmul.mubr.f32.gmra.mrb[0].mxu0 %v1207
    %v1974 = vpop.f32.mrb[0].mxu0
    %v1975 = vadd.f32 0.0, %v1974
    %v1976 = vpop.f32.mrb[0].mxu0
    %v1977 = vadd.f32 0.0, %v1976
    %1978 = vdwg.mxu0
    %1979 = vmatprep.subr.mxu0 %v1342
    %1980 = vmatpush1.msra.mxu0 %v1341
    %1981 = vmatprep.subr.mxu0 %v1346
    %1982 = vmatpush1.msra.mxu0 %v1345
    %1983 = vmatprep.subr.mxu0 %v1350
    %1984 = vmatpush1.msra.mxu0 %v1349
    %1985 = vmatprep.subr.mxu0 %v1354
    %1986 = vmatpush1.msra.mxu0 %v1353
    %1987 = vmatprep.subr.mxu0 %v1358
    %1988 = vmatpush1.msra.mxu0 %v1357
    %1989 = vmatprep.subr.mxu0 %v1362
    %1990 = vmatpush1.msra.mxu0 %v1361
    %1991 = vmatprep.subr.mxu0 %v1366
    %1992 = vmatpush1.msra.mxu0 %v1365
    %1993 = vmatprep.subr.mxu0 %v1370
    %1994 = vmatpush1.msra.mxu0 %v1369
    %1995 = vmatprep.subr.mxu0 %v1374
    %1996 = vmatpush1.msra.mxu0 %v1373
    %1997 = vmatprep.subr.mxu0 %v1378
    %1998 = vmatpush1.msra.mxu0 %v1377
    %1999 = vmatprep.subr.mxu0 %v1382
    %2000 = vmatpush1.msra.mxu0 %v1381
    %2001 = vmatprep.subr.mxu0 %v1386
    %2002 = vmatpush1.msra.mxu0 %v1385
    %2003 = vmatprep.subr.mxu0 %v1390
    %2004 = vmatpush1.msra.mxu0 %v1389
    %2005 = vmatprep.subr.mxu0 %v1394
    %2006 = vmatpush1.msra.mxu0 %v1393
    %2007 = vmatprep.subr.mxu0 %v1398
    %2008 = vmatpush1.msra.mxu0 %v1397
    %2009 = vmatprep.subr.mxu0 %v1402
    %2010 = vmatpush1.msra.mxu0 %v1401
    %2011 = vmatprep.subr.mxu0 %v1406
    %2012 = vmatpush1.msra.mxu0 %v1405
    %2013 = vmatprep.subr.mxu0 %v1410
    %2014 = vmatpush1.msra.mxu0 %v1409
    %2015 = vmatprep.subr.mxu0 %v1414
    %2016 = vmatpush1.msra.mxu0 %v1413
    %2017 = vmatprep.subr.mxu0 %v1418
    %2018 = vmatpush1.msra.mxu0 %v1417
    %2019 = vmatprep.subr.mxu0 %v1422
    %2020 = vmatpush1.msra.mxu0 %v1421
    %2021 = vmatprep.subr.mxu0 %v1426
    %2022 = vmatpush1.msra.mxu0 %v1425
    %2023 = vmatprep.subr.mxu0 %v1430
    %2024 = vmatpush1.msra.mxu0 %v1429
    %2025 = vmatprep.subr.mxu0 %v1434
    %2026 = vmatpush1.msra.mxu0 %v1433
    %2027 = vmatprep.subr.mxu0 %v1438
    %2028 = vmatpush1.msra.mxu0 %v1437
    %2029 = vmatprep.subr.mxu0 %v1442
    %2030 = vmatpush1.msra.mxu0 %v1441
    %2031 = vmatprep.subr.mxu0 %v1446
    %2032 = vmatpush1.msra.mxu0 %v1445
    %2033 = vmatprep.subr.mxu0 %v1450
    %2034 = vmatpush1.msra.mxu0 %v1449
    %2035 = vmatprep.subr.mxu0 %v1454
    %2036 = vmatpush1.msra.mxu0 %v1453
    %2037 = vmatprep.subr.mxu0 %v1458
    %2038 = vmatpush1.msra.mxu0 %v1457
    %2039 = vmatprep.subr.mxu0 %v1462
    %2040 = vmatpush1.msra.mxu0 %v1461
    %2041 = vmatprep.subr.mxu0 %v1466
    %2042 = vmatpush1.msra.mxu0 %v1465
    %2043 = vmatprep.mubr.f32.mxu0 %v1896
    %2044 = vmatmul.mubr.f32.gmra.mrb[0].mxu0 %v1208
    %v2045 = vpop.f32.mrb[0].mxu0
    %v2046 = vadd.f32 %v1975, %v2045
    %v2047 = vpop.f32.mrb[0].mxu0
    %v2048 = vadd.f32 %v1977, %v2047
    %2049 = vdwg.mxu0
    %2050 = vmatprep.subr.mxu0 %v1470
    %2051 = vmatpush1.msra.mxu0 %v1469
    %2052 = vmatprep.subr.mxu0 %v1474
    %2053 = vmatpush1.msra.mxu0 %v1473
    %2054 = vmatprep.subr.mxu0 %v1478
    %2055 = vmatpush1.msra.mxu0 %v1477
    %2056 = vmatprep.subr.mxu0 %v1482
    %2057 = vmatpush1.msra.mxu0 %v1481
    %2058 = vmatprep.subr.mxu0 %v1486
    %2059 = vmatpush1.msra.mxu0 %v1485
    %2060 = vmatprep.subr.mxu0 %v1490
    %2061 = vmatpush1.msra.mxu0 %v1489
    %2062 = vmatprep.subr.mxu0 %v1494
    %2063 = vmatpush1.msra.mxu0 %v1493
    %2064 = vmatprep.subr.mxu0 %v1498
    %2065 = vmatpush1.msra.mxu0 %v1497
    %2066 = vmatprep.subr.mxu0 %v1502
    %2067 = vmatpush1.msra.mxu0 %v1501
    %2068 = vmatprep.subr.mxu0 %v1506
    %2069 = vmatpush1.msra.mxu0 %v1505
    %2070 = vmatprep.subr.mxu0 %v1510
    %2071 = vmatpush1.msra.mxu0 %v1509
    %2072 = vmatprep.subr.mxu0 %v1514
    %2073 = vmatpush1.msra.mxu0 %v1513
    %2074 = vmatprep.subr.mxu0 %v1518
    %2075 = vmatpush1.msra.mxu0 %v1517
    %2076 = vmatprep.subr.mxu0 %v1522
    %2077 = vmatpush1.msra.mxu0 %v1521
    %2078 = vmatprep.subr.mxu0 %v1526
    %2079 = vmatpush1.msra.mxu0 %v1525
    %2080 = vmatprep.subr.mxu0 %v1530
    %2081 = vmatpush1.msra.mxu0 %v1529
    %2082 = vmatprep.subr.mxu0 %v1534
    %2083 = vmatpush1.msra.mxu0 %v1533
    %2084 = vmatprep.subr.mxu0 %v1538
    %2085 = vmatpush1.msra.mxu0 %v1537
    %2086 = vmatprep.subr.mxu0 %v1542
    %2087 = vmatpush1.msra.mxu0 %v1541
    %2088 = vmatprep.subr.mxu0 %v1546
    %2089 = vmatpush1.msra.mxu0 %v1545
    %2090 = vmatprep.subr.mxu0 %v1550
    %2091 = vmatpush1.msra.mxu0 %v1549
    %2092 = vmatprep.subr.mxu0 %v1554
    %2093 = vmatpush1.msra.mxu0 %v1553
    %2094 = vmatprep.subr.mxu0 %v1558
    %2095 = vmatpush1.msra.mxu0 %v1557
    %2096 = vmatprep.subr.mxu0 %v1562
    %2097 = vmatpush1.msra.mxu0 %v1561
    %2098 = vmatprep.subr.mxu0 %v1566
    %2099 = vmatpush1.msra.mxu0 %v1565
    %2100 = vmatprep.subr.mxu0 %v1570
    %2101 = vmatpush1.msra.mxu0 %v1569
    %2102 = vmatprep.subr.mxu0 %v1574
    %2103 = vmatpush1.msra.mxu0 %v1573
    %2104 = vmatprep.subr.mxu0 %v1578
    %2105 = vmatpush1.msra.mxu0 %v1577
    %2106 = vmatprep.subr.mxu0 %v1582
    %2107 = vmatpush1.msra.mxu0 %v1581
    %2108 = vmatprep.subr.mxu0 %v1586
    %2109 = vmatpush1.msra.mxu0 %v1585
    %2110 = vmatprep.subr.mxu0 %v1590
    %2111 = vmatpush1.msra.mxu0 %v1589
    %2112 = vmatprep.subr.mxu0 %v1594
    %2113 = vmatpush1.msra.mxu0 %v1593
    %2114 = vmatprep.mubr.f32.mxu0 %v1897
    %2115 = vmatmul.mubr.f32.gmra.mrb[0].mxu0 %v1209
    %v2116 = vpop.f32.mrb[0].mxu0
    %v2117 = vadd.f32 %v2046, %v2116
    %v2118 = vpop.f32.mrb[0].mxu0
    %v2119 = vadd.f32 %v2048, %v2118
    %2120 = vdwg.mxu0
    %2121 = vmatprep.subr.mxu0 %v1598
    %2122 = vmatpush1.msra.mxu0 %v1597
    %2123 = vmatprep.subr.mxu0 %v1602
    %2124 = vmatpush1.msra.mxu0 %v1601
    %2125 = vmatprep.subr.mxu0 %v1606
    %2126 = vmatpush1.msra.mxu0 %v1605
    %2127 = vmatprep.subr.mxu0 %v1610
    %2128 = vmatpush1.msra.mxu0 %v1609
    %2129 = vmatprep.subr.mxu0 %v1614
    %2130 = vmatpush1.msra.mxu0 %v1613
    %2131 = vmatprep.subr.mxu0 %v1618
    %2132 = vmatpush1.msra.mxu0 %v1617
    %2133 = vmatprep.subr.mxu0 %v1622
    %2134 = vmatpush1.msra.mxu0 %v1621
    %2135 = vmatprep.subr.mxu0 %v1626
    %2136 = vmatpush1.msra.mxu0 %v1625
    %2137 = vmatprep.subr.mxu0 %v1630
    %2138 = vmatpush1.msra.mxu0 %v1629
    %2139 = vmatprep.subr.mxu0 %v1634
    %2140 = vmatpush1.msra.mxu0 %v1633
    %2141 = vmatprep.subr.mxu0 %v1638
    %2142 = vmatpush1.msra.mxu0 %v1637
    %2143 = vmatprep.subr.mxu0 %v1642
    %2144 = vmatpush1.msra.mxu0 %v1641
    %2145 = vmatprep.subr.mxu0 %v1646
    %2146 = vmatpush1.msra.mxu0 %v1645
    %2147 = vmatprep.subr.mxu0 %v1650
    %2148 = vmatpush1.msra.mxu0 %v1649
    %2149 = vmatprep.subr.mxu0 %v1654
    %2150 = vmatpush1.msra.mxu0 %v1653
    %2151 = vmatprep.subr.mxu0 %v1658
    %2152 = vmatpush1.msra.mxu0 %v1657
    %2153 = vmatprep.subr.mxu0 %v1662
    %2154 = vmatpush1.msra.mxu0 %v1661
    %2155 = vmatprep.subr.mxu0 %v1666
    %2156 = vmatpush1.msra.mxu0 %v1665
    %2157 = vmatprep.subr.mxu0 %v1670
    %2158 = vmatpush1.msra.mxu0 %v1669
    %2159 = vmatprep.subr.mxu0 %v1674
    %2160 = vmatpush1.msra.mxu0 %v1673
    %2161 = vmatprep.subr.mxu0 %v1678
    %2162 = vmatpush1.msra.mxu0 %v1677
    %2163 = vmatprep.subr.mxu0 %v1682
    %2164 = vmatpush1.msra.mxu0 %v1681
    %2165 = vmatprep.subr.mxu0 %v1686
    %2166 = vmatpush1.msra.mxu0 %v1685
    %2167 = vmatprep.subr.mxu0 %v1690
    %2168 = vmatpush1.msra.mxu0 %v1689
    %2169 = vmatprep.subr.mxu0 %v1694
    %2170 = vmatpush1.msra.mxu0 %v1693
    %2171 = vmatprep.subr.mxu0 %v1698
    %2172 = vmatpush1.msra.mxu0 %v1697
    %2173 = vmatprep.subr.mxu0 %v1702
    %2174 = vmatpush1.msra.mxu0 %v1701
    %2175 = vmatprep.subr.mxu0 %v1706
    %2176 = vmatpush1.msra.mxu0 %v1705
    %2177 = vmatprep.subr.mxu0 %v1710
    %2178 = vmatpush1.msra.mxu0 %v1709
    %2179 = vmatprep.subr.mxu0 %v1714
    %2180 = vmatpush1.msra.mxu0 %v1713
    %2181 = vmatprep.subr.mxu0 %v1718
    %2182 = vmatpush1.msra.mxu0 %v1717
    %2183 = vmatprep.subr.mxu0 %v1722
    %2184 = vmatpush1.msra.mxu0 %v1721
    %2185 = vmatprep.mubr.f32.mxu0 %v1898
    %2186 = vmatmul.mubr.f32.gmra.mrb[0].mxu0 %v1210
    %v2187 = vpop.f32.mrb[0].mxu0
    %v2188 = vadd.f32 %v2117, %v2187
    %v2189 = vpop.f32.mrb[0].mxu0
    %v2190 = vadd.f32 %v2119, %v2189
    %2191 = vdwg.mxu0
    %2192 = vmatprep.subr.mxu0 %v1726
    %2193 = vmatpush1.msra.mxu0 %v1725
    %2194 = vmatprep.subr.mxu0 %v1730
    %2195 = vmatpush1.msra.mxu0 %v1729
    %2196 = vmatprep.subr.mxu0 %v1734
    %2197 = vmatpush1.msra.mxu0 %v1733
    %2198 = vmatprep.subr.mxu0 %v1738
    %2199 = vmatpush1.msra.mxu0 %v1737
    %2200 = vmatprep.subr.mxu0 %v1742
    %2201 = vmatpush1.msra.mxu0 %v1741
    %2202 = vmatprep.subr.mxu0 %v1746
    %2203 = vmatpush1.msra.mxu0 %v1745
    %2204 = vmatprep.subr.mxu0 %v1750
    %2205 = vmatpush1.msra.mxu0 %v1749
    %2206 = vmatprep.subr.mxu0 %v1754
    %2207 = vmatpush1.msra.mxu0 %v1753
    %2208 = vmatprep.subr.mxu0 %v1758
    %2209 = vmatpush1.msra.mxu0 %v1757
    %2210 = vmatprep.subr.mxu0 %v1762
    %2211 = vmatpush1.msra.mxu0 %v1761
    %2212 = vmatprep.subr.mxu0 %v1766
    %2213 = vmatpush1.msra.mxu0 %v1765
    %2214 = vmatprep.subr.mxu0 %v1770
    %2215 = vmatpush1.msra.mxu0 %v1769
    %2216 = vmatprep.subr.mxu0 %v1774
    %2217 = vmatpush1.msra.mxu0 %v1773
    %2218 = vmatprep.subr.mxu0 %v1778
    %2219 = vmatpush1.msra.mxu0 %v1777
    %2220 = vmatprep.subr.mxu0 %v1782
    %2221 = vmatpush1.msra.mxu0 %v1781
    %2222 = vmatprep.subr.mxu0 %v1786
    %2223 = vmatpush1.msra.mxu0 %v1785
    %2224 = vmatprep.subr.mxu0 %v1790
    %2225 = vmatpush1.msra.mxu0 %v1789
    %2226 = vmatprep.subr.mxu0 %v1794
    %2227 = vmatpush1.msra.mxu0 %v1793
    %2228 = vmatprep.subr.mxu0 %v1798
    %2229 = vmatpush1.msra.mxu0 %v1797
    %2230 = vmatprep.subr.mxu0 %v1802
    %2231 = vmatpush1.msra.mxu0 %v1801
    %2232 = vmatprep.subr.mxu0 %v1806
    %2233 = vmatpush1.msra.mxu0 %v1805
    %2234 = vmatprep.subr.mxu0 %v1810
    %2235 = vmatpush1.msra.mxu0 %v1809
    %2236 = vmatprep.subr.mxu0 %v1814
    %2237 = vmatpush1.msra.mxu0 %v1813
    %2238 = vmatprep.subr.mxu0 %v1818
    %2239 = vmatpush1.msra.mxu0 %v1817
    %2240 = vmatprep.subr.mxu0 %v1822
    %2241 = vmatpush1.msra.mxu0 %v1821
    %2242 = vmatprep.subr.mxu0 %v1826
    %2243 = vmatpush1.msra.mxu0 %v1825
    %2244 = vmatprep.subr.mxu0 %v1830
    %2245 = vmatpush1.msra.mxu0 %v1829
    %2246 = vmatprep.subr.mxu0 %v1834
    %2247 = vmatpush1.msra.mxu0 %v1833
    %2248 = vmatprep.subr.mxu0 %v1838
    %2249 = vmatpush1.msra.mxu0 %v1837
    %2250 = vmatprep.subr.mxu0 %v1842
    %2251 = vmatpush1.msra.mxu0 %v1841
    %2252 = vmatprep.subr.mxu0 %v1846
    %2253 = vmatpush1.msra.mxu0 %v1845
    %2254 = vmatprep.subr.mxu0 %v1850
    %2255 = vmatpush1.msra.mxu0 %v1849
    %2256 = vmatprep.mubr.f32.mxu0 %v1899
    %2257 = vmatmul.mubr.f32.gmra.mrb[0].mxu0 %v1211
    %v2258 = vpop.f32.mrb[0].mxu0
    %v2259 = vadd.f32 %v2188, %v2258
    %v2260 = vpop.f32.mrb[0].mxu0
    %v2261 = vadd.f32 %v2190, %v2260
    %2262 = vdwg.mxu0
    %2263 = vmatprep.subr.mxu0 %v1854
    %2264 = vmatpush1.msra.mxu0 %v1853
    %2265 = vmatprep.subr.mxu0 %v1858
    %2266 = vmatpush1.msra.mxu0 %v1857
    %2267 = vmatprep.subr.mxu0 %v1862
    %2268 = vmatpush1.msra.mxu0 %v1861
    %2269 = vmatprep.subr.mxu0 %v1866
    %2270 = vmatpush1.msra.mxu0 %v1865
    %2271 = vmatprep.subr.mxu0 %v1870
    %2272 = vmatpush1.msra.mxu0 %v1869
    %2273 = vmatprep.subr.mxu0 %v1874
    %2274 = vmatpush1.msra.mxu0 %v1873
    %2275 = vmatprep.subr.mxu0 %v1878
    %2276 = vmatpush1.msra.mxu0 %v1877
    %2277 = vmatprep.subr.mxu0 %v1882
    %2278 = vmatpush1.msra.mxu0 %v1881
    %2279 = vmatprep.subr.mxu0 %v1886
    %2280 = vmatpush1.msra.mxu0 %v1885
    %2281 = vmatprep.subr.mxu0 0.0
    %2282 = vmatpush1.msra.mxu0 0.0
    %2283 = vmatprep.subr.mxu0 0.0
    %2284 = vmatpush1.msra.mxu0 0.0
    %2285 = vmatprep.subr.mxu0 0.0
    %2286 = vmatpush1.msra.mxu0 0.0
    %2287 = vmatprep.subr.mxu0 0.0
    %2288 = vmatpush1.msra.mxu0 0.0
    %2289 = vmatprep.subr.mxu0 0.0
    %2290 = vmatpush1.msra.mxu0 0.0
    %2291 = vmatprep.subr.mxu0 0.0
    %2292 = vmatpush1.msra.mxu0 0.0
    %2293 = vmatprep.subr.mxu0 0.0
    %2294 = vmatpush1.msra.mxu0 0.0
    %2295 = vmatprep.subr.mxu0 0.0
    %2296 = vmatpush1.msra.mxu0 0.0
    %2297 = vmatprep.subr.mxu0 0.0
    %2298 = vmatpush1.msra.mxu0 0.0
    %2299 = vmatprep.subr.mxu0 0.0
    %2300 = vmatpush1.msra.mxu0 0.0
    %2301 = vmatprep.subr.mxu0 0.0
    %2302 = vmatpush1.msra.mxu0 0.0
    %2303 = vmatprep.subr.mxu0 0.0
    %2304 = vmatpush1.msra.mxu0 0.0
    %2305 = vmatprep.subr.mxu0 0.0
    %2306 = vmatpush1.msra.mxu0 0.0
    %2307 = vmatprep.subr.mxu0 0.0
    %2308 = vmatpush1.msra.mxu0 0.0
    %2309 = vmatprep.subr.mxu0 0.0
    %2310 = vmatpush1.msra.mxu0 0.0
    %2311 = vmatprep.subr.mxu0 0.0
    %2312 = vmatpush1.msra.mxu0 0.0
    %2313 = vmatprep.subr.mxu0 0.0
    %2314 = vmatpush1.msra.mxu0 0.0
    %2315 = vmatprep.subr.mxu0 0.0
    %2316 = vmatpush1.msra.mxu0 0.0
    %2317 = vmatprep.subr.mxu0 0.0
    %2318 = vmatpush1.msra.mxu0 0.0
    %2319 = vmatprep.subr.mxu0 0.0
    %2320 = vmatpush1.msra.mxu0 0.0
    %2321 = vmatprep.subr.mxu0 0.0
    %2322 = vmatpush1.msra.mxu0 0.0
    %2323 = vmatprep.subr.mxu0 0.0
    %2324 = vmatpush1.msra.mxu0 0.0
    %2325 = vmatprep.subr.mxu0 0.0
    %2326 = vmatpush1.msra.mxu0 0.0
    %2327 = vmatprep.mubr.f32.mxu0 0.0
    %2328 = vmatmul.mubr.f32.gmra.mrb[0].mxu0 %v1906
    %v2329 = vpop.f32.mrb[0].mxu0
    %v2330 = vadd.f32 %v2259, %v2329
    %v2331 = vpop.f32.mrb[0].mxu0
    %v2332 = vadd.f32 %v2261, %v2331
    %2333 = vdwg.mxu0
    %2334 = vmatprep.subr.mxu0 %v1216
    %2335 = vmatpush1.msra.mxu0 %v1215
    %2336 = vmatprep.subr.mxu0 %v1220
    %2337 = vmatpush1.msra.mxu0 %v1219
    %2338 = vmatprep.subr.mxu0 %v1224
    %2339 = vmatpush1.msra.mxu0 %v1223
    %2340 = vmatprep.subr.mxu0 %v1228
    %2341 = vmatpush1.msra.mxu0 %v1227
    %2342 = vmatprep.subr.mxu0 %v1232
    %2343 = vmatpush1.msra.mxu0 %v1231
    %2344 = vmatprep.subr.mxu0 %v1236
    %2345 = vmatpush1.msra.mxu0 %v1235
    %2346 = vmatprep.subr.mxu0 %v1240
    %2347 = vmatpush1.msra.mxu0 %v1239
    %2348 = vmatprep.subr.mxu0 %v1244
    %2349 = vmatpush1.msra.mxu0 %v1243
    %2350 = vmatprep.subr.mxu0 %v1248
    %2351 = vmatpush1.msra.mxu0 %v1247
    %2352 = vmatprep.subr.mxu0 %v1252
    %2353 = vmatpush1.msra.mxu0 %v1251
    %2354 = vmatprep.subr.mxu0 %v1256
    %2355 = vmatpush1.msra.mxu0 %v1255
    %2356 = vmatprep.subr.mxu0 %v1260
    %2357 = vmatpush1.msra.mxu0 %v1259
    %2358 = vmatprep.subr.mxu0 %v1264
    %2359 = vmatpush1.msra.mxu0 %v1263
    %2360 = vmatprep.subr.mxu0 %v1268
    %2361 = vmatpush1.msra.mxu0 %v1267
    %2362 = vmatprep.subr.mxu0 %v1272
    %2363 = vmatpush1.msra.mxu0 %v1271
    %2364 = vmatprep.subr.mxu0 %v1276
    %2365 = vmatpush1.msra.mxu0 %v1275
    %2366 = vmatprep.subr.mxu0 %v1280
    %2367 = vmatpush1.msra.mxu0 %v1279
    %2368 = vmatprep.subr.mxu0 %v1284
    %2369 = vmatpush1.msra.mxu0 %v1283
    %2370 = vmatprep.subr.mxu0 %v1288
    %2371 = vmatpush1.msra.mxu0 %v1287
    %2372 = vmatprep.subr.mxu0 %v1292
    %2373 = vmatpush1.msra.mxu0 %v1291
    %2374 = vmatprep.subr.mxu0 %v1296
    %2375 = vmatpush1.msra.mxu0 %v1295
    %2376 = vmatprep.subr.mxu0 %v1300
    %2377 = vmatpush1.msra.mxu0 %v1299
    %2378 = vmatprep.subr.mxu0 %v1304
    %2379 = vmatpush1.msra.mxu0 %v1303
    %2380 = vmatprep.subr.mxu0 %v1308
    %2381 = vmatpush1.msra.mxu0 %v1307
    %2382 = vmatprep.subr.mxu0 %v1312
    %2383 = vmatpush1.msra.mxu0 %v1311
    %2384 = vmatprep.subr.mxu0 %v1316
    %2385 = vmatpush1.msra.mxu0 %v1315
    %2386 = vmatprep.subr.mxu0 %v1320
    %2387 = vmatpush1.msra.mxu0 %v1319
    %2388 = vmatprep.subr.mxu0 %v1324
    %2389 = vmatpush1.msra.mxu0 %v1323
    %2390 = vmatprep.subr.mxu0 %v1328
    %2391 = vmatpush1.msra.mxu0 %v1327
    %2392 = vmatprep.subr.mxu0 %v1332
    %2393 = vmatpush1.msra.mxu0 %v1331
    %2394 = vmatprep.subr.mxu0 %v1336
    %2395 = vmatpush1.msra.mxu0 %v1335
    %2396 = vmatprep.subr.mxu0 %v1340
    %2397 = vmatpush1.msra.mxu0 %v1339
    %2398 = vmatprep.mubr.f32.mxu0 %v1895
    %2399 = vmatmul.mubr.f32.gmra.mrb[0].mxu0 %v1207
    %v2400 = vpop.f32.mrb[0].mxu0
    %v2401 = vadd.f32 0.0, %v2400
    %v2402 = vpop.f32.mrb[0].mxu0
    %v2403 = vadd.f32 0.0, %v2402
    %2404 = vdwg.mxu0
    %2405 = vmatprep.subr.mxu0 %v1344
    %2406 = vmatpush1.msra.mxu0 %v1343
    %2407 = vmatprep.subr.mxu0 %v1348
    %2408 = vmatpush1.msra.mxu0 %v1347
    %2409 = vmatprep.subr.mxu0 %v1352
    %2410 = vmatpush1.msra.mxu0 %v1351
    %2411 = vmatprep.subr.mxu0 %v1356
    %2412 = vmatpush1.msra.mxu0 %v1355
    %2413 = vmatprep.subr.mxu0 %v1360
    %2414 = vmatpush1.msra.mxu0 %v1359
    %2415 = vmatprep.subr.mxu0 %v1364
    %2416 = vmatpush1.msra.mxu0 %v1363
    %2417 = vmatprep.subr.mxu0 %v1368
    %2418 = vmatpush1.msra.mxu0 %v1367
    %2419 = vmatprep.subr.mxu0 %v1372
    %2420 = vmatpush1.msra.mxu0 %v1371
    %2421 = vmatprep.subr.mxu0 %v1376
    %2422 = vmatpush1.msra.mxu0 %v1375
    %2423 = vmatprep.subr.mxu0 %v1380
    %2424 = vmatpush1.msra.mxu0 %v1379
    %2425 = vmatprep.subr.mxu0 %v1384
    %2426 = vmatpush1.msra.mxu0 %v1383
    %2427 = vmatprep.subr.mxu0 %v1388
    %2428 = vmatpush1.msra.mxu0 %v1387
    %2429 = vmatprep.subr.mxu0 %v1392
    %2430 = vmatpush1.msra.mxu0 %v1391
    %2431 = vmatprep.subr.mxu0 %v1396
    %2432 = vmatpush1.msra.mxu0 %v1395
    %2433 = vmatprep.subr.mxu0 %v1400
    %2434 = vmatpush1.msra.mxu0 %v1399
    %2435 = vmatprep.subr.mxu0 %v1404
    %2436 = vmatpush1.msra.mxu0 %v1403
    %2437 = vmatprep.subr.mxu0 %v1408
    %2438 = vmatpush1.msra.mxu0 %v1407
    %2439 = vmatprep.subr.mxu0 %v1412
    %2440 = vmatpush1.msra.mxu0 %v1411
    %2441 = vmatprep.subr.mxu0 %v1416
    %2442 = vmatpush1.msra.mxu0 %v1415
    %2443 = vmatprep.subr.mxu0 %v1420
    %2444 = vmatpush1.msra.mxu0 %v1419
    %2445 = vmatprep.subr.mxu0 %v1424
    %2446 = vmatpush1.msra.mxu0 %v1423
    %2447 = vmatprep.subr.mxu0 %v1428
    %2448 = vmatpush1.msra.mxu0 %v1427
    %2449 = vmatprep.subr.mxu0 %v1432
    %2450 = vmatpush1.msra.mxu0 %v1431
    %2451 = vmatprep.subr.mxu0 %v1436
    %2452 = vmatpush1.msra.mxu0 %v1435
    %2453 = vmatprep.subr.mxu0 %v1440
    %2454 = vmatpush1.msra.mxu0 %v1439
    %2455 = vmatprep.subr.mxu0 %v1444
    %2456 = vmatpush1.msra.mxu0 %v1443
    %2457 = vmatprep.subr.mxu0 %v1448
    %2458 = vmatpush1.msra.mxu0 %v1447
    %2459 = vmatprep.subr.mxu0 %v1452
    %2460 = vmatpush1.msra.mxu0 %v1451
    %2461 = vmatprep.subr.mxu0 %v1456
    %2462 = vmatpush1.msra.mxu0 %v1455
    %2463 = vmatprep.subr.mxu0 %v1460
    %2464 = vmatpush1.msra.mxu0 %v1459
    %2465 = vmatprep.subr.mxu0 %v1464
    %2466 = vmatpush1.msra.mxu0 %v1463
    %2467 = vmatprep.subr.mxu0 %v1468
    %2468 = vmatpush1.msra.mxu0 %v1467
    %2469 = vmatprep.mubr.f32.mxu0 %v1896
    %2470 = vmatmul.mubr.f32.gmra.mrb[0].mxu0 %v1208
    %v2471 = vpop.f32.mrb[0].mxu0
    %v2472 = vadd.f32 %v2401, %v2471
    %v2473 = vpop.f32.mrb[0].mxu0
    %v2474 = vadd.f32 %v2403, %v2473
    %2475 = vdwg.mxu0
    %2476 = vmatprep.subr.mxu0 %v1472
    %2477 = vmatpush1.msra.mxu0 %v1471
    %2478 = vmatprep.subr.mxu0 %v1476
    %2479 = vmatpush1.msra.mxu0 %v1475
    %2480 = vmatprep.subr.mxu0 %v1480
    %2481 = vmatpush1.msra.mxu0 %v1479
    %2482 = vmatprep.subr.mxu0 %v1484
    %2483 = vmatpush1.msra.mxu0 %v1483
    %2484 = vmatprep.subr.mxu0 %v1488
    %2485 = vmatpush1.msra.mxu0 %v1487
    %2486 = vmatprep.subr.mxu0 %v1492
    %2487 = vmatpush1.msra.mxu0 %v1491
    %2488 = vmatprep.subr.mxu0 %v1496
    %2489 = vmatpush1.msra.mxu0 %v1495
    %2490 = vmatprep.subr.mxu0 %v1500
    %2491 = vmatpush1.msra.mxu0 %v1499
    %2492 = vmatprep.subr.mxu0 %v1504
    %2493 = vmatpush1.msra.mxu0 %v1503
    %2494 = vmatprep.subr.mxu0 %v1508
    %2495 = vmatpush1.msra.mxu0 %v1507
    %2496 = vmatprep.subr.mxu0 %v1512
    %2497 = vmatpush1.msra.mxu0 %v1511
    %2498 = vmatprep.subr.mxu0 %v1516
    %2499 = vmatpush1.msra.mxu0 %v1515
    %2500 = vmatprep.subr.mxu0 %v1520
    %2501 = vmatpush1.msra.mxu0 %v1519
    %2502 = vmatprep.subr.mxu0 %v1524
    %2503 = vmatpush1.msra.mxu0 %v1523
    %2504 = vmatprep.subr.mxu0 %v1528
    %2505 = vmatpush1.msra.mxu0 %v1527
    %2506 = vmatprep.subr.mxu0 %v1532
    %2507 = vmatpush1.msra.mxu0 %v1531
    %2508 = vmatprep.subr.mxu0 %v1536
    %2509 = vmatpush1.msra.mxu0 %v1535
    %2510 = vmatprep.subr.mxu0 %v1540
    %2511 = vmatpush1.msra.mxu0 %v1539
    %2512 = vmatprep.subr.mxu0 %v1544
    %2513 = vmatpush1.msra.mxu0 %v1543
    %2514 = vmatprep.subr.mxu0 %v1548
    %2515 = vmatpush1.msra.mxu0 %v1547
    %2516 = vmatprep.subr.mxu0 %v1552
    %2517 = vmatpush1.msra.mxu0 %v1551
    %2518 = vmatprep.subr.mxu0 %v1556
    %2519 = vmatpush1.msra.mxu0 %v1555
    %2520 = vmatprep.subr.mxu0 %v1560
    %2521 = vmatpush1.msra.mxu0 %v1559
    %2522 = vmatprep.subr.mxu0 %v1564
    %2523 = vmatpush1.msra.mxu0 %v1563
    %2524 = vmatprep.subr.mxu0 %v1568
    %2525 = vmatpush1.msra.mxu0 %v1567
    %2526 = vmatprep.subr.mxu0 %v1572
    %2527 = vmatpush1.msra.mxu0 %v1571
    %2528 = vmatprep.subr.mxu0 %v1576
    %2529 = vmatpush1.msra.mxu0 %v1575
    %2530 = vmatprep.subr.mxu0 %v1580
    %2531 = vmatpush1.msra.mxu0 %v1579
    %2532 = vmatprep.subr.mxu0 %v1584
    %2533 = vmatpush1.msra.mxu0 %v1583
    %2534 = vmatprep.subr.mxu0 %v1588
    %2535 = vmatpush1.msra.mxu0 %v1587
    %2536 = vmatprep.subr.mxu0 %v1592
    %2537 = vmatpush1.msra.mxu0 %v1591
    %2538 = vmatprep.subr.mxu0 %v1596
    %2539 = vmatpush1.msra.mxu0 %v1595
    %2540 = vmatprep.mubr.f32.mxu0 %v1897
    %2541 = vmatmul.mubr.f32.gmra.mrb[0].mxu0 %v1209
    %v2542 = vpop.f32.mrb[0].mxu0
    %v2543 = vadd.f32 %v2472, %v2542
    %v2544 = vpop.f32.mrb[0].mxu0
    %v2545 = vadd.f32 %v2474, %v2544
    %2546 = vdwg.mxu0
    %2547 = vmatprep.subr.mxu0 %v1600
    %2548 = vmatpush1.msra.mxu0 %v1599
    %2549 = vmatprep.subr.mxu0 %v1604
    %2550 = vmatpush1.msra.mxu0 %v1603
    %2551 = vmatprep.subr.mxu0 %v1608
    %2552 = vmatpush1.msra.mxu0 %v1607
    %2553 = vmatprep.subr.mxu0 %v1612
    %2554 = vmatpush1.msra.mxu0 %v1611
    %2555 = vmatprep.subr.mxu0 %v1616
    %2556 = vmatpush1.msra.mxu0 %v1615
    %2557 = vmatprep.subr.mxu0 %v1620
    %2558 = vmatpush1.msra.mxu0 %v1619
    %2559 = vmatprep.subr.mxu0 %v1624
    %2560 = vmatpush1.msra.mxu0 %v1623
    %2561 = vmatprep.subr.mxu0 %v1628
    %2562 = vmatpush1.msra.mxu0 %v1627
    %2563 = vmatprep.subr.mxu0 %v1632
    %2564 = vmatpush1.msra.mxu0 %v1631
    %2565 = vmatprep.subr.mxu0 %v1636
    %2566 = vmatpush1.msra.mxu0 %v1635
    %2567 = vmatprep.subr.mxu0 %v1640
    %2568 = vmatpush1.msra.mxu0 %v1639
    %2569 = vmatprep.subr.mxu0 %v1644
    %2570 = vmatpush1.msra.mxu0 %v1643
    %2571 = vmatprep.subr.mxu0 %v1648
    %2572 = vmatpush1.msra.mxu0 %v1647
    %2573 = vmatprep.subr.mxu0 %v1652
    %2574 = vmatpush1.msra.mxu0 %v1651
    %2575 = vmatprep.subr.mxu0 %v1656
    %2576 = vmatpush1.msra.mxu0 %v1655
    %2577 = vmatprep.subr.mxu0 %v1660
    %2578 = vmatpush1.msra.mxu0 %v1659
    %2579 = vmatprep.subr.mxu0 %v1664
    %2580 = vmatpush1.msra.mxu0 %v1663
    %2581 = vmatprep.subr.mxu0 %v1668
    %2582 = vmatpush1.msra.mxu0 %v1667
    %2583 = vmatprep.subr.mxu0 %v1672
    %2584 = vmatpush1.msra.mxu0 %v1671
    %2585 = vmatprep.subr.mxu0 %v1676
    %2586 = vmatpush1.msra.mxu0 %v1675
    %2587 = vmatprep.subr.mxu0 %v1680
    %2588 = vmatpush1.msra.mxu0 %v1679
    %2589 = vmatprep.subr.mxu0 %v1684
    %2590 = vmatpush1.msra.mxu0 %v1683
    %2591 = vmatprep.subr.mxu0 %v1688
    %2592 = vmatpush1.msra.mxu0 %v1687
    %2593 = vmatprep.subr.mxu0 %v1692
    %2594 = vmatpush1.msra.mxu0 %v1691
    %2595 = vmatprep.subr.mxu0 %v1696
    %2596 = vmatpush1.msra.mxu0 %v1695
    %2597 = vmatprep.subr.mxu0 %v1700
    %2598 = vmatpush1.msra.mxu0 %v1699
    %2599 = vmatprep.subr.mxu0 %v1704
    %2600 = vmatpush1.msra.mxu0 %v1703
    %2601 = vmatprep.subr.mxu0 %v1708
    %2602 = vmatpush1.msra.mxu0 %v1707
    %2603 = vmatprep.subr.mxu0 %v1712
    %2604 = vmatpush1.msra.mxu0 %v1711
    %2605 = vmatprep.subr.mxu0 %v1716
    %2606 = vmatpush1.msra.mxu0 %v1715
    %2607 = vmatprep.subr.mxu0 %v1720
    %2608 = vmatpush1.msra.mxu0 %v1719
    %2609 = vmatprep.subr.mxu0 %v1724
    %2610 = vmatpush1.msra.mxu0 %v1723
    %2611 = vmatprep.mubr.f32.mxu0 %v1898
    %2612 = vmatmul.mubr.f32.gmra.mrb[0].mxu0 %v1210
    %v2613 = vpop.f32.mrb[0].mxu0
    %v2614 = vadd.f32 %v2543, %v2613
    %v2615 = vpop.f32.mrb[0].mxu0
    %v2616 = vadd.f32 %v2545, %v2615
    %2617 = vdwg.mxu0
    %2618 = vmatprep.subr.mxu0 %v1728
    %2619 = vmatpush1.msra.mxu0 %v1727
    %2620 = vmatprep.subr.mxu0 %v1732
    %2621 = vmatpush1.msra.mxu0 %v1731
    %2622 = vmatprep.subr.mxu0 %v1736
    %2623 = vmatpush1.msra.mxu0 %v1735
    %2624 = vmatprep.subr.mxu0 %v1740
    %2625 = vmatpush1.msra.mxu0 %v1739
    %2626 = vmatprep.subr.mxu0 %v1744
    %2627 = vmatpush1.msra.mxu0 %v1743
    %2628 = vmatprep.subr.mxu0 %v1748
    %2629 = vmatpush1.msra.mxu0 %v1747
    %2630 = vmatprep.subr.mxu0 %v1752
    %2631 = vmatpush1.msra.mxu0 %v1751
    %2632 = vmatprep.subr.mxu0 %v1756
    %2633 = vmatpush1.msra.mxu0 %v1755
    %2634 = vmatprep.subr.mxu0 %v1760
    %2635 = vmatpush1.msra.mxu0 %v1759
    %2636 = vmatprep.subr.mxu0 %v1764
    %2637 = vmatpush1.msra.mxu0 %v1763
    %2638 = vmatprep.subr.mxu0 %v1768
    %2639 = vmatpush1.msra.mxu0 %v1767
    %2640 = vmatprep.subr.mxu0 %v1772
    %2641 = vmatpush1.msra.mxu0 %v1771
    %2642 = vmatprep.subr.mxu0 %v1776
    %2643 = vmatpush1.msra.mxu0 %v1775
    %2644 = vmatprep.subr.mxu0 %v1780
    %2645 = vmatpush1.msra.mxu0 %v1779
    %2646 = vmatprep.subr.mxu0 %v1784
    %2647 = vmatpush1.msra.mxu0 %v1783
    %2648 = vmatprep.subr.mxu0 %v1788
    %2649 = vmatpush1.msra.mxu0 %v1787
    %2650 = vmatprep.subr.mxu0 %v1792
    %2651 = vmatpush1.msra.mxu0 %v1791
    %2652 = vmatprep.subr.mxu0 %v1796
    %2653 = vmatpush1.msra.mxu0 %v1795
    %2654 = vmatprep.subr.mxu0 %v1800
    %2655 = vmatpush1.msra.mxu0 %v1799
    %2656 = vmatprep.subr.mxu0 %v1804
    %2657 = vmatpush1.msra.mxu0 %v1803
    %2658 = vmatprep.subr.mxu0 %v1808
    %2659 = vmatpush1.msra.mxu0 %v1807
    %2660 = vmatprep.subr.mxu0 %v1812
    %2661 = vmatpush1.msra.mxu0 %v1811
    %2662 = vmatprep.subr.mxu0 %v1816
    %2663 = vmatpush1.msra.mxu0 %v1815
    %2664 = vmatprep.subr.mxu0 %v1820
    %2665 = vmatpush1.msra.mxu0 %v1819
    %2666 = vmatprep.subr.mxu0 %v1824
    %2667 = vmatpush1.msra.mxu0 %v1823
    %2668 = vmatprep.subr.mxu0 %v1828
    %2669 = vmatpush1.msra.mxu0 %v1827
    %2670 = vmatprep.subr.mxu0 %v1832
    %2671 = vmatpush1.msra.mxu0 %v1831
    %2672 = vmatprep.subr.mxu0 %v1836
    %2673 = vmatpush1.msra.mxu0 %v1835
    %2674 = vmatprep.subr.mxu0 %v1840
    %2675 = vmatpush1.msra.mxu0 %v1839
    %2676 = vmatprep.subr.mxu0 %v1844
    %2677 = vmatpush1.msra.mxu0 %v1843
    %2678 = vmatprep.subr.mxu0 %v1848
    %2679 = vmatpush1.msra.mxu0 %v1847
    %2680 = vmatprep.subr.mxu0 %v1852
    %2681 = vmatpush1.msra.mxu0 %v1851
    %2682 = vmatprep.mubr.f32.mxu0 %v1899
    %2683 = vmatmul.mubr.f32.gmra.mrb[0].mxu0 %v1211
    %v2684 = vpop.f32.mrb[0].mxu0
    %v2685 = vadd.f32 %v2614, %v2684
    %v2686 = vpop.f32.mrb[0].mxu0
    %v2687 = vadd.f32 %v2616, %v2686
    %2688 = vdwg.mxu0
    %2689 = vmatprep.subr.mxu0 %v1856
    %2690 = vmatpush1.msra.mxu0 %v1855
    %2691 = vmatprep.subr.mxu0 %v1860
    %2692 = vmatpush1.msra.mxu0 %v1859
    %2693 = vmatprep.subr.mxu0 %v1864
    %2694 = vmatpush1.msra.mxu0 %v1863
    %2695 = vmatprep.subr.mxu0 %v1868
    %2696 = vmatpush1.msra.mxu0 %v1867
    %2697 = vmatprep.subr.mxu0 %v1872
    %2698 = vmatpush1.msra.mxu0 %v1871
    %2699 = vmatprep.subr.mxu0 %v1876
    %2700 = vmatpush1.msra.mxu0 %v1875
    %2701 = vmatprep.subr.mxu0 %v1880
    %2702 = vmatpush1.msra.mxu0 %v1879
    %2703 = vmatprep.subr.mxu0 %v1884
    %2704 = vmatpush1.msra.mxu0 %v1883
    %2705 = vmatprep.subr.mxu0 %v1888
    %2706 = vmatpush1.msra.mxu0 %v1887
    %2707 = vmatprep.subr.mxu0 0.0
    %2708 = vmatpush1.msra.mxu0 0.0
    %2709 = vmatprep.subr.mxu0 0.0
    %2710 = vmatpush1.msra.mxu0 0.0
    %2711 = vmatprep.subr.mxu0 0.0
    %2712 = vmatpush1.msra.mxu0 0.0
    %2713 = vmatprep.subr.mxu0 0.0
    %2714 = vmatpush1.msra.mxu0 0.0
    %2715 = vmatprep.subr.mxu0 0.0
    %2716 = vmatpush1.msra.mxu0 0.0
    %2717 = vmatprep.subr.mxu0 0.0
    %2718 = vmatpush1.msra.mxu0 0.0
    %2719 = vmatprep.subr.mxu0 0.0
    %2720 = vmatpush1.msra.mxu0 0.0
    %2721 = vmatprep.subr.mxu0 0.0
    %2722 = vmatpush1.msra.mxu0 0.0
    %2723 = vmatprep.subr.mxu0 0.0
    %2724 = vmatpush1.msra.mxu0 0.0
    %2725 = vmatprep.subr.mxu0 0.0
    %2726 = vmatpush1.msra.mxu0 0.0
    %2727 = vmatprep.subr.mxu0 0.0
    %2728 = vmatpush1.msra.mxu0 0.0
    %2729 = vmatprep.subr.mxu0 0.0
    %2730 = vmatpush1.msra.mxu0 0.0
    %2731 = vmatprep.subr.mxu0 0.0
    %2732 = vmatpush1.msra.mxu0 0.0
    %2733 = vmatprep.subr.mxu0 0.0
    %2734 = vmatpush1.msra.mxu0 0.0
    %2735 = vmatprep.subr.mxu0 0.0
    %2736 = vmatpush1.msra.mxu0 0.0
    %2737 = vmatprep.subr.mxu0 0.0
    %2738 = vmatpush1.msra.mxu0 0.0
    %2739 = vmatprep.subr.mxu0 0.0
    %2740 = vmatpush1.msra.mxu0 0.0
    %2741 = vmatprep.subr.mxu0 0.0
    %2742 = vmatpush1.msra.mxu0 0.0
    %2743 = vmatprep.subr.mxu0 0.0
    %2744 = vmatpush1.msra.mxu0 0.0
    %2745 = vmatprep.subr.mxu0 0.0
    %2746 = vmatpush1.msra.mxu0 0.0
    %2747 = vmatprep.subr.mxu0 0.0
    %2748 = vmatpush1.msra.mxu0 0.0
    %2749 = vmatprep.subr.mxu0 0.0
    %2750 = vmatpush1.msra.mxu0 0.0
    %2751 = vmatprep.subr.mxu0 0.0
    %2752 = vmatpush1.msra.mxu0 0.0
    %2753 = vmatprep.mubr.f32.mxu0 0.0
    %2754 = vmatmul.mubr.f32.gmra.mrb[0].mxu0 %v1906
    %v2755 = vpop.f32.mrb[0].mxu0
    %v2756 = vadd.f32 %v2685, %v2755
    %v2757 = vpop.f32.mrb[0].mxu0
    %v2758 = vadd.f32 %v2687, %v2757
    %2759 = vdwg.mxu0
    %v2764 = vcombine.low %v2330, %v2332
    %v2765 = vcombine.low %v2756, %v2758
    %2768 = vst [vmem:[#allocation3] sm:$0xff] %v2764
    %vm2769 = vcmask 326660
    %vm2770 = vmor %vm2769, %vm974
    %2771 = vst.msk [vmem:[#allocation3 + $0x8] sm:$0xff] %vm2770, %v2765
    %v2772 = vld [vmem:[#allocation3] sm:$0xff]
    %v2773 = vld [vmem:[#allocation3 + $0x8] sm:$0xff]
    %v2774 = vld [vmem:[%s6] sm:$0xff]
    %s2775 = scalar_lea.vmem %s6, 8
    %v2776 = vld [vmem:[%s2775] sm:$0xff]
    %v2779 = vcombine.high %v2772, %v2772
    %v2780 = vcombine.high %v2773, %v2773
    %2781 = vrot.lane.b32.xlu0 %v2772, 126
    %v2782 = vpop.permute.xlu0 %2781
    %2783 = vrot.lane.b32.xlu0 %v2779, 126
    %v2784 = vpop.permute.xlu0 %2783
    %2785 = vrot.lane.b32.xlu0 %v2773, 126
    %v2786 = vpop.permute.xlu0 %2785
    %2787 = vrot.lane.b32.xlu0 %v2780, 126
    %v2788 = vpop.permute.xlu0 %2787
    %v2789 = vsel %vm280, %v2782, %v2784
    %v2790 = vsel %vm280, %v2784, %v2786
    %v2791 = vsel %vm280, %v2786, %v2788
    %vm2792 = vcmask 31744
    %v2794 = vsel %vm2792, %v2776, 0
    %v2796 = vsel %vm974, %v2789, 0
    %v2798 = vsel %vm974, %v2790, 0
    %v2800 = vsel %vm974, %v2791, 0
    %v2802 = vsel %vm974, %v2788, 0
    %2804 = vmatprep.subr.mxu0 %v2798
    %2805 = vmatpush1.msra.mxu0 %v2796
    %2806 = vmatprep.subr.mxu0 0.0
    %2807 = vmatpush1.msra.mxu0 0.0
    %2808 = vmatprep.subr.mxu0 0.0
    %2809 = vmatpush1.msra.mxu0 0.0
    %2810 = vmatprep.subr.mxu0 0.0
    %2811 = vmatpush1.msra.mxu0 0.0
    %2812 = vmatprep.subr.mxu0 0.0
    %2813 = vmatpush1.msra.mxu0 0.0
    %2814 = vmatprep.subr.mxu0 0.0
    %2815 = vmatpush1.msra.mxu0 0.0
    %2816 = vmatprep.subr.mxu0 0.0
    %2817 = vmatpush1.msra.mxu0 0.0
    %2818 = vmatprep.subr.mxu0 0.0
    %2819 = vmatpush1.msra.mxu0 0.0
    %2820 = vmatprep.subr.mxu0 0.0
    %2821 = vmatpush1.msra.mxu0 0.0
    %2822 = vmatprep.subr.mxu0 0.0
    %2823 = vmatpush1.msra.mxu0 0.0
    %2824 = vmatprep.subr.mxu0 0.0
    %2825 = vmatpush1.msra.mxu0 0.0
    %2826 = vmatprep.subr.mxu0 0.0
    %2827 = vmatpush1.msra.mxu0 0.0
    %2828 = vmatprep.subr.mxu0 0.0
    %2829 = vmatpush1.msra.mxu0 0.0
    %2830 = vmatprep.subr.mxu0 0.0
    %2831 = vmatpush1.msra.mxu0 0.0
    %2832 = vmatprep.subr.mxu0 0.0
    %2833 = vmatpush1.msra.mxu0 0.0
    %2834 = vmatprep.subr.mxu0 0.0
    %2835 = vmatpush1.msra.mxu0 0.0
    %2836 = vmatprep.subr.mxu0 0.0
    %2837 = vmatpush1.msra.mxu0 0.0
    %2838 = vmatprep.subr.mxu0 0.0
    %2839 = vmatpush1.msra.mxu0 0.0
    %2840 = vmatprep.subr.mxu0 0.0
    %2841 = vmatpush1.msra.mxu0 0.0
    %2842 = vmatprep.subr.mxu0 0.0
    %2843 = vmatpush1.msra.mxu0 0.0
    %2844 = vmatprep.subr.mxu0 0.0
    %2845 = vmatpush1.msra.mxu0 0.0
    %2846 = vmatprep.subr.mxu0 0.0
    %2847 = vmatpush1.msra.mxu0 0.0
    %2848 = vmatprep.subr.mxu0 0.0
    %2849 = vmatpush1.msra.mxu0 0.0
    %2850 = vmatprep.subr.mxu0 0.0
    %2851 = vmatpush1.msra.mxu0 0.0
    %2852 = vmatprep.subr.mxu0 0.0
    %2853 = vmatpush1.msra.mxu0 0.0
    %2854 = vmatprep.subr.mxu0 0.0
    %2855 = vmatpush1.msra.mxu0 0.0
    %2856 = vmatprep.subr.mxu0 0.0
    %2857 = vmatpush1.msra.mxu0 0.0
    %2858 = vmatprep.subr.mxu0 0.0
    %2859 = vmatpush1.msra.mxu0 0.0
    %2860 = vmatprep.subr.mxu0 0.0
    %2861 = vmatpush1.msra.mxu0 0.0
    %2862 = vmatprep.subr.mxu0 0.0
    %2863 = vmatpush1.msra.mxu0 0.0
    %2864 = vmatprep.subr.mxu0 0.0
    %2865 = vmatpush1.msra.mxu0 0.0
    %2866 = vmatprep.subr.mxu0 0.0
    %2867 = vmatpush1.msra.mxu0 0.0
    %2868 = vmatprep.mubr.f32.mxu0 0.0
    %2869 = vmatmul.mubr.f32.gmra.mrb[0].mxu0 %v2794
    %v2870 = vpop.f32.mrb[0].mxu0
    %v2871 = vadd.f32 0.0, %v2870
    %v2872 = vpop.f32.mrb[0].mxu0
    %v2873 = vadd.f32 0.0, %v2872
    %2874 = vdwg.mxu0
    %2875 = vmatprep.subr.mxu0 %v2802
    %2876 = vmatpush1.msra.mxu0 %v2800
    %2877 = vmatprep.subr.mxu0 0.0
    %2878 = vmatpush1.msra.mxu0 0.0
    %2879 = vmatprep.subr.mxu0 0.0
    %2880 = vmatpush1.msra.mxu0 0.0
    %2881 = vmatprep.subr.mxu0 0.0
    %2882 = vmatpush1.msra.mxu0 0.0
    %2883 = vmatprep.subr.mxu0 0.0
    %2884 = vmatpush1.msra.mxu0 0.0
    %2885 = vmatprep.subr.mxu0 0.0
    %2886 = vmatpush1.msra.mxu0 0.0
    %2887 = vmatprep.subr.mxu0 0.0
    %2888 = vmatpush1.msra.mxu0 0.0
    %2889 = vmatprep.subr.mxu0 0.0
    %2890 = vmatpush1.msra.mxu0 0.0
    %2891 = vmatprep.subr.mxu0 0.0
    %2892 = vmatpush1.msra.mxu0 0.0
    %2893 = vmatprep.subr.mxu0 0.0
    %2894 = vmatpush1.msra.mxu0 0.0
    %2895 = vmatprep.subr.mxu0 0.0
    %2896 = vmatpush1.msra.mxu0 0.0
    %2897 = vmatprep.subr.mxu0 0.0
    %2898 = vmatpush1.msra.mxu0 0.0
    %2899 = vmatprep.subr.mxu0 0.0
    %2900 = vmatpush1.msra.mxu0 0.0
    %2901 = vmatprep.subr.mxu0 0.0
    %2902 = vmatpush1.msra.mxu0 0.0
    %2903 = vmatprep.subr.mxu0 0.0
    %2904 = vmatpush1.msra.mxu0 0.0
    %2905 = vmatprep.subr.mxu0 0.0
    %2906 = vmatpush1.msra.mxu0 0.0
    %2907 = vmatprep.subr.mxu0 0.0
    %2908 = vmatpush1.msra.mxu0 0.0
    %2909 = vmatprep.subr.mxu0 0.0
    %2910 = vmatpush1.msra.mxu0 0.0
    %2911 = vmatprep.subr.mxu0 0.0
    %2912 = vmatpush1.msra.mxu0 0.0
    %2913 = vmatprep.subr.mxu0 0.0
    %2914 = vmatpush1.msra.mxu0 0.0
    %2915 = vmatprep.subr.mxu0 0.0
    %2916 = vmatpush1.msra.mxu0 0.0
    %2917 = vmatprep.subr.mxu0 0.0
    %2918 = vmatpush1.msra.mxu0 0.0
    %2919 = vmatprep.subr.mxu0 0.0
    %2920 = vmatpush1.msra.mxu0 0.0
    %2921 = vmatprep.subr.mxu0 0.0
    %2922 = vmatpush1.msra.mxu0 0.0
    %2923 = vmatprep.subr.mxu0 0.0
    %2924 = vmatpush1.msra.mxu0 0.0
    %2925 = vmatprep.subr.mxu0 0.0
    %2926 = vmatpush1.msra.mxu0 0.0
    %2927 = vmatprep.subr.mxu0 0.0
    %2928 = vmatpush1.msra.mxu0 0.0
    %2929 = vmatprep.subr.mxu0 0.0
    %2930 = vmatpush1.msra.mxu0 0.0
    %2931 = vmatprep.subr.mxu0 0.0
    %2932 = vmatpush1.msra.mxu0 0.0
    %2933 = vmatprep.subr.mxu0 0.0
    %2934 = vmatpush1.msra.mxu0 0.0
    %2935 = vmatprep.subr.mxu0 0.0
    %2936 = vmatpush1.msra.mxu0 0.0
    %2937 = vmatprep.subr.mxu0 0.0
    %2938 = vmatpush1.msra.mxu0 0.0
    %2939 = vmatprep.mubr.f32.mxu0 0.0
    %2940 = vmatmul.mubr.f32.gmra.mrb[0].mxu0 %v2794
    %v2941 = vpop.f32.mrb[0].mxu0
    %v2942 = vadd.f32 0.0, %v2941
    %v2943 = vpop.f32.mrb[0].mxu0
    %v2944 = vadd.f32 0.0, %v2943
    %2945 = vdwg.mxu0
    %2946 = vrot.lane.b32.xlu0 %v2772, 127
    %v2947 = vpop.permute.xlu0 %2946
    %2948 = vrot.lane.b32.xlu0 %v2779, 127
    %v2949 = vpop.permute.xlu0 %2948
    %2950 = vrot.lane.b32.xlu0 %v2773, 127
    %v2951 = vpop.permute.xlu0 %2950
    %2952 = vrot.lane.b32.xlu0 %v2780, 127
    %v2953 = vpop.permute.xlu0 %2952
    %v2954 = vsel %vm196, %v2947, %v2949
    %v2955 = vsel %vm196, %v2949, %v2951
    %v2956 = vsel %vm196, %v2951, %v2953
    %v2958 = vsel %vm2792, %v2774, 0
    %v2960 = vsel %vm974, %v2954, 0
    %v2962 = vsel %vm974, %v2955, 0
    %v2964 = vsel %vm974, %v2956, 0
    %v2966 = vsel %vm974, %v2953, 0
    %2968 = vmatprep.subr.mxu0 %v2962
    %2969 = vmatpush1.msra.mxu0 %v2960
    %2970 = vmatprep.subr.mxu0 0.0
    %2971 = vmatpush1.msra.mxu0 0.0
    %2972 = vmatprep.subr.mxu0 0.0
    %2973 = vmatpush1.msra.mxu0 0.0
    %2974 = vmatprep.subr.mxu0 0.0
    %2975 = vmatpush1.msra.mxu0 0.0
    %2976 = vmatprep.subr.mxu0 0.0
    %2977 = vmatpush1.msra.mxu0 0.0
    %2978 = vmatprep.subr.mxu0 0.0
    %2979 = vmatpush1.msra.mxu0 0.0
    %2980 = vmatprep.subr.mxu0 0.0
    %2981 = vmatpush1.msra.mxu0 0.0
    %2982 = vmatprep.subr.mxu0 0.0
    %2983 = vmatpush1.msra.mxu0 0.0
    %2984 = vmatprep.subr.mxu0 0.0
    %2985 = vmatpush1.msra.mxu0 0.0
    %2986 = vmatprep.subr.mxu0 0.0
    %2987 = vmatpush1.msra.mxu0 0.0
    %2988 = vmatprep.subr.mxu0 0.0
    %2989 = vmatpush1.msra.mxu0 0.0
    %2990 = vmatprep.subr.mxu0 0.0
    %2991 = vmatpush1.msra.mxu0 0.0
    %2992 = vmatprep.subr.mxu0 0.0
    %2993 = vmatpush1.msra.mxu0 0.0
    %2994 = vmatprep.subr.mxu0 0.0
    %2995 = vmatpush1.msra.mxu0 0.0
    %2996 = vmatprep.subr.mxu0 0.0
    %2997 = vmatpush1.msra.mxu0 0.0
    %2998 = vmatprep.subr.mxu0 0.0
    %2999 = vmatpush1.msra.mxu0 0.0
    %3000 = vmatprep.subr.mxu0 0.0
    %3001 = vmatpush1.msra.mxu0 0.0
    %3002 = vmatprep.subr.mxu0 0.0
    %3003 = vmatpush1.msra.mxu0 0.0
    %3004 = vmatprep.subr.mxu0 0.0
    %3005 = vmatpush1.msra.mxu0 0.0
    %3006 = vmatprep.subr.mxu0 0.0
    %3007 = vmatpush1.msra.mxu0 0.0
    %3008 = vmatprep.subr.mxu0 0.0
    %3009 = vmatpush1.msra.mxu0 0.0
    %3010 = vmatprep.subr.mxu0 0.0
    %3011 = vmatpush1.msra.mxu0 0.0
    %3012 = vmatprep.subr.mxu0 0.0
    %3013 = vmatpush1.msra.mxu0 0.0
    %3014 = vmatprep.subr.mxu0 0.0
    %3015 = vmatpush1.msra.mxu0 0.0
    %3016 = vmatprep.subr.mxu0 0.0
    %3017 = vmatpush1.msra.mxu0 0.0
    %3018 = vmatprep.subr.mxu0 0.0
    %3019 = vmatpush1.msra.mxu0 0.0
    %3020 = vmatprep.subr.mxu0 0.0
    %3021 = vmatpush1.msra.mxu0 0.0
    %3022 = vmatprep.subr.mxu0 0.0
    %3023 = vmatpush1.msra.mxu0 0.0
    %3024 = vmatprep.subr.mxu0 0.0
    %3025 = vmatpush1.msra.mxu0 0.0
    %3026 = vmatprep.subr.mxu0 0.0
    %3027 = vmatpush1.msra.mxu0 0.0
    %3028 = vmatprep.subr.mxu0 0.0
    %3029 = vmatpush1.msra.mxu0 0.0
    %3030 = vmatprep.subr.mxu0 0.0
    %3031 = vmatpush1.msra.mxu0 0.0
    %3032 = vmatprep.mubr.f32.mxu0 0.0
    %3033 = vmatmul.mubr.f32.gmra.mrb[0].mxu0 %v2958
    %v3034 = vpop.f32.mrb[0].mxu0
    %v3035 = vadd.f32 %v2871, %v3034
    %v3036 = vpop.f32.mrb[0].mxu0
    %v3037 = vadd.f32 %v2873, %v3036
    %3038 = vdwg.mxu0
    %3039 = vmatprep.subr.mxu0 %v2966
    %3040 = vmatpush1.msra.mxu0 %v2964
    %3041 = vmatprep.subr.mxu0 0.0
    %3042 = vmatpush1.msra.mxu0 0.0
    %3043 = vmatprep.subr.mxu0 0.0
    %3044 = vmatpush1.msra.mxu0 0.0
    %3045 = vmatprep.subr.mxu0 0.0
    %3046 = vmatpush1.msra.mxu0 0.0
    %3047 = vmatprep.subr.mxu0 0.0
    %3048 = vmatpush1.msra.mxu0 0.0
    %3049 = vmatprep.subr.mxu0 0.0
    %3050 = vmatpush1.msra.mxu0 0.0
    %3051 = vmatprep.subr.mxu0 0.0
    %3052 = vmatpush1.msra.mxu0 0.0
    %3053 = vmatprep.subr.mxu0 0.0
    %3054 = vmatpush1.msra.mxu0 0.0
    %3055 = vmatprep.subr.mxu0 0.0
    %3056 = vmatpush1.msra.mxu0 0.0
    %3057 = vmatprep.subr.mxu0 0.0
    %3058 = vmatpush1.msra.mxu0 0.0
    %3059 = vmatprep.subr.mxu0 0.0
    %3060 = vmatpush1.msra.mxu0 0.0
    %3061 = vmatprep.subr.mxu0 0.0
    %3062 = vmatpush1.msra.mxu0 0.0
    %3063 = vmatprep.subr.mxu0 0.0
    %3064 = vmatpush1.msra.mxu0 0.0
    %3065 = vmatprep.subr.mxu0 0.0
    %3066 = vmatpush1.msra.mxu0 0.0
    %3067 = vmatprep.subr.mxu0 0.0
    %3068 = vmatpush1.msra.mxu0 0.0
    %3069 = vmatprep.subr.mxu0 0.0
    %3070 = vmatpush1.msra.mxu0 0.0
    %3071 = vmatprep.subr.mxu0 0.0
    %3072 = vmatpush1.msra.mxu0 0.0
    %3073 = vmatprep.subr.mxu0 0.0
    %3074 = vmatpush1.msra.mxu0 0.0
    %3075 = vmatprep.subr.mxu0 0.0
    %3076 = vmatpush1.msra.mxu0 0.0
    %3077 = vmatprep.subr.mxu0 0.0
    %3078 = vmatpush1.msra.mxu0 0.0
    %3079 = vmatprep.subr.mxu0 0.0
    %3080 = vmatpush1.msra.mxu0 0.0
    %3081 = vmatprep.subr.mxu0 0.0
    %3082 = vmatpush1.msra.mxu0 0.0
    %3083 = vmatprep.subr.mxu0 0.0
    %3084 = vmatpush1.msra.mxu0 0.0
    %3085 = vmatprep.subr.mxu0 0.0
    %3086 = vmatpush1.msra.mxu0 0.0
    %3087 = vmatprep.subr.mxu0 0.0
    %3088 = vmatpush1.msra.mxu0 0.0
    %3089 = vmatprep.subr.mxu0 0.0
    %3090 = vmatpush1.msra.mxu0 0.0
    %3091 = vmatprep.subr.mxu0 0.0
    %3092 = vmatpush1.msra.mxu0 0.0
    %3093 = vmatprep.subr.mxu0 0.0
    %3094 = vmatpush1.msra.mxu0 0.0
    %3095 = vmatprep.subr.mxu0 0.0
    %3096 = vmatpush1.msra.mxu0 0.0
    %3097 = vmatprep.subr.mxu0 0.0
    %3098 = vmatpush1.msra.mxu0 0.0
    %3099 = vmatprep.subr.mxu0 0.0
    %3100 = vmatpush1.msra.mxu0 0.0
    %3101 = vmatprep.subr.mxu0 0.0
    %3102 = vmatpush1.msra.mxu0 0.0
    %3103 = vmatprep.mubr.f32.mxu0 0.0
    %3104 = vmatmul.mubr.f32.gmra.mrb[0].mxu0 %v2958
    %v3105 = vpop.f32.mrb[0].mxu0
    %v3106 = vadd.f32 %v2942, %v3105
    %v3107 = vpop.f32.mrb[0].mxu0
    %v3108 = vadd.f32 %v2944, %v3107
    %3109 = vdwg.mxu0
    %v3110 = vld [vmem:[#allocation3] sm:$0xff]
    %v3111 = vld [vmem:[#allocation3 + $0x8] sm:$0xff]
    %s3112 = scalar_lea.vmem %s6, 16
    %v3113 = vld [vmem:[%s3112] sm:$0xff]
    %v3116 = vcombine.high %v3110, %v3110
    %v3117 = vcombine.high %v3111, %v3111
    %3118 = vrot.lane.b32.xlu0 %v3110, 125
    %v3119 = vpop.permute.xlu0 %3118
    %3120 = vrot.lane.b32.xlu0 %v3116, 125
    %v3121 = vpop.permute.xlu0 %3120
    %3122 = vrot.lane.b32.xlu0 %v3111, 125
    %v3123 = vpop.permute.xlu0 %3122
    %3124 = vrot.lane.b32.xlu0 %v3117, 125
    %v3125 = vpop.permute.xlu0 %3124
    %vm3126 = vcmask 1022976
    %v3127 = vsel %vm3126, %v3119, %v3121
    %v3128 = vsel %vm3126, %v3121, %v3123
    %v3129 = vsel %vm3126, %v3123, %v3125
    %v3131 = vsel %vm2792, %v3113, 0
    %v3133 = vsel %vm974, %v3127, 0
    %v3135 = vsel %vm974, %v3128, 0
    %v3137 = vsel %vm974, %v3129, 0
    %v3139 = vsel %vm974, %v3125, 0
    %3141 = vmatprep.subr.mxu0 %v3135
    %3142 = vmatpush1.msra.mxu0 %v3133
    %3143 = vmatprep.subr.mxu0 0.0
    %3144 = vmatpush1.msra.mxu0 0.0
    %3145 = vmatprep.subr.mxu0 0.0
    %3146 = vmatpush1.msra.mxu0 0.0
    %3147 = vmatprep.subr.mxu0 0.0
    %3148 = vmatpush1.msra.mxu0 0.0
    %3149 = vmatprep.subr.mxu0 0.0
    %3150 = vmatpush1.msra.mxu0 0.0
    %3151 = vmatprep.subr.mxu0 0.0
    %3152 = vmatpush1.msra.mxu0 0.0
    %3153 = vmatprep.subr.mxu0 0.0
    %3154 = vmatpush1.msra.mxu0 0.0
    %3155 = vmatprep.subr.mxu0 0.0
    %3156 = vmatpush1.msra.mxu0 0.0
    %3157 = vmatprep.subr.mxu0 0.0
    %3158 = vmatpush1.msra.mxu0 0.0
    %3159 = vmatprep.subr.mxu0 0.0
    %3160 = vmatpush1.msra.mxu0 0.0
    %3161 = vmatprep.subr.mxu0 0.0
    %3162 = vmatpush1.msra.mxu0 0.0
    %3163 = vmatprep.subr.mxu0 0.0
    %3164 = vmatpush1.msra.mxu0 0.0
    %3165 = vmatprep.subr.mxu0 0.0
    %3166 = vmatpush1.msra.mxu0 0.0
    %3167 = vmatprep.subr.mxu0 0.0
    %3168 = vmatpush1.msra.mxu0 0.0
    %3169 = vmatprep.subr.mxu0 0.0
    %3170 = vmatpush1.msra.mxu0 0.0
    %3171 = vmatprep.subr.mxu0 0.0
    %3172 = vmatpush1.msra.mxu0 0.0
    %3173 = vmatprep.subr.mxu0 0.0
    %3174 = vmatpush1.msra.mxu0 0.0
    %3175 = vmatprep.subr.mxu0 0.0
    %3176 = vmatpush1.msra.mxu0 0.0
    %3177 = vmatprep.subr.mxu0 0.0
    %3178 = vmatpush1.msra.mxu0 0.0
    %3179 = vmatprep.subr.mxu0 0.0
    %3180 = vmatpush1.msra.mxu0 0.0
    %3181 = vmatprep.subr.mxu0 0.0
    %3182 = vmatpush1.msra.mxu0 0.0
    %3183 = vmatprep.subr.mxu0 0.0
    %3184 = vmatpush1.msra.mxu0 0.0
    %3185 = vmatprep.subr.mxu0 0.0
    %3186 = vmatpush1.msra.mxu0 0.0
    %3187 = vmatprep.subr.mxu0 0.0
    %3188 = vmatpush1.msra.mxu0 0.0
    %3189 = vmatprep.subr.mxu0 0.0
    %3190 = vmatpush1.msra.mxu0 0.0
    %3191 = vmatprep.subr.mxu0 0.0
    %3192 = vmatpush1.msra.mxu0 0.0
    %3193 = vmatprep.subr.mxu0 0.0
    %3194 = vmatpush1.msra.mxu0 0.0
    %3195 = vmatprep.subr.mxu0 0.0
    %3196 = vmatpush1.msra.mxu0 0.0
    %3197 = vmatprep.subr.mxu0 0.0
    %3198 = vmatpush1.msra.mxu0 0.0
    %3199 = vmatprep.subr.mxu0 0.0
    %3200 = vmatpush1.msra.mxu0 0.0
    %3201 = vmatprep.subr.mxu0 0.0
    %3202 = vmatpush1.msra.mxu0 0.0
    %3203 = vmatprep.subr.mxu0 0.0
    %3204 = vmatpush1.msra.mxu0 0.0
    %3205 = vmatprep.mubr.f32.mxu0 0.0
    %3206 = vmatmul.mubr.f32.gmra.mrb[0].mxu0 %v3131
    %v3207 = vpop.f32.mrb[0].mxu0
    %v3208 = vadd.f32 0.0, %v3207
    %v3209 = vpop.f32.mrb[0].mxu0
    %v3210 = vadd.f32 0.0, %v3209
    %3211 = vdwg.mxu0
    %3212 = vmatprep.subr.mxu0 %v3139
    %3213 = vmatpush1.msra.mxu0 %v3137
    %3214 = vmatprep.subr.mxu0 0.0
    %3215 = vmatpush1.msra.mxu0 0.0
    %3216 = vmatprep.subr.mxu0 0.0
    %3217 = vmatpush1.msra.mxu0 0.0
    %3218 = vmatprep.subr.mxu0 0.0
    %3219 = vmatpush1.msra.mxu0 0.0
    %3220 = vmatprep.subr.mxu0 0.0
    %3221 = vmatpush1.msra.mxu0 0.0
    %3222 = vmatprep.subr.mxu0 0.0
    %3223 = vmatpush1.msra.mxu0 0.0
    %3224 = vmatprep.subr.mxu0 0.0
    %3225 = vmatpush1.msra.mxu0 0.0
    %3226 = vmatprep.subr.mxu0 0.0
    %3227 = vmatpush1.msra.mxu0 0.0
    %3228 = vmatprep.subr.mxu0 0.0
    %3229 = vmatpush1.msra.mxu0 0.0
    %3230 = vmatprep.subr.mxu0 0.0
    %3231 = vmatpush1.msra.mxu0 0.0
    %3232 = vmatprep.subr.mxu0 0.0
    %3233 = vmatpush1.msra.mxu0 0.0
    %3234 = vmatprep.subr.mxu0 0.0
    %3235 = vmatpush1.msra.mxu0 0.0
    %3236 = vmatprep.subr.mxu0 0.0
    %3237 = vmatpush1.msra.mxu0 0.0
    %3238 = vmatprep.subr.mxu0 0.0
    %3239 = vmatpush1.msra.mxu0 0.0
    %3240 = vmatprep.subr.mxu0 0.0
    %3241 = vmatpush1.msra.mxu0 0.0
    %3242 = vmatprep.subr.mxu0 0.0
    %3243 = vmatpush1.msra.mxu0 0.0
    %3244 = vmatprep.subr.mxu0 0.0
    %3245 = vmatpush1.msra.mxu0 0.0
    %3246 = vmatprep.subr.mxu0 0.0
    %3247 = vmatpush1.msra.mxu0 0.0
    %3248 = vmatprep.subr.mxu0 0.0
    %3249 = vmatpush1.msra.mxu0 0.0
    %3250 = vmatprep.subr.mxu0 0.0
    %3251 = vmatpush1.msra.mxu0 0.0
    %3252 = vmatprep.subr.mxu0 0.0
    %3253 = vmatpush1.msra.mxu0 0.0
    %3254 = vmatprep.subr.mxu0 0.0
    %3255 = vmatpush1.msra.mxu0 0.0
    %3256 = vmatprep.subr.mxu0 0.0
    %3257 = vmatpush1.msra.mxu0 0.0
    %3258 = vmatprep.subr.mxu0 0.0
    %3259 = vmatpush1.msra.mxu0 0.0
    %3260 = vmatprep.subr.mxu0 0.0
    %3261 = vmatpush1.msra.mxu0 0.0
    %3262 = vmatprep.subr.mxu0 0.0
    %3263 = vmatpush1.msra.mxu0 0.0
    %3264 = vmatprep.subr.mxu0 0.0
    %3265 = vmatpush1.msra.mxu0 0.0
    %3266 = vmatprep.subr.mxu0 0.0
    %3267 = vmatpush1.msra.mxu0 0.0
    %3268 = vmatprep.subr.mxu0 0.0
    %3269 = vmatpush1.msra.mxu0 0.0
    %3270 = vmatprep.subr.mxu0 0.0
    %3271 = vmatpush1.msra.mxu0 0.0
    %3272 = vmatprep.subr.mxu0 0.0
    %3273 = vmatpush1.msra.mxu0 0.0
    %3274 = vmatprep.subr.mxu0 0.0
    %3275 = vmatpush1.msra.mxu0 0.0
    %3276 = vmatprep.mubr.f32.mxu0 0.0
    %3277 = vmatmul.mubr.f32.gmra.mrb[0].mxu0 %v3131
    %v3278 = vpop.f32.mrb[0].mxu0
    %v3279 = vadd.f32 0.0, %v3278
    %v3280 = vpop.f32.mrb[0].mxu0
    %v3281 = vadd.f32 0.0, %v3280
    %3282 = vdwg.mxu0
    %v3283 = vadd.f32 %v3035, %v3208
    %v3284 = vadd.f32 %v3037, %v3210
    %v3285 = vadd.f32 %v3106, %v3279
    %v3286 = vadd.f32 %v3108, %v3281
    %v3287 = vld [vmem:[#allocation3] sm:$0xff]
    %v3288 = vld [vmem:[#allocation3 + $0x8] sm:$0xff]
    %s3289 = scalar_lea.vmem %s6, 24
    %v3290 = vld [vmem:[%s3289] sm:$0xff]
    %v3293 = vcombine.high %v3287, %v3287
    %v3294 = vcombine.high %v3288, %v3288
    %3295 = vrot.lane.b32.xlu0 %v3287, 113
    %v3296 = vpop.permute.xlu0 %3295
    %3297 = vrot.lane.b32.xlu0 %v3293, 113
    %v3298 = vpop.permute.xlu0 %3297
    %3299 = vrot.lane.b32.xlu0 %v3288, 113
    %v3300 = vpop.permute.xlu0 %3299
    %3301 = vrot.lane.b32.xlu0 %v3294, 113
    %v3302 = vpop.permute.xlu0 %3301
    %vm3303 = vcmask 924672
    %v3304 = vsel %vm3303, %v3296, %v3298
    %v3305 = vsel %vm3303, %v3298, %v3300
    %v3306 = vsel %vm3303, %v3300, %v3302
    %v3308 = vsel %vm2792, %v3290, 0
    %v3310 = vsel %vm974, %v3304, 0
    %v3312 = vsel %vm974, %v3305, 0
    %v3314 = vsel %vm974, %v3306, 0
    %v3316 = vsel %vm974, %v3302, 0
    %3318 = vmatprep.subr.mxu0 %v3312
    %3319 = vmatpush1.msra.mxu0 %v3310
    %3320 = vmatprep.subr.mxu0 0.0
    %3321 = vmatpush1.msra.mxu0 0.0
    %3322 = vmatprep.subr.mxu0 0.0
    %3323 = vmatpush1.msra.mxu0 0.0
    %3324 = vmatprep.subr.mxu0 0.0
    %3325 = vmatpush1.msra.mxu0 0.0
    %3326 = vmatprep.subr.mxu0 0.0
    %3327 = vmatpush1.msra.mxu0 0.0
    %3328 = vmatprep.subr.mxu0 0.0
    %3329 = vmatpush1.msra.mxu0 0.0
    %3330 = vmatprep.subr.mxu0 0.0
    %3331 = vmatpush1.msra.mxu0 0.0
    %3332 = vmatprep.subr.mxu0 0.0
    %3333 = vmatpush1.msra.mxu0 0.0
    %3334 = vmatprep.subr.mxu0 0.0
    %3335 = vmatpush1.msra.mxu0 0.0
    %3336 = vmatprep.subr.mxu0 0.0
    %3337 = vmatpush1.msra.mxu0 0.0
    %3338 = vmatprep.subr.mxu0 0.0
    %3339 = vmatpush1.msra.mxu0 0.0
    %3340 = vmatprep.subr.mxu0 0.0
    %3341 = vmatpush1.msra.mxu0 0.0
    %3342 = vmatprep.subr.mxu0 0.0
    %3343 = vmatpush1.msra.mxu0 0.0
    %3344 = vmatprep.subr.mxu0 0.0
    %3345 = vmatpush1.msra.mxu0 0.0
    %3346 = vmatprep.subr.mxu0 0.0
    %3347 = vmatpush1.msra.mxu0 0.0
    %3348 = vmatprep.subr.mxu0 0.0
    %3349 = vmatpush1.msra.mxu0 0.0
    %3350 = vmatprep.subr.mxu0 0.0
    %3351 = vmatpush1.msra.mxu0 0.0
    %3352 = vmatprep.subr.mxu0 0.0
    %3353 = vmatpush1.msra.mxu0 0.0
    %3354 = vmatprep.subr.mxu0 0.0
    %3355 = vmatpush1.msra.mxu0 0.0
    %3356 = vmatprep.subr.mxu0 0.0
    %3357 = vmatpush1.msra.mxu0 0.0
    %3358 = vmatprep.subr.mxu0 0.0
    %3359 = vmatpush1.msra.mxu0 0.0
    %3360 = vmatprep.subr.mxu0 0.0
    %3361 = vmatpush1.msra.mxu0 0.0
    %3362 = vmatprep.subr.mxu0 0.0
    %3363 = vmatpush1.msra.mxu0 0.0
    %3364 = vmatprep.subr.mxu0 0.0
    %3365 = vmatpush1.msra.mxu0 0.0
    %3366 = vmatprep.subr.mxu0 0.0
    %3367 = vmatpush1.msra.mxu0 0.0
    %3368 = vmatprep.subr.mxu0 0.0
    %3369 = vmatpush1.msra.mxu0 0.0
    %3370 = vmatprep.subr.mxu0 0.0
    %3371 = vmatpush1.msra.mxu0 0.0
    %3372 = vmatprep.subr.mxu0 0.0
    %3373 = vmatpush1.msra.mxu0 0.0
    %3374 = vmatprep.subr.mxu0 0.0
    %3375 = vmatpush1.msra.mxu0 0.0
    %3376 = vmatprep.subr.mxu0 0.0
    %3377 = vmatpush1.msra.mxu0 0.0
    %3378 = vmatprep.subr.mxu0 0.0
    %3379 = vmatpush1.msra.mxu0 0.0
    %3380 = vmatprep.subr.mxu0 0.0
    %3381 = vmatpush1.msra.mxu0 0.0
    %3382 = vmatprep.mubr.f32.mxu0 0.0
    %3383 = vmatmul.mubr.f32.gmra.mrb[0].mxu0 %v3308
    %v3384 = vpop.f32.mrb[0].mxu0
    %v3385 = vadd.f32 0.0, %v3384
    %v3386 = vpop.f32.mrb[0].mxu0
    %v3387 = vadd.f32 0.0, %v3386
    %3388 = vdwg.mxu0
    %3389 = vmatprep.subr.mxu0 %v3316
    %3390 = vmatpush1.msra.mxu0 %v3314
    %3391 = vmatprep.subr.mxu0 0.0
    %3392 = vmatpush1.msra.mxu0 0.0
    %3393 = vmatprep.subr.mxu0 0.0
    %3394 = vmatpush1.msra.mxu0 0.0
    %3395 = vmatprep.subr.mxu0 0.0
    %3396 = vmatpush1.msra.mxu0 0.0
    %3397 = vmatprep.subr.mxu0 0.0
    %3398 = vmatpush1.msra.mxu0 0.0
    %3399 = vmatprep.subr.mxu0 0.0
    %3400 = vmatpush1.msra.mxu0 0.0
    %3401 = vmatprep.subr.mxu0 0.0
    %3402 = vmatpush1.msra.mxu0 0.0
    %3403 = vmatprep.subr.mxu0 0.0
    %3404 = vmatpush1.msra.mxu0 0.0
    %3405 = vmatprep.subr.mxu0 0.0
    %3406 = vmatpush1.msra.mxu0 0.0
    %3407 = vmatprep.subr.mxu0 0.0
    %3408 = vmatpush1.msra.mxu0 0.0
    %3409 = vmatprep.subr.mxu0 0.0
    %3410 = vmatpush1.msra.mxu0 0.0
    %3411 = vmatprep.subr.mxu0 0.0
    %3412 = vmatpush1.msra.mxu0 0.0
    %3413 = vmatprep.subr.mxu0 0.0
    %3414 = vmatpush1.msra.mxu0 0.0
    %3415 = vmatprep.subr.mxu0 0.0
    %3416 = vmatpush1.msra.mxu0 0.0
    %3417 = vmatprep.subr.mxu0 0.0
    %3418 = vmatpush1.msra.mxu0 0.0
    %3419 = vmatprep.subr.mxu0 0.0
    %3420 = vmatpush1.msra.mxu0 0.0
    %3421 = vmatprep.subr.mxu0 0.0
    %3422 = vmatpush1.msra.mxu0 0.0
    %3423 = vmatprep.subr.mxu0 0.0
    %3424 = vmatpush1.msra.mxu0 0.0
    %3425 = vmatprep.subr.mxu0 0.0
    %3426 = vmatpush1.msra.mxu0 0.0
    %3427 = vmatprep.subr.mxu0 0.0
    %3428 = vmatpush1.msra.mxu0 0.0
    %3429 = vmatprep.subr.mxu0 0.0
    %3430 = vmatpush1.msra.mxu0 0.0
    %3431 = vmatprep.subr.mxu0 0.0
    %3432 = vmatpush1.msra.mxu0 0.0
    %3433 = vmatprep.subr.mxu0 0.0
    %3434 = vmatpush1.msra.mxu0 0.0
    %3435 = vmatprep.subr.mxu0 0.0
    %3436 = vmatpush1.msra.mxu0 0.0
    %3437 = vmatprep.subr.mxu0 0.0
    %3438 = vmatpush1.msra.mxu0 0.0
    %3439 = vmatprep.subr.mxu0 0.0
    %3440 = vmatpush1.msra.mxu0 0.0
    %3441 = vmatprep.subr.mxu0 0.0
    %3442 = vmatpush1.msra.mxu0 0.0
    %3443 = vmatprep.subr.mxu0 0.0
    %3444 = vmatpush1.msra.mxu0 0.0
    %3445 = vmatprep.subr.mxu0 0.0
    %3446 = vmatpush1.msra.mxu0 0.0
    %3447 = vmatprep.subr.mxu0 0.0
    %3448 = vmatpush1.msra.mxu0 0.0
    %3449 = vmatprep.subr.mxu0 0.0
    %3450 = vmatpush1.msra.mxu0 0.0
    %3451 = vmatprep.subr.mxu0 0.0
    %3452 = vmatpush1.msra.mxu0 0.0
    %3453 = vmatprep.mubr.f32.mxu0 0.0
    %3454 = vmatmul.mubr.f32.gmra.mrb[0].mxu0 %v3308
    %v3455 = vpop.f32.mrb[0].mxu0
    %v3456 = vadd.f32 0.0, %v3455
    %v3457 = vpop.f32.mrb[0].mxu0
    %v3458 = vadd.f32 0.0, %v3457
    %3459 = vdwg.mxu0
    %v3460 = vadd.f32 %v3283, %v3385
    %v3461 = vadd.f32 %v3284, %v3387
    %v3462 = vadd.f32 %v3285, %v3456
    %v3463 = vadd.f32 %v3286, %v3458
    %v3464 = vld [vmem:[#allocation3] sm:$0xff]
    %v3465 = vld [vmem:[#allocation3 + $0x8] sm:$0xff]
    %s3466 = scalar_lea.vmem %s6, 32
    %v3467 = vld [vmem:[%s3466] sm:$0xff]
    %v3470 = vcombine.high %v3464, %v3464
    %v3471 = vcombine.high %v3465, %v3465
    %3472 = vrot.lane.b32.xlu0 %v3464, 112
    %v3473 = vpop.permute.xlu0 %3472
    %3474 = vrot.lane.b32.xlu0 %v3470, 112
    %v3475 = vpop.permute.xlu0 %3474
    %3476 = vrot.lane.b32.xlu0 %v3465, 112
    %v3477 = vpop.permute.xlu0 %3476
    %3478 = vrot.lane.b32.xlu0 %v3471, 112
    %v3479 = vpop.permute.xlu0 %3478
    %vm3480 = vcmask 916480
    %v3481 = vsel %vm3480, %v3473, %v3475
    %v3482 = vsel %vm3480, %v3475, %v3477
    %v3483 = vsel %vm3480, %v3477, %v3479
    %v3485 = vsel %vm2792, %v3467, 0
    %v3487 = vsel %vm974, %v3481, 0
    %v3489 = vsel %vm974, %v3482, 0
    %v3491 = vsel %vm974, %v3483, 0
    %v3493 = vsel %vm974, %v3479, 0
    %3495 = vmatprep.subr.mxu0 %v3489
    %3496 = vmatpush1.msra.mxu0 %v3487
    %3497 = vmatprep.subr.mxu0 0.0
    %3498 = vmatpush1.msra.mxu0 0.0
    %3499 = vmatprep.subr.mxu0 0.0
    %3500 = vmatpush1.msra.mxu0 0.0
    %3501 = vmatprep.subr.mxu0 0.0
    %3502 = vmatpush1.msra.mxu0 0.0
    %3503 = vmatprep.subr.mxu0 0.0
    %3504 = vmatpush1.msra.mxu0 0.0
    %3505 = vmatprep.subr.mxu0 0.0
    %3506 = vmatpush1.msra.mxu0 0.0
    %3507 = vmatprep.subr.mxu0 0.0
    %3508 = vmatpush1.msra.mxu0 0.0
    %3509 = vmatprep.subr.mxu0 0.0
    %3510 = vmatpush1.msra.mxu0 0.0
    %3511 = vmatprep.subr.mxu0 0.0
    %3512 = vmatpush1.msra.mxu0 0.0
    %3513 = vmatprep.subr.mxu0 0.0
    %3514 = vmatpush1.msra.mxu0 0.0
    %3515 = vmatprep.subr.mxu0 0.0
    %3516 = vmatpush1.msra.mxu0 0.0
    %3517 = vmatprep.subr.mxu0 0.0
    %3518 = vmatpush1.msra.mxu0 0.0
    %3519 = vmatprep.subr.mxu0 0.0
    %3520 = vmatpush1.msra.mxu0 0.0
    %3521 = vmatprep.subr.mxu0 0.0
    %3522 = vmatpush1.msra.mxu0 0.0
    %3523 = vmatprep.subr.mxu0 0.0
    %3524 = vmatpush1.msra.mxu0 0.0
    %3525 = vmatprep.subr.mxu0 0.0
    %3526 = vmatpush1.msra.mxu0 0.0
    %3527 = vmatprep.subr.mxu0 0.0
    %3528 = vmatpush1.msra.mxu0 0.0
    %3529 = vmatprep.subr.mxu0 0.0
    %3530 = vmatpush1.msra.mxu0 0.0
    %3531 = vmatprep.subr.mxu0 0.0
    %3532 = vmatpush1.msra.mxu0 0.0
    %3533 = vmatprep.subr.mxu0 0.0
    %3534 = vmatpush1.msra.mxu0 0.0
    %3535 = vmatprep.subr.mxu0 0.0
    %3536 = vmatpush1.msra.mxu0 0.0
    %3537 = vmatprep.subr.mxu0 0.0
    %3538 = vmatpush1.msra.mxu0 0.0
    %3539 = vmatprep.subr.mxu0 0.0
    %3540 = vmatpush1.msra.mxu0 0.0
    %3541 = vmatprep.subr.mxu0 0.0
    %3542 = vmatpush1.msra.mxu0 0.0
    %3543 = vmatprep.subr.mxu0 0.0
    %3544 = vmatpush1.msra.mxu0 0.0
    %3545 = vmatprep.subr.mxu0 0.0
    %3546 = vmatpush1.msra.mxu0 0.0
    %3547 = vmatprep.subr.mxu0 0.0
    %3548 = vmatpush1.msra.mxu0 0.0
    %3549 = vmatprep.subr.mxu0 0.0
    %3550 = vmatpush1.msra.mxu0 0.0
    %3551 = vmatprep.subr.mxu0 0.0
    %3552 = vmatpush1.msra.mxu0 0.0
    %3553 = vmatprep.subr.mxu0 0.0
    %3554 = vmatpush1.msra.mxu0 0.0
    %3555 = vmatprep.subr.mxu0 0.0
    %3556 = vmatpush1.msra.mxu0 0.0
    %3557 = vmatprep.subr.mxu0 0.0
    %3558 = vmatpush1.msra.mxu0 0.0
    %3559 = vmatprep.mubr.f32.mxu0 0.0
    %3560 = vmatmul.mubr.f32.gmra.mrb[0].mxu0 %v3485
    %v3561 = vpop.f32.mrb[0].mxu0
    %v3562 = vadd.f32 0.0, %v3561
    %v3563 = vpop.f32.mrb[0].mxu0
    %v3564 = vadd.f32 0.0, %v3563
    %3565 = vdwg.mxu0
    %3566 = vmatprep.subr.mxu0 %v3493
    %3567 = vmatpush1.msra.mxu0 %v3491
    %3568 = vmatprep.subr.mxu0 0.0
    %3569 = vmatpush1.msra.mxu0 0.0
    %3570 = vmatprep.subr.mxu0 0.0
    %3571 = vmatpush1.msra.mxu0 0.0
    %3572 = vmatprep.subr.mxu0 0.0
    %3573 = vmatpush1.msra.mxu0 0.0
    %3574 = vmatprep.subr.mxu0 0.0
    %3575 = vmatpush1.msra.mxu0 0.0
    %3576 = vmatprep.subr.mxu0 0.0
    %3577 = vmatpush1.msra.mxu0 0.0
    %3578 = vmatprep.subr.mxu0 0.0
    %3579 = vmatpush1.msra.mxu0 0.0
    %3580 = vmatprep.subr.mxu0 0.0
    %3581 = vmatpush1.msra.mxu0 0.0
    %3582 = vmatprep.subr.mxu0 0.0
    %3583 = vmatpush1.msra.mxu0 0.0
    %3584 = vmatprep.subr.mxu0 0.0
    %3585 = vmatpush1.msra.mxu0 0.0
    %3586 = vmatprep.subr.mxu0 0.0
    %3587 = vmatpush1.msra.mxu0 0.0
    %3588 = vmatprep.subr.mxu0 0.0
    %3589 = vmatpush1.msra.mxu0 0.0
    %3590 = vmatprep.subr.mxu0 0.0
    %3591 = vmatpush1.msra.mxu0 0.0
    %3592 = vmatprep.subr.mxu0 0.0
    %3593 = vmatpush1.msra.mxu0 0.0
    %3594 = vmatprep.subr.mxu0 0.0
    %3595 = vmatpush1.msra.mxu0 0.0
    %3596 = vmatprep.subr.mxu0 0.0
    %3597 = vmatpush1.msra.mxu0 0.0
    %3598 = vmatprep.subr.mxu0 0.0
    %3599 = vmatpush1.msra.mxu0 0.0
    %3600 = vmatprep.subr.mxu0 0.0
    %3601 = vmatpush1.msra.mxu0 0.0
    %3602 = vmatprep.subr.mxu0 0.0
    %3603 = vmatpush1.msra.mxu0 0.0
    %3604 = vmatprep.subr.mxu0 0.0
    %3605 = vmatpush1.msra.mxu0 0.0
    %3606 = vmatprep.subr.mxu0 0.0
    %3607 = vmatpush1.msra.mxu0 0.0
    %3608 = vmatprep.subr.mxu0 0.0
    %3609 = vmatpush1.msra.mxu0 0.0
    %3610 = vmatprep.subr.mxu0 0.0
    %3611 = vmatpush1.msra.mxu0 0.0
    %3612 = vmatprep.subr.mxu0 0.0
    %3613 = vmatpush1.msra.mxu0 0.0
    %3614 = vmatprep.subr.mxu0 0.0
    %3615 = vmatpush1.msra.mxu0 0.0
    %3616 = vmatprep.subr.mxu0 0.0
    %3617 = vmatpush1.msra.mxu0 0.0
    %3618 = vmatprep.subr.mxu0 0.0
    %3619 = vmatpush1.msra.mxu0 0.0
    %3620 = vmatprep.subr.mxu0 0.0
    %3621 = vmatpush1.msra.mxu0 0.0
    %3622 = vmatprep.subr.mxu0 0.0
    %3623 = vmatpush1.msra.mxu0 0.0
    %3624 = vmatprep.subr.mxu0 0.0
    %3625 = vmatpush1.msra.mxu0 0.0
    %3626 = vmatprep.subr.mxu0 0.0
    %3627 = vmatpush1.msra.mxu0 0.0
    %3628 = vmatprep.subr.mxu0 0.0
    %3629 = vmatpush1.msra.mxu0 0.0
    %3630 = vmatprep.mubr.f32.mxu0 0.0
    %3631 = vmatmul.mubr.f32.gmra.mrb[0].mxu0 %v3485
    %v3632 = vpop.f32.mrb[0].mxu0
    %v3633 = vadd.f32 0.0, %v3632
    %v3634 = vpop.f32.mrb[0].mxu0
    %v3635 = vadd.f32 0.0, %v3634
    %3636 = vdwg.mxu0
    %v3637 = vadd.f32 %v3460, %v3562
    %v3638 = vadd.f32 %v3461, %v3564
    %v3639 = vadd.f32 %v3462, %v3633
    %v3640 = vadd.f32 %v3463, %v3635
    %v3641 = vld [vmem:[#allocation3] sm:$0xff]
    %v3642 = vld [vmem:[#allocation3 + $0x8] sm:$0xff]
    %s3643 = scalar_lea.vmem %s6, 40
    %v3644 = vld [vmem:[%s3643] sm:$0xff]
    %v3647 = vcombine.high %v3641, %v3641
    %v3648 = vcombine.high %v3642, %v3642
    %3649 = vrot.lane.b32.xlu0 %v3641, 111
    %v3650 = vpop.permute.xlu0 %3649
    %3651 = vrot.lane.b32.xlu0 %v3647, 111
    %v3652 = vpop.permute.xlu0 %3651
    %3653 = vrot.lane.b32.xlu0 %v3642, 111
    %v3654 = vpop.permute.xlu0 %3653
    %3655 = vrot.lane.b32.xlu0 %v3648, 111
    %v3656 = vpop.permute.xlu0 %3655
    %vm3657 = vcmask 908288
    %v3658 = vsel %vm3657, %v3650, %v3652
    %v3659 = vsel %vm3657, %v3652, %v3654
    %v3660 = vsel %vm3657, %v3654, %v3656
    %v3662 = vsel %vm2792, %v3644, 0
    %v3664 = vsel %vm974, %v3658, 0
    %v3666 = vsel %vm974, %v3659, 0
    %v3668 = vsel %vm974, %v3660, 0
    %v3670 = vsel %vm974, %v3656, 0
    %3672 = vmatprep.subr.mxu0 %v3666
    %3673 = vmatpush1.msra.mxu0 %v3664
    %3674 = vmatprep.subr.mxu0 0.0
    %3675 = vmatpush1.msra.mxu0 0.0
    %3676 = vmatprep.subr.mxu0 0.0
    %3677 = vmatpush1.msra.mxu0 0.0
    %3678 = vmatprep.subr.mxu0 0.0
    %3679 = vmatpush1.msra.mxu0 0.0
    %3680 = vmatprep.subr.mxu0 0.0
    %3681 = vmatpush1.msra.mxu0 0.0
    %3682 = vmatprep.subr.mxu0 0.0
    %3683 = vmatpush1.msra.mxu0 0.0
    %3684 = vmatprep.subr.mxu0 0.0
    %3685 = vmatpush1.msra.mxu0 0.0
    %3686 = vmatprep.subr.mxu0 0.0
    %3687 = vmatpush1.msra.mxu0 0.0
    %3688 = vmatprep.subr.mxu0 0.0
    %3689 = vmatpush1.msra.mxu0 0.0
    %3690 = vmatprep.subr.mxu0 0.0
    %3691 = vmatpush1.msra.mxu0 0.0
    %3692 = vmatprep.subr.mxu0 0.0
    %3693 = vmatpush1.msra.mxu0 0.0
    %3694 = vmatprep.subr.mxu0 0.0
    %3695 = vmatpush1.msra.mxu0 0.0
    %3696 = vmatprep.subr.mxu0 0.0
    %3697 = vmatpush1.msra.mxu0 0.0
    %3698 = vmatprep.subr.mxu0 0.0
    %3699 = vmatpush1.msra.mxu0 0.0
    %3700 = vmatprep.subr.mxu0 0.0
    %3701 = vmatpush1.msra.mxu0 0.0
    %3702 = vmatprep.subr.mxu0 0.0
    %3703 = vmatpush1.msra.mxu0 0.0
    %3704 = vmatprep.subr.mxu0 0.0
    %3705 = vmatpush1.msra.mxu0 0.0
    %3706 = vmatprep.subr.mxu0 0.0
    %3707 = vmatpush1.msra.mxu0 0.0
    %3708 = vmatprep.subr.mxu0 0.0
    %3709 = vmatpush1.msra.mxu0 0.0
    %3710 = vmatprep.subr.mxu0 0.0
    %3711 = vmatpush1.msra.mxu0 0.0
    %3712 = vmatprep.subr.mxu0 0.0
    %3713 = vmatpush1.msra.mxu0 0.0
    %3714 = vmatprep.subr.mxu0 0.0
    %3715 = vmatpush1.msra.mxu0 0.0
    %3716 = vmatprep.subr.mxu0 0.0
    %3717 = vmatpush1.msra.mxu0 0.0
    %3718 = vmatprep.subr.mxu0 0.0
    %3719 = vmatpush1.msra.mxu0 0.0
    %3720 = vmatprep.subr.mxu0 0.0
    %3721 = vmatpush1.msra.mxu0 0.0
    %3722 = vmatprep.subr.mxu0 0.0
    %3723 = vmatpush1.msra.mxu0 0.0
    %3724 = vmatprep.subr.mxu0 0.0
    %3725 = vmatpush1.msra.mxu0 0.0
    %3726 = vmatprep.subr.mxu0 0.0
    %3727 = vmatpush1.msra.mxu0 0.0
    %3728 = vmatprep.subr.mxu0 0.0
    %3729 = vmatpush1.msra.mxu0 0.0
    %3730 = vmatprep.subr.mxu0 0.0
    %3731 = vmatpush1.msra.mxu0 0.0
    %3732 = vmatprep.subr.mxu0 0.0
    %3733 = vmatpush1.msra.mxu0 0.0
    %3734 = vmatprep.subr.mxu0 0.0
    %3735 = vmatpush1.msra.mxu0 0.0
    %3736 = vmatprep.mubr.f32.mxu0 0.0
    %3737 = vmatmul.mubr.f32.gmra.mrb[0].mxu0 %v3662
    %v3738 = vpop.f32.mrb[0].mxu0
    %v3739 = vadd.f32 0.0, %v3738
    %v3740 = vpop.f32.mrb[0].mxu0
    %v3741 = vadd.f32 0.0, %v3740
    %3742 = vdwg.mxu0
    %3743 = vmatprep.subr.mxu0 %v3670
    %3744 = vmatpush1.msra.mxu0 %v3668
    %3745 = vmatprep.subr.mxu0 0.0
    %3746 = vmatpush1.msra.mxu0 0.0
    %3747 = vmatprep.subr.mxu0 0.0
    %3748 = vmatpush1.msra.mxu0 0.0
    %3749 = vmatprep.subr.mxu0 0.0
    %3750 = vmatpush1.msra.mxu0 0.0
    %3751 = vmatprep.subr.mxu0 0.0
    %3752 = vmatpush1.msra.mxu0 0.0
    %3753 = vmatprep.subr.mxu0 0.0
    %3754 = vmatpush1.msra.mxu0 0.0
    %3755 = vmatprep.subr.mxu0 0.0
    %3756 = vmatpush1.msra.mxu0 0.0
    %3757 = vmatprep.subr.mxu0 0.0
    %3758 = vmatpush1.msra.mxu0 0.0
    %3759 = vmatprep.subr.mxu0 0.0
    %3760 = vmatpush1.msra.mxu0 0.0
    %3761 = vmatprep.subr.mxu0 0.0
    %3762 = vmatpush1.msra.mxu0 0.0
    %3763 = vmatprep.subr.mxu0 0.0
    %3764 = vmatpush1.msra.mxu0 0.0
    %3765 = vmatprep.subr.mxu0 0.0
    %3766 = vmatpush1.msra.mxu0 0.0
    %3767 = vmatprep.subr.mxu0 0.0
    %3768 = vmatpush1.msra.mxu0 0.0
    %3769 = vmatprep.subr.mxu0 0.0
    %3770 = vmatpush1.msra.mxu0 0.0
    %3771 = vmatprep.subr.mxu0 0.0
    %3772 = vmatpush1.msra.mxu0 0.0
    %3773 = vmatprep.subr.mxu0 0.0
    %3774 = vmatpush1.msra.mxu0 0.0
    %3775 = vmatprep.subr.mxu0 0.0
    %3776 = vmatpush1.msra.mxu0 0.0
    %3777 = vmatprep.subr.mxu0 0.0
    %3778 = vmatpush1.msra.mxu0 0.0
    %3779 = vmatprep.subr.mxu0 0.0
    %3780 = vmatpush1.msra.mxu0 0.0
    %3781 = vmatprep.subr.mxu0 0.0
    %3782 = vmatpush1.msra.mxu0 0.0
    %3783 = vmatprep.subr.mxu0 0.0
    %3784 = vmatpush1.msra.mxu0 0.0
    %3785 = vmatprep.subr.mxu0 0.0
    %3786 = vmatpush1.msra.mxu0 0.0
    %3787 = vmatprep.subr.mxu0 0.0
    %3788 = vmatpush1.msra.mxu0 0.0
    %3789 = vmatprep.subr.mxu0 0.0
    %3790 = vmatpush1.msra.mxu0 0.0
    %3791 = vmatprep.subr.mxu0 0.0
    %3792 = vmatpush1.msra.mxu0 0.0
    %3793 = vmatprep.subr.mxu0 0.0
    %3794 = vmatpush1.msra.mxu0 0.0
    %3795 = vmatprep.subr.mxu0 0.0
    %3796 = vmatpush1.msra.mxu0 0.0
    %3797 = vmatprep.subr.mxu0 0.0
    %3798 = vmatpush1.msra.mxu0 0.0
    %3799 = vmatprep.subr.mxu0 0.0
    %3800 = vmatpush1.msra.mxu0 0.0
    %3801 = vmatprep.subr.mxu0 0.0
    %3802 = vmatpush1.msra.mxu0 0.0
    %3803 = vmatprep.subr.mxu0 0.0
    %3804 = vmatpush1.msra.mxu0 0.0
    %3805 = vmatprep.subr.mxu0 0.0
    %3806 = vmatpush1.msra.mxu0 0.0
    %3807 = vmatprep.mubr.f32.mxu0 0.0
    %3808 = vmatmul.mubr.f32.gmra.mrb[0].mxu0 %v3662
    %v3809 = vpop.f32.mrb[0].mxu0
    %v3810 = vadd.f32 0.0, %v3809
    %v3811 = vpop.f32.mrb[0].mxu0
    %v3812 = vadd.f32 0.0, %v3811
    %3813 = vdwg.mxu0
    %v3814 = vadd.f32 %v3637, %v3739
    %v3815 = vadd.f32 %v3638, %v3741
    %v3816 = vadd.f32 %v3639, %v3810
    %v3817 = vadd.f32 %v3640, %v3812
    %v3818 = vld [vmem:[#allocation3] sm:$0xff]
    %v3819 = vld [vmem:[#allocation3 + $0x8] sm:$0xff]
    %s3820 = scalar_lea.vmem %s6, 48
    %v3821 = vld [vmem:[%s3820] sm:$0xff]
    %v3824 = vcombine.high %v3818, %v3818
    %v3825 = vcombine.high %v3819, %v3819
    %3826 = vrot.lane.b32.xlu0 %v3818, 99
    %v3827 = vpop.permute.xlu0 %3826
    %3828 = vrot.lane.b32.xlu0 %v3824, 99
    %v3829 = vpop.permute.xlu0 %3828
    %3830 = vrot.lane.b32.xlu0 %v3819, 99
    %v3831 = vpop.permute.xlu0 %3830
    %3832 = vrot.lane.b32.xlu0 %v3825, 99
    %v3833 = vpop.permute.xlu0 %3832
    %vm3834 = vcmask 809984
    %v3835 = vsel %vm3834, %v3827, %v3829
    %v3836 = vsel %vm3834, %v3829, %v3831
    %v3837 = vsel %vm3834, %v3831, %v3833
    %v3839 = vsel %vm2792, %v3821, 0
    %v3841 = vsel %vm974, %v3835, 0
    %v3843 = vsel %vm974, %v3836, 0
    %v3845 = vsel %vm974, %v3837, 0
    %v3847 = vsel %vm974, %v3833, 0
    %3849 = vmatprep.subr.mxu0 %v3843
    %3850 = vmatpush1.msra.mxu0 %v3841
    %3851 = vmatprep.subr.mxu0 0.0
    %3852 = vmatpush1.msra.mxu0 0.0
    %3853 = vmatprep.subr.mxu0 0.0
    %3854 = vmatpush1.msra.mxu0 0.0
    %3855 = vmatprep.subr.mxu0 0.0
    %3856 = vmatpush1.msra.mxu0 0.0
    %3857 = vmatprep.subr.mxu0 0.0
    %3858 = vmatpush1.msra.mxu0 0.0
    %3859 = vmatprep.subr.mxu0 0.0
    %3860 = vmatpush1.msra.mxu0 0.0
    %3861 = vmatprep.subr.mxu0 0.0
    %3862 = vmatpush1.msra.mxu0 0.0
    %3863 = vmatprep.subr.mxu0 0.0
    %3864 = vmatpush1.msra.mxu0 0.0
    %3865 = vmatprep.subr.mxu0 0.0
    %3866 = vmatpush1.msra.mxu0 0.0
    %3867 = vmatprep.subr.mxu0 0.0
    %3868 = vmatpush1.msra.mxu0 0.0
    %3869 = vmatprep.subr.mxu0 0.0
    %3870 = vmatpush1.msra.mxu0 0.0
    %3871 = vmatprep.subr.mxu0 0.0
    %3872 = vmatpush1.msra.mxu0 0.0
    %3873 = vmatprep.subr.mxu0 0.0
    %3874 = vmatpush1.msra.mxu0 0.0
    %3875 = vmatprep.subr.mxu0 0.0
    %3876 = vmatpush1.msra.mxu0 0.0
    %3877 = vmatprep.subr.mxu0 0.0
    %3878 = vmatpush1.msra.mxu0 0.0
    %3879 = vmatprep.subr.mxu0 0.0
    %3880 = vmatpush1.msra.mxu0 0.0
    %3881 = vmatprep.subr.mxu0 0.0
    %3882 = vmatpush1.msra.mxu0 0.0
    %3883 = vmatprep.subr.mxu0 0.0
    %3884 = vmatpush1.msra.mxu0 0.0
    %3885 = vmatprep.subr.mxu0 0.0
    %3886 = vmatpush1.msra.mxu0 0.0
    %3887 = vmatprep.subr.mxu0 0.0
    %3888 = vmatpush1.msra.mxu0 0.0
    %3889 = vmatprep.subr.mxu0 0.0
    %3890 = vmatpush1.msra.mxu0 0.0
    %3891 = vmatprep.subr.mxu0 0.0
    %3892 = vmatpush1.msra.mxu0 0.0
    %3893 = vmatprep.subr.mxu0 0.0
    %3894 = vmatpush1.msra.mxu0 0.0
    %3895 = vmatprep.subr.mxu0 0.0
    %3896 = vmatpush1.msra.mxu0 0.0
    %3897 = vmatprep.subr.mxu0 0.0
    %3898 = vmatpush1.msra.mxu0 0.0
    %3899 = vmatprep.subr.mxu0 0.0
    %3900 = vmatpush1.msra.mxu0 0.0
    %3901 = vmatprep.subr.mxu0 0.0
    %3902 = vmatpush1.msra.mxu0 0.0
    %3903 = vmatprep.subr.mxu0 0.0
    %3904 = vmatpush1.msra.mxu0 0.0
    %3905 = vmatprep.subr.mxu0 0.0
    %3906 = vmatpush1.msra.mxu0 0.0
    %3907 = vmatprep.subr.mxu0 0.0
    %3908 = vmatpush1.msra.mxu0 0.0
    %3909 = vmatprep.subr.mxu0 0.0
    %3910 = vmatpush1.msra.mxu0 0.0
    %3911 = vmatprep.subr.mxu0 0.0
    %3912 = vmatpush1.msra.mxu0 0.0
    %3913 = vmatprep.mubr.f32.mxu0 0.0
    %3914 = vmatmul.mubr.f32.gmra.mrb[0].mxu0 %v3839
    %v3915 = vpop.f32.mrb[0].mxu0
    %v3916 = vadd.f32 0.0, %v3915
    %v3917 = vpop.f32.mrb[0].mxu0
    %v3918 = vadd.f32 0.0, %v3917
    %3919 = vdwg.mxu0
    %3920 = vmatprep.subr.mxu0 %v3847
    %3921 = vmatpush1.msra.mxu0 %v3845
    %3922 = vmatprep.subr.mxu0 0.0
    %3923 = vmatpush1.msra.mxu0 0.0
    %3924 = vmatprep.subr.mxu0 0.0
    %3925 = vmatpush1.msra.mxu0 0.0
    %3926 = vmatprep.subr.mxu0 0.0
    %3927 = vmatpush1.msra.mxu0 0.0
    %3928 = vmatprep.subr.mxu0 0.0
    %3929 = vmatpush1.msra.mxu0 0.0
    %3930 = vmatprep.subr.mxu0 0.0
    %3931 = vmatpush1.msra.mxu0 0.0
    %3932 = vmatprep.subr.mxu0 0.0
    %3933 = vmatpush1.msra.mxu0 0.0
    %3934 = vmatprep.subr.mxu0 0.0
    %3935 = vmatpush1.msra.mxu0 0.0
    %3936 = vmatprep.subr.mxu0 0.0
    %3937 = vmatpush1.msra.mxu0 0.0
    %3938 = vmatprep.subr.mxu0 0.0
    %3939 = vmatpush1.msra.mxu0 0.0
    %3940 = vmatprep.subr.mxu0 0.0
    %3941 = vmatpush1.msra.mxu0 0.0
    %3942 = vmatprep.subr.mxu0 0.0
    %3943 = vmatpush1.msra.mxu0 0.0
    %3944 = vmatprep.subr.mxu0 0.0
    %3945 = vmatpush1.msra.mxu0 0.0
    %3946 = vmatprep.subr.mxu0 0.0
    %3947 = vmatpush1.msra.mxu0 0.0
    %3948 = vmatprep.subr.mxu0 0.0
    %3949 = vmatpush1.msra.mxu0 0.0
    %3950 = vmatprep.subr.mxu0 0.0
    %3951 = vmatpush1.msra.mxu0 0.0
    %3952 = vmatprep.subr.mxu0 0.0
    %3953 = vmatpush1.msra.mxu0 0.0
    %3954 = vmatprep.subr.mxu0 0.0
    %3955 = vmatpush1.msra.mxu0 0.0
    %3956 = vmatprep.subr.mxu0 0.0
    %3957 = vmatpush1.msra.mxu0 0.0
    %3958 = vmatprep.subr.mxu0 0.0
    %3959 = vmatpush1.msra.mxu0 0.0
    %3960 = vmatprep.subr.mxu0 0.0
    %3961 = vmatpush1.msra.mxu0 0.0
    %3962 = vmatprep.subr.mxu0 0.0
    %3963 = vmatpush1.msra.mxu0 0.0
    %3964 = vmatprep.subr.mxu0 0.0
    %3965 = vmatpush1.msra.mxu0 0.0
    %3966 = vmatprep.subr.mxu0 0.0
    %3967 = vmatpush1.msra.mxu0 0.0
    %3968 = vmatprep.subr.mxu0 0.0
    %3969 = vmatpush1.msra.mxu0 0.0
    %3970 = vmatprep.subr.mxu0 0.0
    %3971 = vmatpush1.msra.mxu0 0.0
    %3972 = vmatprep.subr.mxu0 0.0
    %3973 = vmatpush1.msra.mxu0 0.0
    %3974 = vmatprep.subr.mxu0 0.0
    %3975 = vmatpush1.msra.mxu0 0.0
    %3976 = vmatprep.subr.mxu0 0.0
    %3977 = vmatpush1.msra.mxu0 0.0
    %3978 = vmatprep.subr.mxu0 0.0
    %3979 = vmatpush1.msra.mxu0 0.0
    %3980 = vmatprep.subr.mxu0 0.0
    %3981 = vmatpush1.msra.mxu0 0.0
    %3982 = vmatprep.subr.mxu0 0.0
    %3983 = vmatpush1.msra.mxu0 0.0
    %3984 = vmatprep.mubr.f32.mxu0 0.0
    %3985 = vmatmul.mubr.f32.gmra.mrb[0].mxu0 %v3839
    %v3986 = vpop.f32.mrb[0].mxu0
    %v3987 = vadd.f32 0.0, %v3986
    %v3988 = vpop.f32.mrb[0].mxu0
    %v3989 = vadd.f32 0.0, %v3988
    %3990 = vdwg.mxu0
    %v3991 = vadd.f32 %v3814, %v3916
    %v3992 = vadd.f32 %v3815, %v3918
    %v3993 = vadd.f32 %v3816, %v3987
    %v3994 = vadd.f32 %v3817, %v3989
    %v3995 = vld [vmem:[#allocation3] sm:$0xff]
    %v3996 = vld [vmem:[#allocation3 + $0x8] sm:$0xff]
    %s3997 = scalar_lea.vmem %s6, 56
    %v3998 = vld [vmem:[%s3997] sm:$0xff]
    %v4001 = vcombine.high %v3995, %v3995
    %v4002 = vcombine.high %v3996, %v3996
    %4003 = vrot.lane.b32.xlu0 %v3995, 98
    %v4004 = vpop.permute.xlu0 %4003
    %4005 = vrot.lane.b32.xlu0 %v4001, 98
    %v4006 = vpop.permute.xlu0 %4005
    %4007 = vrot.lane.b32.xlu0 %v3996, 98
    %v4008 = vpop.permute.xlu0 %4007
    %4009 = vrot.lane.b32.xlu0 %v4002, 98
    %v4010 = vpop.permute.xlu0 %4009
    %vm4011 = vcmask 801792
    %v4012 = vsel %vm4011, %v4004, %v4006
    %v4013 = vsel %vm4011, %v4006, %v4008
    %v4014 = vsel %vm4011, %v4008, %v4010
    %v4016 = vsel %vm2792, %v3998, 0
    %v4018 = vsel %vm974, %v4012, 0
    %v4020 = vsel %vm974, %v4013, 0
    %v4022 = vsel %vm974, %v4014, 0
    %v4024 = vsel %vm974, %v4010, 0
    %4026 = vmatprep.subr.mxu0 %v4020
    %4027 = vmatpush1.msra.mxu0 %v4018
    %4028 = vmatprep.subr.mxu0 0.0
    %4029 = vmatpush1.msra.mxu0 0.0
    %4030 = vmatprep.subr.mxu0 0.0
    %4031 = vmatpush1.msra.mxu0 0.0
    %4032 = vmatprep.subr.mxu0 0.0
    %4033 = vmatpush1.msra.mxu0 0.0
    %4034 = vmatprep.subr.mxu0 0.0
    %4035 = vmatpush1.msra.mxu0 0.0
    %4036 = vmatprep.subr.mxu0 0.0
    %4037 = vmatpush1.msra.mxu0 0.0
    %4038 = vmatprep.subr.mxu0 0.0
    %4039 = vmatpush1.msra.mxu0 0.0
    %4040 = vmatprep.subr.mxu0 0.0
    %4041 = vmatpush1.msra.mxu0 0.0
    %4042 = vmatprep.subr.mxu0 0.0
    %4043 = vmatpush1.msra.mxu0 0.0
    %4044 = vmatprep.subr.mxu0 0.0
    %4045 = vmatpush1.msra.mxu0 0.0
    %4046 = vmatprep.subr.mxu0 0.0
    %4047 = vmatpush1.msra.mxu0 0.0
    %4048 = vmatprep.subr.mxu0 0.0
    %4049 = vmatpush1.msra.mxu0 0.0
    %4050 = vmatprep.subr.mxu0 0.0
    %4051 = vmatpush1.msra.mxu0 0.0
    %4052 = vmatprep.subr.mxu0 0.0
    %4053 = vmatpush1.msra.mxu0 0.0
    %4054 = vmatprep.subr.mxu0 0.0
    %4055 = vmatpush1.msra.mxu0 0.0
    %4056 = vmatprep.subr.mxu0 0.0
    %4057 = vmatpush1.msra.mxu0 0.0
    %4058 = vmatprep.subr.mxu0 0.0
    %4059 = vmatpush1.msra.mxu0 0.0
    %4060 = vmatprep.subr.mxu0 0.0
    %4061 = vmatpush1.msra.mxu0 0.0
    %4062 = vmatprep.subr.mxu0 0.0
    %4063 = vmatpush1.msra.mxu0 0.0
    %4064 = vmatprep.subr.mxu0 0.0
    %4065 = vmatpush1.msra.mxu0 0.0
    %4066 = vmatprep.subr.mxu0 0.0
    %4067 = vmatpush1.msra.mxu0 0.0
    %4068 = vmatprep.subr.mxu0 0.0
    %4069 = vmatpush1.msra.mxu0 0.0
    %4070 = vmatprep.subr.mxu0 0.0
    %4071 = vmatpush1.msra.mxu0 0.0
    %4072 = vmatprep.subr.mxu0 0.0
    %4073 = vmatpush1.msra.mxu0 0.0
    %4074 = vmatprep.subr.mxu0 0.0
    %4075 = vmatpush1.msra.mxu0 0.0
    %4076 = vmatprep.subr.mxu0 0.0
    %4077 = vmatpush1.msra.mxu0 0.0
    %4078 = vmatprep.subr.mxu0 0.0
    %4079 = vmatpush1.msra.mxu0 0.0
    %4080 = vmatprep.subr.mxu0 0.0
    %4081 = vmatpush1.msra.mxu0 0.0
    %4082 = vmatprep.subr.mxu0 0.0
    %4083 = vmatpush1.msra.mxu0 0.0
    %4084 = vmatprep.subr.mxu0 0.0
    %4085 = vmatpush1.msra.mxu0 0.0
    %4086 = vmatprep.subr.mxu0 0.0
    %4087 = vmatpush1.msra.mxu0 0.0
    %4088 = vmatprep.subr.mxu0 0.0
    %4089 = vmatpush1.msra.mxu0 0.0
    %4090 = vmatprep.mubr.f32.mxu0 0.0
    %4091 = vmatmul.mubr.f32.gmra.mrb[0].mxu0 %v4016
    %v4092 = vpop.f32.mrb[0].mxu0
    %v4093 = vadd.f32 0.0, %v4092
    %v4094 = vpop.f32.mrb[0].mxu0
    %v4095 = vadd.f32 0.0, %v4094
    %4096 = vdwg.mxu0
    %4097 = vmatprep.subr.mxu0 %v4024
    %4098 = vmatpush1.msra.mxu0 %v4022
    %4099 = vmatprep.subr.mxu0 0.0
    %4100 = vmatpush1.msra.mxu0 0.0
    %4101 = vmatprep.subr.mxu0 0.0
    %4102 = vmatpush1.msra.mxu0 0.0
    %4103 = vmatprep.subr.mxu0 0.0
    %4104 = vmatpush1.msra.mxu0 0.0
    %4105 = vmatprep.subr.mxu0 0.0
    %4106 = vmatpush1.msra.mxu0 0.0
    %4107 = vmatprep.subr.mxu0 0.0
    %4108 = vmatpush1.msra.mxu0 0.0
    %4109 = vmatprep.subr.mxu0 0.0
    %4110 = vmatpush1.msra.mxu0 0.0
    %4111 = vmatprep.subr.mxu0 0.0
    %4112 = vmatpush1.msra.mxu0 0.0
    %4113 = vmatprep.subr.mxu0 0.0
    %4114 = vmatpush1.msra.mxu0 0.0
    %4115 = vmatprep.subr.mxu0 0.0
    %4116 = vmatpush1.msra.mxu0 0.0
    %4117 = vmatprep.subr.mxu0 0.0
    %4118 = vmatpush1.msra.mxu0 0.0
    %4119 = vmatprep.subr.mxu0 0.0
    %4120 = vmatpush1.msra.mxu0 0.0
    %4121 = vmatprep.subr.mxu0 0.0
    %4122 = vmatpush1.msra.mxu0 0.0
    %4123 = vmatprep.subr.mxu0 0.0
    %4124 = vmatpush1.msra.mxu0 0.0
    %4125 = vmatprep.subr.mxu0 0.0
    %4126 = vmatpush1.msra.mxu0 0.0
    %4127 = vmatprep.subr.mxu0 0.0
    %4128 = vmatpush1.msra.mxu0 0.0
    %4129 = vmatprep.subr.mxu0 0.0
    %4130 = vmatpush1.msra.mxu0 0.0
    %4131 = vmatprep.subr.mxu0 0.0
    %4132 = vmatpush1.msra.mxu0 0.0
    %4133 = vmatprep.subr.mxu0 0.0
    %4134 = vmatpush1.msra.mxu0 0.0
    %4135 = vmatprep.subr.mxu0 0.0
    %4136 = vmatpush1.msra.mxu0 0.0
    %4137 = vmatprep.subr.mxu0 0.0
    %4138 = vmatpush1.msra.mxu0 0.0
    %4139 = vmatprep.subr.mxu0 0.0
    %4140 = vmatpush1.msra.mxu0 0.0
    %4141 = vmatprep.subr.mxu0 0.0
    %4142 = vmatpush1.msra.mxu0 0.0
    %4143 = vmatprep.subr.mxu0 0.0
    %4144 = vmatpush1.msra.mxu0 0.0
    %4145 = vmatprep.subr.mxu0 0.0
    %4146 = vmatpush1.msra.mxu0 0.0
    %4147 = vmatprep.subr.mxu0 0.0
    %4148 = vmatpush1.msra.mxu0 0.0
    %4149 = vmatprep.subr.mxu0 0.0
    %4150 = vmatpush1.msra.mxu0 0.0
    %4151 = vmatprep.subr.mxu0 0.0
    %4152 = vmatpush1.msra.mxu0 0.0
    %4153 = vmatprep.subr.mxu0 0.0
    %4154 = vmatpush1.msra.mxu0 0.0
    %4155 = vmatprep.subr.mxu0 0.0
    %4156 = vmatpush1.msra.mxu0 0.0
    %4157 = vmatprep.subr.mxu0 0.0
    %4158 = vmatpush1.msra.mxu0 0.0
    %4159 = vmatprep.subr.mxu0 0.0
    %4160 = vmatpush1.msra.mxu0 0.0
    %4161 = vmatprep.mubr.f32.mxu0 0.0
    %4162 = vmatmul.mubr.f32.gmra.mrb[0].mxu0 %v4016
    %v4163 = vpop.f32.mrb[0].mxu0
    %v4164 = vadd.f32 0.0, %v4163
    %v4165 = vpop.f32.mrb[0].mxu0
    %v4166 = vadd.f32 0.0, %v4165
    %4167 = vdwg.mxu0
    %v4168 = vadd.f32 %v3991, %v4093
    %v4169 = vadd.f32 %v3992, %v4095
    %v4170 = vadd.f32 %v3993, %v4164
    %v4171 = vadd.f32 %v3994, %v4166
    %v4172 = vld [vmem:[#allocation3] sm:$0xff]
    %v4173 = vld [vmem:[#allocation3 + $0x8] sm:$0xff]
    %s4174 = scalar_lea.vmem %s6, 64
    %v4175 = vld [vmem:[%s4174] sm:$0xff]
    %v4178 = vcombine.high %v4172, %v4172
    %v4179 = vcombine.high %v4173, %v4173
    %4180 = vrot.lane.b32.xlu0 %v4172, 97
    %v4181 = vpop.permute.xlu0 %4180
    %4182 = vrot.lane.b32.xlu0 %v4178, 97
    %v4183 = vpop.permute.xlu0 %4182
    %4184 = vrot.lane.b32.xlu0 %v4173, 97
    %v4185 = vpop.permute.xlu0 %4184
    %4186 = vrot.lane.b32.xlu0 %v4179, 97
    %v4187 = vpop.permute.xlu0 %4186
    %vm4188 = vcmask 793600
    %v4189 = vsel %vm4188, %v4181, %v4183
    %v4190 = vsel %vm4188, %v4183, %v4185
    %v4191 = vsel %vm4188, %v4185, %v4187
    %v4193 = vsel %vm2792, %v4175, 0
    %v4195 = vsel %vm974, %v4189, 0
    %v4197 = vsel %vm974, %v4190, 0
    %v4199 = vsel %vm974, %v4191, 0
    %v4201 = vsel %vm974, %v4187, 0
    %4203 = vmatprep.subr.mxu0 %v4197
    %4204 = vmatpush1.msra.mxu0 %v4195
    %4205 = vmatprep.subr.mxu0 0.0
    %4206 = vmatpush1.msra.mxu0 0.0
    %4207 = vmatprep.subr.mxu0 0.0
    %4208 = vmatpush1.msra.mxu0 0.0
    %4209 = vmatprep.subr.mxu0 0.0
    %4210 = vmatpush1.msra.mxu0 0.0
    %4211 = vmatprep.subr.mxu0 0.0
    %4212 = vmatpush1.msra.mxu0 0.0
    %4213 = vmatprep.subr.mxu0 0.0
    %4214 = vmatpush1.msra.mxu0 0.0
    %4215 = vmatprep.subr.mxu0 0.0
    %4216 = vmatpush1.msra.mxu0 0.0
    %4217 = vmatprep.subr.mxu0 0.0
    %4218 = vmatpush1.msra.mxu0 0.0
    %4219 = vmatprep.subr.mxu0 0.0
    %4220 = vmatpush1.msra.mxu0 0.0
    %4221 = vmatprep.subr.mxu0 0.0
    %4222 = vmatpush1.msra.mxu0 0.0
    %4223 = vmatprep.subr.mxu0 0.0
    %4224 = vmatpush1.msra.mxu0 0.0
    %4225 = vmatprep.subr.mxu0 0.0
    %4226 = vmatpush1.msra.mxu0 0.0
    %4227 = vmatprep.subr.mxu0 0.0
    %4228 = vmatpush1.msra.mxu0 0.0
    %4229 = vmatprep.subr.mxu0 0.0
    %4230 = vmatpush1.msra.mxu0 0.0
    %4231 = vmatprep.subr.mxu0 0.0
    %4232 = vmatpush1.msra.mxu0 0.0
    %4233 = vmatprep.subr.mxu0 0.0
    %4234 = vmatpush1.msra.mxu0 0.0
    %4235 = vmatprep.subr.mxu0 0.0
    %4236 = vmatpush1.msra.mxu0 0.0
    %4237 = vmatprep.subr.mxu0 0.0
    %4238 = vmatpush1.msra.mxu0 0.0
    %4239 = vmatprep.subr.mxu0 0.0
    %4240 = vmatpush1.msra.mxu0 0.0
    %4241 = vmatprep.subr.mxu0 0.0
    %4242 = vmatpush1.msra.mxu0 0.0
    %4243 = vmatprep.subr.mxu0 0.0
    %4244 = vmatpush1.msra.mxu0 0.0
    %4245 = vmatprep.subr.mxu0 0.0
    %4246 = vmatpush1.msra.mxu0 0.0
    %4247 = vmatprep.subr.mxu0 0.0
    %4248 = vmatpush1.msra.mxu0 0.0
    %4249 = vmatprep.subr.mxu0 0.0
    %4250 = vmatpush1.msra.mxu0 0.0
    %4251 = vmatprep.subr.mxu0 0.0
    %4252 = vmatpush1.msra.mxu0 0.0
    %4253 = vmatprep.subr.mxu0 0.0
    %4254 = vmatpush1.msra.mxu0 0.0
    %4255 = vmatprep.subr.mxu0 0.0
    %4256 = vmatpush1.msra.mxu0 0.0
    %4257 = vmatprep.subr.mxu0 0.0
    %4258 = vmatpush1.msra.mxu0 0.0
    %4259 = vmatprep.subr.mxu0 0.0
    %4260 = vmatpush1.msra.mxu0 0.0
    %4261 = vmatprep.subr.mxu0 0.0
    %4262 = vmatpush1.msra.mxu0 0.0
    %4263 = vmatprep.subr.mxu0 0.0
    %4264 = vmatpush1.msra.mxu0 0.0
    %4265 = vmatprep.subr.mxu0 0.0
    %4266 = vmatpush1.msra.mxu0 0.0
    %4267 = vmatprep.mubr.f32.mxu0 0.0
    %4268 = vmatmul.mubr.f32.gmra.mrb[0].mxu0 %v4193
    %v4269 = vpop.f32.mrb[0].mxu0
    %v4270 = vadd.f32 0.0, %v4269
    %v4271 = vpop.f32.mrb[0].mxu0
    %v4272 = vadd.f32 0.0, %v4271
    %4273 = vdwg.mxu0
    %4274 = vmatprep.subr.mxu0 %v4201
    %4275 = vmatpush1.msra.mxu0 %v4199
    %4276 = vmatprep.subr.mxu0 0.0
    %4277 = vmatpush1.msra.mxu0 0.0
    %4278 = vmatprep.subr.mxu0 0.0
    %4279 = vmatpush1.msra.mxu0 0.0
    %4280 = vmatprep.subr.mxu0 0.0
    %4281 = vmatpush1.msra.mxu0 0.0
    %4282 = vmatprep.subr.mxu0 0.0
    %4283 = vmatpush1.msra.mxu0 0.0
    %4284 = vmatprep.subr.mxu0 0.0
    %4285 = vmatpush1.msra.mxu0 0.0
    %4286 = vmatprep.subr.mxu0 0.0
    %4287 = vmatpush1.msra.mxu0 0.0
    %4288 = vmatprep.subr.mxu0 0.0
    %4289 = vmatpush1.msra.mxu0 0.0
    %4290 = vmatprep.subr.mxu0 0.0
    %4291 = vmatpush1.msra.mxu0 0.0
    %4292 = vmatprep.subr.mxu0 0.0
    %4293 = vmatpush1.msra.mxu0 0.0
    %4294 = vmatprep.subr.mxu0 0.0
    %4295 = vmatpush1.msra.mxu0 0.0
    %4296 = vmatprep.subr.mxu0 0.0
    %4297 = vmatpush1.msra.mxu0 0.0
    %4298 = vmatprep.subr.mxu0 0.0
    %4299 = vmatpush1.msra.mxu0 0.0
    %4300 = vmatprep.subr.mxu0 0.0
    %4301 = vmatpush1.msra.mxu0 0.0
    %4302 = vmatprep.subr.mxu0 0.0
    %4303 = vmatpush1.msra.mxu0 0.0
    %4304 = vmatprep.subr.mxu0 0.0
    %4305 = vmatpush1.msra.mxu0 0.0
    %4306 = vmatprep.subr.mxu0 0.0
    %4307 = vmatpush1.msra.mxu0 0.0
    %4308 = vmatprep.subr.mxu0 0.0
    %4309 = vmatpush1.msra.mxu0 0.0
    %4310 = vmatprep.subr.mxu0 0.0
    %4311 = vmatpush1.msra.mxu0 0.0
    %4312 = vmatprep.subr.mxu0 0.0
    %4313 = vmatpush1.msra.mxu0 0.0
    %4314 = vmatprep.subr.mxu0 0.0
    %4315 = vmatpush1.msra.mxu0 0.0
    %4316 = vmatprep.subr.mxu0 0.0
    %4317 = vmatpush1.msra.mxu0 0.0
    %4318 = vmatprep.subr.mxu0 0.0
    %4319 = vmatpush1.msra.mxu0 0.0
    %4320 = vmatprep.subr.mxu0 0.0
    %4321 = vmatpush1.msra.mxu0 0.0
    %4322 = vmatprep.subr.mxu0 0.0
    %4323 = vmatpush1.msra.mxu0 0.0
    %4324 = vmatprep.subr.mxu0 0.0
    %4325 = vmatpush1.msra.mxu0 0.0
    %4326 = vmatprep.subr.mxu0 0.0
    %4327 = vmatpush1.msra.mxu0 0.0
    %4328 = vmatprep.subr.mxu0 0.0
    %4329 = vmatpush1.msra.mxu0 0.0
    %4330 = vmatprep.subr.mxu0 0.0
    %4331 = vmatpush1.msra.mxu0 0.0
    %4332 = vmatprep.subr.mxu0 0.0
    %4333 = vmatpush1.msra.mxu0 0.0
    %4334 = vmatprep.subr.mxu0 0.0
    %4335 = vmatpush1.msra.mxu0 0.0
    %4336 = vmatprep.subr.mxu0 0.0
    %4337 = vmatpush1.msra.mxu0 0.0
    %4338 = vmatprep.mubr.f32.mxu0 0.0
    %4339 = vmatmul.mubr.f32.gmra.mrb[0].mxu0 %v4193
    %v4340 = vpop.f32.mrb[0].mxu0
    %v4341 = vadd.f32 0.0, %v4340
    %v4342 = vpop.f32.mrb[0].mxu0
    %v4343 = vadd.f32 0.0, %v4342
    %4344 = vdwg.mxu0
    %v4345 = vadd.f32 %v4168, %v4270
    %v4346 = vadd.f32 %v4169, %v4272
    %v4347 = vadd.f32 %v4170, %v4341
    %v4348 = vadd.f32 %v4171, %v4343
    %v4349 = vld [vmem:[%s9] sm:$0xf]
    %v4351 = vlaneseq
    %v4352 = vshrl.u32 %v4351, 7
    %v4353 = vsub.s32 0, %v4352
    %v4354 = vrot.slane %v4349, %v4353
    %v4355 = vlaneseq
    %v4356 = vshrl.u32 %v4355, 7
    %v4357 = vsub.s32 1, %v4356
    %v4358 = vrot.slane %v4349, %v4357
    %v4359 = vlaneseq
    %v4360 = vshrl.u32 %v4359, 7
    %v4361 = vsub.s32 2, %v4360
    %v4362 = vrot.slane %v4349, %v4361
    %v4363 = vlaneseq
    %v4364 = vshrl.u32 %v4363, 7
    %v4365 = vsub.s32 3, %v4364
    %v4366 = vrot.slane %v4349, %v4365
    %v4371 = vmul.f32 %v4345, %v4354
    %v4372 = vmul.f32 %v4346, %v4358
    %v4373 = vmul.f32 %v4347, %v4362
    %v4374 = vmul.f32 %v4348, %v4366
    %v4375 = vadd.f32 %v4371, %v4372
    %v4376 = vadd.f32 %v4375, %v4373
    %vm4377 = vcmask 64512
    %v4378 = vsel %vm4377, %v4374, 0.0
    %v4379 = vadd.f32 %v4376, %v4378
    %4380 = vadd.xlane.f32.xlu0 %v4379
    %v4381 = vpop.xlane.xlu0 %4380
    %v4382 = vmul.f32 %v4381, 0.0034722222
    %v4383 = vmul.f32 %v4371, %v4345
    %v4384 = vmul.f32 %v4372, %v4346
    %v4385 = vmul.f32 %v4373, %v4347
    %v4386 = vmul.f32 %v4374, %v4348
    %v4387 = vadd.f32 %v4383, %v4384
    %v4388 = vadd.f32 %v4387, %v4385
    %v4389 = vsel %vm4377, %v4386, 0.0
    %v4390 = vadd.f32 %v4388, %v4389
    %4391 = vadd.xlane.f32.xlu0 %v4390
    %v4392 = vpop.xlane.xlu0 %4391
    %v4393 = vmul.f32 %v4392, 0.0034722222
    %v4394 = vmul.f32 %v4382, %v4382
    %v4395 = vsub.f32 %v4393, %v4394
    %v4396 = vmax.f32 %v4395, 0.0
    %v4397 = vld [vmem:[%s7] sm:$0xff]
    %v4398 = vadd.f32 %v4396, 1e-05
    %v4399 = vrsqrt.pop %v4398
    %v4400 = vmul.f32 %v4397, %v4399
    %v4401 = vsub.f32 %v4345, %v4382
    %v4402 = vsub.f32 %v4346, %v4382
    %v4403 = vsub.f32 %v4347, %v4382
    %v4404 = vsub.f32 %v4348, %v4382
    %4406 = vset.pattern.permute.xlu0 0
    %4407 = vperm.xlu0 %4406, %v4400
    %v4408 = vpop.permute.xlu0 %4407
    %v4410 = vmul.f32 %v4401, %v4408
    %v4411 = vmul.f32 %v4402, %v4408
    %v4412 = vmul.f32 %v4403, %v4408
    %v4413 = vmul.f32 %v4404, %v4408
    %v4414 = vld [vmem:[%s8] sm:$0xff]
    %4416 = vset.pattern.permute.xlu0 0
    %4417 = vperm.xlu0 %4416, %v4414
    %v4418 = vpop.permute.xlu0 %4417
    %v4420 = vadd.f32 %v4410, %v4418
    %v4421 = vadd.f32 %v4411, %v4418
    %v4422 = vadd.f32 %v4412, %v4418
    %v4423 = vadd.f32 %v4413, %v4418
    %v4424 = vmax.f32 %v4420, 0.0
    %v4425 = vmax.f32 %v4421, 0.0
    %v4426 = vmax.f32 %v4422, 0.0
    %v4427 = vmax.f32 %v4423, 0.0
    %4428 = vst [vmem:[#allocation4] sm:$0xff] %v4424
    %4429 = vst [vmem:[#allocation4 + $0x8] sm:$0xff] %v4425
    %4430 = vst [vmem:[#allocation4 + $0x10] sm:$0xff] %v4426
    %4431 = vst.msk [vmem:[#allocation4 + $0x18] sm:$0xff] %vm4377, %v4427
    %v4432 = vld [vmem:[#allocation4] sm:$0xff]
    %v4433 = vld [vmem:[#allocation4 + $0x8] sm:$0xff]
    %v4434 = vld [vmem:[#allocation4 + $0x10] sm:$0xff]
    %v4435 = vld [vmem:[#allocation4 + $0x18] sm:$0xff]
    %v4436 = vld [vmem:[%s10] sm:$0xff]
    %v4437 = vld [vmem:[%s10 + $0x8] sm:$0xff]
    %v4438 = vld [vmem:[%s10 + $0x10] sm:$0xff]
    %v4439 = vld [vmem:[%s10 + $0x18] sm:$0xff]
    %v4440 = vld [vmem:[%s10 + $0x20] sm:$0xff]
    %v4441 = vld [vmem:[%s10 + $0x28] sm:$0xff]
    %v4442 = vld [vmem:[%s10 + $0x30] sm:$0xff]
    %v4443 = vld [vmem:[%s10 + $0x38] sm:$0xff]
    %v4444 = vld [vmem:[%s10 + $0x40] sm:$0xff]
    %v4445 = vld [vmem:[%s10 + $0x48] sm:$0xff]
    %v4446 = vld [vmem:[%s10 + $0x50] sm:$0xff]
    %v4447 = vld [vmem:[%s10 + $0x58] sm:$0xff]
    %v4448 = vld [vmem:[%s10 + $0x60] sm:$0xff]
    %v4449 = vld [vmem:[%s10 + $0x68] sm:$0xff]
    %v4450 = vld [vmem:[%s10 + $0x70] sm:$0xff]
    %v4451 = vld [vmem:[%s10 + $0x78] sm:$0xff]
    %v4452 = vld [vmem:[%s10 + $0x80] sm:$0xff]
    %v4453 = vld [vmem:[%s10 + $0x88] sm:$0xff]
    %v4454 = vld [vmem:[%s10 + $0x90] sm:$0xff]
    %v4455 = vld [vmem:[%s10 + $0x98] sm:$0xff]
    %v4456 = vld [vmem:[%s10 + $0xa0] sm:$0xff]
    %v4457 = vld [vmem:[%s10 + $0xa8] sm:$0xff]
    %v4458 = vld [vmem:[%s10 + $0xb0] sm:$0xff]
    %v4459 = vld [vmem:[%s10 + $0xb8] sm:$0xff]
    %v4460 = vld [vmem:[%s10 + $0xc0] sm:$0xff]
    %v4461 = vld [vmem:[%s10 + $0xc8] sm:$0xff]
    %v4462 = vld [vmem:[%s10 + $0xd0] sm:$0xff]
    %v4463 = vld [vmem:[%s10 + $0xd8] sm:$0xff]
    %v4464 = vld [vmem:[%s10 + $0xe0] sm:$0xff]
    %v4465 = vld [vmem:[%s10 + $0xe8] sm:$0xff]
    %v4466 = vld [vmem:[%s10 + $0xf0] sm:$0xff]
    %v4467 = vld [vmem:[%s10 + $0xf8] sm:$0xff]
    %v4468 = vld [vmem:[%s10 + $0x100] sm:$0xff]
    %v4469 = vld [vmem:[%s10 + $0x108] sm:$0xff]
    %v4470 = vld [vmem:[%s10 + $0x110] sm:$0xff]
    %v4471 = vld [vmem:[%s10 + $0x118] sm:$0xff]
    %v4472 = vld [vmem:[%s10 + $0x120] sm:$0xff]
    %v4473 = vld [vmem:[%s10 + $0x128] sm:$0xff]
    %v4474 = vld [vmem:[%s10 + $0x130] sm:$0xff]
    %v4475 = vld [vmem:[%s10 + $0x138] sm:$0xff]
    %v4476 = vld [vmem:[%s10 + $0x140] sm:$0xff]
    %v4477 = vld [vmem:[%s10 + $0x148] sm:$0xff]
    %v4478 = vld [vmem:[%s10 + $0x150] sm:$0xff]
    %v4479 = vld [vmem:[%s10 + $0x158] sm:$0xff]
    %v4480 = vld [vmem:[%s10 + $0x160] sm:$0xff]
    %v4481 = vld [vmem:[%s10 + $0x168] sm:$0xff]
    %v4482 = vld [vmem:[%s10 + $0x170] sm:$0xff]
    %v4483 = vld [vmem:[%s10 + $0x178] sm:$0xff]
    %v4484 = vld [vmem:[%s10 + $0x180] sm:$0xff]
    %v4485 = vld [vmem:[%s10 + $0x188] sm:$0xff]
    %v4486 = vld [vmem:[%s10 + $0x190] sm:$0xff]
    %v4487 = vld [vmem:[%s10 + $0x198] sm:$0xff]
    %v4488 = vld [vmem:[%s10 + $0x1a0] sm:$0xff]
    %v4489 = vld [vmem:[%s10 + $0x1a8] sm:$0xff]
    %v4490 = vld [vmem:[%s10 + $0x1b0] sm:$0xff]
    %v4491 = vld [vmem:[%s10 + $0x1b8] sm:$0xff]
    %v4492 = vld [vmem:[%s10 + $0x1c0] sm:$0xff]
    %v4493 = vld [vmem:[%s10 + $0x1c8] sm:$0xff]
    %v4494 = vld [vmem:[%s10 + $0x1d0] sm:$0xff]
    %v4495 = vld [vmem:[%s10 + $0x1d8] sm:$0xff]
    %v4496 = vld [vmem:[%s10 + $0x1e0] sm:$0xff]
    %v4497 = vld [vmem:[%s10 + $0x1e8] sm:$0xff]
    %v4498 = vld [vmem:[%s10 + $0x1f0] sm:$0xff]
    %v4499 = vld [vmem:[%s10 + $0x1f8] sm:$0xff]
    %v4500 = vld [vmem:[%s10 + $0x200] sm:$0xff]
    %v4501 = vld [vmem:[%s10 + $0x208] sm:$0xff]
    %v4502 = vld [vmem:[%s10 + $0x210] sm:$0xff]
    %v4503 = vld [vmem:[%s10 + $0x218] sm:$0xff]
    %v4504 = vld [vmem:[%s10 + $0x220] sm:$0xff]
    %v4505 = vld [vmem:[%s10 + $0x228] sm:$0xff]
    %v4506 = vld [vmem:[%s10 + $0x230] sm:$0xff]
    %v4507 = vld [vmem:[%s10 + $0x238] sm:$0xff]
    %v4508 = vld [vmem:[%s10 + $0x240] sm:$0xff]
    %v4509 = vld [vmem:[%s10 + $0x248] sm:$0xff]
    %v4510 = vld [vmem:[%s10 + $0x250] sm:$0xff]
    %v4511 = vld [vmem:[%s10 + $0x258] sm:$0xff]
    %v4512 = vld [vmem:[%s10 + $0x260] sm:$0xff]
    %v4513 = vld [vmem:[%s10 + $0x268] sm:$0xff]
    %v4514 = vld [vmem:[%s10 + $0x270] sm:$0xff]
    %v4515 = vld [vmem:[%s10 + $0x278] sm:$0xff]
    %v4516 = vld [vmem:[%s10 + $0x280] sm:$0xff]
    %v4517 = vld [vmem:[%s10 + $0x288] sm:$0xff]
    %v4518 = vld [vmem:[%s10 + $0x290] sm:$0xff]
    %v4519 = vld [vmem:[%s10 + $0x298] sm:$0xff]
    %v4520 = vld [vmem:[%s10 + $0x2a0] sm:$0xff]
    %v4521 = vld [vmem:[%s10 + $0x2a8] sm:$0xff]
    %v4522 = vld [vmem:[%s10 + $0x2b0] sm:$0xff]
    %v4523 = vld [vmem:[%s10 + $0x2b8] sm:$0xff]
    %v4524 = vld [vmem:[%s10 + $0x2c0] sm:$0xff]
    %v4525 = vld [vmem:[%s10 + $0x2c8] sm:$0xff]
    %v4526 = vld [vmem:[%s10 + $0x2d0] sm:$0xff]
    %v4527 = vld [vmem:[%s10 + $0x2d8] sm:$0xff]
    %v4528 = vld [vmem:[%s10 + $0x2e0] sm:$0xff]
    %v4529 = vld [vmem:[%s10 + $0x2e8] sm:$0xff]
    %v4530 = vld [vmem:[%s10 + $0x2f0] sm:$0xff]
    %v4531 = vld [vmem:[%s10 + $0x2f8] sm:$0xff]
    %v4532 = vld [vmem:[%s10 + $0x300] sm:$0xff]
    %v4533 = vld [vmem:[%s10 + $0x308] sm:$0xff]
    %v4535 = vsel %vm4377, %v4435, 0
    %4537 = vmatprep.subr.mxu0 %v4437
    %4538 = vmatpush1.msra.mxu0 %v4436
    %4539 = vmatprep.subr.mxu0 %v4439
    %4540 = vmatpush1.msra.mxu0 %v4438
    %4541 = vmatprep.subr.mxu0 %v4441
    %4542 = vmatpush1.msra.mxu0 %v4440
    %4543 = vmatprep.subr.mxu0 %v4443
    %4544 = vmatpush1.msra.mxu0 %v4442
    %4545 = vmatprep.subr.mxu0 %v4445
    %4546 = vmatpush1.msra.mxu0 %v4444
    %4547 = vmatprep.subr.mxu0 %v4447
    %4548 = vmatpush1.msra.mxu0 %v4446
    %4549 = vmatprep.subr.mxu0 %v4449
    %4550 = vmatpush1.msra.mxu0 %v4448
    %4551 = vmatprep.subr.mxu0 %v4451
    %4552 = vmatpush1.msra.mxu0 %v4450
    %4553 = vmatprep.subr.mxu0 %v4453
    %4554 = vmatpush1.msra.mxu0 %v4452
    %4555 = vmatprep.subr.mxu0 %v4455
    %4556 = vmatpush1.msra.mxu0 %v4454
    %4557 = vmatprep.subr.mxu0 %v4457
    %4558 = vmatpush1.msra.mxu0 %v4456
    %4559 = vmatprep.subr.mxu0 %v4459
    %4560 = vmatpush1.msra.mxu0 %v4458
    %4561 = vmatprep.subr.mxu0 %v4461
    %4562 = vmatpush1.msra.mxu0 %v4460
    %4563 = vmatprep.subr.mxu0 %v4463
    %4564 = vmatpush1.msra.mxu0 %v4462
    %4565 = vmatprep.subr.mxu0 %v4465
    %4566 = vmatpush1.msra.mxu0 %v4464
    %4567 = vmatprep.subr.mxu0 %v4467
    %4568 = vmatpush1.msra.mxu0 %v4466
    %4569 = vmatprep.subr.mxu0 %v4469
    %4570 = vmatpush1.msra.mxu0 %v4468
    %4571 = vmatprep.subr.mxu0 %v4471
    %4572 = vmatpush1.msra.mxu0 %v4470
    %4573 = vmatprep.subr.mxu0 %v4473
    %4574 = vmatpush1.msra.mxu0 %v4472
    %4575 = vmatprep.subr.mxu0 %v4475
    %4576 = vmatpush1.msra.mxu0 %v4474
    %4577 = vmatprep.subr.mxu0 %v4477
    %4578 = vmatpush1.msra.mxu0 %v4476
    %4579 = vmatprep.subr.mxu0 %v4479
    %4580 = vmatpush1.msra.mxu0 %v4478
    %4581 = vmatprep.subr.mxu0 %v4481
    %4582 = vmatpush1.msra.mxu0 %v4480
    %4583 = vmatprep.subr.mxu0 %v4483
    %4584 = vmatpush1.msra.mxu0 %v4482
    %4585 = vmatprep.subr.mxu0 %v4485
    %4586 = vmatpush1.msra.mxu0 %v4484
    %4587 = vmatprep.subr.mxu0 %v4487
    %4588 = vmatpush1.msra.mxu0 %v4486
    %4589 = vmatprep.subr.mxu0 %v4489
    %4590 = vmatpush1.msra.mxu0 %v4488
    %4591 = vmatprep.subr.mxu0 %v4491
    %4592 = vmatpush1.msra.mxu0 %v4490
    %4593 = vmatprep.subr.mxu0 %v4493
    %4594 = vmatpush1.msra.mxu0 %v4492
    %4595 = vmatprep.subr.mxu0 %v4495
    %4596 = vmatpush1.msra.mxu0 %v4494
    %4597 = vmatprep.subr.mxu0 %v4497
    %4598 = vmatpush1.msra.mxu0 %v4496
    %4599 = vmatprep.subr.mxu0 %v4499
    %4600 = vmatpush1.msra.mxu0 %v4498
    %4601 = vmatprep.mubr.f32.mxu0 %v4433
    %4602 = vmatmul.mubr.f32.gmra.mrb[0].mxu0 %v4432
    %v4603 = vpop.f32.mrb[0].mxu0
    %v4604 = vadd.f32 0.0, %v4603
    %v4605 = vpop.f32.mrb[0].mxu0
    %v4606 = vadd.f32 0.0, %v4605
    %4607 = vdwg.mxu0
    %4608 = vmatprep.subr.mxu0 %v4501
    %4609 = vmatpush1.msra.mxu0 %v4500
    %4610 = vmatprep.subr.mxu0 %v4503
    %4611 = vmatpush1.msra.mxu0 %v4502
    %4612 = vmatprep.subr.mxu0 %v4505
    %4613 = vmatpush1.msra.mxu0 %v4504
    %4614 = vmatprep.subr.mxu0 %v4507
    %4615 = vmatpush1.msra.mxu0 %v4506
    %4616 = vmatprep.subr.mxu0 %v4509
    %4617 = vmatpush1.msra.mxu0 %v4508
    %4618 = vmatprep.subr.mxu0 %v4511
    %4619 = vmatpush1.msra.mxu0 %v4510
    %4620 = vmatprep.subr.mxu0 %v4513
    %4621 = vmatpush1.msra.mxu0 %v4512
    %4622 = vmatprep.subr.mxu0 %v4515
    %4623 = vmatpush1.msra.mxu0 %v4514
    %4624 = vmatprep.subr.mxu0 %v4517
    %4625 = vmatpush1.msra.mxu0 %v4516
    %4626 = vmatprep.subr.mxu0 %v4519
    %4627 = vmatpush1.msra.mxu0 %v4518
    %4628 = vmatprep.subr.mxu0 %v4521
    %4629 = vmatpush1.msra.mxu0 %v4520
    %4630 = vmatprep.subr.mxu0 %v4523
    %4631 = vmatpush1.msra.mxu0 %v4522
    %4632 = vmatprep.subr.mxu0 %v4525
    %4633 = vmatpush1.msra.mxu0 %v4524
    %4634 = vmatprep.subr.mxu0 %v4527
    %4635 = vmatpush1.msra.mxu0 %v4526
    %4636 = vmatprep.subr.mxu0 %v4529
    %4637 = vmatpush1.msra.mxu0 %v4528
    %4638 = vmatprep.subr.mxu0 %v4531
    %4639 = vmatpush1.msra.mxu0 %v4530
    %4640 = vmatprep.subr.mxu0 %v4533
    %4641 = vmatpush1.msra.mxu0 %v4532
    %4642 = vmatprep.subr.mxu0 0.0
    %4643 = vmatpush1.msra.mxu0 0.0
    %4644 = vmatprep.subr.mxu0 0.0
    %4645 = vmatpush1.msra.mxu0 0.0
    %4646 = vmatprep.subr.mxu0 0.0
    %4647 = vmatpush1.msra.mxu0 0.0
    %4648 = vmatprep.subr.mxu0 0.0
    %4649 = vmatpush1.msra.mxu0 0.0
    %4650 = vmatprep.subr.mxu0 0.0
    %4651 = vmatpush1.msra.mxu0 0.0
    %4652 = vmatprep.subr.mxu0 0.0
    %4653 = vmatpush1.msra.mxu0 0.0
    %4654 = vmatprep.subr.mxu0 0.0
    %4655 = vmatpush1.msra.mxu0 0.0
    %4656 = vmatprep.subr.mxu0 0.0
    %4657 = vmatpush1.msra.mxu0 0.0
    %4658 = vmatprep.subr.mxu0 0.0
    %4659 = vmatpush1.msra.mxu0 0.0
    %4660 = vmatprep.subr.mxu0 0.0
    %4661 = vmatpush1.msra.mxu0 0.0
    %4662 = vmatprep.subr.mxu0 0.0
    %4663 = vmatpush1.msra.mxu0 0.0
    %4664 = vmatprep.subr.mxu0 0.0
    %4665 = vmatpush1.msra.mxu0 0.0
    %4666 = vmatprep.subr.mxu0 0.0
    %4667 = vmatpush1.msra.mxu0 0.0
    %4668 = vmatprep.subr.mxu0 0.0
    %4669 = vmatpush1.msra.mxu0 0.0
    %4670 = vmatprep.subr.mxu0 0.0
    %4671 = vmatpush1.msra.mxu0 0.0
    %4672 = vmatprep.mubr.f32.mxu0 %v4535
    %4673 = vmatmul.mubr.f32.gmra.mrb[0].mxu0 %v4434
    %v4674 = vpop.f32.mrb[0].mxu0
    %v4675 = vadd.f32 %v4604, %v4674
    %v4676 = vpop.f32.mrb[0].mxu0
    %v4677 = vadd.f32 %v4606, %v4676
    %4678 = vdwg.mxu0
    %4679 = vst [vmem:[#allocation5] sm:$0xff] %v4675
    %vm4680 = vcmask 162816
    %4681 = vst.msk [vmem:[#allocation5 + $0x8] sm:$0xff] %vm4680, %v4677
    %v4682 = vld [vmem:[#allocation5] sm:$0xff]
    %v4683 = vld [vmem:[#allocation5 + $0x8] sm:$0xff]
    %v4684 = vld [vmem:[%s11] sm:$0xff]
    %s4685 = scalar_lea.vmem %s11, 8
    %v4686 = vld [vmem:[%s4685] sm:$0xff]
    %4689 = vrot.lane.b32.xlu0 %v4682, 126
    %v4690 = vpop.permute.xlu0 %4689
    %4691 = vrot.lane.b32.xlu0 %v4683, 126
    %v4692 = vpop.permute.xlu0 %4691
    %v4693 = vsel %vm280, %v4690, %v4692
    %v4696 = vsel %vm4377, %v4686, 0
    %4698 = vmatprep.subr.mxu0 0.0
    %4699 = vmatpush1.msra.mxu0 %v4693
    %4700 = vmatprep.subr.mxu0 0.0
    %4701 = vmatpush1.msra.mxu0 0.0
    %4702 = vmatprep.subr.mxu0 0.0
    %4703 = vmatpush1.msra.mxu0 0.0
    %4704 = vmatprep.subr.mxu0 0.0
    %4705 = vmatpush1.msra.mxu0 0.0
    %4706 = vmatprep.subr.mxu0 0.0
    %4707 = vmatpush1.msra.mxu0 0.0
    %4708 = vmatprep.subr.mxu0 0.0
    %4709 = vmatpush1.msra.mxu0 0.0
    %4710 = vmatprep.subr.mxu0 0.0
    %4711 = vmatpush1.msra.mxu0 0.0
    %4712 = vmatprep.subr.mxu0 0.0
    %4713 = vmatpush1.msra.mxu0 0.0
    %4714 = vmatprep.subr.mxu0 0.0
    %4715 = vmatpush1.msra.mxu0 0.0
    %4716 = vmatprep.subr.mxu0 0.0
    %4717 = vmatpush1.msra.mxu0 0.0
    %4718 = vmatprep.subr.mxu0 0.0
    %4719 = vmatpush1.msra.mxu0 0.0
    %4720 = vmatprep.subr.mxu0 0.0
    %4721 = vmatpush1.msra.mxu0 0.0
    %4722 = vmatprep.subr.mxu0 0.0
    %4723 = vmatpush1.msra.mxu0 0.0
    %4724 = vmatprep.subr.mxu0 0.0
    %4725 = vmatpush1.msra.mxu0 0.0
    %4726 = vmatprep.subr.mxu0 0.0
    %4727 = vmatpush1.msra.mxu0 0.0
    %4728 = vmatprep.subr.mxu0 0.0
    %4729 = vmatpush1.msra.mxu0 0.0
    %4730 = vmatprep.subr.mxu0 0.0
    %4731 = vmatpush1.msra.mxu0 0.0
    %4732 = vmatprep.subr.mxu0 0.0
    %4733 = vmatpush1.msra.mxu0 0.0
    %4734 = vmatprep.subr.mxu0 0.0
    %4735 = vmatpush1.msra.mxu0 0.0
    %4736 = vmatprep.subr.mxu0 0.0
    %4737 = vmatpush1.msra.mxu0 0.0
    %4738 = vmatprep.subr.mxu0 0.0
    %4739 = vmatpush1.msra.mxu0 0.0
    %4740 = vmatprep.subr.mxu0 0.0
    %4741 = vmatpush1.msra.mxu0 0.0
    %4742 = vmatprep.subr.mxu0 0.0
    %4743 = vmatpush1.msra.mxu0 0.0
    %4744 = vmatprep.subr.mxu0 0.0
    %4745 = vmatpush1.msra.mxu0 0.0
    %4746 = vmatprep.subr.mxu0 0.0
    %4747 = vmatpush1.msra.mxu0 0.0
    %4748 = vmatprep.subr.mxu0 0.0
    %4749 = vmatpush1.msra.mxu0 0.0
    %4750 = vmatprep.subr.mxu0 0.0
    %4751 = vmatpush1.msra.mxu0 0.0
    %4752 = vmatprep.subr.mxu0 0.0
    %4753 = vmatpush1.msra.mxu0 0.0
    %4754 = vmatprep.subr.mxu0 0.0
    %4755 = vmatpush1.msra.mxu0 0.0
    %4756 = vmatprep.subr.mxu0 0.0
    %4757 = vmatpush1.msra.mxu0 0.0
    %4758 = vmatprep.subr.mxu0 0.0
    %4759 = vmatpush1.msra.mxu0 0.0
    %4760 = vmatprep.subr.mxu0 0.0
    %4761 = vmatpush1.msra.mxu0 0.0
    %4762 = vmatprep.mubr.f32.mxu0 0.0
    %4763 = vmatmul.mubr.f32.gmra.mrb[0].mxu0 %v4696
    %v4764 = vpop.f32.mrb[0].mxu0
    %v4765 = vadd.f32 0.0, %v4764
    %v4766 = vpop.f32.mrb[0].mxu0
    %4767 = vdwg.mxu0
    %4768 = vrot.lane.b32.xlu0 %v4682, 127
    %v4769 = vpop.permute.xlu0 %4768
    %4770 = vrot.lane.b32.xlu0 %v4683, 127
    %v4771 = vpop.permute.xlu0 %4770
    %v4772 = vsel %vm196, %v4769, %v4771
    %v4775 = vsel %vm4377, %v4684, 0
    %4777 = vmatprep.subr.mxu0 0.0
    %4778 = vmatpush1.msra.mxu0 %v4772
    %4779 = vmatprep.subr.mxu0 0.0
    %4780 = vmatpush1.msra.mxu0 0.0
    %4781 = vmatprep.subr.mxu0 0.0
    %4782 = vmatpush1.msra.mxu0 0.0
    %4783 = vmatprep.subr.mxu0 0.0
    %4784 = vmatpush1.msra.mxu0 0.0
    %4785 = vmatprep.subr.mxu0 0.0
    %4786 = vmatpush1.msra.mxu0 0.0
    %4787 = vmatprep.subr.mxu0 0.0
    %4788 = vmatpush1.msra.mxu0 0.0
    %4789 = vmatprep.subr.mxu0 0.0
    %4790 = vmatpush1.msra.mxu0 0.0
    %4791 = vmatprep.subr.mxu0 0.0
    %4792 = vmatpush1.msra.mxu0 0.0
    %4793 = vmatprep.subr.mxu0 0.0
    %4794 = vmatpush1.msra.mxu0 0.0
    %4795 = vmatprep.subr.mxu0 0.0
    %4796 = vmatpush1.msra.mxu0 0.0
    %4797 = vmatprep.subr.mxu0 0.0
    %4798 = vmatpush1.msra.mxu0 0.0
    %4799 = vmatprep.subr.mxu0 0.0
    %4800 = vmatpush1.msra.mxu0 0.0
    %4801 = vmatprep.subr.mxu0 0.0
    %4802 = vmatpush1.msra.mxu0 0.0
    %4803 = vmatprep.subr.mxu0 0.0
    %4804 = vmatpush1.msra.mxu0 0.0
    %4805 = vmatprep.subr.mxu0 0.0
    %4806 = vmatpush1.msra.mxu0 0.0
    %4807 = vmatprep.subr.mxu0 0.0
    %4808 = vmatpush1.msra.mxu0 0.0
    %4809 = vmatprep.subr.mxu0 0.0
    %4810 = vmatpush1.msra.mxu0 0.0
    %4811 = vmatprep.subr.mxu0 0.0
    %4812 = vmatpush1.msra.mxu0 0.0
    %4813 = vmatprep.subr.mxu0 0.0
    %4814 = vmatpush1.msra.mxu0 0.0
    %4815 = vmatprep.subr.mxu0 0.0
    %4816 = vmatpush1.msra.mxu0 0.0
    %4817 = vmatprep.subr.mxu0 0.0
    %4818 = vmatpush1.msra.mxu0 0.0
    %4819 = vmatprep.subr.mxu0 0.0
    %4820 = vmatpush1.msra.mxu0 0.0
    %4821 = vmatprep.subr.mxu0 0.0
    %4822 = vmatpush1.msra.mxu0 0.0
    %4823 = vmatprep.subr.mxu0 0.0
    %4824 = vmatpush1.msra.mxu0 0.0
    %4825 = vmatprep.subr.mxu0 0.0
    %4826 = vmatpush1.msra.mxu0 0.0
    %4827 = vmatprep.subr.mxu0 0.0
    %4828 = vmatpush1.msra.mxu0 0.0
    %4829 = vmatprep.subr.mxu0 0.0
    %4830 = vmatpush1.msra.mxu0 0.0
    %4831 = vmatprep.subr.mxu0 0.0
    %4832 = vmatpush1.msra.mxu0 0.0
    %4833 = vmatprep.subr.mxu0 0.0
    %4834 = vmatpush1.msra.mxu0 0.0
    %4835 = vmatprep.subr.mxu0 0.0
    %4836 = vmatpush1.msra.mxu0 0.0
    %4837 = vmatprep.subr.mxu0 0.0
    %4838 = vmatpush1.msra.mxu0 0.0
    %4839 = vmatprep.subr.mxu0 0.0
    %4840 = vmatpush1.msra.mxu0 0.0
    %4841 = vmatprep.mubr.f32.mxu0 0.0
    %4842 = vmatmul.mubr.f32.gmra.mrb[0].mxu0 %v4775
    %v4843 = vpop.f32.mrb[0].mxu0
    %v4844 = vadd.f32 %v4765, %v4843
    %v4845 = vpop.f32.mrb[0].mxu0
    %4846 = vdwg.mxu0
    %s4847 = scalar_lea.vmem %s11, 16
    %v4848 = vld [vmem:[%s4847] sm:$0xff]
    %4849 = vrot.lane.b32.xlu0 %v4682, 125
    %v4850 = vpop.permute.xlu0 %4849
    %4851 = vrot.lane.b32.xlu0 %v4683, 125
    %v4852 = vpop.permute.xlu0 %4851
    %v4853 = vsel %vm3126, %v4850, %v4852
    %v4856 = vsel %vm4377, %v4848, 0
    %4858 = vmatprep.subr.mxu0 0.0
    %4859 = vmatpush1.msra.mxu0 %v4853
    %4860 = vmatprep.subr.mxu0 0.0
    %4861 = vmatpush1.msra.mxu0 0.0
    %4862 = vmatprep.subr.mxu0 0.0
    %4863 = vmatpush1.msra.mxu0 0.0
    %4864 = vmatprep.subr.mxu0 0.0
    %4865 = vmatpush1.msra.mxu0 0.0
    %4866 = vmatprep.subr.mxu0 0.0
    %4867 = vmatpush1.msra.mxu0 0.0
    %4868 = vmatprep.subr.mxu0 0.0
    %4869 = vmatpush1.msra.mxu0 0.0
    %4870 = vmatprep.subr.mxu0 0.0
    %4871 = vmatpush1.msra.mxu0 0.0
    %4872 = vmatprep.subr.mxu0 0.0
    %4873 = vmatpush1.msra.mxu0 0.0
    %4874 = vmatprep.subr.mxu0 0.0
    %4875 = vmatpush1.msra.mxu0 0.0
    %4876 = vmatprep.subr.mxu0 0.0
    %4877 = vmatpush1.msra.mxu0 0.0
    %4878 = vmatprep.subr.mxu0 0.0
    %4879 = vmatpush1.msra.mxu0 0.0
    %4880 = vmatprep.subr.mxu0 0.0
    %4881 = vmatpush1.msra.mxu0 0.0
    %4882 = vmatprep.subr.mxu0 0.0
    %4883 = vmatpush1.msra.mxu0 0.0
    %4884 = vmatprep.subr.mxu0 0.0
    %4885 = vmatpush1.msra.mxu0 0.0
    %4886 = vmatprep.subr.mxu0 0.0
    %4887 = vmatpush1.msra.mxu0 0.0
    %4888 = vmatprep.subr.mxu0 0.0
    %4889 = vmatpush1.msra.mxu0 0.0
    %4890 = vmatprep.subr.mxu0 0.0
    %4891 = vmatpush1.msra.mxu0 0.0
    %4892 = vmatprep.subr.mxu0 0.0
    %4893 = vmatpush1.msra.mxu0 0.0
    %4894 = vmatprep.subr.mxu0 0.0
    %4895 = vmatpush1.msra.mxu0 0.0
    %4896 = vmatprep.subr.mxu0 0.0
    %4897 = vmatpush1.msra.mxu0 0.0
    %4898 = vmatprep.subr.mxu0 0.0
    %4899 = vmatpush1.msra.mxu0 0.0
    %4900 = vmatprep.subr.mxu0 0.0
    %4901 = vmatpush1.msra.mxu0 0.0
    %4902 = vmatprep.subr.mxu0 0.0
    %4903 = vmatpush1.msra.mxu0 0.0
    %4904 = vmatprep.subr.mxu0 0.0
    %4905 = vmatpush1.msra.mxu0 0.0
    %4906 = vmatprep.subr.mxu0 0.0
    %4907 = vmatpush1.msra.mxu0 0.0
    %4908 = vmatprep.subr.mxu0 0.0
    %4909 = vmatpush1.msra.mxu0 0.0
    %4910 = vmatprep.subr.mxu0 0.0
    %4911 = vmatpush1.msra.mxu0 0.0
    %4912 = vmatprep.subr.mxu0 0.0
    %4913 = vmatpush1.msra.mxu0 0.0
    %4914 = vmatprep.subr.mxu0 0.0
    %4915 = vmatpush1.msra.mxu0 0.0
    %4916 = vmatprep.subr.mxu0 0.0
    %4917 = vmatpush1.msra.mxu0 0.0
    %4918 = vmatprep.subr.mxu0 0.0
    %4919 = vmatpush1.msra.mxu0 0.0
    %4920 = vmatprep.subr.mxu0 0.0
    %4921 = vmatpush1.msra.mxu0 0.0
    %4922 = vmatprep.mubr.f32.mxu0 0.0
    %4923 = vmatmul.mubr.f32.gmra.mrb[0].mxu0 %v4856
    %v4924 = vpop.f32.mrb[0].mxu0
    %v4925 = vadd.f32 0.0, %v4924
    %v4926 = vpop.f32.mrb[0].mxu0
    %4927 = vdwg.mxu0
    %v4928 = vadd.f32 %v4844, %v4925
    %s4929 = scalar_lea.vmem %s11, 24
    %v4930 = vld [vmem:[%s4929] sm:$0xff]
    %4931 = vrot.lane.b32.xlu0 %v4682, 119
    %v4932 = vpop.permute.xlu0 %4931
    %4933 = vrot.lane.b32.xlu0 %v4683, 119
    %v4934 = vpop.permute.xlu0 %4933
    %vm4935 = vcmask 973824
    %v4936 = vsel %vm4935, %v4932, %v4934
    %v4939 = vsel %vm4377, %v4930, 0
    %4941 = vmatprep.subr.mxu0 0.0
    %4942 = vmatpush1.msra.mxu0 %v4936
    %4943 = vmatprep.subr.mxu0 0.0
    %4944 = vmatpush1.msra.mxu0 0.0
    %4945 = vmatprep.subr.mxu0 0.0
    %4946 = vmatpush1.msra.mxu0 0.0
    %4947 = vmatprep.subr.mxu0 0.0
    %4948 = vmatpush1.msra.mxu0 0.0
    %4949 = vmatprep.subr.mxu0 0.0
    %4950 = vmatpush1.msra.mxu0 0.0
    %4951 = vmatprep.subr.mxu0 0.0
    %4952 = vmatpush1.msra.mxu0 0.0
    %4953 = vmatprep.subr.mxu0 0.0
    %4954 = vmatpush1.msra.mxu0 0.0
    %4955 = vmatprep.subr.mxu0 0.0
    %4956 = vmatpush1.msra.mxu0 0.0
    %4957 = vmatprep.subr.mxu0 0.0
    %4958 = vmatpush1.msra.mxu0 0.0
    %4959 = vmatprep.subr.mxu0 0.0
    %4960 = vmatpush1.msra.mxu0 0.0
    %4961 = vmatprep.subr.mxu0 0.0
    %4962 = vmatpush1.msra.mxu0 0.0
    %4963 = vmatprep.subr.mxu0 0.0
    %4964 = vmatpush1.msra.mxu0 0.0
    %4965 = vmatprep.subr.mxu0 0.0
    %4966 = vmatpush1.msra.mxu0 0.0
    %4967 = vmatprep.subr.mxu0 0.0
    %4968 = vmatpush1.msra.mxu0 0.0
    %4969 = vmatprep.subr.mxu0 0.0
    %4970 = vmatpush1.msra.mxu0 0.0
    %4971 = vmatprep.subr.mxu0 0.0
    %4972 = vmatpush1.msra.mxu0 0.0
    %4973 = vmatprep.subr.mxu0 0.0
    %4974 = vmatpush1.msra.mxu0 0.0
    %4975 = vmatprep.subr.mxu0 0.0
    %4976 = vmatpush1.msra.mxu0 0.0
    %4977 = vmatprep.subr.mxu0 0.0
    %4978 = vmatpush1.msra.mxu0 0.0
    %4979 = vmatprep.subr.mxu0 0.0
    %4980 = vmatpush1.msra.mxu0 0.0
    %4981 = vmatprep.subr.mxu0 0.0
    %4982 = vmatpush1.msra.mxu0 0.0
    %4983 = vmatprep.subr.mxu0 0.0
    %4984 = vmatpush1.msra.mxu0 0.0
    %4985 = vmatprep.subr.mxu0 0.0
    %4986 = vmatpush1.msra.mxu0 0.0
    %4987 = vmatprep.subr.mxu0 0.0
    %4988 = vmatpush1.msra.mxu0 0.0
    %4989 = vmatprep.subr.mxu0 0.0
    %4990 = vmatpush1.msra.mxu0 0.0
    %4991 = vmatprep.subr.mxu0 0.0
    %4992 = vmatpush1.msra.mxu0 0.0
    %4993 = vmatprep.subr.mxu0 0.0
    %4994 = vmatpush1.msra.mxu0 0.0
    %4995 = vmatprep.subr.mxu0 0.0
    %4996 = vmatpush1.msra.mxu0 0.0
    %4997 = vmatprep.subr.mxu0 0.0
    %4998 = vmatpush1.msra.mxu0 0.0
    %4999 = vmatprep.subr.mxu0 0.0
    %5000 = vmatpush1.msra.mxu0 0.0
    %5001 = vmatprep.subr.mxu0 0.0
    %5002 = vmatpush1.msra.mxu0 0.0
    %5003 = vmatprep.subr.mxu0 0.0
    %5004 = vmatpush1.msra.mxu0 0.0
    %5005 = vmatprep.mubr.f32.mxu0 0.0
    %5006 = vmatmul.mubr.f32.gmra.mrb[0].mxu0 %v4939
    %v5007 = vpop.f32.mrb[0].mxu0
    %v5008 = vadd.f32 0.0, %v5007
    %v5009 = vpop.f32.mrb[0].mxu0
    %5010 = vdwg.mxu0
    %v5011 = vadd.f32 %v4928, %v5008
    %s5012 = scalar_lea.vmem %s11, 32
    %v5013 = vld [vmem:[%s5012] sm:$0xff]
    %5014 = vrot.lane.b32.xlu0 %v4682, 118
    %v5015 = vpop.permute.xlu0 %5014
    %5016 = vrot.lane.b32.xlu0 %v4683, 118
    %v5017 = vpop.permute.xlu0 %5016
    %vm5018 = vcmask 965632
    %v5019 = vsel %vm5018, %v5015, %v5017
    %v5022 = vsel %vm4377, %v5013, 0
    %5024 = vmatprep.subr.mxu0 0.0
    %5025 = vmatpush1.msra.mxu0 %v5019
    %5026 = vmatprep.subr.mxu0 0.0
    %5027 = vmatpush1.msra.mxu0 0.0
    %5028 = vmatprep.subr.mxu0 0.0
    %5029 = vmatpush1.msra.mxu0 0.0
    %5030 = vmatprep.subr.mxu0 0.0
    %5031 = vmatpush1.msra.mxu0 0.0
    %5032 = vmatprep.subr.mxu0 0.0
    %5033 = vmatpush1.msra.mxu0 0.0
    %5034 = vmatprep.subr.mxu0 0.0
    %5035 = vmatpush1.msra.mxu0 0.0
    %5036 = vmatprep.subr.mxu0 0.0
    %5037 = vmatpush1.msra.mxu0 0.0
    %5038 = vmatprep.subr.mxu0 0.0
    %5039 = vmatpush1.msra.mxu0 0.0
    %5040 = vmatprep.subr.mxu0 0.0
    %5041 = vmatpush1.msra.mxu0 0.0
    %5042 = vmatprep.subr.mxu0 0.0
    %5043 = vmatpush1.msra.mxu0 0.0
    %5044 = vmatprep.subr.mxu0 0.0
    %5045 = vmatpush1.msra.mxu0 0.0
    %5046 = vmatprep.subr.mxu0 0.0
    %5047 = vmatpush1.msra.mxu0 0.0
    %5048 = vmatprep.subr.mxu0 0.0
    %5049 = vmatpush1.msra.mxu0 0.0
    %5050 = vmatprep.subr.mxu0 0.0
    %5051 = vmatpush1.msra.mxu0 0.0
    %5052 = vmatprep.subr.mxu0 0.0
    %5053 = vmatpush1.msra.mxu0 0.0
    %5054 = vmatprep.subr.mxu0 0.0
    %5055 = vmatpush1.msra.mxu0 0.0
    %5056 = vmatprep.subr.mxu0 0.0
    %5057 = vmatpush1.msra.mxu0 0.0
    %5058 = vmatprep.subr.mxu0 0.0
    %5059 = vmatpush1.msra.mxu0 0.0
    %5060 = vmatprep.subr.mxu0 0.0
    %5061 = vmatpush1.msra.mxu0 0.0
    %5062 = vmatprep.subr.mxu0 0.0
    %5063 = vmatpush1.msra.mxu0 0.0
    %5064 = vmatprep.subr.mxu0 0.0
    %5065 = vmatpush1.msra.mxu0 0.0
    %5066 = vmatprep.subr.mxu0 0.0
    %5067 = vmatpush1.msra.mxu0 0.0
    %5068 = vmatprep.subr.mxu0 0.0
    %5069 = vmatpush1.msra.mxu0 0.0
    %5070 = vmatprep.subr.mxu0 0.0
    %5071 = vmatpush1.msra.mxu0 0.0
    %5072 = vmatprep.subr.mxu0 0.0
    %5073 = vmatpush1.msra.mxu0 0.0
    %5074 = vmatprep.subr.mxu0 0.0
    %5075 = vmatpush1.msra.mxu0 0.0
    %5076 = vmatprep.subr.mxu0 0.0
    %5077 = vmatpush1.msra.mxu0 0.0
    %5078 = vmatprep.subr.mxu0 0.0
    %5079 = vmatpush1.msra.mxu0 0.0
    %5080 = vmatprep.subr.mxu0 0.0
    %5081 = vmatpush1.msra.mxu0 0.0
    %5082 = vmatprep.subr.mxu0 0.0
    %5083 = vmatpush1.msra.mxu0 0.0
    %5084 = vmatprep.subr.mxu0 0.0
    %5085 = vmatpush1.msra.mxu0 0.0
    %5086 = vmatprep.subr.mxu0 0.0
    %5087 = vmatpush1.msra.mxu0 0.0
    %5088 = vmatprep.mubr.f32.mxu0 0.0
    %5089 = vmatmul.mubr.f32.gmra.mrb[0].mxu0 %v5022
    %v5090 = vpop.f32.mrb[0].mxu0
    %v5091 = vadd.f32 0.0, %v5090
    %v5092 = vpop.f32.mrb[0].mxu0
    %5093 = vdwg.mxu0
    %v5094 = vadd.f32 %v5011, %v5091
    %s5095 = scalar_lea.vmem %s11, 40
    %v5096 = vld [vmem:[%s5095] sm:$0xff]
    %5097 = vrot.lane.b32.xlu0 %v4682, 117
    %v5098 = vpop.permute.xlu0 %5097
    %5099 = vrot.lane.b32.xlu0 %v4683, 117
    %v5100 = vpop.permute.xlu0 %5099
    %vm5101 = vcmask 957440
    %v5102 = vsel %vm5101, %v5098, %v5100
    %v5105 = vsel %vm4377, %v5096, 0
    %5107 = vmatprep.subr.mxu0 0.0
    %5108 = vmatpush1.msra.mxu0 %v5102
    %5109 = vmatprep.subr.mxu0 0.0
    %5110 = vmatpush1.msra.mxu0 0.0
    %5111 = vmatprep.subr.mxu0 0.0
    %5112 = vmatpush1.msra.mxu0 0.0
    %5113 = vmatprep.subr.mxu0 0.0
    %5114 = vmatpush1.msra.mxu0 0.0
    %5115 = vmatprep.subr.mxu0 0.0
    %5116 = vmatpush1.msra.mxu0 0.0
    %5117 = vmatprep.subr.mxu0 0.0
    %5118 = vmatpush1.msra.mxu0 0.0
    %5119 = vmatprep.subr.mxu0 0.0
    %5120 = vmatpush1.msra.mxu0 0.0
    %5121 = vmatprep.subr.mxu0 0.0
    %5122 = vmatpush1.msra.mxu0 0.0
    %5123 = vmatprep.subr.mxu0 0.0
    %5124 = vmatpush1.msra.mxu0 0.0
    %5125 = vmatprep.subr.mxu0 0.0
    %5126 = vmatpush1.msra.mxu0 0.0
    %5127 = vmatprep.subr.mxu0 0.0
    %5128 = vmatpush1.msra.mxu0 0.0
    %5129 = vmatprep.subr.mxu0 0.0
    %5130 = vmatpush1.msra.mxu0 0.0
    %5131 = vmatprep.subr.mxu0 0.0
    %5132 = vmatpush1.msra.mxu0 0.0
    %5133 = vmatprep.subr.mxu0 0.0
    %5134 = vmatpush1.msra.mxu0 0.0
    %5135 = vmatprep.subr.mxu0 0.0
    %5136 = vmatpush1.msra.mxu0 0.0
    %5137 = vmatprep.subr.mxu0 0.0
    %5138 = vmatpush1.msra.mxu0 0.0
    %5139 = vmatprep.subr.mxu0 0.0
    %5140 = vmatpush1.msra.mxu0 0.0
    %5141 = vmatprep.subr.mxu0 0.0
    %5142 = vmatpush1.msra.mxu0 0.0
    %5143 = vmatprep.subr.mxu0 0.0
    %5144 = vmatpush1.msra.mxu0 0.0
    %5145 = vmatprep.subr.mxu0 0.0
    %5146 = vmatpush1.msra.mxu0 0.0
    %5147 = vmatprep.subr.mxu0 0.0
    %5148 = vmatpush1.msra.mxu0 0.0
    %5149 = vmatprep.subr.mxu0 0.0
    %5150 = vmatpush1.msra.mxu0 0.0
    %5151 = vmatprep.subr.mxu0 0.0
    %5152 = vmatpush1.msra.mxu0 0.0
    %5153 = vmatprep.subr.mxu0 0.0
    %5154 = vmatpush1.msra.mxu0 0.0
    %5155 = vmatprep.subr.mxu0 0.0
    %5156 = vmatpush1.msra.mxu0 0.0
    %5157 = vmatprep.subr.mxu0 0.0
    %5158 = vmatpush1.msra.mxu0 0.0
    %5159 = vmatprep.subr.mxu0 0.0
    %5160 = vmatpush1.msra.mxu0 0.0
    %5161 = vmatprep.subr.mxu0 0.0
    %5162 = vmatpush1.msra.mxu0 0.0
    %5163 = vmatprep.subr.mxu0 0.0
    %5164 = vmatpush1.msra.mxu0 0.0
    %5165 = vmatprep.subr.mxu0 0.0
    %5166 = vmatpush1.msra.mxu0 0.0
    %5167 = vmatprep.subr.mxu0 0.0
    %5168 = vmatpush1.msra.mxu0 0.0
    %5169 = vmatprep.subr.mxu0 0.0
    %5170 = vmatpush1.msra.mxu0 0.0
    %5171 = vmatprep.mubr.f32.mxu0 0.0
    %5172 = vmatmul.mubr.f32.gmra.mrb[0].mxu0 %v5105
    %v5173 = vpop.f32.mrb[0].mxu0
    %v5174 = vadd.f32 0.0, %v5173
    %v5175 = vpop.f32.mrb[0].mxu0
    %5176 = vdwg.mxu0
    %v5177 = vadd.f32 %v5094, %v5174
    %s5178 = scalar_lea.vmem %s11, 48
    %v5179 = vld [vmem:[%s5178] sm:$0xff]
    %5180 = vrot.lane.b32.xlu0 %v4682, 111
    %v5181 = vpop.permute.xlu0 %5180
    %5182 = vrot.lane.b32.xlu0 %v4683, 111
    %v5183 = vpop.permute.xlu0 %5182
    %v5184 = vsel %vm3657, %v5181, %v5183
    %v5187 = vsel %vm4377, %v5179, 0
    %5189 = vmatprep.subr.mxu0 0.0
    %5190 = vmatpush1.msra.mxu0 %v5184
    %5191 = vmatprep.subr.mxu0 0.0
    %5192 = vmatpush1.msra.mxu0 0.0
    %5193 = vmatprep.subr.mxu0 0.0
    %5194 = vmatpush1.msra.mxu0 0.0
    %5195 = vmatprep.subr.mxu0 0.0
    %5196 = vmatpush1.msra.mxu0 0.0
    %5197 = vmatprep.subr.mxu0 0.0
    %5198 = vmatpush1.msra.mxu0 0.0
    %5199 = vmatprep.subr.mxu0 0.0
    %5200 = vmatpush1.msra.mxu0 0.0
    %5201 = vmatprep.subr.mxu0 0.0
    %5202 = vmatpush1.msra.mxu0 0.0
    %5203 = vmatprep.subr.mxu0 0.0
    %5204 = vmatpush1.msra.mxu0 0.0
    %5205 = vmatprep.subr.mxu0 0.0
    %5206 = vmatpush1.msra.mxu0 0.0
    %5207 = vmatprep.subr.mxu0 0.0
    %5208 = vmatpush1.msra.mxu0 0.0
    %5209 = vmatprep.subr.mxu0 0.0
    %5210 = vmatpush1.msra.mxu0 0.0
    %5211 = vmatprep.subr.mxu0 0.0
    %5212 = vmatpush1.msra.mxu0 0.0
    %5213 = vmatprep.subr.mxu0 0.0
    %5214 = vmatpush1.msra.mxu0 0.0
    %5215 = vmatprep.subr.mxu0 0.0
    %5216 = vmatpush1.msra.mxu0 0.0
    %5217 = vmatprep.subr.mxu0 0.0
    %5218 = vmatpush1.msra.mxu0 0.0
    %5219 = vmatprep.subr.mxu0 0.0
    %5220 = vmatpush1.msra.mxu0 0.0
    %5221 = vmatprep.subr.mxu0 0.0
    %5222 = vmatpush1.msra.mxu0 0.0
    %5223 = vmatprep.subr.mxu0 0.0
    %5224 = vmatpush1.msra.mxu0 0.0
    %5225 = vmatprep.subr.mxu0 0.0
    %5226 = vmatpush1.msra.mxu0 0.0
    %5227 = vmatprep.subr.mxu0 0.0
    %5228 = vmatpush1.msra.mxu0 0.0
    %5229 = vmatprep.subr.mxu0 0.0
    %5230 = vmatpush1.msra.mxu0 0.0
    %5231 = vmatprep.subr.mxu0 0.0
    %5232 = vmatpush1.msra.mxu0 0.0
    %5233 = vmatprep.subr.mxu0 0.0
    %5234 = vmatpush1.msra.mxu0 0.0
    %5235 = vmatprep.subr.mxu0 0.0
    %5236 = vmatpush1.msra.mxu0 0.0
    %5237 = vmatprep.subr.mxu0 0.0
    %5238 = vmatpush1.msra.mxu0 0.0
    %5239 = vmatprep.subr.mxu0 0.0
    %5240 = vmatpush1.msra.mxu0 0.0
    %5241 = vmatprep.subr.mxu0 0.0
    %5242 = vmatpush1.msra.mxu0 0.0
    %5243 = vmatprep.subr.mxu0 0.0
    %5244 = vmatpush1.msra.mxu0 0.0
    %5245 = vmatprep.subr.mxu0 0.0
    %5246 = vmatpush1.msra.mxu0 0.0
    %5247 = vmatprep.subr.mxu0 0.0
    %5248 = vmatpush1.msra.mxu0 0.0
    %5249 = vmatprep.subr.mxu0 0.0
    %5250 = vmatpush1.msra.mxu0 0.0
    %5251 = vmatprep.subr.mxu0 0.0
    %5252 = vmatpush1.msra.mxu0 0.0
    %5253 = vmatprep.mubr.f32.mxu0 0.0
    %5254 = vmatmul.mubr.f32.gmra.mrb[0].mxu0 %v5187
    %v5255 = vpop.f32.mrb[0].mxu0
    %v5256 = vadd.f32 0.0, %v5255
    %v5257 = vpop.f32.mrb[0].mxu0
    %5258 = vdwg.mxu0
    %v5259 = vadd.f32 %v5177, %v5256
    %s5260 = scalar_lea.vmem %s11, 56
    %v5261 = vld [vmem:[%s5260] sm:$0xff]
    %5262 = vrot.lane.b32.xlu0 %v4682, 110
    %v5263 = vpop.permute.xlu0 %5262
    %5264 = vrot.lane.b32.xlu0 %v4683, 110
    %v5265 = vpop.permute.xlu0 %5264
    %vm5266 = vcmask 900096
    %v5267 = vsel %vm5266, %v5263, %v5265
    %v5270 = vsel %vm4377, %v5261, 0
    %5272 = vmatprep.subr.mxu0 0.0
    %5273 = vmatpush1.msra.mxu0 %v5267
    %5274 = vmatprep.subr.mxu0 0.0
    %5275 = vmatpush1.msra.mxu0 0.0
    %5276 = vmatprep.subr.mxu0 0.0
    %5277 = vmatpush1.msra.mxu0 0.0
    %5278 = vmatprep.subr.mxu0 0.0
    %5279 = vmatpush1.msra.mxu0 0.0
    %5280 = vmatprep.subr.mxu0 0.0
    %5281 = vmatpush1.msra.mxu0 0.0
    %5282 = vmatprep.subr.mxu0 0.0
    %5283 = vmatpush1.msra.mxu0 0.0
    %5284 = vmatprep.subr.mxu0 0.0
    %5285 = vmatpush1.msra.mxu0 0.0
    %5286 = vmatprep.subr.mxu0 0.0
    %5287 = vmatpush1.msra.mxu0 0.0
    %5288 = vmatprep.subr.mxu0 0.0
    %5289 = vmatpush1.msra.mxu0 0.0
    %5290 = vmatprep.subr.mxu0 0.0
    %5291 = vmatpush1.msra.mxu0 0.0
    %5292 = vmatprep.subr.mxu0 0.0
    %5293 = vmatpush1.msra.mxu0 0.0
    %5294 = vmatprep.subr.mxu0 0.0
    %5295 = vmatpush1.msra.mxu0 0.0
    %5296 = vmatprep.subr.mxu0 0.0
    %5297 = vmatpush1.msra.mxu0 0.0
    %5298 = vmatprep.subr.mxu0 0.0
    %5299 = vmatpush1.msra.mxu0 0.0
    %5300 = vmatprep.subr.mxu0 0.0
    %5301 = vmatpush1.msra.mxu0 0.0
    %5302 = vmatprep.subr.mxu0 0.0
    %5303 = vmatpush1.msra.mxu0 0.0
    %5304 = vmatprep.subr.mxu0 0.0
    %5305 = vmatpush1.msra.mxu0 0.0
    %5306 = vmatprep.subr.mxu0 0.0
    %5307 = vmatpush1.msra.mxu0 0.0
    %5308 = vmatprep.subr.mxu0 0.0
    %5309 = vmatpush1.msra.mxu0 0.0
    %5310 = vmatprep.subr.mxu0 0.0
    %5311 = vmatpush1.msra.mxu0 0.0
    %5312 = vmatprep.subr.mxu0 0.0
    %5313 = vmatpush1.msra.mxu0 0.0
    %5314 = vmatprep.subr.mxu0 0.0
    %5315 = vmatpush1.msra.mxu0 0.0
    %5316 = vmatprep.subr.mxu0 0.0
    %5317 = vmatpush1.msra.mxu0 0.0
    %5318 = vmatprep.subr.mxu0 0.0
    %5319 = vmatpush1.msra.mxu0 0.0
    %5320 = vmatprep.subr.mxu0 0.0
    %5321 = vmatpush1.msra.mxu0 0.0
    %5322 = vmatprep.subr.mxu0 0.0
    %5323 = vmatpush1.msra.mxu0 0.0
    %5324 = vmatprep.subr.mxu0 0.0
    %5325 = vmatpush1.msra.mxu0 0.0
    %5326 = vmatprep.subr.mxu0 0.0
    %5327 = vmatpush1.msra.mxu0 0.0
    %5328 = vmatprep.subr.mxu0 0.0
    %5329 = vmatpush1.msra.mxu0 0.0
    %5330 = vmatprep.subr.mxu0 0.0
    %5331 = vmatpush1.msra.mxu0 0.0
    %5332 = vmatprep.subr.mxu0 0.0
    %5333 = vmatpush1.msra.mxu0 0.0
    %5334 = vmatprep.subr.mxu0 0.0
    %5335 = vmatpush1.msra.mxu0 0.0
    %5336 = vmatprep.mubr.f32.mxu0 0.0
    %5337 = vmatmul.mubr.f32.gmra.mrb[0].mxu0 %v5270
    %v5338 = vpop.f32.mrb[0].mxu0
    %v5339 = vadd.f32 0.0, %v5338
    %v5340 = vpop.f32.mrb[0].mxu0
    %5341 = vdwg.mxu0
    %v5342 = vadd.f32 %v5259, %v5339
    %s5343 = scalar_lea.vmem %s11, 64
    %v5344 = vld [vmem:[%s5343] sm:$0xff]
    %5345 = vrot.lane.b32.xlu0 %v4682, 109
    %v5346 = vpop.permute.xlu0 %5345
    %5347 = vrot.lane.b32.xlu0 %v4683, 109
    %v5348 = vpop.permute.xlu0 %5347
    %vm5349 = vcmask 891904
    %v5350 = vsel %vm5349, %v5346, %v5348
    %v5353 = vsel %vm4377, %v5344, 0
    %5355 = vmatprep.subr.mxu0 0.0
    %5356 = vmatpush1.msra.mxu0 %v5350
    %5357 = vmatprep.subr.mxu0 0.0
    %5358 = vmatpush1.msra.mxu0 0.0
    %5359 = vmatprep.subr.mxu0 0.0
    %5360 = vmatpush1.msra.mxu0 0.0
    %5361 = vmatprep.subr.mxu0 0.0
    %5362 = vmatpush1.msra.mxu0 0.0
    %5363 = vmatprep.subr.mxu0 0.0
    %5364 = vmatpush1.msra.mxu0 0.0
    %5365 = vmatprep.subr.mxu0 0.0
    %5366 = vmatpush1.msra.mxu0 0.0
    %5367 = vmatprep.subr.mxu0 0.0
    %5368 = vmatpush1.msra.mxu0 0.0
    %5369 = vmatprep.subr.mxu0 0.0
    %5370 = vmatpush1.msra.mxu0 0.0
    %5371 = vmatprep.subr.mxu0 0.0
    %5372 = vmatpush1.msra.mxu0 0.0
    %5373 = vmatprep.subr.mxu0 0.0
    %5374 = vmatpush1.msra.mxu0 0.0
    %5375 = vmatprep.subr.mxu0 0.0
    %5376 = vmatpush1.msra.mxu0 0.0
    %5377 = vmatprep.subr.mxu0 0.0
    %5378 = vmatpush1.msra.mxu0 0.0
    %5379 = vmatprep.subr.mxu0 0.0
    %5380 = vmatpush1.msra.mxu0 0.0
    %5381 = vmatprep.subr.mxu0 0.0
    %5382 = vmatpush1.msra.mxu0 0.0
    %5383 = vmatprep.subr.mxu0 0.0
    %5384 = vmatpush1.msra.mxu0 0.0
    %5385 = vmatprep.subr.mxu0 0.0
    %5386 = vmatpush1.msra.mxu0 0.0
    %5387 = vmatprep.subr.mxu0 0.0
    %5388 = vmatpush1.msra.mxu0 0.0
    %5389 = vmatprep.subr.mxu0 0.0
    %5390 = vmatpush1.msra.mxu0 0.0
    %5391 = vmatprep.subr.mxu0 0.0
    %5392 = vmatpush1.msra.mxu0 0.0
    %5393 = vmatprep.subr.mxu0 0.0
    %5394 = vmatpush1.msra.mxu0 0.0
    %5395 = vmatprep.subr.mxu0 0.0
    %5396 = vmatpush1.msra.mxu0 0.0
    %5397 = vmatprep.subr.mxu0 0.0
    %5398 = vmatpush1.msra.mxu0 0.0
    %5399 = vmatprep.subr.mxu0 0.0
    %5400 = vmatpush1.msra.mxu0 0.0
    %5401 = vmatprep.subr.mxu0 0.0
    %5402 = vmatpush1.msra.mxu0 0.0
    %5403 = vmatprep.subr.mxu0 0.0
    %5404 = vmatpush1.msra.mxu0 0.0
    %5405 = vmatprep.subr.mxu0 0.0
    %5406 = vmatpush1.msra.mxu0 0.0
    %5407 = vmatprep.subr.mxu0 0.0
    %5408 = vmatpush1.msra.mxu0 0.0
    %5409 = vmatprep.subr.mxu0 0.0
    %5410 = vmatpush1.msra.mxu0 0.0
    %5411 = vmatprep.subr.mxu0 0.0
    %5412 = vmatpush1.msra.mxu0 0.0
    %5413 = vmatprep.subr.mxu0 0.0
    %5414 = vmatpush1.msra.mxu0 0.0
    %5415 = vmatprep.subr.mxu0 0.0
    %5416 = vmatpush1.msra.mxu0 0.0
    %5417 = vmatprep.subr.mxu0 0.0
    %5418 = vmatpush1.msra.mxu0 0.0
    %5419 = vmatprep.mubr.f32.mxu0 0.0
    %5420 = vmatmul.mubr.f32.gmra.mrb[0].mxu0 %v5353
    %v5421 = vpop.f32.mrb[0].mxu0
    %v5422 = vadd.f32 0.0, %v5421
    %v5423 = vpop.f32.mrb[0].mxu0
    %5424 = vdwg.mxu0
    %v5425 = vadd.f32 %v5342, %v5422
    %v5426 = vld [vmem:[%s14] sm:$0x1]
    %v5428 = vlaneseq
    %v5429 = vshrl.u32 %v5428, 7
    %v5430 = vsub.s32 0, %v5429
    %v5431 = vrot.slane %v5426, %v5430
    %v5433 = vmul.f32 %v5425, %v5431
    %5434 = vadd.xlane.f32.xlu0 %v5433
    %v5435 = vpop.xlane.xlu0 %5434
    %v5436 = vmul.f32 %v5435, 0.013888889
    %v5437 = vmul.f32 %v5433, %v5425
    %5438 = vadd.xlane.f32.xlu0 %v5437
    %v5439 = vpop.xlane.xlu0 %5438
    %v5440 = vmul.f32 %v5439, 0.013888889
    %v5441 = vmul.f32 %v5436, %v5436
    %v5442 = vsub.f32 %v5440, %v5441
    %v5443 = vmax.f32 %v5442, 0.0
    %v5444 = vld [vmem:[%s12] sm:$0xff]
    %v5445 = vadd.f32 %v5443, 1e-05
    %v5446 = vrsqrt.pop %v5445
    %v5447 = vmul.f32 %v5444, %v5446
    %v5448 = vsub.f32 %v5425, %v5436
    %5450 = vset.pattern.permute.xlu0 0
    %5451 = vperm.xlu0 %5450, %v5447
    %v5452 = vpop.permute.xlu0 %5451
    %v5454 = vmul.f32 %v5448, %v5452
    %v5455 = vld [vmem:[%s13] sm:$0xff]
    %5457 = vset.pattern.permute.xlu0 0
    %5458 = vperm.xlu0 %5457, %v5455
    %v5459 = vpop.permute.xlu0 %5458
    %v5461 = vadd.f32 %v5454, %v5459
    %v5462 = vmax.f32 %v5461, 0.0
    %5463 = vst [vmem:[#allocation6] sm:$0xff] %v5462
    %v5464 = vld [vmem:[#allocation6] sm:$0xff]
    %v5465 = vld [vmem:[%s15] sm:$0xff]
    %v5466 = vld [vmem:[%s15 + $0x8] sm:$0xff]
    %v5467 = vld [vmem:[%s15 + $0x10] sm:$0xff]
    %v5468 = vld [vmem:[%s15 + $0x18] sm:$0xff]
    %v5469 = vld [vmem:[%s15 + $0x20] sm:$0xff]
    %v5470 = vld [vmem:[%s15 + $0x28] sm:$0xff]
    %v5471 = vld [vmem:[%s15 + $0x30] sm:$0xff]
    %v5472 = vld [vmem:[%s15 + $0x38] sm:$0xff]
    %v5473 = vld [vmem:[%s15 + $0x40] sm:$0xff]
    %v5474 = vld [vmem:[%s15 + $0x48] sm:$0xff]
    %v5475 = vld [vmem:[%s15 + $0x50] sm:$0xff]
    %v5476 = vld [vmem:[%s15 + $0x58] sm:$0xff]
    %v5477 = vld [vmem:[%s15 + $0x60] sm:$0xff]
    %v5478 = vld [vmem:[%s15 + $0x68] sm:$0xff]
    %v5479 = vld [vmem:[%s15 + $0x70] sm:$0xff]
    %v5480 = vld [vmem:[%s15 + $0x78] sm:$0xff]
    %5481 = vmatprep.subr.mxu0 0.0
    %5482 = vmatpush1.msra.mxu0 %v5465
    %5483 = vmatprep.subr.mxu0 0.0
    %5484 = vmatpush1.msra.mxu0 %v5466
    %5485 = vmatprep.subr.mxu0 0.0
    %5486 = vmatpush1.msra.mxu0 %v5467
    %5487 = vmatprep.subr.mxu0 0.0
    %5488 = vmatpush1.msra.mxu0 %v5468
    %5489 = vmatprep.subr.mxu0 0.0
    %5490 = vmatpush1.msra.mxu0 %v5469
    %5491 = vmatprep.subr.mxu0 0.0
    %5492 = vmatpush1.msra.mxu0 %v5470
    %5493 = vmatprep.subr.mxu0 0.0
    %5494 = vmatpush1.msra.mxu0 %v5471
    %5495 = vmatprep.subr.mxu0 0.0
    %5496 = vmatpush1.msra.mxu0 %v5472
    %5497 = vmatprep.subr.mxu0 0.0
    %5498 = vmatpush1.msra.mxu0 %v5473
    %5499 = vmatprep.subr.mxu0 0.0
    %5500 = vmatpush1.msra.mxu0 %v5474
    %5501 = vmatprep.subr.mxu0 0.0
    %5502 = vmatpush1.msra.mxu0 %v5475
    %5503 = vmatprep.subr.mxu0 0.0
    %5504 = vmatpush1.msra.mxu0 %v5476
    %5505 = vmatprep.subr.mxu0 0.0
    %5506 = vmatpush1.msra.mxu0 %v5477
    %5507 = vmatprep.subr.mxu0 0.0
    %5508 = vmatpush1.msra.mxu0 %v5478
    %5509 = vmatprep.subr.mxu0 0.0
    %5510 = vmatpush1.msra.mxu0 %v5479
    %5511 = vmatprep.subr.mxu0 0.0
    %5512 = vmatpush1.msra.mxu0 %v5480
    %5513 = vmatprep.subr.mxu0 0.0
    %5514 = vmatpush1.msra.mxu0 0.0
    %5515 = vmatprep.subr.mxu0 0.0
    %5516 = vmatpush1.msra.mxu0 0.0
    %5517 = vmatprep.subr.mxu0 0.0
    %5518 = vmatpush1.msra.mxu0 0.0
    %5519 = vmatprep.subr.mxu0 0.0
    %5520 = vmatpush1.msra.mxu0 0.0
    %5521 = vmatprep.subr.mxu0 0.0
    %5522 = vmatpush1.msra.mxu0 0.0
    %5523 = vmatprep.subr.mxu0 0.0
    %5524 = vmatpush1.msra.mxu0 0.0
    %5525 = vmatprep.subr.mxu0 0.0
    %5526 = vmatpush1.msra.mxu0 0.0
    %5527 = vmatprep.subr.mxu0 0.0
    %5528 = vmatpush1.msra.mxu0 0.0
    %5529 = vmatprep.subr.mxu0 0.0
    %5530 = vmatpush1.msra.mxu0 0.0
    %5531 = vmatprep.subr.mxu0 0.0
    %5532 = vmatpush1.msra.mxu0 0.0
    %5533 = vmatprep.subr.mxu0 0.0
    %5534 = vmatpush1.msra.mxu0 0.0
    %5535 = vmatprep.subr.mxu0 0.0
    %5536 = vmatpush1.msra.mxu0 0.0
    %5537 = vmatprep.subr.mxu0 0.0
    %5538 = vmatpush1.msra.mxu0 0.0
    %5539 = vmatprep.subr.mxu0 0.0
    %5540 = vmatpush1.msra.mxu0 0.0
    %5541 = vmatprep.subr.mxu0 0.0
    %5542 = vmatpush1.msra.mxu0 0.0
    %5543 = vmatprep.subr.mxu0 0.0
    %5544 = vmatpush1.msra.mxu0 0.0
    %5545 = vmatprep.mubr.f32.mxu0 0.0
    %5546 = vmatmul.mubr.f32.gmra.mrb[0].mxu0 %v5464
    %v5547 = vpop.f32.mrb[0].mxu0
    %v5548 = vadd.f32 0.0, %v5547
    %v5549 = vpop.f32.mrb[0].mxu0
    %5550 = vdwg.mxu0
    %vm5551 = vcmask 146432
    %5552 = vst.msk [vmem:[#allocation7] sm:$0xff] %vm5551, %v5548
    %v5553 = vld [vmem:[#allocation7] sm:$0x1]
    %v5554 = vld [vmem:[%s16] sm:$0xff]
    %v5555 = vld [vmem:[%s16 + $0x8] sm:$0x1]
    %v5556 = vld [vmem:[#allocation7 + $0x1] sm:$0x1]
    %s5557 = scalar_lea.vmem %s16, 16
    %v5558 = vld [vmem:[%s5557] sm:$0xff]
    %v5559 = vld [vmem:[%s5557 + $0x8] sm:$0x1]
    %vm5560 = vcmask 72704
    %v5562 = vsel %vm5560, %v5556, 0
    %vm5564 = vcmask 1040384
    %v5566 = vsel %vm5564, %v5559, 0
    %5568 = vmatprep.subr.mxu0 0.0
    %5569 = vmatpush1.msra.mxu0 %v5558
    %5570 = vmatprep.subr.mxu0 0.0
    %5571 = vmatpush1.msra.mxu0 %v5566
    %5572 = vmatprep.subr.mxu0 0.0
    %5573 = vmatpush1.msra.mxu0 0.0
    %5574 = vmatprep.subr.mxu0 0.0
    %5575 = vmatpush1.msra.mxu0 0.0
    %5576 = vmatprep.subr.mxu0 0.0
    %5577 = vmatpush1.msra.mxu0 0.0
    %5578 = vmatprep.subr.mxu0 0.0
    %5579 = vmatpush1.msra.mxu0 0.0
    %5580 = vmatprep.subr.mxu0 0.0
    %5581 = vmatpush1.msra.mxu0 0.0
    %5582 = vmatprep.subr.mxu0 0.0
    %5583 = vmatpush1.msra.mxu0 0.0
    %5584 = vmatprep.subr.mxu0 0.0
    %5585 = vmatpush1.msra.mxu0 0.0
    %5586 = vmatprep.subr.mxu0 0.0
    %5587 = vmatpush1.msra.mxu0 0.0
    %5588 = vmatprep.subr.mxu0 0.0
    %5589 = vmatpush1.msra.mxu0 0.0
    %5590 = vmatprep.subr.mxu0 0.0
    %5591 = vmatpush1.msra.mxu0 0.0
    %5592 = vmatprep.subr.mxu0 0.0
    %5593 = vmatpush1.msra.mxu0 0.0
    %5594 = vmatprep.subr.mxu0 0.0
    %5595 = vmatpush1.msra.mxu0 0.0
    %5596 = vmatprep.subr.mxu0 0.0
    %5597 = vmatpush1.msra.mxu0 0.0
    %5598 = vmatprep.subr.mxu0 0.0
    %5599 = vmatpush1.msra.mxu0 0.0
    %5600 = vmatprep.subr.mxu0 0.0
    %5601 = vmatpush1.msra.mxu0 0.0
    %5602 = vmatprep.subr.mxu0 0.0
    %5603 = vmatpush1.msra.mxu0 0.0
    %5604 = vmatprep.subr.mxu0 0.0
    %5605 = vmatpush1.msra.mxu0 0.0
    %5606 = vmatprep.subr.mxu0 0.0
    %5607 = vmatpush1.msra.mxu0 0.0
    %5608 = vmatprep.subr.mxu0 0.0
    %5609 = vmatpush1.msra.mxu0 0.0
    %5610 = vmatprep.subr.mxu0 0.0
    %5611 = vmatpush1.msra.mxu0 0.0
    %5612 = vmatprep.subr.mxu0 0.0
    %5613 = vmatpush1.msra.mxu0 0.0
    %5614 = vmatprep.subr.mxu0 0.0
    %5615 = vmatpush1.msra.mxu0 0.0
    %5616 = vmatprep.subr.mxu0 0.0
    %5617 = vmatpush1.msra.mxu0 0.0
    %5618 = vmatprep.subr.mxu0 0.0
    %5619 = vmatpush1.msra.mxu0 0.0
    %5620 = vmatprep.subr.mxu0 0.0
    %5621 = vmatpush1.msra.mxu0 0.0
    %5622 = vmatprep.subr.mxu0 0.0
    %5623 = vmatpush1.msra.mxu0 0.0
    %5624 = vmatprep.subr.mxu0 0.0
    %5625 = vmatpush1.msra.mxu0 0.0
    %5626 = vmatprep.subr.mxu0 0.0
    %5627 = vmatpush1.msra.mxu0 0.0
    %5628 = vmatprep.subr.mxu0 0.0
    %5629 = vmatpush1.msra.mxu0 0.0
    %5630 = vmatprep.subr.mxu0 0.0
    %5631 = vmatpush1.msra.mxu0 0.0
    %5632 = vmatprep.mubr.f32.mxu0 0.0
    %5633 = vmatmul.mubr.f32.gmra.mrb[0].mxu0 %v5562
    %v5634 = vpop.f32.mrb[0].mxu0
    %v5635 = vadd.f32 0.0, %v5634
    %v5636 = vpop.f32.mrb[0].mxu0
    %5637 = vdwg.mxu0
    %v5639 = vsel %vm5560, %v5553, 0
    %v5642 = vsel %vm5564, %v5555, 0
    %5644 = vmatprep.subr.mxu0 0.0
    %5645 = vmatpush1.msra.mxu0 %v5554
    %5646 = vmatprep.subr.mxu0 0.0
    %5647 = vmatpush1.msra.mxu0 %v5642
    %5648 = vmatprep.subr.mxu0 0.0
    %5649 = vmatpush1.msra.mxu0 0.0
    %5650 = vmatprep.subr.mxu0 0.0
    %5651 = vmatpush1.msra.mxu0 0.0
    %5652 = vmatprep.subr.mxu0 0.0
    %5653 = vmatpush1.msra.mxu0 0.0
    %5654 = vmatprep.subr.mxu0 0.0
    %5655 = vmatpush1.msra.mxu0 0.0
    %5656 = vmatprep.subr.mxu0 0.0
    %5657 = vmatpush1.msra.mxu0 0.0
    %5658 = vmatprep.subr.mxu0 0.0
    %5659 = vmatpush1.msra.mxu0 0.0
    %5660 = vmatprep.subr.mxu0 0.0
    %5661 = vmatpush1.msra.mxu0 0.0
    %5662 = vmatprep.subr.mxu0 0.0
    %5663 = vmatpush1.msra.mxu0 0.0
    %5664 = vmatprep.subr.mxu0 0.0
    %5665 = vmatpush1.msra.mxu0 0.0
    %5666 = vmatprep.subr.mxu0 0.0
    %5667 = vmatpush1.msra.mxu0 0.0
    %5668 = vmatprep.subr.mxu0 0.0
    %5669 = vmatpush1.msra.mxu0 0.0
    %5670 = vmatprep.subr.mxu0 0.0
    %5671 = vmatpush1.msra.mxu0 0.0
    %5672 = vmatprep.subr.mxu0 0.0
    %5673 = vmatpush1.msra.mxu0 0.0
    %5674 = vmatprep.subr.mxu0 0.0
    %5675 = vmatpush1.msra.mxu0 0.0
    %5676 = vmatprep.subr.mxu0 0.0
    %5677 = vmatpush1.msra.mxu0 0.0
    %5678 = vmatprep.subr.mxu0 0.0
    %5679 = vmatpush1.msra.mxu0 0.0
    %5680 = vmatprep.subr.mxu0 0.0
    %5681 = vmatpush1.msra.mxu0 0.0
    %5682 = vmatprep.subr.mxu0 0.0
    %5683 = vmatpush1.msra.mxu0 0.0
    %5684 = vmatprep.subr.mxu0 0.0
    %5685 = vmatpush1.msra.mxu0 0.0
    %5686 = vmatprep.subr.mxu0 0.0
    %5687 = vmatpush1.msra.mxu0 0.0
    %5688 = vmatprep.subr.mxu0 0.0
    %5689 = vmatpush1.msra.mxu0 0.0
    %5690 = vmatprep.subr.mxu0 0.0
    %5691 = vmatpush1.msra.mxu0 0.0
    %5692 = vmatprep.subr.mxu0 0.0
    %5693 = vmatpush1.msra.mxu0 0.0
    %5694 = vmatprep.subr.mxu0 0.0
    %5695 = vmatpush1.msra.mxu0 0.0
    %5696 = vmatprep.subr.mxu0 0.0
    %5697 = vmatpush1.msra.mxu0 0.0
    %5698 = vmatprep.subr.mxu0 0.0
    %5699 = vmatpush1.msra.mxu0 0.0
    %5700 = vmatprep.subr.mxu0 0.0
    %5701 = vmatpush1.msra.mxu0 0.0
    %5702 = vmatprep.subr.mxu0 0.0
    %5703 = vmatpush1.msra.mxu0 0.0
    %5704 = vmatprep.subr.mxu0 0.0
    %5705 = vmatpush1.msra.mxu0 0.0
    %5706 = vmatprep.subr.mxu0 0.0
    %5707 = vmatpush1.msra.mxu0 0.0
    %5708 = vmatprep.mubr.f32.mxu0 0.0
    %5709 = vmatmul.mubr.f32.gmra.mrb[0].mxu0 %v5639
    %v5710 = vpop.f32.mrb[0].mxu0
    %v5711 = vadd.f32 %v5635, %v5710
    %v5712 = vpop.f32.mrb[0].mxu0
    %5713 = vdwg.mxu0
    %v5714 = vld [vmem:[#allocation7 + $0x2] sm:$0x1]
    %s5715 = scalar_lea.vmem %s16, 32
    %v5716 = vld [vmem:[%s5715] sm:$0xff]
    %v5717 = vld [vmem:[%s5715 + $0x8] sm:$0x1]
    %v5719 = vsel %vm5560, %v5714, 0
    %v5722 = vsel %vm5564, %v5717, 0
    %5724 = vmatprep.subr.mxu0 0.0
    %5725 = vmatpush1.msra.mxu0 %v5716
    %5726 = vmatprep.subr.mxu0 0.0
    %5727 = vmatpush1.msra.mxu0 %v5722
    %5728 = vmatprep.subr.mxu0 0.0
    %5729 = vmatpush1.msra.mxu0 0.0
    %5730 = vmatprep.subr.mxu0 0.0
    %5731 = vmatpush1.msra.mxu0 0.0
    %5732 = vmatprep.subr.mxu0 0.0
    %5733 = vmatpush1.msra.mxu0 0.0
    %5734 = vmatprep.subr.mxu0 0.0
    %5735 = vmatpush1.msra.mxu0 0.0
    %5736 = vmatprep.subr.mxu0 0.0
    %5737 = vmatpush1.msra.mxu0 0.0
    %5738 = vmatprep.subr.mxu0 0.0
    %5739 = vmatpush1.msra.mxu0 0.0
    %5740 = vmatprep.subr.mxu0 0.0
    %5741 = vmatpush1.msra.mxu0 0.0
    %5742 = vmatprep.subr.mxu0 0.0
    %5743 = vmatpush1.msra.mxu0 0.0
    %5744 = vmatprep.subr.mxu0 0.0
    %5745 = vmatpush1.msra.mxu0 0.0
    %5746 = vmatprep.subr.mxu0 0.0
    %5747 = vmatpush1.msra.mxu0 0.0
    %5748 = vmatprep.subr.mxu0 0.0
    %5749 = vmatpush1.msra.mxu0 0.0
    %5750 = vmatprep.subr.mxu0 0.0
    %5751 = vmatpush1.msra.mxu0 0.0
    %5752 = vmatprep.subr.mxu0 0.0
    %5753 = vmatpush1.msra.mxu0 0.0
    %5754 = vmatprep.subr.mxu0 0.0
    %5755 = vmatpush1.msra.mxu0 0.0
    %5756 = vmatprep.subr.mxu0 0.0
    %5757 = vmatpush1.msra.mxu0 0.0
    %5758 = vmatprep.subr.mxu0 0.0
    %5759 = vmatpush1.msra.mxu0 0.0
    %5760 = vmatprep.subr.mxu0 0.0
    %5761 = vmatpush1.msra.mxu0 0.0
    %5762 = vmatprep.subr.mxu0 0.0
    %5763 = vmatpush1.msra.mxu0 0.0
    %5764 = vmatprep.subr.mxu0 0.0
    %5765 = vmatpush1.msra.mxu0 0.0
    %5766 = vmatprep.subr.mxu0 0.0
    %5767 = vmatpush1.msra.mxu0 0.0
    %5768 = vmatprep.subr.mxu0 0.0
    %5769 = vmatpush1.msra.mxu0 0.0
    %5770 = vmatprep.subr.mxu0 0.0
    %5771 = vmatpush1.msra.mxu0 0.0
    %5772 = vmatprep.subr.mxu0 0.0
    %5773 = vmatpush1.msra.mxu0 0.0
    %5774 = vmatprep.subr.mxu0 0.0
    %5775 = vmatpush1.msra.mxu0 0.0
    %5776 = vmatprep.subr.mxu0 0.0
    %5777 = vmatpush1.msra.mxu0 0.0
    %5778 = vmatprep.subr.mxu0 0.0
    %5779 = vmatpush1.msra.mxu0 0.0
    %5780 = vmatprep.subr.mxu0 0.0
    %5781 = vmatpush1.msra.mxu0 0.0
    %5782 = vmatprep.subr.mxu0 0.0
    %5783 = vmatpush1.msra.mxu0 0.0
    %5784 = vmatprep.subr.mxu0 0.0
    %5785 = vmatpush1.msra.mxu0 0.0
    %5786 = vmatprep.subr.mxu0 0.0
    %5787 = vmatpush1.msra.mxu0 0.0
    %5788 = vmatprep.mubr.f32.mxu0 0.0
    %5789 = vmatmul.mubr.f32.gmra.mrb[0].mxu0 %v5719
    %v5790 = vpop.f32.mrb[0].mxu0
    %v5791 = vadd.f32 0.0, %v5790
    %v5792 = vpop.f32.mrb[0].mxu0
    %5793 = vdwg.mxu0
    %v5794 = vadd.f32 %v5711, %v5791
    %v5795 = vld [vmem:[#allocation7 + $0x3] sm:$0x1]
    %s5796 = scalar_lea.vmem %s16, 48
    %v5797 = vld [vmem:[%s5796] sm:$0xff]
    %v5798 = vld [vmem:[%s5796 + $0x8] sm:$0x1]
    %v5800 = vsel %vm5560, %v5795, 0
    %v5803 = vsel %vm5564, %v5798, 0
    %5805 = vmatprep.subr.mxu0 0.0
    %5806 = vmatpush1.msra.mxu0 %v5797
    %5807 = vmatprep.subr.mxu0 0.0
    %5808 = vmatpush1.msra.mxu0 %v5803
    %5809 = vmatprep.subr.mxu0 0.0
    %5810 = vmatpush1.msra.mxu0 0.0
    %5811 = vmatprep.subr.mxu0 0.0
    %5812 = vmatpush1.msra.mxu0 0.0
    %5813 = vmatprep.subr.mxu0 0.0
    %5814 = vmatpush1.msra.mxu0 0.0
    %5815 = vmatprep.subr.mxu0 0.0
    %5816 = vmatpush1.msra.mxu0 0.0
    %5817 = vmatprep.subr.mxu0 0.0
    %5818 = vmatpush1.msra.mxu0 0.0
    %5819 = vmatprep.subr.mxu0 0.0
    %5820 = vmatpush1.msra.mxu0 0.0
    %5821 = vmatprep.subr.mxu0 0.0
    %5822 = vmatpush1.msra.mxu0 0.0
    %5823 = vmatprep.subr.mxu0 0.0
    %5824 = vmatpush1.msra.mxu0 0.0
    %5825 = vmatprep.subr.mxu0 0.0
    %5826 = vmatpush1.msra.mxu0 0.0
    %5827 = vmatprep.subr.mxu0 0.0
    %5828 = vmatpush1.msra.mxu0 0.0
    %5829 = vmatprep.subr.mxu0 0.0
    %5830 = vmatpush1.msra.mxu0 0.0
    %5831 = vmatprep.subr.mxu0 0.0
    %5832 = vmatpush1.msra.mxu0 0.0
    %5833 = vmatprep.subr.mxu0 0.0
    %5834 = vmatpush1.msra.mxu0 0.0
    %5835 = vmatprep.subr.mxu0 0.0
    %5836 = vmatpush1.msra.mxu0 0.0
    %5837 = vmatprep.subr.mxu0 0.0
    %5838 = vmatpush1.msra.mxu0 0.0
    %5839 = vmatprep.subr.mxu0 0.0
    %5840 = vmatpush1.msra.mxu0 0.0
    %5841 = vmatprep.subr.mxu0 0.0
    %5842 = vmatpush1.msra.mxu0 0.0
    %5843 = vmatprep.subr.mxu0 0.0
    %5844 = vmatpush1.msra.mxu0 0.0
    %5845 = vmatprep.subr.mxu0 0.0
    %5846 = vmatpush1.msra.mxu0 0.0
    %5847 = vmatprep.subr.mxu0 0.0
    %5848 = vmatpush1.msra.mxu0 0.0
    %5849 = vmatprep.subr.mxu0 0.0
    %5850 = vmatpush1.msra.mxu0 0.0
    %5851 = vmatprep.subr.mxu0 0.0
    %5852 = vmatpush1.msra.mxu0 0.0
    %5853 = vmatprep.subr.mxu0 0.0
    %5854 = vmatpush1.msra.mxu0 0.0
    %5855 = vmatprep.subr.mxu0 0.0
    %5856 = vmatpush1.msra.mxu0 0.0
    %5857 = vmatprep.subr.mxu0 0.0
    %5858 = vmatpush1.msra.mxu0 0.0
    %5859 = vmatprep.subr.mxu0 0.0
    %5860 = vmatpush1.msra.mxu0 0.0
    %5861 = vmatprep.subr.mxu0 0.0
    %5862 = vmatpush1.msra.mxu0 0.0
    %5863 = vmatprep.subr.mxu0 0.0
    %5864 = vmatpush1.msra.mxu0 0.0
    %5865 = vmatprep.subr.mxu0 0.0
    %5866 = vmatpush1.msra.mxu0 0.0
    %5867 = vmatprep.subr.mxu0 0.0
    %5868 = vmatpush1.msra.mxu0 0.0
    %5869 = vmatprep.mubr.f32.mxu0 0.0
    %5870 = vmatmul.mubr.f32.gmra.mrb[0].mxu0 %v5800
    %v5871 = vpop.f32.mrb[0].mxu0
    %v5872 = vadd.f32 0.0, %v5871
    %v5873 = vpop.f32.mrb[0].mxu0
    %5874 = vdwg.mxu0
    %v5875 = vadd.f32 %v5794, %v5872
    %v5876 = vld [vmem:[#allocation7 + $0x4] sm:$0x1]
    %s5877 = scalar_lea.vmem %s16, 64
    %v5878 = vld [vmem:[%s5877] sm:$0xff]
    %v5879 = vld [vmem:[%s5877 + $0x8] sm:$0x1]
    %v5881 = vsel %vm5560, %v5876, 0
    %v5884 = vsel %vm5564, %v5879, 0
    %5886 = vmatprep.subr.mxu0 0.0
    %5887 = vmatpush1.msra.mxu0 %v5878
    %5888 = vmatprep.subr.mxu0 0.0
    %5889 = vmatpush1.msra.mxu0 %v5884
    %5890 = vmatprep.subr.mxu0 0.0
    %5891 = vmatpush1.msra.mxu0 0.0
    %5892 = vmatprep.subr.mxu0 0.0
    %5893 = vmatpush1.msra.mxu0 0.0
    %5894 = vmatprep.subr.mxu0 0.0
    %5895 = vmatpush1.msra.mxu0 0.0
    %5896 = vmatprep.subr.mxu0 0.0
    %5897 = vmatpush1.msra.mxu0 0.0
    %5898 = vmatprep.subr.mxu0 0.0
    %5899 = vmatpush1.msra.mxu0 0.0
    %5900 = vmatprep.subr.mxu0 0.0
    %5901 = vmatpush1.msra.mxu0 0.0
    %5902 = vmatprep.subr.mxu0 0.0
    %5903 = vmatpush1.msra.mxu0 0.0
    %5904 = vmatprep.subr.mxu0 0.0
    %5905 = vmatpush1.msra.mxu0 0.0
    %5906 = vmatprep.subr.mxu0 0.0
    %5907 = vmatpush1.msra.mxu0 0.0
    %5908 = vmatprep.subr.mxu0 0.0
    %5909 = vmatpush1.msra.mxu0 0.0
    %5910 = vmatprep.subr.mxu0 0.0
    %5911 = vmatpush1.msra.mxu0 0.0
    %5912 = vmatprep.subr.mxu0 0.0
    %5913 = vmatpush1.msra.mxu0 0.0
    %5914 = vmatprep.subr.mxu0 0.0
    %5915 = vmatpush1.msra.mxu0 0.0
    %5916 = vmatprep.subr.mxu0 0.0
    %5917 = vmatpush1.msra.mxu0 0.0
    %5918 = vmatprep.subr.mxu0 0.0
    %5919 = vmatpush1.msra.mxu0 0.0
    %5920 = vmatprep.subr.mxu0 0.0
    %5921 = vmatpush1.msra.mxu0 0.0
    %5922 = vmatprep.subr.mxu0 0.0
    %5923 = vmatpush1.msra.mxu0 0.0
    %5924 = vmatprep.subr.mxu0 0.0
    %5925 = vmatpush1.msra.mxu0 0.0
    %5926 = vmatprep.subr.mxu0 0.0
    %5927 = vmatpush1.msra.mxu0 0.0
    %5928 = vmatprep.subr.mxu0 0.0
    %5929 = vmatpush1.msra.mxu0 0.0
    %5930 = vmatprep.subr.mxu0 0.0
    %5931 = vmatpush1.msra.mxu0 0.0
    %5932 = vmatprep.subr.mxu0 0.0
    %5933 = vmatpush1.msra.mxu0 0.0
    %5934 = vmatprep.subr.mxu0 0.0
    %5935 = vmatpush1.msra.mxu0 0.0
    %5936 = vmatprep.subr.mxu0 0.0
    %5937 = vmatpush1.msra.mxu0 0.0
    %5938 = vmatprep.subr.mxu0 0.0
    %5939 = vmatpush1.msra.mxu0 0.0
    %5940 = vmatprep.subr.mxu0 0.0
    %5941 = vmatpush1.msra.mxu0 0.0
    %5942 = vmatprep.subr.mxu0 0.0
    %5943 = vmatpush1.msra.mxu0 0.0
    %5944 = vmatprep.subr.mxu0 0.0
    %5945 = vmatpush1.msra.mxu0 0.0
    %5946 = vmatprep.subr.mxu0 0.0
    %5947 = vmatpush1.msra.mxu0 0.0
    %5948 = vmatprep.subr.mxu0 0.0
    %5949 = vmatpush1.msra.mxu0 0.0
    %5950 = vmatprep.mubr.f32.mxu0 0.0
    %5951 = vmatmul.mubr.f32.gmra.mrb[0].mxu0 %v5881
    %v5952 = vpop.f32.mrb[0].mxu0
    %v5953 = vadd.f32 0.0, %v5952
    %v5954 = vpop.f32.mrb[0].mxu0
    %5955 = vdwg.mxu0
    %v5956 = vadd.f32 %v5875, %v5953
    %v5957 = vld [vmem:[#allocation7 + $0x5] sm:$0x1]
    %s5958 = scalar_lea.vmem %s16, 80
    %v5959 = vld [vmem:[%s5958] sm:$0xff]
    %v5960 = vld [vmem:[%s5958 + $0x8] sm:$0x1]
    %v5962 = vsel %vm5560, %v5957, 0
    %v5965 = vsel %vm5564, %v5960, 0
    %5967 = vmatprep.subr.mxu0 0.0
    %5968 = vmatpush1.msra.mxu0 %v5959
    %5969 = vmatprep.subr.mxu0 0.0
    %5970 = vmatpush1.msra.mxu0 %v5965
    %5971 = vmatprep.subr.mxu0 0.0
    %5972 = vmatpush1.msra.mxu0 0.0
    %5973 = vmatprep.subr.mxu0 0.0
    %5974 = vmatpush1.msra.mxu0 0.0
    %5975 = vmatprep.subr.mxu0 0.0
    %5976 = vmatpush1.msra.mxu0 0.0
    %5977 = vmatprep.subr.mxu0 0.0
    %5978 = vmatpush1.msra.mxu0 0.0
    %5979 = vmatprep.subr.mxu0 0.0
    %5980 = vmatpush1.msra.mxu0 0.0
    %5981 = vmatprep.subr.mxu0 0.0
    %5982 = vmatpush1.msra.mxu0 0.0
    %5983 = vmatprep.subr.mxu0 0.0
    %5984 = vmatpush1.msra.mxu0 0.0
    %5985 = vmatprep.subr.mxu0 0.0
    %5986 = vmatpush1.msra.mxu0 0.0
    %5987 = vmatprep.subr.mxu0 0.0
    %5988 = vmatpush1.msra.mxu0 0.0
    %5989 = vmatprep.subr.mxu0 0.0
    %5990 = vmatpush1.msra.mxu0 0.0
    %5991 = vmatprep.subr.mxu0 0.0
    %5992 = vmatpush1.msra.mxu0 0.0
    %5993 = vmatprep.subr.mxu0 0.0
    %5994 = vmatpush1.msra.mxu0 0.0
    %5995 = vmatprep.subr.mxu0 0.0
    %5996 = vmatpush1.msra.mxu0 0.0
    %5997 = vmatprep.subr.mxu0 0.0
    %5998 = vmatpush1.msra.mxu0 0.0
    %5999 = vmatprep.subr.mxu0 0.0
    %6000 = vmatpush1.msra.mxu0 0.0
    %6001 = vmatprep.subr.mxu0 0.0
    %6002 = vmatpush1.msra.mxu0 0.0
    %6003 = vmatprep.subr.mxu0 0.0
    %6004 = vmatpush1.msra.mxu0 0.0
    %6005 = vmatprep.subr.mxu0 0.0
    %6006 = vmatpush1.msra.mxu0 0.0
    %6007 = vmatprep.subr.mxu0 0.0
    %6008 = vmatpush1.msra.mxu0 0.0
    %6009 = vmatprep.subr.mxu0 0.0
    %6010 = vmatpush1.msra.mxu0 0.0
    %6011 = vmatprep.subr.mxu0 0.0
    %6012 = vmatpush1.msra.mxu0 0.0
    %6013 = vmatprep.subr.mxu0 0.0
    %6014 = vmatpush1.msra.mxu0 0.0
    %6015 = vmatprep.subr.mxu0 0.0
    %6016 = vmatpush1.msra.mxu0 0.0
    %6017 = vmatprep.subr.mxu0 0.0
    %6018 = vmatpush1.msra.mxu0 0.0
    %6019 = vmatprep.subr.mxu0 0.0
    %6020 = vmatpush1.msra.mxu0 0.0
    %6021 = vmatprep.subr.mxu0 0.0
    %6022 = vmatpush1.msra.mxu0 0.0
    %6023 = vmatprep.subr.mxu0 0.0
    %6024 = vmatpush1.msra.mxu0 0.0
    %6025 = vmatprep.subr.mxu0 0.0
    %6026 = vmatpush1.msra.mxu0 0.0
    %6027 = vmatprep.subr.mxu0 0.0
    %6028 = vmatpush1.msra.mxu0 0.0
    %6029 = vmatprep.subr.mxu0 0.0
    %6030 = vmatpush1.msra.mxu0 0.0
    %6031 = vmatprep.mubr.f32.mxu0 0.0
    %6032 = vmatmul.mubr.f32.gmra.mrb[0].mxu0 %v5962
    %v6033 = vpop.f32.mrb[0].mxu0
    %v6034 = vadd.f32 0.0, %v6033
    %v6035 = vpop.f32.mrb[0].mxu0
    %6036 = vdwg.mxu0
    %v6037 = vadd.f32 %v5956, %v6034
    %v6038 = vld [vmem:[#allocation7 + $0x6] sm:$0x1]
    %s6039 = scalar_lea.vmem %s16, 96
    %v6040 = vld [vmem:[%s6039] sm:$0xff]
    %v6041 = vld [vmem:[%s6039 + $0x8] sm:$0x1]
    %v6043 = vsel %vm5560, %v6038, 0
    %v6046 = vsel %vm5564, %v6041, 0
    %6048 = vmatprep.subr.mxu0 0.0
    %6049 = vmatpush1.msra.mxu0 %v6040
    %6050 = vmatprep.subr.mxu0 0.0
    %6051 = vmatpush1.msra.mxu0 %v6046
    %6052 = vmatprep.subr.mxu0 0.0
    %6053 = vmatpush1.msra.mxu0 0.0
    %6054 = vmatprep.subr.mxu0 0.0
    %6055 = vmatpush1.msra.mxu0 0.0
    %6056 = vmatprep.subr.mxu0 0.0
    %6057 = vmatpush1.msra.mxu0 0.0
    %6058 = vmatprep.subr.mxu0 0.0
    %6059 = vmatpush1.msra.mxu0 0.0
    %6060 = vmatprep.subr.mxu0 0.0
    %6061 = vmatpush1.msra.mxu0 0.0
    %6062 = vmatprep.subr.mxu0 0.0
    %6063 = vmatpush1.msra.mxu0 0.0
    %6064 = vmatprep.subr.mxu0 0.0
    %6065 = vmatpush1.msra.mxu0 0.0
    %6066 = vmatprep.subr.mxu0 0.0
    %6067 = vmatpush1.msra.mxu0 0.0
    %6068 = vmatprep.subr.mxu0 0.0
    %6069 = vmatpush1.msra.mxu0 0.0
    %6070 = vmatprep.subr.mxu0 0.0
    %6071 = vmatpush1.msra.mxu0 0.0
    %6072 = vmatprep.subr.mxu0 0.0
    %6073 = vmatpush1.msra.mxu0 0.0
    %6074 = vmatprep.subr.mxu0 0.0
    %6075 = vmatpush1.msra.mxu0 0.0
    %6076 = vmatprep.subr.mxu0 0.0
    %6077 = vmatpush1.msra.mxu0 0.0
    %6078 = vmatprep.subr.mxu0 0.0
    %6079 = vmatpush1.msra.mxu0 0.0
    %6080 = vmatprep.subr.mxu0 0.0
    %6081 = vmatpush1.msra.mxu0 0.0
    %6082 = vmatprep.subr.mxu0 0.0
    %6083 = vmatpush1.msra.mxu0 0.0
    %6084 = vmatprep.subr.mxu0 0.0
    %6085 = vmatpush1.msra.mxu0 0.0
    %6086 = vmatprep.subr.mxu0 0.0
    %6087 = vmatpush1.msra.mxu0 0.0
    %6088 = vmatprep.subr.mxu0 0.0
    %6089 = vmatpush1.msra.mxu0 0.0
    %6090 = vmatprep.subr.mxu0 0.0
    %6091 = vmatpush1.msra.mxu0 0.0
    %6092 = vmatprep.subr.mxu0 0.0
    %6093 = vmatpush1.msra.mxu0 0.0
    %6094 = vmatprep.subr.mxu0 0.0
    %6095 = vmatpush1.msra.mxu0 0.0
    %6096 = vmatprep.subr.mxu0 0.0
    %6097 = vmatpush1.msra.mxu0 0.0
    %6098 = vmatprep.subr.mxu0 0.0
    %6099 = vmatpush1.msra.mxu0 0.0
    %6100 = vmatprep.subr.mxu0 0.0
    %6101 = vmatpush1.msra.mxu0 0.0
    %6102 = vmatprep.subr.mxu0 0.0
    %6103 = vmatpush1.msra.mxu0 0.0
    %6104 = vmatprep.subr.mxu0 0.0
    %6105 = vmatpush1.msra.mxu0 0.0
    %6106 = vmatprep.subr.mxu0 0.0
    %6107 = vmatpush1.msra.mxu0 0.0
    %6108 = vmatprep.subr.mxu0 0.0
    %6109 = vmatpush1.msra.mxu0 0.0
    %6110 = vmatprep.subr.mxu0 0.0
    %6111 = vmatpush1.msra.mxu0 0.0
    %6112 = vmatprep.mubr.f32.mxu0 0.0
    %6113 = vmatmul.mubr.f32.gmra.mrb[0].mxu0 %v6043
    %v6114 = vpop.f32.mrb[0].mxu0
    %v6115 = vadd.f32 0.0, %v6114
    %v6116 = vpop.f32.mrb[0].mxu0
    %6117 = vdwg.mxu0
    %v6118 = vadd.f32 %v6037, %v6115
    %v6119 = vld [vmem:[#allocation7 + $0x7] sm:$0x1]
    %s6120 = scalar_lea.vmem %s16, 112
    %v6121 = vld [vmem:[%s6120] sm:$0xff]
    %v6122 = vld [vmem:[%s6120 + $0x8] sm:$0x1]
    %v6124 = vsel %vm5560, %v6119, 0
    %v6127 = vsel %vm5564, %v6122, 0
    %6129 = vmatprep.subr.mxu0 0.0
    %6130 = vmatpush1.msra.mxu0 %v6121
    %6131 = vmatprep.subr.mxu0 0.0
    %6132 = vmatpush1.msra.mxu0 %v6127
    %6133 = vmatprep.subr.mxu0 0.0
    %6134 = vmatpush1.msra.mxu0 0.0
    %6135 = vmatprep.subr.mxu0 0.0
    %6136 = vmatpush1.msra.mxu0 0.0
    %6137 = vmatprep.subr.mxu0 0.0
    %6138 = vmatpush1.msra.mxu0 0.0
    %6139 = vmatprep.subr.mxu0 0.0
    %6140 = vmatpush1.msra.mxu0 0.0
    %6141 = vmatprep.subr.mxu0 0.0
    %6142 = vmatpush1.msra.mxu0 0.0
    %6143 = vmatprep.subr.mxu0 0.0
    %6144 = vmatpush1.msra.mxu0 0.0
    %6145 = vmatprep.subr.mxu0 0.0
    %6146 = vmatpush1.msra.mxu0 0.0
    %6147 = vmatprep.subr.mxu0 0.0
    %6148 = vmatpush1.msra.mxu0 0.0
    %6149 = vmatprep.subr.mxu0 0.0
    %6150 = vmatpush1.msra.mxu0 0.0
    %6151 = vmatprep.subr.mxu0 0.0
    %6152 = vmatpush1.msra.mxu0 0.0
    %6153 = vmatprep.subr.mxu0 0.0
    %6154 = vmatpush1.msra.mxu0 0.0
    %6155 = vmatprep.subr.mxu0 0.0
    %6156 = vmatpush1.msra.mxu0 0.0
    %6157 = vmatprep.subr.mxu0 0.0
    %6158 = vmatpush1.msra.mxu0 0.0
    %6159 = vmatprep.subr.mxu0 0.0
    %6160 = vmatpush1.msra.mxu0 0.0
    %6161 = vmatprep.subr.mxu0 0.0
    %6162 = vmatpush1.msra.mxu0 0.0
    %6163 = vmatprep.subr.mxu0 0.0
    %6164 = vmatpush1.msra.mxu0 0.0
    %6165 = vmatprep.subr.mxu0 0.0
    %6166 = vmatpush1.msra.mxu0 0.0
    %6167 = vmatprep.subr.mxu0 0.0
    %6168 = vmatpush1.msra.mxu0 0.0
    %6169 = vmatprep.subr.mxu0 0.0
    %6170 = vmatpush1.msra.mxu0 0.0
    %6171 = vmatprep.subr.mxu0 0.0
    %6172 = vmatpush1.msra.mxu0 0.0
    %6173 = vmatprep.subr.mxu0 0.0
    %6174 = vmatpush1.msra.mxu0 0.0
    %6175 = vmatprep.subr.mxu0 0.0
    %6176 = vmatpush1.msra.mxu0 0.0
    %6177 = vmatprep.subr.mxu0 0.0
    %6178 = vmatpush1.msra.mxu0 0.0
    %6179 = vmatprep.subr.mxu0 0.0
    %6180 = vmatpush1.msra.mxu0 0.0
    %6181 = vmatprep.subr.mxu0 0.0
    %6182 = vmatpush1.msra.mxu0 0.0
    %6183 = vmatprep.subr.mxu0 0.0
    %6184 = vmatpush1.msra.mxu0 0.0
    %6185 = vmatprep.subr.mxu0 0.0
    %6186 = vmatpush1.msra.mxu0 0.0
    %6187 = vmatprep.subr.mxu0 0.0
    %6188 = vmatpush1.msra.mxu0 0.0
    %6189 = vmatprep.subr.mxu0 0.0
    %6190 = vmatpush1.msra.mxu0 0.0
    %6191 = vmatprep.subr.mxu0 0.0
    %6192 = vmatpush1.msra.mxu0 0.0
    %6193 = vmatprep.mubr.f32.mxu0 0.0
    %6194 = vmatmul.mubr.f32.gmra.mrb[0].mxu0 %v6124
    %v6195 = vpop.f32.mrb[0].mxu0
    %v6196 = vadd.f32 0.0, %v6195
    %v6197 = vpop.f32.mrb[0].mxu0
    %6198 = vdwg.mxu0
    %v6199 = vadd.f32 %v6118, %v6196
    %vm6200 = vcmask 253952
    %6201 = vst.msk [vmem:[#allocation8] sm:$0x1] %vm6200, %v6199
    %v6202 = vld [vmem:[#allocation7] sm:$0x1]
    %v6203 = vld [vmem:[%s16] sm:$0xff]
    %v6204 = vld [vmem:[%s16 + $0x8] sm:$0x1]
    %v6205 = vld [vmem:[#allocation7 + $0x1] sm:$0x1]
    %v6206 = vld [vmem:[%s5557] sm:$0xff]
    %v6207 = vld [vmem:[%s5557 + $0x8] sm:$0x1]
    %6209 = vrot.lane.b32.xlu0 %v6205, 119
    %v6210 = vpop.permute.xlu0 %6209
    %v6211 = vsel %vm5560, %v6210, 0
    %v6214 = vsel %vm5564, %v6207, 0
    %6216 = vmatprep.subr.mxu0 0.0
    %6217 = vmatpush1.msra.mxu0 %v6206
    %6218 = vmatprep.subr.mxu0 0.0
    %6219 = vmatpush1.msra.mxu0 %v6214
    %6220 = vmatprep.subr.mxu0 0.0
    %6221 = vmatpush1.msra.mxu0 0.0
    %6222 = vmatprep.subr.mxu0 0.0
    %6223 = vmatpush1.msra.mxu0 0.0
    %6224 = vmatprep.subr.mxu0 0.0
    %6225 = vmatpush1.msra.mxu0 0.0
    %6226 = vmatprep.subr.mxu0 0.0
    %6227 = vmatpush1.msra.mxu0 0.0
    %6228 = vmatprep.subr.mxu0 0.0
    %6229 = vmatpush1.msra.mxu0 0.0
    %6230 = vmatprep.subr.mxu0 0.0
    %6231 = vmatpush1.msra.mxu0 0.0
    %6232 = vmatprep.subr.mxu0 0.0
    %6233 = vmatpush1.msra.mxu0 0.0
    %6234 = vmatprep.subr.mxu0 0.0
    %6235 = vmatpush1.msra.mxu0 0.0
    %6236 = vmatprep.subr.mxu0 0.0
    %6237 = vmatpush1.msra.mxu0 0.0
    %6238 = vmatprep.subr.mxu0 0.0
    %6239 = vmatpush1.msra.mxu0 0.0
    %6240 = vmatprep.subr.mxu0 0.0
    %6241 = vmatpush1.msra.mxu0 0.0
    %6242 = vmatprep.subr.mxu0 0.0
    %6243 = vmatpush1.msra.mxu0 0.0
    %6244 = vmatprep.subr.mxu0 0.0
    %6245 = vmatpush1.msra.mxu0 0.0
    %6246 = vmatprep.subr.mxu0 0.0
    %6247 = vmatpush1.msra.mxu0 0.0
    %6248 = vmatprep.subr.mxu0 0.0
    %6249 = vmatpush1.msra.mxu0 0.0
    %6250 = vmatprep.subr.mxu0 0.0
    %6251 = vmatpush1.msra.mxu0 0.0
    %6252 = vmatprep.subr.mxu0 0.0
    %6253 = vmatpush1.msra.mxu0 0.0
    %6254 = vmatprep.subr.mxu0 0.0
    %6255 = vmatpush1.msra.mxu0 0.0
    %6256 = vmatprep.subr.mxu0 0.0
    %6257 = vmatpush1.msra.mxu0 0.0
    %6258 = vmatprep.subr.mxu0 0.0
    %6259 = vmatpush1.msra.mxu0 0.0
    %6260 = vmatprep.subr.mxu0 0.0
    %6261 = vmatpush1.msra.mxu0 0.0
    %6262 = vmatprep.subr.mxu0 0.0
    %6263 = vmatpush1.msra.mxu0 0.0
    %6264 = vmatprep.subr.mxu0 0.0
    %6265 = vmatpush1.msra.mxu0 0.0
    %6266 = vmatprep.subr.mxu0 0.0
    %6267 = vmatpush1.msra.mxu0 0.0
    %6268 = vmatprep.subr.mxu0 0.0
    %6269 = vmatpush1.msra.mxu0 0.0
    %6270 = vmatprep.subr.mxu0 0.0
    %6271 = vmatpush1.msra.mxu0 0.0
    %6272 = vmatprep.subr.mxu0 0.0
    %6273 = vmatpush1.msra.mxu0 0.0
    %6274 = vmatprep.subr.mxu0 0.0
    %6275 = vmatpush1.msra.mxu0 0.0
    %6276 = vmatprep.subr.mxu0 0.0
    %6277 = vmatpush1.msra.mxu0 0.0
    %6278 = vmatprep.subr.mxu0 0.0
    %6279 = vmatpush1.msra.mxu0 0.0
    %6280 = vmatprep.mubr.f32.mxu0 0.0
    %6281 = vmatmul.mubr.f32.gmra.mrb[0].mxu0 %v6211
    %v6282 = vpop.f32.mrb[0].mxu0
    %v6283 = vadd.f32 0.0, %v6282
    %v6284 = vpop.f32.mrb[0].mxu0
    %6285 = vdwg.mxu0
    %6287 = vrot.lane.b32.xlu0 %v6202, 119
    %v6288 = vpop.permute.xlu0 %6287
    %v6289 = vsel %vm5560, %v6288, 0
    %v6292 = vsel %vm5564, %v6204, 0
    %6294 = vmatprep.subr.mxu0 0.0
    %6295 = vmatpush1.msra.mxu0 %v6203
    %6296 = vmatprep.subr.mxu0 0.0
    %6297 = vmatpush1.msra.mxu0 %v6292
    %6298 = vmatprep.subr.mxu0 0.0
    %6299 = vmatpush1.msra.mxu0 0.0
    %6300 = vmatprep.subr.mxu0 0.0
    %6301 = vmatpush1.msra.mxu0 0.0
    %6302 = vmatprep.subr.mxu0 0.0
    %6303 = vmatpush1.msra.mxu0 0.0
    %6304 = vmatprep.subr.mxu0 0.0
    %6305 = vmatpush1.msra.mxu0 0.0
    %6306 = vmatprep.subr.mxu0 0.0
    %6307 = vmatpush1.msra.mxu0 0.0
    %6308 = vmatprep.subr.mxu0 0.0
    %6309 = vmatpush1.msra.mxu0 0.0
    %6310 = vmatprep.subr.mxu0 0.0
    %6311 = vmatpush1.msra.mxu0 0.0
    %6312 = vmatprep.subr.mxu0 0.0
    %6313 = vmatpush1.msra.mxu0 0.0
    %6314 = vmatprep.subr.mxu0 0.0
    %6315 = vmatpush1.msra.mxu0 0.0
    %6316 = vmatprep.subr.mxu0 0.0
    %6317 = vmatpush1.msra.mxu0 0.0
    %6318 = vmatprep.subr.mxu0 0.0
    %6319 = vmatpush1.msra.mxu0 0.0
    %6320 = vmatprep.subr.mxu0 0.0
    %6321 = vmatpush1.msra.mxu0 0.0
    %6322 = vmatprep.subr.mxu0 0.0
    %6323 = vmatpush1.msra.mxu0 0.0
    %6324 = vmatprep.subr.mxu0 0.0
    %6325 = vmatpush1.msra.mxu0 0.0
    %6326 = vmatprep.subr.mxu0 0.0
    %6327 = vmatpush1.msra.mxu0 0.0
    %6328 = vmatprep.subr.mxu0 0.0
    %6329 = vmatpush1.msra.mxu0 0.0
    %6330 = vmatprep.subr.mxu0 0.0
    %6331 = vmatpush1.msra.mxu0 0.0
    %6332 = vmatprep.subr.mxu0 0.0
    %6333 = vmatpush1.msra.mxu0 0.0
    %6334 = vmatprep.subr.mxu0 0.0
    %6335 = vmatpush1.msra.mxu0 0.0
    %6336 = vmatprep.subr.mxu0 0.0
    %6337 = vmatpush1.msra.mxu0 0.0
    %6338 = vmatprep.subr.mxu0 0.0
    %6339 = vmatpush1.msra.mxu0 0.0
    %6340 = vmatprep.subr.mxu0 0.0
    %6341 = vmatpush1.msra.mxu0 0.0
    %6342 = vmatprep.subr.mxu0 0.0
    %6343 = vmatpush1.msra.mxu0 0.0
    %6344 = vmatprep.subr.mxu0 0.0
    %6345 = vmatpush1.msra.mxu0 0.0
    %6346 = vmatprep.subr.mxu0 0.0
    %6347 = vmatpush1.msra.mxu0 0.0
    %6348 = vmatprep.subr.mxu0 0.0
    %6349 = vmatpush1.msra.mxu0 0.0
    %6350 = vmatprep.subr.mxu0 0.0
    %6351 = vmatpush1.msra.mxu0 0.0
    %6352 = vmatprep.subr.mxu0 0.0
    %6353 = vmatpush1.msra.mxu0 0.0
    %6354 = vmatprep.subr.mxu0 0.0
    %6355 = vmatpush1.msra.mxu0 0.0
    %6356 = vmatprep.subr.mxu0 0.0
    %6357 = vmatpush1.msra.mxu0 0.0
    %6358 = vmatprep.mubr.f32.mxu0 0.0
    %6359 = vmatmul.mubr.f32.gmra.mrb[0].mxu0 %v6289
    %v6360 = vpop.f32.mrb[0].mxu0
    %v6361 = vadd.f32 %v6283, %v6360
    %v6362 = vpop.f32.mrb[0].mxu0
    %6363 = vdwg.mxu0
    %v6364 = vld [vmem:[#allocation7 + $0x2] sm:$0x1]
    %v6365 = vld [vmem:[%s5715] sm:$0xff]
    %v6366 = vld [vmem:[%s5715 + $0x8] sm:$0x1]
    %6368 = vrot.lane.b32.xlu0 %v6364, 119
    %v6369 = vpop.permute.xlu0 %6368
    %v6370 = vsel %vm5560, %v6369, 0
    %v6373 = vsel %vm5564, %v6366, 0
    %6375 = vmatprep.subr.mxu0 0.0
    %6376 = vmatpush1.msra.mxu0 %v6365
    %6377 = vmatprep.subr.mxu0 0.0
    %6378 = vmatpush1.msra.mxu0 %v6373
    %6379 = vmatprep.subr.mxu0 0.0
    %6380 = vmatpush1.msra.mxu0 0.0
    %6381 = vmatprep.subr.mxu0 0.0
    %6382 = vmatpush1.msra.mxu0 0.0
    %6383 = vmatprep.subr.mxu0 0.0
    %6384 = vmatpush1.msra.mxu0 0.0
    %6385 = vmatprep.subr.mxu0 0.0
    %6386 = vmatpush1.msra.mxu0 0.0
    %6387 = vmatprep.subr.mxu0 0.0
    %6388 = vmatpush1.msra.mxu0 0.0
    %6389 = vmatprep.subr.mxu0 0.0
    %6390 = vmatpush1.msra.mxu0 0.0
    %6391 = vmatprep.subr.mxu0 0.0
    %6392 = vmatpush1.msra.mxu0 0.0
    %6393 = vmatprep.subr.mxu0 0.0
    %6394 = vmatpush1.msra.mxu0 0.0
    %6395 = vmatprep.subr.mxu0 0.0
    %6396 = vmatpush1.msra.mxu0 0.0
    %6397 = vmatprep.subr.mxu0 0.0
    %6398 = vmatpush1.msra.mxu0 0.0
    %6399 = vmatprep.subr.mxu0 0.0
    %6400 = vmatpush1.msra.mxu0 0.0
    %6401 = vmatprep.subr.mxu0 0.0
    %6402 = vmatpush1.msra.mxu0 0.0
    %6403 = vmatprep.subr.mxu0 0.0
    %6404 = vmatpush1.msra.mxu0 0.0
    %6405 = vmatprep.subr.mxu0 0.0
    %6406 = vmatpush1.msra.mxu0 0.0
    %6407 = vmatprep.subr.mxu0 0.0
    %6408 = vmatpush1.msra.mxu0 0.0
    %6409 = vmatprep.subr.mxu0 0.0
    %6410 = vmatpush1.msra.mxu0 0.0
    %6411 = vmatprep.subr.mxu0 0.0
    %6412 = vmatpush1.msra.mxu0 0.0
    %6413 = vmatprep.subr.mxu0 0.0
    %6414 = vmatpush1.msra.mxu0 0.0
    %6415 = vmatprep.subr.mxu0 0.0
    %6416 = vmatpush1.msra.mxu0 0.0
    %6417 = vmatprep.subr.mxu0 0.0
    %6418 = vmatpush1.msra.mxu0 0.0
    %6419 = vmatprep.subr.mxu0 0.0
    %6420 = vmatpush1.msra.mxu0 0.0
    %6421 = vmatprep.subr.mxu0 0.0
    %6422 = vmatpush1.msra.mxu0 0.0
    %6423 = vmatprep.subr.mxu0 0.0
    %6424 = vmatpush1.msra.mxu0 0.0
    %6425 = vmatprep.subr.mxu0 0.0
    %6426 = vmatpush1.msra.mxu0 0.0
    %6427 = vmatprep.subr.mxu0 0.0
    %6428 = vmatpush1.msra.mxu0 0.0
    %6429 = vmatprep.subr.mxu0 0.0
    %6430 = vmatpush1.msra.mxu0 0.0
    %6431 = vmatprep.subr.mxu0 0.0
    %6432 = vmatpush1.msra.mxu0 0.0
    %6433 = vmatprep.subr.mxu0 0.0
    %6434 = vmatpush1.msra.mxu0 0.0
    %6435 = vmatprep.subr.mxu0 0.0
    %6436 = vmatpush1.msra.mxu0 0.0
    %6437 = vmatprep.subr.mxu0 0.0
    %6438 = vmatpush1.msra.mxu0 0.0
    %6439 = vmatprep.mubr.f32.mxu0 0.0
    %6440 = vmatmul.mubr.f32.gmra.mrb[0].mxu0 %v6370
    %v6441 = vpop.f32.mrb[0].mxu0
    %v6442 = vadd.f32 0.0, %v6441
    %v6443 = vpop.f32.mrb[0].mxu0
    %6444 = vdwg.mxu0
    %v6445 = vadd.f32 %v6361, %v6442
    %v6446 = vld [vmem:[#allocation7 + $0x3] sm:$0x1]
    %v6447 = vld [vmem:[%s5796] sm:$0xff]
    %v6448 = vld [vmem:[%s5796 + $0x8] sm:$0x1]
    %6450 = vrot.lane.b32.xlu0 %v6446, 119
    %v6451 = vpop.permute.xlu0 %6450
    %v6452 = vsel %vm5560, %v6451, 0
    %v6455 = vsel %vm5564, %v6448, 0
    %6457 = vmatprep.subr.mxu0 0.0
    %6458 = vmatpush1.msra.mxu0 %v6447
    %6459 = vmatprep.subr.mxu0 0.0
    %6460 = vmatpush1.msra.mxu0 %v6455
    %6461 = vmatprep.subr.mxu0 0.0
    %6462 = vmatpush1.msra.mxu0 0.0
    %6463 = vmatprep.subr.mxu0 0.0
    %6464 = vmatpush1.msra.mxu0 0.0
    %6465 = vmatprep.subr.mxu0 0.0
    %6466 = vmatpush1.msra.mxu0 0.0
    %6467 = vmatprep.subr.mxu0 0.0
    %6468 = vmatpush1.msra.mxu0 0.0
    %6469 = vmatprep.subr.mxu0 0.0
    %6470 = vmatpush1.msra.mxu0 0.0
    %6471 = vmatprep.subr.mxu0 0.0
    %6472 = vmatpush1.msra.mxu0 0.0
    %6473 = vmatprep.subr.mxu0 0.0
    %6474 = vmatpush1.msra.mxu0 0.0
    %6475 = vmatprep.subr.mxu0 0.0
    %6476 = vmatpush1.msra.mxu0 0.0
    %6477 = vmatprep.subr.mxu0 0.0
    %6478 = vmatpush1.msra.mxu0 0.0
    %6479 = vmatprep.subr.mxu0 0.0
    %6480 = vmatpush1.msra.mxu0 0.0
    %6481 = vmatprep.subr.mxu0 0.0
    %6482 = vmatpush1.msra.mxu0 0.0
    %6483 = vmatprep.subr.mxu0 0.0
    %6484 = vmatpush1.msra.mxu0 0.0
    %6485 = vmatprep.subr.mxu0 0.0
    %6486 = vmatpush1.msra.mxu0 0.0
    %6487 = vmatprep.subr.mxu0 0.0
    %6488 = vmatpush1.msra.mxu0 0.0
    %6489 = vmatprep.subr.mxu0 0.0
    %6490 = vmatpush1.msra.mxu0 0.0
    %6491 = vmatprep.subr.mxu0 0.0
    %6492 = vmatpush1.msra.mxu0 0.0
    %6493 = vmatprep.subr.mxu0 0.0
    %6494 = vmatpush1.msra.mxu0 0.0
    %6495 = vmatprep.subr.mxu0 0.0
    %6496 = vmatpush1.msra.mxu0 0.0
    %6497 = vmatprep.subr.mxu0 0.0
    %6498 = vmatpush1.msra.mxu0 0.0
    %6499 = vmatprep.subr.mxu0 0.0
    %6500 = vmatpush1.msra.mxu0 0.0
    %6501 = vmatprep.subr.mxu0 0.0
    %6502 = vmatpush1.msra.mxu0 0.0
    %6503 = vmatprep.subr.mxu0 0.0
    %6504 = vmatpush1.msra.mxu0 0.0
    %6505 = vmatprep.subr.mxu0 0.0
    %6506 = vmatpush1.msra.mxu0 0.0
    %6507 = vmatprep.subr.mxu0 0.0
    %6508 = vmatpush1.msra.mxu0 0.0
    %6509 = vmatprep.subr.mxu0 0.0
    %6510 = vmatpush1.msra.mxu0 0.0
    %6511 = vmatprep.subr.mxu0 0.0
    %6512 = vmatpush1.msra.mxu0 0.0
    %6513 = vmatprep.subr.mxu0 0.0
    %6514 = vmatpush1.msra.mxu0 0.0
    %6515 = vmatprep.subr.mxu0 0.0
    %6516 = vmatpush1.msra.mxu0 0.0
    %6517 = vmatprep.subr.mxu0 0.0
    %6518 = vmatpush1.msra.mxu0 0.0
    %6519 = vmatprep.subr.mxu0 0.0
    %6520 = vmatpush1.msra.mxu0 0.0
    %6521 = vmatprep.mubr.f32.mxu0 0.0
    %6522 = vmatmul.mubr.f32.gmra.mrb[0].mxu0 %v6452
    %v6523 = vpop.f32.mrb[0].mxu0
    %v6524 = vadd.f32 0.0, %v6523
    %v6525 = vpop.f32.mrb[0].mxu0
    %6526 = vdwg.mxu0
    %v6527 = vadd.f32 %v6445, %v6524
    %v6528 = vld [vmem:[#allocation7 + $0x4] sm:$0x1]
    %v6529 = vld [vmem:[%s5877] sm:$0xff]
    %v6530 = vld [vmem:[%s5877 + $0x8] sm:$0x1]
    %6532 = vrot.lane.b32.xlu0 %v6528, 119
    %v6533 = vpop.permute.xlu0 %6532
    %v6534 = vsel %vm5560, %v6533, 0
    %v6537 = vsel %vm5564, %v6530, 0
    %6539 = vmatprep.subr.mxu0 0.0
    %6540 = vmatpush1.msra.mxu0 %v6529
    %6541 = vmatprep.subr.mxu0 0.0
    %6542 = vmatpush1.msra.mxu0 %v6537
    %6543 = vmatprep.subr.mxu0 0.0
    %6544 = vmatpush1.msra.mxu0 0.0
    %6545 = vmatprep.subr.mxu0 0.0
    %6546 = vmatpush1.msra.mxu0 0.0
    %6547 = vmatprep.subr.mxu0 0.0
    %6548 = vmatpush1.msra.mxu0 0.0
    %6549 = vmatprep.subr.mxu0 0.0
    %6550 = vmatpush1.msra.mxu0 0.0
    %6551 = vmatprep.subr.mxu0 0.0
    %6552 = vmatpush1.msra.mxu0 0.0
    %6553 = vmatprep.subr.mxu0 0.0
    %6554 = vmatpush1.msra.mxu0 0.0
    %6555 = vmatprep.subr.mxu0 0.0
    %6556 = vmatpush1.msra.mxu0 0.0
    %6557 = vmatprep.subr.mxu0 0.0
    %6558 = vmatpush1.msra.mxu0 0.0
    %6559 = vmatprep.subr.mxu0 0.0
    %6560 = vmatpush1.msra.mxu0 0.0
    %6561 = vmatprep.subr.mxu0 0.0
    %6562 = vmatpush1.msra.mxu0 0.0
    %6563 = vmatprep.subr.mxu0 0.0
    %6564 = vmatpush1.msra.mxu0 0.0
    %6565 = vmatprep.subr.mxu0 0.0
    %6566 = vmatpush1.msra.mxu0 0.0
    %6567 = vmatprep.subr.mxu0 0.0
    %6568 = vmatpush1.msra.mxu0 0.0
    %6569 = vmatprep.subr.mxu0 0.0
    %6570 = vmatpush1.msra.mxu0 0.0
    %6571 = vmatprep.subr.mxu0 0.0
    %6572 = vmatpush1.msra.mxu0 0.0
    %6573 = vmatprep.subr.mxu0 0.0
    %6574 = vmatpush1.msra.mxu0 0.0
    %6575 = vmatprep.subr.mxu0 0.0
    %6576 = vmatpush1.msra.mxu0 0.0
    %6577 = vmatprep.subr.mxu0 0.0
    %6578 = vmatpush1.msra.mxu0 0.0
    %6579 = vmatprep.subr.mxu0 0.0
    %6580 = vmatpush1.msra.mxu0 0.0
    %6581 = vmatprep.subr.mxu0 0.0
    %6582 = vmatpush1.msra.mxu0 0.0
    %6583 = vmatprep.subr.mxu0 0.0
    %6584 = vmatpush1.msra.mxu0 0.0
    %6585 = vmatprep.subr.mxu0 0.0
    %6586 = vmatpush1.msra.mxu0 0.0
    %6587 = vmatprep.subr.mxu0 0.0
    %6588 = vmatpush1.msra.mxu0 0.0
    %6589 = vmatprep.subr.mxu0 0.0
    %6590 = vmatpush1.msra.mxu0 0.0
    %6591 = vmatprep.subr.mxu0 0.0
    %6592 = vmatpush1.msra.mxu0 0.0
    %6593 = vmatprep.subr.mxu0 0.0
    %6594 = vmatpush1.msra.mxu0 0.0
    %6595 = vmatprep.subr.mxu0 0.0
    %6596 = vmatpush1.msra.mxu0 0.0
    %6597 = vmatprep.subr.mxu0 0.0
    %6598 = vmatpush1.msra.mxu0 0.0
    %6599 = vmatprep.subr.mxu0 0.0
    %6600 = vmatpush1.msra.mxu0 0.0
    %6601 = vmatprep.subr.mxu0 0.0
    %6602 = vmatpush1.msra.mxu0 0.0
    %6603 = vmatprep.mubr.f32.mxu0 0.0
    %6604 = vmatmul.mubr.f32.gmra.mrb[0].mxu0 %v6534
    %v6605 = vpop.f32.mrb[0].mxu0
    %v6606 = vadd.f32 0.0, %v6605
    %v6607 = vpop.f32.mrb[0].mxu0
    %6608 = vdwg.mxu0
    %v6609 = vadd.f32 %v6527, %v6606
    %v6610 = vld [vmem:[#allocation7 + $0x5] sm:$0x1]
    %v6611 = vld [vmem:[%s5958] sm:$0xff]
    %v6612 = vld [vmem:[%s5958 + $0x8] sm:$0x1]
    %6614 = vrot.lane.b32.xlu0 %v6610, 119
    %v6615 = vpop.permute.xlu0 %6614
    %v6616 = vsel %vm5560, %v6615, 0
    %v6619 = vsel %vm5564, %v6612, 0
    %6621 = vmatprep.subr.mxu0 0.0
    %6622 = vmatpush1.msra.mxu0 %v6611
    %6623 = vmatprep.subr.mxu0 0.0
    %6624 = vmatpush1.msra.mxu0 %v6619
    %6625 = vmatprep.subr.mxu0 0.0
    %6626 = vmatpush1.msra.mxu0 0.0
    %6627 = vmatprep.subr.mxu0 0.0
    %6628 = vmatpush1.msra.mxu0 0.0
    %6629 = vmatprep.subr.mxu0 0.0
    %6630 = vmatpush1.msra.mxu0 0.0
    %6631 = vmatprep.subr.mxu0 0.0
    %6632 = vmatpush1.msra.mxu0 0.0
    %6633 = vmatprep.subr.mxu0 0.0
    %6634 = vmatpush1.msra.mxu0 0.0
    %6635 = vmatprep.subr.mxu0 0.0
    %6636 = vmatpush1.msra.mxu0 0.0
    %6637 = vmatprep.subr.mxu0 0.0
    %6638 = vmatpush1.msra.mxu0 0.0
    %6639 = vmatprep.subr.mxu0 0.0
    %6640 = vmatpush1.msra.mxu0 0.0
    %6641 = vmatprep.subr.mxu0 0.0
    %6642 = vmatpush1.msra.mxu0 0.0
    %6643 = vmatprep.subr.mxu0 0.0
    %6644 = vmatpush1.msra.mxu0 0.0
    %6645 = vmatprep.subr.mxu0 0.0
    %6646 = vmatpush1.msra.mxu0 0.0
    %6647 = vmatprep.subr.mxu0 0.0
    %6648 = vmatpush1.msra.mxu0 0.0
    %6649 = vmatprep.subr.mxu0 0.0
    %6650 = vmatpush1.msra.mxu0 0.0
    %6651 = vmatprep.subr.mxu0 0.0
    %6652 = vmatpush1.msra.mxu0 0.0
    %6653 = vmatprep.subr.mxu0 0.0
    %6654 = vmatpush1.msra.mxu0 0.0
    %6655 = vmatprep.subr.mxu0 0.0
    %6656 = vmatpush1.msra.mxu0 0.0
    %6657 = vmatprep.subr.mxu0 0.0
    %6658 = vmatpush1.msra.mxu0 0.0
    %6659 = vmatprep.subr.mxu0 0.0
    %6660 = vmatpush1.msra.mxu0 0.0
    %6661 = vmatprep.subr.mxu0 0.0
    %6662 = vmatpush1.msra.mxu0 0.0
    %6663 = vmatprep.subr.mxu0 0.0
    %6664 = vmatpush1.msra.mxu0 0.0
    %6665 = vmatprep.subr.mxu0 0.0
    %6666 = vmatpush1.msra.mxu0 0.0
    %6667 = vmatprep.subr.mxu0 0.0
    %6668 = vmatpush1.msra.mxu0 0.0
    %6669 = vmatprep.subr.mxu0 0.0
    %6670 = vmatpush1.msra.mxu0 0.0
    %6671 = vmatprep.subr.mxu0 0.0
    %6672 = vmatpush1.msra.mxu0 0.0
    %6673 = vmatprep.subr.mxu0 0.0
    %6674 = vmatpush1.msra.mxu0 0.0
    %6675 = vmatprep.subr.mxu0 0.0
    %6676 = vmatpush1.msra.mxu0 0.0
    %6677 = vmatprep.subr.mxu0 0.0
    %6678 = vmatpush1.msra.mxu0 0.0
    %6679 = vmatprep.subr.mxu0 0.0
    %6680 = vmatpush1.msra.mxu0 0.0
    %6681 = vmatprep.subr.mxu0 0.0
    %6682 = vmatpush1.msra.mxu0 0.0
    %6683 = vmatprep.subr.mxu0 0.0
    %6684 = vmatpush1.msra.mxu0 0.0
    %6685 = vmatprep.mubr.f32.mxu0 0.0
    %6686 = vmatmul.mubr.f32.gmra.mrb[0].mxu0 %v6616
    %v6687 = vpop.f32.mrb[0].mxu0
    %v6688 = vadd.f32 0.0, %v6687
    %v6689 = vpop.f32.mrb[0].mxu0
    %6690 = vdwg.mxu0
    %v6691 = vadd.f32 %v6609, %v6688
    %v6692 = vld [vmem:[#allocation7 + $0x6] sm:$0x1]
    %v6693 = vld [vmem:[%s6039] sm:$0xff]
    %v6694 = vld [vmem:[%s6039 + $0x8] sm:$0x1]
    %6696 = vrot.lane.b32.xlu0 %v6692, 119
    %v6697 = vpop.permute.xlu0 %6696
    %v6698 = vsel %vm5560, %v6697, 0
    %v6701 = vsel %vm5564, %v6694, 0
    %6703 = vmatprep.subr.mxu0 0.0
    %6704 = vmatpush1.msra.mxu0 %v6693
    %6705 = vmatprep.subr.mxu0 0.0
    %6706 = vmatpush1.msra.mxu0 %v6701
    %6707 = vmatprep.subr.mxu0 0.0
    %6708 = vmatpush1.msra.mxu0 0.0
    %6709 = vmatprep.subr.mxu0 0.0
    %6710 = vmatpush1.msra.mxu0 0.0
    %6711 = vmatprep.subr.mxu0 0.0
    %6712 = vmatpush1.msra.mxu0 0.0
    %6713 = vmatprep.subr.mxu0 0.0
    %6714 = vmatpush1.msra.mxu0 0.0
    %6715 = vmatprep.subr.mxu0 0.0
    %6716 = vmatpush1.msra.mxu0 0.0
    %6717 = vmatprep.subr.mxu0 0.0
    %6718 = vmatpush1.msra.mxu0 0.0
    %6719 = vmatprep.subr.mxu0 0.0
    %6720 = vmatpush1.msra.mxu0 0.0
    %6721 = vmatprep.subr.mxu0 0.0
    %6722 = vmatpush1.msra.mxu0 0.0
    %6723 = vmatprep.subr.mxu0 0.0
    %6724 = vmatpush1.msra.mxu0 0.0
    %6725 = vmatprep.subr.mxu0 0.0
    %6726 = vmatpush1.msra.mxu0 0.0
    %6727 = vmatprep.subr.mxu0 0.0
    %6728 = vmatpush1.msra.mxu0 0.0
    %6729 = vmatprep.subr.mxu0 0.0
    %6730 = vmatpush1.msra.mxu0 0.0
    %6731 = vmatprep.subr.mxu0 0.0
    %6732 = vmatpush1.msra.mxu0 0.0
    %6733 = vmatprep.subr.mxu0 0.0
    %6734 = vmatpush1.msra.mxu0 0.0
    %6735 = vmatprep.subr.mxu0 0.0
    %6736 = vmatpush1.msra.mxu0 0.0
    %6737 = vmatprep.subr.mxu0 0.0
    %6738 = vmatpush1.msra.mxu0 0.0
    %6739 = vmatprep.subr.mxu0 0.0
    %6740 = vmatpush1.msra.mxu0 0.0
    %6741 = vmatprep.subr.mxu0 0.0
    %6742 = vmatpush1.msra.mxu0 0.0
    %6743 = vmatprep.subr.mxu0 0.0
    %6744 = vmatpush1.msra.mxu0 0.0
    %6745 = vmatprep.subr.mxu0 0.0
    %6746 = vmatpush1.msra.mxu0 0.0
    %6747 = vmatprep.subr.mxu0 0.0
    %6748 = vmatpush1.msra.mxu0 0.0
    %6749 = vmatprep.subr.mxu0 0.0
    %6750 = vmatpush1.msra.mxu0 0.0
    %6751 = vmatprep.subr.mxu0 0.0
    %6752 = vmatpush1.msra.mxu0 0.0
    %6753 = vmatprep.subr.mxu0 0.0
    %6754 = vmatpush1.msra.mxu0 0.0
    %6755 = vmatprep.subr.mxu0 0.0
    %6756 = vmatpush1.msra.mxu0 0.0
    %6757 = vmatprep.subr.mxu0 0.0
    %6758 = vmatpush1.msra.mxu0 0.0
    %6759 = vmatprep.subr.mxu0 0.0
    %6760 = vmatpush1.msra.mxu0 0.0
    %6761 = vmatprep.subr.mxu0 0.0
    %6762 = vmatpush1.msra.mxu0 0.0
    %6763 = vmatprep.subr.mxu0 0.0
    %6764 = vmatpush1.msra.mxu0 0.0
    %6765 = vmatprep.subr.mxu0 0.0
    %6766 = vmatpush1.msra.mxu0 0.0
    %6767 = vmatprep.mubr.f32.mxu0 0.0
    %6768 = vmatmul.mubr.f32.gmra.mrb[0].mxu0 %v6698
    %v6769 = vpop.f32.mrb[0].mxu0
    %v6770 = vadd.f32 0.0, %v6769
    %v6771 = vpop.f32.mrb[0].mxu0
    %6772 = vdwg.mxu0
    %v6773 = vadd.f32 %v6691, %v6770
    %v6774 = vld [vmem:[#allocation7 + $0x7] sm:$0x1]
    %v6775 = vld [vmem:[%s6120] sm:$0xff]
    %v6776 = vld [vmem:[%s6120 + $0x8] sm:$0x1]
    %6778 = vrot.lane.b32.xlu0 %v6774, 119
    %v6779 = vpop.permute.xlu0 %6778
    %v6780 = vsel %vm5560, %v6779, 0
    %v6783 = vsel %vm5564, %v6776, 0
    %6785 = vmatprep.subr.mxu0 0.0
    %6786 = vmatpush1.msra.mxu0 %v6775
    %6787 = vmatprep.subr.mxu0 0.0
    %6788 = vmatpush1.msra.mxu0 %v6783
    %6789 = vmatprep.subr.mxu0 0.0
    %6790 = vmatpush1.msra.mxu0 0.0
    %6791 = vmatprep.subr.mxu0 0.0
    %6792 = vmatpush1.msra.mxu0 0.0
    %6793 = vmatprep.subr.mxu0 0.0
    %6794 = vmatpush1.msra.mxu0 0.0
    %6795 = vmatprep.subr.mxu0 0.0
    %6796 = vmatpush1.msra.mxu0 0.0
    %6797 = vmatprep.subr.mxu0 0.0
    %6798 = vmatpush1.msra.mxu0 0.0
    %6799 = vmatprep.subr.mxu0 0.0
    %6800 = vmatpush1.msra.mxu0 0.0
    %6801 = vmatprep.subr.mxu0 0.0
    %6802 = vmatpush1.msra.mxu0 0.0
    %6803 = vmatprep.subr.mxu0 0.0
    %6804 = vmatpush1.msra.mxu0 0.0
    %6805 = vmatprep.subr.mxu0 0.0
    %6806 = vmatpush1.msra.mxu0 0.0
    %6807 = vmatprep.subr.mxu0 0.0
    %6808 = vmatpush1.msra.mxu0 0.0
    %6809 = vmatprep.subr.mxu0 0.0
    %6810 = vmatpush1.msra.mxu0 0.0
    %6811 = vmatprep.subr.mxu0 0.0
    %6812 = vmatpush1.msra.mxu0 0.0
    %6813 = vmatprep.subr.mxu0 0.0
    %6814 = vmatpush1.msra.mxu0 0.0
    %6815 = vmatprep.subr.mxu0 0.0
    %6816 = vmatpush1.msra.mxu0 0.0
    %6817 = vmatprep.subr.mxu0 0.0
    %6818 = vmatpush1.msra.mxu0 0.0
    %6819 = vmatprep.subr.mxu0 0.0
    %6820 = vmatpush1.msra.mxu0 0.0
    %6821 = vmatprep.subr.mxu0 0.0
    %6822 = vmatpush1.msra.mxu0 0.0
    %6823 = vmatprep.subr.mxu0 0.0
    %6824 = vmatpush1.msra.mxu0 0.0
    %6825 = vmatprep.subr.mxu0 0.0
    %6826 = vmatpush1.msra.mxu0 0.0
    %6827 = vmatprep.subr.mxu0 0.0
    %6828 = vmatpush1.msra.mxu0 0.0
    %6829 = vmatprep.subr.mxu0 0.0
    %6830 = vmatpush1.msra.mxu0 0.0
    %6831 = vmatprep.subr.mxu0 0.0
    %6832 = vmatpush1.msra.mxu0 0.0
    %6833 = vmatprep.subr.mxu0 0.0
    %6834 = vmatpush1.msra.mxu0 0.0
    %6835 = vmatprep.subr.mxu0 0.0
    %6836 = vmatpush1.msra.mxu0 0.0
    %6837 = vmatprep.subr.mxu0 0.0
    %6838 = vmatpush1.msra.mxu0 0.0
    %6839 = vmatprep.subr.mxu0 0.0
    %6840 = vmatpush1.msra.mxu0 0.0
    %6841 = vmatprep.subr.mxu0 0.0
    %6842 = vmatpush1.msra.mxu0 0.0
    %6843 = vmatprep.subr.mxu0 0.0
    %6844 = vmatpush1.msra.mxu0 0.0
    %6845 = vmatprep.subr.mxu0 0.0
    %6846 = vmatpush1.msra.mxu0 0.0
    %6847 = vmatprep.subr.mxu0 0.0
    %6848 = vmatpush1.msra.mxu0 0.0
    %6849 = vmatprep.mubr.f32.mxu0 0.0
    %6850 = vmatmul.mubr.f32.gmra.mrb[0].mxu0 %v6780
    %v6851 = vpop.f32.mrb[0].mxu0
    %v6852 = vadd.f32 0.0, %v6851
    %v6853 = vpop.f32.mrb[0].mxu0
    %6854 = vdwg.mxu0
    %v6855 = vadd.f32 %v6773, %v6852
    %6856 = vst.msk [vmem:[#allocation8 + $0x1] sm:$0x1] %vm6200, %v6855
    %v6857 = vld [vmem:[#allocation8] sm:$0x3]
    %vm6858 = vcmask 254976
    %v6859 = vsel %vm6858, %v6857, 0.0
    %v6860 = vrot.slane %v6859, 4
    %v6861 = vadd.f32 %v6859, %v6860
    %v6862 = vrot.slane %v6861, 2
    %v6863 = vadd.f32 %v6861, %v6862
    %v6864 = vrot.slane %v6863, 1
    %v6865 = vadd.f32 %v6863, %v6864
    %v6866 = vrcp.pop 2.0
    %v6867 = vmul.f32 %v6865, %v6866
    %v6868 = vmul.f32 %v6857, %v6857
    %v6869 = vsel %vm6858, %v6868, 0.0
    %v6870 = vrot.slane %v6869, 4
    %v6871 = vadd.f32 %v6869, %v6870
    %v6872 = vrot.slane %v6871, 2
    %v6873 = vadd.f32 %v6871, %v6872
    %v6874 = vrot.slane %v6873, 1
    %v6875 = vadd.f32 %v6873, %v6874
    %v6876 = vmul.f32 %v6875, %v6866
    %v6877 = vmul.f32 %v6867, %v6867
    %v6878 = vsub.f32 %v6876, %v6877
    %v6879 = vmax.f32 %v6878, 0.0
    %v6880 = vsub.f32 %v6857, %v6867
    %v6881 = vld [vmem:[%s17] sm:$0x1]
    %v6882 = vadd.f32 %v6879, 1e-05
    %v6883 = vrsqrt.pop %v6882
    %v6884 = vmul.f32 %v6881, %v6883
    %v6886 = vlaneseq
    %v6887 = vshrl.u32 %v6886, 7
    %v6888 = vsub.s32 0, %v6887
    %v6889 = vrot.slane %v6884, %v6888
    %v6891 = vmul.f32 %v6880, %v6889
    %v6892 = vld [vmem:[%s18] sm:$0x1]
    %v6894 = vlaneseq
    %v6895 = vshrl.u32 %v6894, 7
    %v6896 = vsub.s32 0, %v6895
    %v6897 = vrot.slane %v6892, %v6896
    %v6899 = vadd.f32 %v6891, %v6897
    %v6900 = vmax.f32 %v6899, 0.0
    %v6901 = vld [vmem:[%s19] sm:$0xff]
    %v6902 = vld [vmem:[%s19 + $0x8] sm:$0xff]
    %v6903 = vld [vmem:[%s19 + $0x10] sm:$0xff]
    %v6904 = vld [vmem:[%s19 + $0x18] sm:$0xff]
    %v6905 = vld [vmem:[%s20] sm:$0x1]
    %v6907 = vlaneseq
    %v6908 = vshrl.u32 %v6907, 7
    %v6909 = vsub.s32 0, %v6908
    %v6910 = vrot.slane %v6905, %v6909
    %vm6912 = vcmask 261120
    %v6914 = vsel %vm6912, %v6900, 0
    %6916 = vmatprep.subr.mxu0 0.0
    %6917 = vmatpush1.msra.mxu0 %v6901
    %6918 = vmatprep.subr.mxu0 0.0
    %6919 = vmatpush1.msra.mxu0 %v6902
    %6920 = vmatprep.subr.mxu0 0.0
    %6921 = vmatpush1.msra.mxu0 %v6903
    %6922 = vmatprep.subr.mxu0 0.0
    %6923 = vmatpush1.msra.mxu0 %v6904
    %6924 = vmatprep.subr.mxu0 0.0
    %6925 = vmatpush1.msra.mxu0 0.0
    %6926 = vmatprep.subr.mxu0 0.0
    %6927 = vmatpush1.msra.mxu0 0.0
    %6928 = vmatprep.subr.mxu0 0.0
    %6929 = vmatpush1.msra.mxu0 0.0
    %6930 = vmatprep.subr.mxu0 0.0
    %6931 = vmatpush1.msra.mxu0 0.0
    %6932 = vmatprep.subr.mxu0 0.0
    %6933 = vmatpush1.msra.mxu0 0.0
    %6934 = vmatprep.subr.mxu0 0.0
    %6935 = vmatpush1.msra.mxu0 0.0
    %6936 = vmatprep.subr.mxu0 0.0
    %6937 = vmatpush1.msra.mxu0 0.0
    %6938 = vmatprep.subr.mxu0 0.0
    %6939 = vmatpush1.msra.mxu0 0.0
    %6940 = vmatprep.subr.mxu0 0.0
    %6941 = vmatpush1.msra.mxu0 0.0
    %6942 = vmatprep.subr.mxu0 0.0
    %6943 = vmatpush1.msra.mxu0 0.0
    %6944 = vmatprep.subr.mxu0 0.0
    %6945 = vmatpush1.msra.mxu0 0.0
    %6946 = vmatprep.subr.mxu0 0.0
    %6947 = vmatpush1.msra.mxu0 0.0
    %6948 = vmatprep.subr.mxu0 0.0
    %6949 = vmatpush1.msra.mxu0 0.0
    %6950 = vmatprep.subr.mxu0 0.0
    %6951 = vmatpush1.msra.mxu0 0.0
    %6952 = vmatprep.subr.mxu0 0.0
    %6953 = vmatpush1.msra.mxu0 0.0
    %6954 = vmatprep.subr.mxu0 0.0
    %6955 = vmatpush1.msra.mxu0 0.0
    %6956 = vmatprep.subr.mxu0 0.0
    %6957 = vmatpush1.msra.mxu0 0.0
    %6958 = vmatprep.subr.mxu0 0.0
    %6959 = vmatpush1.msra.mxu0 0.0
    %6960 = vmatprep.subr.mxu0 0.0
    %6961 = vmatpush1.msra.mxu0 0.0
    %6962 = vmatprep.subr.mxu0 0.0
    %6963 = vmatpush1.msra.mxu0 0.0
    %6964 = vmatprep.subr.mxu0 0.0
    %6965 = vmatpush1.msra.mxu0 0.0
    %6966 = vmatprep.subr.mxu0 0.0
    %6967 = vmatpush1.msra.mxu0 0.0
    %6968 = vmatprep.subr.mxu0 0.0
    %6969 = vmatpush1.msra.mxu0 0.0
    %6970 = vmatprep.subr.mxu0 0.0
    %6971 = vmatpush1.msra.mxu0 0.0
    %6972 = vmatprep.subr.mxu0 0.0
    %6973 = vmatpush1.msra.mxu0 0.0
    %6974 = vmatprep.subr.mxu0 0.0
    %6975 = vmatpush1.msra.mxu0 0.0
    %6976 = vmatprep.subr.mxu0 0.0
    %6977 = vmatpush1.msra.mxu0 0.0
    %6978 = vmatprep.subr.mxu0 0.0
    %6979 = vmatpush1.msra.mxu0 0.0
    %6980 = vmatprep.mubr.f32.mxu0 0.0
    %6981 = vmatmul.mubr.f32.gmra.mrb[0].mxu0 %v6914
    %v6982 = vpop.f32.mrb[0].mxu0
    %v6983 = vadd.f32 %v6910, %v6982
    %v6984 = vpop.f32.mrb[0].mxu0
    %6985 = vdwg.mxu0
    %vm6986 = vcmask 74752
    %6987 = vst.msk [vmem:[#allocation9] sm:$0x3] %vm6986, %v6983
    // Predicated region
    $region86: #{simple_cnn_forward.1} parent=1 // pred_check
      _
    $region87: #{simple_cnn_forward.1} parent=1 // pred_check_branch
      %6989 = sbr.rel (0) target = $region89
    $region88: #{simple_cnn_forward.1} parent=1 // pred_region
      %s6991 = ssub.s32 32, 32
      %6992 = vsyncadd [#allocation10], %s6991
      %s6994 = sshll.u32 [#allocation9], 4
      %s6995 = int_to_ptr.vmem [resolvable:$true] %s6994
      %6997 = dma.vmem_to_hbm [thread:$0]  %s6995, 32, %s21, [#allocation10]
    $region89: #{simple_cnn_forward.1} parent=1 // pred_fallthru
      _
    // Predicated region
    $region90: #{simple_cnn_forward.1} parent=1 // pred_check
      _
    $region91: #{simple_cnn_forward.1} parent=1 // pred_check_branch
      %6999 = sbr.rel (0) target = $region93
    $region92: #{simple_cnn_forward.1} parent=1 // pred_region
      %7000 = dma.done [#allocation10], 32
    $region93: #{simple_cnn_forward.1} parent=1 // pred_fallthru
      _
    %7001 = vsyncpa [#allocation10], 1

</llo_original>
